<compile_context>
chip_gen: v6e
topology: v6e:2x2x1
jax: 0.10.0
libtpu: 0.0.40
codegen_flags: <defaults>
</compile_context>

<pallas_src>
import functools

import jax
import jax.numpy as jnp
from jax import lax
from jax.experimental import pallas as pl
from jax.experimental.pallas import tpu as pltpu


def _resblock_kernel(xpad_ref, w1_ref, b1_ref, w2_ref, b2_ref, o_ref, mid_ref,
                     *, res_scale, ksize):
    # xpad_ref: (1, Hp, Wp, Cp) bf16  zero-padded input, one batch element
    # w*_ref  : (K*K, Cp, Cp)   bf16  conv weights, tap-major, lane-dense
    # b*_ref  : (1, Cp)         f32   conv biases
    # o_ref   : (1, H, W, Cp)   f32   output (lane-dense last dim = Cp)
    # mid_ref : (Hp, Wp, Cp)    bf16  scratch: zero-padded relu(conv1)
    K = ksize
    pad = K // 2
    _, H, W, Cp = o_ref.shape
    HW = H * W
    Wp = W + 2 * pad

    def conv(load_patch, w_ref):
        # Sum over the K*K taps; each tap is one full-width MXU matmul
        # (HW, Cp) x (Cp, Cp) with f32 accumulation.
        acc = jnp.zeros((HW, Cp), jnp.float32)
        for dy in range(K):
            for dx in range(K):
                patch = load_patch(dy, dx).reshape(HW, Cp)   # bf16, free reshape
                acc += jnp.dot(patch, w_ref[dy * K + dx],
                               preferred_element_type=jnp.float32)
        return acc

    # ---- conv1 + bias + ReLU (f32) ------------------------------------------
    acc1 = conv(lambda dy, dx: xpad_ref[0, pl.ds(dy, H), pl.ds(dx, W), :],
                w1_ref)
    mid = jnp.maximum(acc1 + b1_ref[...], 0.0).astype(mid_ref.dtype)

    # ---- stage zero-padded intermediate for conv2 ---------------------------
    # Zero only the halo strips (top/bottom rows, left/right columns); the
    # interior is fully overwritten every step, so this is megacore-safe and
    # avoids re-zeroing the whole padded buffer each iteration.
    mid_ref[pl.ds(0, pad), :, :] = jnp.zeros((pad, Wp, Cp), mid_ref.dtype)
    mid_ref[pl.ds(pad + H, pad), :, :] = jnp.zeros((pad, Wp, Cp), mid_ref.dtype)
    mid_ref[pl.ds(pad, H), pl.ds(0, pad), :] = jnp.zeros((H, pad, Cp),
                                                         mid_ref.dtype)
    mid_ref[pl.ds(pad, H), pl.ds(pad + W, pad), :] = jnp.zeros((H, pad, Cp),
                                                               mid_ref.dtype)
    mid_ref[pl.ds(pad, H), pl.ds(pad, W), :] = mid.reshape(H, W, Cp)

    # ---- conv2 + bias (f32) --------------------------------------------------
    acc2 = conv(lambda dy, dx: mid_ref[pl.ds(dy, H), pl.ds(dx, W), :], w2_ref)
    acc2 = acc2 + b2_ref[...]

    # ---- residual scale + add (f32) ------------------------------------------
    x_in = xpad_ref[0, pl.ds(pad, H), pl.ds(pad, W), :].astype(jnp.float32)
    out = acc2 * res_scale + x_in.reshape(HW, Cp)
    o_ref[0, :, :, :] = out.reshape(H, W, Cp).astype(o_ref.dtype)


def resblock_pallas(x_nchw, w1, b1, w2, b2, res_scale=1.0):
    """x_nchw: (N, C, H, W); w*: (K, K, C, C) HWIO; b*: (C,). Returns NCHW f32."""
    N, C, H, W = x_nchw.shape
    K = w1.shape[0]
    pad = K // 2
    Hp, Wp = H + 2 * pad, W + 2 * pad
    Cp = ((C + 127) // 128) * 128          # lane-dense channel dim

    # NCHW -> NHWC, spatial zero-pad, channel zero-pad, bf16 for the MXU.
    x_nhwc = jnp.transpose(x_nchw, (0, 2, 3, 1))
    x_pad = jnp.pad(x_nhwc, ((0, 0), (pad, pad), (pad, pad), (0, Cp - C)))
    x_pad = x_pad.astype(jnp.bfloat16)

    def prep_w(w):   # (K, K, C, C) HWIO -> (K*K, Cp, Cp) bf16, zero-padded
        w = jnp.pad(w, ((0, 0), (0, 0), (0, Cp - C), (0, Cp - C)))
        return w.reshape(K * K, Cp, Cp).astype(jnp.bfloat16)

    def prep_b(b):   # (C,) -> (1, Cp) f32, zero-padded
        return jnp.pad(b, (0, Cp - C)).reshape(1, Cp).astype(jnp.float32)

    w1p, w2p = prep_w(w1), prep_w(w2)
    b1p, b2p = prep_b(b1), prep_b(b2)

    kernel = functools.partial(_resblock_kernel,
                               res_scale=float(res_scale), ksize=K)

    flops = N * 2 * (2 * H * W * K * K * Cp * Cp)
    bytes_accessed = (x_pad.size * 2 + (w1p.size + w2p.size) * 2
                      + (b1p.size + b2p.size) * 4 + N * H * W * Cp * 4)

    out_wide = pl.pallas_call(
        kernel,
        out_shape=jax.ShapeDtypeStruct((N, H, W, Cp), jnp.float32),
        grid_spec=pltpu.PrefetchScalarGridSpec(
            num_scalar_prefetch=0,
            grid=(N,),
            in_specs=[
                pl.BlockSpec((1, Hp, Wp, Cp), lambda n: (n, 0, 0, 0)),
                pl.BlockSpec((K * K, Cp, Cp), lambda n: (0, 0, 0)),
                pl.BlockSpec((1, Cp), lambda n: (0, 0)),
                pl.BlockSpec((K * K, Cp, Cp), lambda n: (0, 0, 0)),
                pl.BlockSpec((1, Cp), lambda n: (0, 0)),
            ],
            out_specs=pl.BlockSpec((1, H, W, Cp), lambda n: (n, 0, 0, 0)),
            scratch_shapes=[pltpu.VMEM((Hp, Wp, Cp), jnp.bfloat16)],
        ),
        compiler_params=pltpu.CompilerParams(
            dimension_semantics=("parallel",),
            vmem_limit_bytes=32 * 1024 * 1024),
        cost_estimate=pl.CostEstimate(flops=flops, transcendentals=0,
                                      bytes_accessed=bytes_accessed),
    )(x_pad, w1p, b1p, w2p, b2p)

    out = out_wide[..., :C]                      # drop padded channels
    return jnp.transpose(out, (0, 3, 1, 2))      # back to NCHW


def resblock_reference(x_nchw, w1, b1, w2, b2, res_scale=1.0):
    """Pure-JAX reference matching the kernel's bf16-MXU / f32-accumulate math."""
    x_nhwc = jnp.transpose(x_nchw, (0, 2, 3, 1))
    xb = x_nhwc.astype(jnp.bfloat16)
    dn = lax.conv_dimension_numbers(x_nhwc.shape, w1.shape,
                                    ("NHWC", "HWIO", "NHWC"))
    y = lax.conv_general_dilated(xb, w1.astype(jnp.bfloat16), (1, 1), "SAME",
                                 dimension_numbers=dn,
                                 preferred_element_type=jnp.float32)
    y = jnp.maximum(y + b1, 0.0).astype(jnp.bfloat16)
    y = lax.conv_general_dilated(y, w2.astype(jnp.bfloat16), (1, 1), "SAME",
                                 dimension_numbers=dn,
                                 preferred_element_type=jnp.float32)
    out = (y + b2) * res_scale + xb.astype(jnp.float32)
    return jnp.transpose(out, (0, 3, 1, 2))


if __name__ == "__main__":
    # Small shapes consistent with the module: batch=2, n_feats=8, 16x16, k=3.
    N, C, H, W = 2, 8, 16, 16
    K = 3
    res_scale = 1.0

    key = jax.random.PRNGKey(0)
    kx, kw1, kb1, kw2, kb2 = jax.random.split(key, 5)

    x = jax.random.normal(kx, (N, C, H, W), dtype=jnp.float32)

    # PyTorch-like uniform init with bound 1/sqrt(fan_in).
    bound = 1.0 / (C * K * K) ** 0.5
    w1 = jax.random.uniform(kw1, (K, K, C, C), jnp.float32, -bound, bound)
    b1 = jax.random.uniform(kb1, (C,), jnp.float32, -bound, bound)
    w2 = jax.random.uniform(kw2, (K, K, C, C), jnp.float32, -bound, bound)
    b2 = jax.random.uniform(kb2, (C,), jnp.float32, -bound, bound)

    out = resblock_pallas(x, w1, b1, w2, b2, res_scale)
    out = jax.block_until_ready(out)

    ref = resblock_reference(x, w1, b1, w2, b2, res_scale)
    assert out.shape == (N, C, H, W)
    # Both sides use bf16 MXU inputs with f32 accumulation; differences are
    # accumulation-order / rare bf16 rounding flips of the intermediate.
    assert jnp.allclose(out, ref, atol=1e-2, rtol=1e-2), \
        float(jnp.max(jnp.abs(out - ref)))

    print("KERNEL_OK")
</pallas_src>

<mosaic_0001>
module attributes {stable_mosaic.version = 11 : i64} {
  func.func @_resblock_kernel(%arg0: i32, %arg1: memref<1x18x18x128xbf16, #tpu.memory_space<vmem>>, %arg2: memref<9x128x128xbf16, #tpu.memory_space<vmem>>, %arg3: memref<1x128xf32, #tpu.memory_space<vmem>>, %arg4: memref<9x128x128xbf16, #tpu.memory_space<vmem>>, %arg5: memref<1x128xf32, #tpu.memory_space<vmem>>, %arg6: memref<1x16x16x128xf32, #tpu.memory_space<vmem>>, %arg7: memref<18x18x128xbf16, #tpu.memory_space<vmem>>) attributes {dimension_semantics = [#tpu.dimension_semantics<parallel>], iteration_bounds = array<i64: 2>, scalar_prefetch = 0 : i64, scratch_operands = 1 : i64, tpu.core_type = #tpu.core_type<tc>, window_params = [{transform_indices = @transform_0, window_bounds = array<i64: 1, 18, 18, 128>}, {pipeline_mode = #tpu.pipeline_mode<synchronous>, transform_indices = @transform_1, window_bounds = array<i64: 9, 128, 128>}, {pipeline_mode = #tpu.pipeline_mode<synchronous>, transform_indices = @transform_2, window_bounds = array<i64: 1, 128>}, {pipeline_mode = #tpu.pipeline_mode<synchronous>, transform_indices = @transform_3, window_bounds = array<i64: 9, 128, 128>}, {pipeline_mode = #tpu.pipeline_mode<synchronous>, transform_indices = @transform_4, window_bounds = array<i64: 1, 128>}, {transform_indices = @transform_5, window_bounds = array<i64: 1, 16, 16, 128>}]} {
    %cst = arith.constant 0.000000e+00 : f32
    %0 = vector.broadcast %cst : f32 to vector<256x128xf32>
    %c0 = arith.constant 0 : index
    %c0_0 = arith.constant 0 : index
    %c0_1 = arith.constant 0 : index
    %c0_2 = arith.constant 0 : index
    %1 = vector.load %arg1[%c0, %c0_0, %c0_1, %c0_2] : memref<1x18x18x128xbf16, #tpu.memory_space<vmem>>, vector<1x16x16x128xbf16>
    %2 = vector.shape_cast %1 : vector<1x16x16x128xbf16> to vector<16x16x128xbf16>
    %3 = vector.shape_cast %2 : vector<16x16x128xbf16> to vector<256x128xbf16>
    %c0_3 = arith.constant 0 : index
    %c0_4 = arith.constant 0 : index
    %c0_5 = arith.constant 0 : index
    %4 = vector.load %arg2[%c0_3, %c0_4, %c0_5] : memref<9x128x128xbf16, #tpu.memory_space<vmem>>, vector<1x128x128xbf16>
    %5 = vector.shape_cast %4 : vector<1x128x128xbf16> to vector<128x128xbf16>
    %cst_6 = arith.constant dense<0.000000e+00> : vector<256x128xf32>
    %6 = tpu.matmul %3, %5, %cst_6 {dimension_numbers = #tpu.dot_dimension_numbers<[1], [0], [0], [1], [0, 0, 1, 1], [], []>} : vector<256x128xbf16>, vector<128x128xbf16>, vector<256x128xf32> -> vector<256x128xf32>
    %7 = arith.addf %0, %6 : vector<256x128xf32>
    %c0_7 = arith.constant 0 : index
    %c0_8 = arith.constant 0 : index
    %c1 = arith.constant 1 : index
    %c0_9 = arith.constant 0 : index
    %8 = vector.load %arg1[%c0_7, %c0_8, %c1, %c0_9] : memref<1x18x18x128xbf16, #tpu.memory_space<vmem>>, vector<1x16x16x128xbf16>
    %9 = vector.shape_cast %8 : vector<1x16x16x128xbf16> to vector<16x16x128xbf16>
    %10 = vector.shape_cast %9 : vector<16x16x128xbf16> to vector<256x128xbf16>
    %c1_10 = arith.constant 1 : index
    %c0_11 = arith.constant 0 : index
    %c0_12 = arith.constant 0 : index
    %11 = vector.load %arg2[%c1_10, %c0_11, %c0_12] : memref<9x128x128xbf16, #tpu.memory_space<vmem>>, vector<1x128x128xbf16>
    %12 = vector.shape_cast %11 : vector<1x128x128xbf16> to vector<128x128xbf16>
    %cst_13 = arith.constant dense<0.000000e+00> : vector<256x128xf32>
    %13 = tpu.matmul %10, %12, %cst_13 {dimension_numbers = #tpu.dot_dimension_numbers<[1], [0], [0], [1], [0, 0, 1, 1], [], []>} : vector<256x128xbf16>, vector<128x128xbf16>, vector<256x128xf32> -> vector<256x128xf32>
    %14 = arith.addf %7, %13 : vector<256x128xf32>
    %c0_14 = arith.constant 0 : index
    %c0_15 = arith.constant 0 : index
    %c2 = arith.constant 2 : index
    %c0_16 = arith.constant 0 : index
    %15 = vector.load %arg1[%c0_14, %c0_15, %c2, %c0_16] : memref<1x18x18x128xbf16, #tpu.memory_space<vmem>>, vector<1x16x16x128xbf16>
    %16 = vector.shape_cast %15 : vector<1x16x16x128xbf16> to vector<16x16x128xbf16>
    %17 = vector.shape_cast %16 : vector<16x16x128xbf16> to vector<256x128xbf16>
    %c2_17 = arith.constant 2 : index
    %c0_18 = arith.constant 0 : index
    %c0_19 = arith.constant 0 : index
    %18 = vector.load %arg2[%c2_17, %c0_18, %c0_19] : memref<9x128x128xbf16, #tpu.memory_space<vmem>>, vector<1x128x128xbf16>
    %19 = vector.shape_cast %18 : vector<1x128x128xbf16> to vector<128x128xbf16>
    %cst_20 = arith.constant dense<0.000000e+00> : vector<256x128xf32>
    %20 = tpu.matmul %17, %19, %cst_20 {dimension_numbers = #tpu.dot_dimension_numbers<[1], [0], [0], [1], [0, 0, 1, 1], [], []>} : vector<256x128xbf16>, vector<128x128xbf16>, vector<256x128xf32> -> vector<256x128xf32>
    %21 = arith.addf %14, %20 : vector<256x128xf32>
    %c0_21 = arith.constant 0 : index
    %c1_22 = arith.constant 1 : index
    %c0_23 = arith.constant 0 : index
    %c0_24 = arith.constant 0 : index
    %22 = vector.load %arg1[%c0_21, %c1_22, %c0_23, %c0_24] : memref<1x18x18x128xbf16, #tpu.memory_space<vmem>>, vector<1x16x16x128xbf16>
    %23 = vector.shape_cast %22 : vector<1x16x16x128xbf16> to vector<16x16x128xbf16>
    %24 = vector.shape_cast %23 : vector<16x16x128xbf16> to vector<256x128xbf16>
    %c3 = arith.constant 3 : index
    %c0_25 = arith.constant 0 : index
    %c0_26 = arith.constant 0 : index
    %25 = vector.load %arg2[%c3, %c0_25, %c0_26] : memref<9x128x128xbf16, #tpu.memory_space<vmem>>, vector<1x128x128xbf16>
    %26 = vector.shape_cast %25 : vector<1x128x128xbf16> to vector<128x128xbf16>
    %cst_27 = arith.constant dense<0.000000e+00> : vector<256x128xf32>
    %27 = tpu.matmul %24, %26, %cst_27 {dimension_numbers = #tpu.dot_dimension_numbers<[1], [0], [0], [1], [0, 0, 1, 1], [], []>} : vector<256x128xbf16>, vector<128x128xbf16>, vector<256x128xf32> -> vector<256x128xf32>
    %28 = arith.addf %21, %27 : vector<256x128xf32>
    %c0_28 = arith.constant 0 : index
    %c1_29 = arith.constant 1 : index
    %c1_30 = arith.constant 1 : index
    %c0_31 = arith.constant 0 : index
    %29 = vector.load %arg1[%c0_28, %c1_29, %c1_30, %c0_31] : memref<1x18x18x128xbf16, #tpu.memory_space<vmem>>, vector<1x16x16x128xbf16>
    %30 = vector.shape_cast %29 : vector<1x16x16x128xbf16> to vector<16x16x128xbf16>
    %31 = vector.shape_cast %30 : vector<16x16x128xbf16> to vector<256x128xbf16>
    %c4 = arith.constant 4 : index
    %c0_32 = arith.constant 0 : index
    %c0_33 = arith.constant 0 : index
    %32 = vector.load %arg2[%c4, %c0_32, %c0_33] : memref<9x128x128xbf16, #tpu.memory_space<vmem>>, vector<1x128x128xbf16>
    %33 = vector.shape_cast %32 : vector<1x128x128xbf16> to vector<128x128xbf16>
    %cst_34 = arith.constant dense<0.000000e+00> : vector<256x128xf32>
    %34 = tpu.matmul %31, %33, %cst_34 {dimension_numbers = #tpu.dot_dimension_numbers<[1], [0], [0], [1], [0, 0, 1, 1], [], []>} : vector<256x128xbf16>, vector<128x128xbf16>, vector<256x128xf32> -> vector<256x128xf32>
    %35 = arith.addf %28, %34 : vector<256x128xf32>
    %c0_35 = arith.constant 0 : index
    %c1_36 = arith.constant 1 : index
    %c2_37 = arith.constant 2 : index
    %c0_38 = arith.constant 0 : index
    %36 = vector.load %arg1[%c0_35, %c1_36, %c2_37, %c0_38] : memref<1x18x18x128xbf16, #tpu.memory_space<vmem>>, vector<1x16x16x128xbf16>
    %37 = vector.shape_cast %36 : vector<1x16x16x128xbf16> to vector<16x16x128xbf16>
    %38 = vector.shape_cast %37 : vector<16x16x128xbf16> to vector<256x128xbf16>
    %c5 = arith.constant 5 : index
    %c0_39 = arith.constant 0 : index
    %c0_40 = arith.constant 0 : index
    %39 = vector.load %arg2[%c5, %c0_39, %c0_40] : memref<9x128x128xbf16, #tpu.memory_space<vmem>>, vector<1x128x128xbf16>
    %40 = vector.shape_cast %39 : vector<1x128x128xbf16> to vector<128x128xbf16>
    %cst_41 = arith.constant dense<0.000000e+00> : vector<256x128xf32>
    %41 = tpu.matmul %38, %40, %cst_41 {dimension_numbers = #tpu.dot_dimension_numbers<[1], [0], [0], [1], [0, 0, 1, 1], [], []>} : vector<256x128xbf16>, vector<128x128xbf16>, vector<256x128xf32> -> vector<256x128xf32>
    %42 = arith.addf %35, %41 : vector<256x128xf32>
    %c0_42 = arith.constant 0 : index
    %c2_43 = arith.constant 2 : index
    %c0_44 = arith.constant 0 : index
    %c0_45 = arith.constant 0 : index
    %43 = vector.load %arg1[%c0_42, %c2_43, %c0_44, %c0_45] : memref<1x18x18x128xbf16, #tpu.memory_space<vmem>>, vector<1x16x16x128xbf16>
    %44 = vector.shape_cast %43 : vector<1x16x16x128xbf16> to vector<16x16x128xbf16>
    %45 = vector.shape_cast %44 : vector<16x16x128xbf16> to vector<256x128xbf16>
    %c6 = arith.constant 6 : index
    %c0_46 = arith.constant 0 : index
    %c0_47 = arith.constant 0 : index
    %46 = vector.load %arg2[%c6, %c0_46, %c0_47] : memref<9x128x128xbf16, #tpu.memory_space<vmem>>, vector<1x128x128xbf16>
    %47 = vector.shape_cast %46 : vector<1x128x128xbf16> to vector<128x128xbf16>
    %cst_48 = arith.constant dense<0.000000e+00> : vector<256x128xf32>
    %48 = tpu.matmul %45, %47, %cst_48 {dimension_numbers = #tpu.dot_dimension_numbers<[1], [0], [0], [1], [0, 0, 1, 1], [], []>} : vector<256x128xbf16>, vector<128x128xbf16>, vector<256x128xf32> -> vector<256x128xf32>
    %49 = arith.addf %42, %48 : vector<256x128xf32>
    %c0_49 = arith.constant 0 : index
    %c2_50 = arith.constant 2 : index
    %c1_51 = arith.constant 1 : index
    %c0_52 = arith.constant 0 : index
    %50 = vector.load %arg1[%c0_49, %c2_50, %c1_51, %c0_52] : memref<1x18x18x128xbf16, #tpu.memory_space<vmem>>, vector<1x16x16x128xbf16>
    %51 = vector.shape_cast %50 : vector<1x16x16x128xbf16> to vector<16x16x128xbf16>
    %52 = vector.shape_cast %51 : vector<16x16x128xbf16> to vector<256x128xbf16>
    %c7 = arith.constant 7 : index
    %c0_53 = arith.constant 0 : index
    %c0_54 = arith.constant 0 : index
    %53 = vector.load %arg2[%c7, %c0_53, %c0_54] : memref<9x128x128xbf16, #tpu.memory_space<vmem>>, vector<1x128x128xbf16>
    %54 = vector.shape_cast %53 : vector<1x128x128xbf16> to vector<128x128xbf16>
    %cst_55 = arith.constant dense<0.000000e+00> : vector<256x128xf32>
    %55 = tpu.matmul %52, %54, %cst_55 {dimension_numbers = #tpu.dot_dimension_numbers<[1], [0], [0], [1], [0, 0, 1, 1], [], []>} : vector<256x128xbf16>, vector<128x128xbf16>, vector<256x128xf32> -> vector<256x128xf32>
    %56 = arith.addf %49, %55 : vector<256x128xf32>
    %c0_56 = arith.constant 0 : index
    %c2_57 = arith.constant 2 : index
    %c2_58 = arith.constant 2 : index
    %c0_59 = arith.constant 0 : index
    %57 = vector.load %arg1[%c0_56, %c2_57, %c2_58, %c0_59] : memref<1x18x18x128xbf16, #tpu.memory_space<vmem>>, vector<1x16x16x128xbf16>
    %58 = vector.shape_cast %57 : vector<1x16x16x128xbf16> to vector<16x16x128xbf16>
    %59 = vector.shape_cast %58 : vector<16x16x128xbf16> to vector<256x128xbf16>
    %c8 = arith.constant 8 : index
    %c0_60 = arith.constant 0 : index
    %c0_61 = arith.constant 0 : index
    %60 = vector.load %arg2[%c8, %c0_60, %c0_61] : memref<9x128x128xbf16, #tpu.memory_space<vmem>>, vector<1x128x128xbf16>
    %61 = vector.shape_cast %60 : vector<1x128x128xbf16> to vector<128x128xbf16>
    %cst_62 = arith.constant dense<0.000000e+00> : vector<256x128xf32>
    %62 = tpu.matmul %59, %61, %cst_62 {dimension_numbers = #tpu.dot_dimension_numbers<[1], [0], [0], [1], [0, 0, 1, 1], [], []>} : vector<256x128xbf16>, vector<128x128xbf16>, vector<256x128xf32> -> vector<256x128xf32>
    %63 = arith.addf %56, %62 : vector<256x128xf32>
    %c0_63 = arith.constant 0 : index
    %c0_64 = arith.constant 0 : index
    %64 = vector.load %arg3[%c0_63, %c0_64] : memref<1x128xf32, #tpu.memory_space<vmem>>, vector<1x128xf32>
    %65 = vector.broadcast %64 : vector<1x128xf32> to vector<256x128xf32>
    %66 = arith.addf %63, %65 : vector<256x128xf32>
    %cst_65 = arith.constant 0.000000e+00 : f32
    %67 = vector.broadcast %cst_65 : f32 to vector<256x128xf32>
    %68 = arith.maximumf %66, %67 : vector<256x128xf32>
    %69 = arith.truncf %68 : vector<256x128xf32> to vector<256x128xbf16>
    %cst_66 = arith.constant 0.000000e+00 : bf16
    %70 = vector.broadcast %cst_66 : bf16 to vector<1x18x128xbf16>
    %c0_67 = arith.constant 0 : index
    %c0_68 = arith.constant 0 : index
    %c0_69 = arith.constant 0 : index
    %71 = vector.load %arg7[%c0_67, %c0_68, %c0_69] : memref<18x18x128xbf16, #tpu.memory_space<vmem>>, vector<1x18x128xbf16>
    tpu.vector_store %arg7[%c0_67, %c0_68, %c0_69], %70 {strides = array<i32>} : memref<18x18x128xbf16, #tpu.memory_space<vmem>>, vector<1x18x128xbf16>,
    %cst_70 = arith.constant 0.000000e+00 : bf16
    %72 = vector.broadcast %cst_70 : bf16 to vector<1x18x128xbf16>
    %c17 = arith.constant 17 : index
    %c0_71 = arith.constant 0 : index
    %c0_72 = arith.constant 0 : index
    %73 = vector.load %arg7[%c17, %c0_71, %c0_72] : memref<18x18x128xbf16, #tpu.memory_space<vmem>>, vector<1x18x128xbf16>
    tpu.vector_store %arg7[%c17, %c0_71, %c0_72], %72 {strides = array<i32>} : memref<18x18x128xbf16, #tpu.memory_space<vmem>>, vector<1x18x128xbf16>,
    %cst_73 = arith.constant 0.000000e+00 : bf16
    %74 = vector.broadcast %cst_73 : bf16 to vector<16x1x128xbf16>
    %c1_74 = arith.constant 1 : index
    %c0_75 = arith.constant 0 : index
    %c0_76 = arith.constant 0 : index
    %75 = vector.load %arg7[%c1_74, %c0_75, %c0_76] : memref<18x18x128xbf16, #tpu.memory_space<vmem>>, vector<16x1x128xbf16>
    tpu.vector_store %arg7[%c1_74, %c0_75, %c0_76], %74 {strides = array<i32>} : memref<18x18x128xbf16, #tpu.memory_space<vmem>>, vector<16x1x128xbf16>,
    %cst_77 = arith.constant 0.000000e+00 : bf16
    %76 = vector.broadcast %cst_77 : bf16 to vector<16x1x128xbf16>
    %c1_78 = arith.constant 1 : index
    %c17_79 = arith.constant 17 : index
    %c0_80 = arith.constant 0 : index
    %77 = vector.load %arg7[%c1_78, %c17_79, %c0_80] : memref<18x18x128xbf16, #tpu.memory_space<vmem>>, vector<16x1x128xbf16>
    tpu.vector_store %arg7[%c1_78, %c17_79, %c0_80], %76 {strides = array<i32>} : memref<18x18x128xbf16, #tpu.memory_space<vmem>>, vector<16x1x128xbf16>,
    %78 = vector.shape_cast %69 : vector<256x128xbf16> to vector<16x16x128xbf16>
    %c1_81 = arith.constant 1 : index
    %c1_82 = arith.constant 1 : index
    %c0_83 = arith.constant 0 : index
    %79 = vector.load %arg7[%c1_81, %c1_82, %c0_83] : memref<18x18x128xbf16, #tpu.memory_space<vmem>>, vector<16x16x128xbf16>
    tpu.vector_store %arg7[%c1_81, %c1_82, %c0_83], %78 {strides = array<i32>} : memref<18x18x128xbf16, #tpu.memory_space<vmem>>, vector<16x16x128xbf16>,
    %cst_84 = arith.constant 0.000000e+00 : f32
    %80 = vector.broadcast %cst_84 : f32 to vector<256x128xf32>
    %c0_85 = arith.constant 0 : index
    %c0_86 = arith.constant 0 : index
    %c0_87 = arith.constant 0 : index
    %81 = vector.load %arg7[%c0_85, %c0_86, %c0_87] : memref<18x18x128xbf16, #tpu.memory_space<vmem>>, vector<16x16x128xbf16>
    %82 = vector.shape_cast %81 : vector<16x16x128xbf16> to vector<256x128xbf16>
    %c0_88 = arith.constant 0 : index
    %c0_89 = arith.constant 0 : index
    %c0_90 = arith.constant 0 : index
    %83 = vector.load %arg4[%c0_88, %c0_89, %c0_90] : memref<9x128x128xbf16, #tpu.memory_space<vmem>>, vector<1x128x128xbf16>
    %84 = vector.shape_cast %83 : vector<1x128x128xbf16> to vector<128x128xbf16>
    %cst_91 = arith.constant dense<0.000000e+00> : vector<256x128xf32>
    %85 = tpu.matmul %82, %84, %cst_91 {dimension_numbers = #tpu.dot_dimension_numbers<[1], [0], [0], [1], [0, 0, 1, 1], [], []>} : vector<256x128xbf16>, vector<128x128xbf16>, vector<256x128xf32> -> vector<256x128xf32>
    %86 = arith.addf %80, %85 : vector<256x128xf32>
    %c0_92 = arith.constant 0 : index
    %c1_93 = arith.constant 1 : index
    %c0_94 = arith.constant 0 : index
    %87 = vector.load %arg7[%c0_92, %c1_93, %c0_94] : memref<18x18x128xbf16, #tpu.memory_space<vmem>>, vector<16x16x128xbf16>
    %88 = vector.shape_cast %87 : vector<16x16x128xbf16> to vector<256x128xbf16>
    %c1_95 = arith.constant 1 : index
    %c0_96 = arith.constant 0 : index
    %c0_97 = arith.constant 0 : index
    %89 = vector.load %arg4[%c1_95, %c0_96, %c0_97] : memref<9x128x128xbf16, #tpu.memory_space<vmem>>, vector<1x128x128xbf16>
    %90 = vector.shape_cast %89 : vector<1x128x128xbf16> to vector<128x128xbf16>
    %cst_98 = arith.constant dense<0.000000e+00> : vector<256x128xf32>
    %91 = tpu.matmul %88, %90, %cst_98 {dimension_numbers = #tpu.dot_dimension_numbers<[1], [0], [0], [1], [0, 0, 1, 1], [], []>} : vector<256x128xbf16>, vector<128x128xbf16>, vector<256x128xf32> -> vector<256x128xf32>
    %92 = arith.addf %86, %91 : vector<256x128xf32>
    %c0_99 = arith.constant 0 : index
    %c2_100 = arith.constant 2 : index
    %c0_101 = arith.constant 0 : index
    %93 = vector.load %arg7[%c0_99, %c2_100, %c0_101] : memref<18x18x128xbf16, #tpu.memory_space<vmem>>, vector<16x16x128xbf16>
    %94 = vector.shape_cast %93 : vector<16x16x128xbf16> to vector<256x128xbf16>
    %c2_102 = arith.constant 2 : index
    %c0_103 = arith.constant 0 : index
    %c0_104 = arith.constant 0 : index
    %95 = vector.load %arg4[%c2_102, %c0_103, %c0_104] : memref<9x128x128xbf16, #tpu.memory_space<vmem>>, vector<1x128x128xbf16>
    %96 = vector.shape_cast %95 : vector<1x128x128xbf16> to vector<128x128xbf16>
    %cst_105 = arith.constant dense<0.000000e+00> : vector<256x128xf32>
    %97 = tpu.matmul %94, %96, %cst_105 {dimension_numbers = #tpu.dot_dimension_numbers<[1], [0], [0], [1], [0, 0, 1, 1], [], []>} : vector<256x128xbf16>, vector<128x128xbf16>, vector<256x128xf32> -> vector<256x128xf32>
    %98 = arith.addf %92, %97 : vector<256x128xf32>
    %c1_106 = arith.constant 1 : index
    %c0_107 = arith.constant 0 : index
    %c0_108 = arith.constant 0 : index
    %99 = vector.load %arg7[%c1_106, %c0_107, %c0_108] : memref<18x18x128xbf16, #tpu.memory_space<vmem>>, vector<16x16x128xbf16>
    %100 = vector.shape_cast %99 : vector<16x16x128xbf16> to vector<256x128xbf16>
    %c3_109 = arith.constant 3 : index
    %c0_110 = arith.constant 0 : index
    %c0_111 = arith.constant 0 : index
    %101 = vector.load %arg4[%c3_109, %c0_110, %c0_111] : memref<9x128x128xbf16, #tpu.memory_space<vmem>>, vector<1x128x128xbf16>
    %102 = vector.shape_cast %101 : vector<1x128x128xbf16> to vector<128x128xbf16>
    %cst_112 = arith.constant dense<0.000000e+00> : vector<256x128xf32>
    %103 = tpu.matmul %100, %102, %cst_112 {dimension_numbers = #tpu.dot_dimension_numbers<[1], [0], [0], [1], [0, 0, 1, 1], [], []>} : vector<256x128xbf16>, vector<128x128xbf16>, vector<256x128xf32> -> vector<256x128xf32>
    %104 = arith.addf %98, %103 : vector<256x128xf32>
    %c1_113 = arith.constant 1 : index
    %c1_114 = arith.constant 1 : index
    %c0_115 = arith.constant 0 : index
    %105 = vector.load %arg7[%c1_113, %c1_114, %c0_115] : memref<18x18x128xbf16, #tpu.memory_space<vmem>>, vector<16x16x128xbf16>
    %106 = vector.shape_cast %105 : vector<16x16x128xbf16> to vector<256x128xbf16>
    %c4_116 = arith.constant 4 : index
    %c0_117 = arith.constant 0 : index
    %c0_118 = arith.constant 0 : index
    %107 = vector.load %arg4[%c4_116, %c0_117, %c0_118] : memref<9x128x128xbf16, #tpu.memory_space<vmem>>, vector<1x128x128xbf16>
    %108 = vector.shape_cast %107 : vector<1x128x128xbf16> to vector<128x128xbf16>
    %cst_119 = arith.constant dense<0.000000e+00> : vector<256x128xf32>
    %109 = tpu.matmul %106, %108, %cst_119 {dimension_numbers = #tpu.dot_dimension_numbers<[1], [0], [0], [1], [0, 0, 1, 1], [], []>} : vector<256x128xbf16>, vector<128x128xbf16>, vector<256x128xf32> -> vector<256x128xf32>
    %110 = arith.addf %104, %109 : vector<256x128xf32>
    %c1_120 = arith.constant 1 : index
    %c2_121 = arith.constant 2 : index
    %c0_122 = arith.constant 0 : index
    %111 = vector.load %arg7[%c1_120, %c2_121, %c0_122] : memref<18x18x128xbf16, #tpu.memory_space<vmem>>, vector<16x16x128xbf16>
    %112 = vector.shape_cast %111 : vector<16x16x128xbf16> to vector<256x128xbf16>
    %c5_123 = arith.constant 5 : index
    %c0_124 = arith.constant 0 : index
    %c0_125 = arith.constant 0 : index
    %113 = vector.load %arg4[%c5_123, %c0_124, %c0_125] : memref<9x128x128xbf16, #tpu.memory_space<vmem>>, vector<1x128x128xbf16>
    %114 = vector.shape_cast %113 : vector<1x128x128xbf16> to vector<128x128xbf16>
    %cst_126 = arith.constant dense<0.000000e+00> : vector<256x128xf32>
    %115 = tpu.matmul %112, %114, %cst_126 {dimension_numbers = #tpu.dot_dimension_numbers<[1], [0], [0], [1], [0, 0, 1, 1], [], []>} : vector<256x128xbf16>, vector<128x128xbf16>, vector<256x128xf32> -> vector<256x128xf32>
    %116 = arith.addf %110, %115 : vector<256x128xf32>
    %c2_127 = arith.constant 2 : index
    %c0_128 = arith.constant 0 : index
    %c0_129 = arith.constant 0 : index
    %117 = vector.load %arg7[%c2_127, %c0_128, %c0_129] : memref<18x18x128xbf16, #tpu.memory_space<vmem>>, vector<16x16x128xbf16>
    %118 = vector.shape_cast %117 : vector<16x16x128xbf16> to vector<256x128xbf16>
    %c6_130 = arith.constant 6 : index
    %c0_131 = arith.constant 0 : index
    %c0_132 = arith.constant 0 : index
    %119 = vector.load %arg4[%c6_130, %c0_131, %c0_132] : memref<9x128x128xbf16, #tpu.memory_space<vmem>>, vector<1x128x128xbf16>
    %120 = vector.shape_cast %119 : vector<1x128x128xbf16> to vector<128x128xbf16>
    %cst_133 = arith.constant dense<0.000000e+00> : vector<256x128xf32>
    %121 = tpu.matmul %118, %120, %cst_133 {dimension_numbers = #tpu.dot_dimension_numbers<[1], [0], [0], [1], [0, 0, 1, 1], [], []>} : vector<256x128xbf16>, vector<128x128xbf16>, vector<256x128xf32> -> vector<256x128xf32>
    %122 = arith.addf %116, %121 : vector<256x128xf32>
    %c2_134 = arith.constant 2 : index
    %c1_135 = arith.constant 1 : index
    %c0_136 = arith.constant 0 : index
    %123 = vector.load %arg7[%c2_134, %c1_135, %c0_136] : memref<18x18x128xbf16, #tpu.memory_space<vmem>>, vector<16x16x128xbf16>
    %124 = vector.shape_cast %123 : vector<16x16x128xbf16> to vector<256x128xbf16>
    %c7_137 = arith.constant 7 : index
    %c0_138 = arith.constant 0 : index
    %c0_139 = arith.constant 0 : index
    %125 = vector.load %arg4[%c7_137, %c0_138, %c0_139] : memref<9x128x128xbf16, #tpu.memory_space<vmem>>, vector<1x128x128xbf16>
    %126 = vector.shape_cast %125 : vector<1x128x128xbf16> to vector<128x128xbf16>
    %cst_140 = arith.constant dense<0.000000e+00> : vector<256x128xf32>
    %127 = tpu.matmul %124, %126, %cst_140 {dimension_numbers = #tpu.dot_dimension_numbers<[1], [0], [0], [1], [0, 0, 1, 1], [], []>} : vector<256x128xbf16>, vector<128x128xbf16>, vector<256x128xf32> -> vector<256x128xf32>
    %128 = arith.addf %122, %127 : vector<256x128xf32>
    %c2_141 = arith.constant 2 : index
    %c2_142 = arith.constant 2 : index
    %c0_143 = arith.constant 0 : index
    %129 = vector.load %arg7[%c2_141, %c2_142, %c0_143] : memref<18x18x128xbf16, #tpu.memory_space<vmem>>, vector<16x16x128xbf16>
    %130 = vector.shape_cast %129 : vector<16x16x128xbf16> to vector<256x128xbf16>
    %c8_144 = arith.constant 8 : index
    %c0_145 = arith.constant 0 : index
    %c0_146 = arith.constant 0 : index
    %131 = vector.load %arg4[%c8_144, %c0_145, %c0_146] : memref<9x128x128xbf16, #tpu.memory_space<vmem>>, vector<1x128x128xbf16>
    %132 = vector.shape_cast %131 : vector<1x128x128xbf16> to vector<128x128xbf16>
    %cst_147 = arith.constant dense<0.000000e+00> : vector<256x128xf32>
    %133 = tpu.matmul %130, %132, %cst_147 {dimension_numbers = #tpu.dot_dimension_numbers<[1], [0], [0], [1], [0, 0, 1, 1], [], []>} : vector<256x128xbf16>, vector<128x128xbf16>, vector<256x128xf32> -> vector<256x128xf32>
    %134 = arith.addf %128, %133 : vector<256x128xf32>
    %c0_148 = arith.constant 0 : index
    %c0_149 = arith.constant 0 : index
    %135 = vector.load %arg5[%c0_148, %c0_149] : memref<1x128xf32, #tpu.memory_space<vmem>>, vector<1x128xf32>
    %136 = vector.broadcast %135 : vector<1x128xf32> to vector<256x128xf32>
    %137 = arith.addf %134, %136 : vector<256x128xf32>
    %c0_150 = arith.constant 0 : index
    %c1_151 = arith.constant 1 : index
    %c1_152 = arith.constant 1 : index
    %c0_153 = arith.constant 0 : index
    %138 = vector.load %arg1[%c0_150, %c1_151, %c1_152, %c0_153] : memref<1x18x18x128xbf16, #tpu.memory_space<vmem>>, vector<1x16x16x128xbf16>
    %139 = vector.shape_cast %138 : vector<1x16x16x128xbf16> to vector<16x16x128xbf16>
    %140 = arith.extf %139 : vector<16x16x128xbf16> to vector<16x16x128xf32>
    %cst_154 = arith.constant 1.000000e+00 : f32
    %141 = vector.broadcast %cst_154 : f32 to vector<256x128xf32>
    %142 = arith.mulf %137, %141 : vector<256x128xf32>
    %143 = vector.shape_cast %140 : vector<16x16x128xf32> to vector<256x128xf32>
    %144 = arith.addf %142, %143 : vector<256x128xf32>
    %145 = vector.shape_cast %144 : vector<256x128xf32> to vector<16x16x128xf32>
    %c0_155 = arith.constant 0 : index
    %c0_156 = arith.constant 0 : index
    %c0_157 = arith.constant 0 : index
    %c0_158 = arith.constant 0 : index
    %146 = vector.load %arg6[%c0_155, %c0_156, %c0_157, %c0_158] : memref<1x16x16x128xf32, #tpu.memory_space<vmem>>, vector<1x16x16x128xf32>
    %147 = vector.shape_cast %146 : vector<1x16x16x128xf32> to vector<16x16x128xf32>
    %148 = vector.shape_cast %145 : vector<16x16x128xf32> to vector<1x16x16x128xf32>
    tpu.vector_store %arg6[%c0_155, %c0_156, %c0_157, %c0_158], %148 {strides = array<i32>} : memref<1x16x16x128xf32, #tpu.memory_space<vmem>>, vector<1x16x16x128xf32>,
    return
  }
  func.func @transform_0(%arg0: i32) -> (i32, i32, i32, i32) {
    %c0_i32 = arith.constant 0 : i32
    %c0_i32_0 = arith.constant 0 : i32
    %c0_i32_1 = arith.constant 0 : i32
    %c0_i32_2 = arith.constant 0 : i32
    return %arg0, %c0_i32, %c0_i32_0, %c0_i32_1 : i32, i32, i32, i32
  }
  func.func @transform_1(%arg0: i32) -> (i32, i32, i32) {
    %c0_i32 = arith.constant 0 : i32
    %c0_i32_0 = arith.constant 0 : i32
    %c0_i32_1 = arith.constant 0 : i32
    %c0_i32_2 = arith.constant 0 : i32
    return %c0_i32, %c0_i32_0, %c0_i32_1 : i32, i32, i32
  }
  func.func @transform_2(%arg0: i32) -> (i32, i32) {
    %c0_i32 = arith.constant 0 : i32
    %c0_i32_0 = arith.constant 0 : i32
    %c0_i32_1 = arith.constant 0 : i32
    return %c0_i32, %c0_i32_0 : i32, i32
  }
  func.func @transform_3(%arg0: i32) -> (i32, i32, i32) {
    %c0_i32 = arith.constant 0 : i32
    %c0_i32_0 = arith.constant 0 : i32
    %c0_i32_1 = arith.constant 0 : i32
    %c0_i32_2 = arith.constant 0 : i32
    return %c0_i32, %c0_i32_0, %c0_i32_1 : i32, i32, i32
  }
  func.func @transform_4(%arg0: i32) -> (i32, i32) {
    %c0_i32 = arith.constant 0 : i32
    %c0_i32_0 = arith.constant 0 : i32
    %c0_i32_1 = arith.constant 0 : i32
    return %c0_i32, %c0_i32_0 : i32, i32
  }
  func.func @transform_5(%arg0: i32) -> (i32, i32, i32, i32) {
    %c0_i32 = arith.constant 0 : i32
    %c0_i32_0 = arith.constant 0 : i32
    %c0_i32_1 = arith.constant 0 : i32
    %c0_i32_2 = arith.constant 0 : i32
    return %arg0, %c0_i32, %c0_i32_0, %c0_i32_1 : i32, i32, i32, i32
  }
}

</mosaic_0001>

<llo_original>
// kernel: tpu_custom_call.1
$region0: #{tpu_custom_call.1}
  #allocation0 [shape = 'u32[]', space=smem, size = 0x4, offset = 0x4, fixed_abs, tag = 'smem constant byte address 0x4 - core index']
  #allocation1 [shape = 'u32[144,128]{1,0:T(1,128)}', space=vmem, size = 0x12000, scoped, tag = 'internal scratch']
  #allocation2 [shape = 'bf16[18,18,128]{2,1,0:T(8,128)(2,1)}', space=vmem, size = 0x1b000, scoped, tag = 'scratch operand']
  %s0 = inlined_call_operand.vmem [shape: bf16[2,18,18,128], index: 0, kind: input, shape index: {}]
  %s1 = inlined_call_operand.vmem [shape: bf16[9,128,128], index: 1, kind: input, shape index: {}]
  %s2 = inlined_call_operand.vmem [shape: f32[1,128], index: 2, kind: input, shape index: {}]
  %s3 = inlined_call_operand.hbm [shape: bf16[9,128,128], index: 3, kind: input, shape index: {}]
  %s4 = inlined_call_operand.vmem [shape: f32[1,128], index: 4, kind: input, shape index: {}]
  %s5 = inlined_call_operand.hbm [shape: f32[2,16,16,128], index: 5, kind: output, shape index: {}]
  %s6 = sld [smem:[#allocation0]]
  $region57: #{tpu_custom_call.1} parent=0
    _
  %s8 = ssub.s32 1, %s6
  %s9 = scalar_select 0, %s8, %s6
  $region1: #{tpu_custom_call.1} parent=0
    #allocation3 [shape = 'u8[294912]{0}', space=vmem, size = 0x48000, scoped, tag = 'input window, operand 3, single buffered']
    #allocation4 [shape = 's32[2]{0}', space=sflag, size = 0x8, scoped, tag = 'scoped memory for tpu_custom_call.1']
    #allocation5 [shape = 's32[2]{0}', space=sflag, size = 0x8, scoped, tag = 'scoped memory for tpu_custom_call.1']
    #allocation6 [shape = 'u8[262144]{0}', space=vmem, size = 0x40000, scoped, tag = 'output window, operand 0']
    %10 = vsyncpa [#allocation4], 0
    %11 = vsyncpa [#allocation5], 0
    %s12 = scalar_lea.sflag [#allocation5], 1
    %13 = vsyncpa %s12, 0
    loop: start=0, step=1, limit=4
    $region2: #{tpu_custom_call.1} parent=1 // loop_pre_header
      _
    $region3: #{tpu_custom_call.1} parent=1 // loop_header
      %s15 = sphi 0, %s19
      %p16 = scmp.ge.s32.totalorder %s15, 4
      %s25 = sphi 0, %s27
      %s28 = sphi 0, %s25
      %s29 = sphi 0, %s28
      %s45 = sphi 0, %s29
      %s49 = sphi 0, %s49
      %s51 = sphi 0, %s49
      %s52 = sphi 0, %s51
      %s66 = sphi 0, %s52
      %s70 = sphi 0, %s70
      %s72 = sphi 0, %s70
      %s73 = sphi 0, %s72
      %s87 = sphi 0, %s73
      %s91 = sphi 0, %s91
      %s93 = sphi 0, %s91
      %s94 = sphi 0, %s93
      %s108 = sphi 0, %s94
      %s112 = sphi 0, %s112
      %s114 = sphi 0, %s112
      %s115 = sphi 0, %s114
      %s129 = sphi 0, %s115
      %s135 = sphi 0, %s137
      %s138 = sphi 0, %s135
      %s139 = sphi 0, %s138
      %s155 = sphi 0, %s139
    $region4: #{tpu_custom_call.1} parent=1 // loop_header_branch
      %18 = sbr.rel (%p16) target = $region8
    $region5: #{tpu_custom_call.1} parent=1 // loop_body
      %s20 = ssub.s32 %s15, 1
      %s21 = ssub.s32 %s15, 2
      %s22 = sadd.s32 %s15, 1
      %s23 = ssub.s32 %s15, %s22
      %p24 = scmp.eq.s32.totalorder %s23, 0
      %s26 = sadd.s32 %s25, 1
      %s27 = scalar_select %p24, %s25, %s26
      %p30 = pneg %p24
      %p31 = scmp.eq.s32.totalorder %s15, 1
      %p32 = por %p30, %p31
      %p33 = scmp.ne.s32.totalorder %s25, %s28
      %p34 = scmp.eq.s32.totalorder %s15, 0
      %p35 = por %p33, %p34
      %p36 = scmp.ne.s32.totalorder %s25, %s28
      %p37 = scmp.eq.s32.totalorder %s20, 1
      %p38 = por %p36, %p37
      %p39 = scmp.ne.s32.totalorder %s28, %s29
      %p40 = scmp.eq.s32.totalorder %s20, 0
      %p41 = por %p39, %p40
      %p42 = scmp.ne.s32.totalorder %s28, %s29
      %p43 = scmp.eq.s32.totalorder %s21, 1
      %p44 = por %p42, %p43
      %p46 = scmp.ne.s32.totalorder %s29, %s45
      %p47 = scmp.eq.s32.totalorder %s21, 0
      %p48 = por %p46, %p47
      %s50 = sadd.s32 %s49, 1
      %p53 = scmp.eq.s32.totalorder %s15, 1
      %p54 = scmp.ne.s32.totalorder %s49, %s51
      %p55 = scmp.eq.s32.totalorder %s15, 0
      %p56 = por %p54, %p55
      %p57 = scmp.ne.s32.totalorder %s49, %s51
      %p58 = scmp.eq.s32.totalorder %s20, 1
      %p59 = por %p57, %p58
      %p60 = scmp.ne.s32.totalorder %s51, %s52
      %p61 = scmp.eq.s32.totalorder %s20, 0
      %p62 = por %p60, %p61
      %p63 = scmp.ne.s32.totalorder %s51, %s52
      %p64 = scmp.eq.s32.totalorder %s21, 1
      %p65 = por %p63, %p64
      %p67 = scmp.ne.s32.totalorder %s52, %s66
      %p68 = scmp.eq.s32.totalorder %s21, 0
      %p69 = por %p67, %p68
      %s71 = sadd.s32 %s70, 1
      %p74 = scmp.eq.s32.totalorder %s15, 1
      %p75 = scmp.ne.s32.totalorder %s70, %s72
      %p76 = scmp.eq.s32.totalorder %s15, 0
      %p77 = por %p75, %p76
      %p78 = scmp.ne.s32.totalorder %s70, %s72
      %p79 = scmp.eq.s32.totalorder %s20, 1
      %p80 = por %p78, %p79
      %p81 = scmp.ne.s32.totalorder %s72, %s73
      %p82 = scmp.eq.s32.totalorder %s20, 0
      %p83 = por %p81, %p82
      %p84 = scmp.ne.s32.totalorder %s72, %s73
      %p85 = scmp.eq.s32.totalorder %s21, 1
      %p86 = por %p84, %p85
      %p88 = scmp.ne.s32.totalorder %s73, %s87
      %p89 = scmp.eq.s32.totalorder %s21, 0
      %p90 = por %p88, %p89
      %s92 = sadd.s32 %s91, 1
      %p95 = scmp.eq.s32.totalorder %s15, 1
      %p96 = scmp.ne.s32.totalorder %s91, %s93
      %p97 = scmp.eq.s32.totalorder %s15, 0
      %p98 = por %p96, %p97
      %p99 = scmp.ne.s32.totalorder %s91, %s93
      %p100 = scmp.eq.s32.totalorder %s20, 1
      %p101 = por %p99, %p100
      %p102 = scmp.ne.s32.totalorder %s93, %s94
      %p103 = scmp.eq.s32.totalorder %s20, 0
      %p104 = por %p102, %p103
      %p105 = scmp.ne.s32.totalorder %s93, %s94
      %p106 = scmp.eq.s32.totalorder %s21, 1
      %p107 = por %p105, %p106
      %p109 = scmp.ne.s32.totalorder %s94, %s108
      %p110 = scmp.eq.s32.totalorder %s21, 0
      %p111 = por %p109, %p110
      %s113 = sadd.s32 %s112, 1
      %p116 = scmp.eq.s32.totalorder %s15, 1
      %p117 = scmp.ne.s32.totalorder %s112, %s114
      %p118 = scmp.eq.s32.totalorder %s15, 0
      %p119 = por %p117, %p118
      %p120 = scmp.ne.s32.totalorder %s112, %s114
      %p121 = scmp.eq.s32.totalorder %s20, 1
      %p122 = por %p120, %p121
      %p123 = scmp.ne.s32.totalorder %s114, %s115
      %p124 = scmp.eq.s32.totalorder %s20, 0
      %p125 = por %p123, %p124
      %p126 = scmp.ne.s32.totalorder %s114, %s115
      %p127 = scmp.eq.s32.totalorder %s21, 1
      %p128 = por %p126, %p127
      %p130 = scmp.ne.s32.totalorder %s115, %s129
      %p131 = scmp.eq.s32.totalorder %s21, 0
      %p132 = por %p130, %p131
      %s133 = ssub.s32 %s15, %s22
      %p134 = scmp.eq.s32.totalorder %s133, 0
      %s136 = sadd.s32 %s135, 1
      %s137 = scalar_select %p134, %s135, %s136
      %p140 = pneg %p134
      %p141 = scmp.eq.s32.totalorder %s15, 1
      %p142 = por %p140, %p141
      %p143 = scmp.ne.s32.totalorder %s135, %s138
      %p144 = scmp.eq.s32.totalorder %s15, 0
      %p145 = por %p143, %p144
      %p146 = scmp.ne.s32.totalorder %s135, %s138
      %p147 = scmp.eq.s32.totalorder %s20, 1
      %p148 = por %p146, %p147
      %p149 = scmp.ne.s32.totalorder %s138, %s139
      %p150 = scmp.eq.s32.totalorder %s20, 0
      %p151 = por %p149, %p150
      %p152 = scmp.ne.s32.totalorder %s138, %s139
      %p153 = scmp.eq.s32.totalorder %s21, 1
      %p154 = por %p152, %p153
      %p156 = scmp.ne.s32.totalorder %s139, %s155
      %p157 = scmp.eq.s32.totalorder %s21, 0
      %p158 = por %p156, %p157
      %p159 = scmp.le.s32.totalorder 1, %s15
      %p160 = scmp.lt.s32.totalorder %s15, 3
      %p161 = pnand %p159, %p160
      %p162 = pneg %p161
      // Predicated region
      $region9: #{tpu_custom_call.1} parent=5 // pred_check
        _
      $region10: #{tpu_custom_call.1} parent=5 // pred_check_branch
        %164 = sbr.rel (%p161) target = $region12
      $region11: #{tpu_custom_call.1} parent=5 // pred_region
        %s165 = ssub.s32 %s15, 1
        // Predicated region
        $region13: #{tpu_custom_call.1} parent=11 // pred_check
          %p166 = pneg %p62
        $region14: #{tpu_custom_call.1} parent=11 // pred_check_branch
          %168 = sbr.rel (%p166) target = $region16
        $region15: #{tpu_custom_call.1} parent=11 // pred_region
          _
        $region16: #{tpu_custom_call.1} parent=11 // pred_fallthru
          _
        // Predicated region
        $region17: #{tpu_custom_call.1} parent=11 // pred_check
          %p169 = pneg %p83
        $region18: #{tpu_custom_call.1} parent=11 // pred_check_branch
          %171 = sbr.rel (%p169) target = $region20
        $region19: #{tpu_custom_call.1} parent=11 // pred_region
          _
        $region20: #{tpu_custom_call.1} parent=11 // pred_fallthru
          _
        // Predicated region
        $region21: #{tpu_custom_call.1} parent=11 // pred_check
          %p172 = pneg %p104
        $region22: #{tpu_custom_call.1} parent=11 // pred_check_branch
          %174 = sbr.rel (%p172) target = $region24
        $region23: #{tpu_custom_call.1} parent=11 // pred_region
          %s176 = ssub.s32 9216, 9216
          %177 = vsyncadd [#allocation4], %s176
          %s178 = sshll.u32 [#allocation3], 4
          %s179 = int_to_ptr.vmem [resolvable:$true] %s178
          %184 = dma.hbm_to_vmem [thread:$0]  %s3, 9216, %s179, [#allocation4], 64, 64, 4
        $region24: #{tpu_custom_call.1} parent=11 // pred_fallthru
          _
        // Predicated region
        $region25: #{tpu_custom_call.1} parent=11 // pred_check
          %p185 = pneg %p125
        $region26: #{tpu_custom_call.1} parent=11 // pred_check_branch
          %187 = sbr.rel (%p185) target = $region28
        $region27: #{tpu_custom_call.1} parent=11 // pred_region
          _
        $region28: #{tpu_custom_call.1} parent=11 // pred_fallthru
          _
      $region12: #{tpu_custom_call.1} parent=5 // pred_fallthru
        _
      %p188 = scmp.lt.s32.totalorder %s15, 2
      // Predicated region
      $region29: #{tpu_custom_call.1} parent=5 // pred_check
        %p189 = pneg %p188
      $region30: #{tpu_custom_call.1} parent=5 // pred_check_branch
        %191 = sbr.rel (%p189) target = $region32
      $region31: #{tpu_custom_call.1} parent=5 // pred_region
        // Predicated region
        $region33: #{tpu_custom_call.1} parent=31 // pred_check
          %p192 = pneg %p35
        $region34: #{tpu_custom_call.1} parent=31 // pred_check_branch
          %194 = sbr.rel (%p192) target = $region36
        $region35: #{tpu_custom_call.1} parent=31 // pred_region
          %p195 = scmp.lt.s32.totalorder %s15, 1
          %s196 = scalar_select %p195, %s15, 1
          %s197 = smul.addr %s196, 54
          %s198 = smul.addr %s197, 4
          %s199 = scalar_lea.vmem %s0, %s198
        $region36: #{tpu_custom_call.1} parent=31 // pred_fallthru
          _
      $region32: #{tpu_custom_call.1} parent=5 // pred_fallthru
        _
      %p200 = scmp.le.s32.totalorder 1, %s15
      %p201 = scmp.lt.s32.totalorder %s15, 3
      %p202 = pnand %p200, %p201
      %p203 = pneg %p202
      // Predicated region
      $region37: #{tpu_custom_call.1} parent=5 // pred_check
        _
      $region38: #{tpu_custom_call.1} parent=5 // pred_check_branch
        %205 = sbr.rel (%p202) target = $region40
      $region39: #{tpu_custom_call.1} parent=5 // pred_region
        %s206 = ssub.s32 %s15, 1
        // Predicated region
        $region41: #{tpu_custom_call.1} parent=39 // pred_check
          %p207 = pneg %p104
        $region42: #{tpu_custom_call.1} parent=39 // pred_check_branch
          %209 = sbr.rel (%p207) target = $region44
        $region43: #{tpu_custom_call.1} parent=39 // pred_region
          %210 = dma.done [#allocation4], 9216
        $region44: #{tpu_custom_call.1} parent=39 // pred_fallthru
          _
        %p211 = scmp.lt.s32.totalorder %s20, 1
        %s212 = scalar_select %p211, %s20, 1
        %s213 = smul.addr %s212, 54
        %s214 = smul.addr %s213, 4
        %s215 = scalar_lea.vmem %s0, %s214
        %p216 = pneg %p41
        %p217 = pneg %p38
        %p218 = pneg %p62
        %p219 = pneg %p59
        %p220 = pneg %p83
        %p221 = pneg %p80
        %p222 = pneg %p104
        %p223 = pneg %p101
        %p224 = pneg %p125
        %p225 = pneg %p122
        %p226 = pneg %p151
        %p227 = pneg %p148
        %s228 = sand.u32 %s138, 1
        %s229 = scalar_lea.sflag [#allocation5], %s228
        %s230 = sand.u32 %s138, 1
        %s231 = smul.addr %s230, 256
        %s232 = scalar_lea.vmem [#allocation6], %s231
        %p233 = scmp.lt.s32.totalorder %s20, 1
        %s234 = scalar_select %p233, %s20, 1
        %s235 = smul.addr %s234, 54
        %s236 = smul.addr %s235, 4
        %s237 = scalar_lea.vmem %s0, %s236
        %v239 = vld [vmem:[%s237] sm:$0xf]
        %v240 = vld [vmem:[%s237 + $0x4] sm:$0xf]
        %v241 = vld [vmem:[%s237 + $0xc] sm:$0xf]
        %v242 = vld [vmem:[%s237 + $0x10] sm:$0xf]
        %v243 = vld [vmem:[%s237 + $0x18] sm:$0xf]
        %v244 = vld [vmem:[%s237 + $0x1c] sm:$0xf]
        %v245 = vld [vmem:[%s237 + $0x24] sm:$0xf]
        %v246 = vld [vmem:[%s237 + $0x28] sm:$0xf]
        %v247 = vld [vmem:[%s237 + $0x30] sm:$0xf]
        %v248 = vld [vmem:[%s237 + $0x34] sm:$0xf]
        %v249 = vld [vmem:[%s237 + $0x3c] sm:$0xf]
        %v250 = vld [vmem:[%s237 + $0x40] sm:$0xf]
        %v251 = vld [vmem:[%s237 + $0x48] sm:$0xf]
        %v252 = vld [vmem:[%s237 + $0x4c] sm:$0xf]
        %v253 = vld [vmem:[%s237 + $0x54] sm:$0xf]
        %v254 = vld [vmem:[%s237 + $0x58] sm:$0xf]
        %v255 = vld [vmem:[%s237 + $0x60] sm:$0xf]
        %v256 = vld [vmem:[%s237 + $0x64] sm:$0xf]
        %v257 = vld [vmem:[%s237 + $0x6c] sm:$0xf]
        %v258 = vld [vmem:[%s237 + $0x70] sm:$0xf]
        %v259 = vld [vmem:[%s237 + $0x78] sm:$0xf]
        %v260 = vld [vmem:[%s237 + $0x7c] sm:$0xf]
        %v261 = vld [vmem:[%s237 + $0x84] sm:$0xf]
        %v262 = vld [vmem:[%s237 + $0x88] sm:$0xf]
        %v263 = vld [vmem:[%s237 + $0x90] sm:$0xf]
        %v264 = vld [vmem:[%s237 + $0x94] sm:$0xf]
        %v265 = vld [vmem:[%s237 + $0x9c] sm:$0xf]
        %v266 = vld [vmem:[%s237 + $0xa0] sm:$0xf]
        %v267 = vld [vmem:[%s237 + $0xa8] sm:$0xf]
        %v268 = vld [vmem:[%s237 + $0xac] sm:$0xf]
        %v269 = vld [vmem:[%s237 + $0xb4] sm:$0xf]
        %v270 = vld [vmem:[%s237 + $0xb8] sm:$0xf]
        %v271 = vld [vmem:[%s1] sm:$0xf]
        %v272 = vld [vmem:[%s1 + $0x4] sm:$0xf]
        %v273 = vld [vmem:[%s1 + $0x8] sm:$0xf]
        %v274 = vld [vmem:[%s1 + $0xc] sm:$0xf]
        %v275 = vld [vmem:[%s1 + $0x10] sm:$0xf]
        %v276 = vld [vmem:[%s1 + $0x14] sm:$0xf]
        %v277 = vld [vmem:[%s1 + $0x18] sm:$0xf]
        %v278 = vld [vmem:[%s1 + $0x1c] sm:$0xf]
        %v279 = vld [vmem:[%s1 + $0x20] sm:$0xf]
        %v280 = vld [vmem:[%s1 + $0x24] sm:$0xf]
        %v281 = vld [vmem:[%s1 + $0x28] sm:$0xf]
        %v282 = vld [vmem:[%s1 + $0x2c] sm:$0xf]
        %v283 = vld [vmem:[%s1 + $0x30] sm:$0xf]
        %v284 = vld [vmem:[%s1 + $0x34] sm:$0xf]
        %v285 = vld [vmem:[%s1 + $0x38] sm:$0xf]
        %v286 = vld [vmem:[%s1 + $0x3c] sm:$0xf]
        %v287 = vld [vmem:[%s237 + $0x8] sm:$0x1]
        %v288 = vld [vmem:[%s237 + $0x14] sm:$0x1]
        %v289 = vld [vmem:[%s237 + $0x20] sm:$0x1]
        %v290 = vld [vmem:[%s237 + $0x2c] sm:$0x1]
        %v291 = vld [vmem:[%s237 + $0x38] sm:$0x1]
        %v292 = vld [vmem:[%s237 + $0x44] sm:$0x1]
        %v293 = vld [vmem:[%s237 + $0x50] sm:$0x1]
        %v294 = vld [vmem:[%s237 + $0x5c] sm:$0x1]
        %v295 = vld [vmem:[%s237 + $0x68] sm:$0x1]
        %v296 = vld [vmem:[%s237 + $0x74] sm:$0x1]
        %v297 = vld [vmem:[%s237 + $0x80] sm:$0x1]
        %v298 = vld [vmem:[%s237 + $0x8c] sm:$0x1]
        %v299 = vld [vmem:[%s237 + $0x98] sm:$0x1]
        %v300 = vld [vmem:[%s237 + $0xa4] sm:$0x1]
        %v301 = vld [vmem:[%s237 + $0xb0] sm:$0x1]
        %v302 = vld [vmem:[%s237 + $0xbc] sm:$0x1]
        %vm303 = vsmask.f32 3328
        %vm304 = vsmask.f32 7440
        %vm305 = vmor %vm303, %vm304
        %v307 = vshrl.u32 %v239, 16
        %v309 = vrot.slane %v307, 4
        %v310 = vshll.u32 %v239, 16
        %v312 = vrot.slane %v310, 5
        %v313 = vor.u32 %v309, %v312
        %v314 = vrot.slane %v313, 4
        %v316 = vshll.u32 %v240, 16
        %v318 = vrot.slane %v316, 5
        %v319 = vsel %vm305, %v314, %v318
        %v320 = vshrl.u32 %v240, 16
        %v322 = vrot.slane %v320, 4
        %v323 = vor.u32 %v322, %v318
        %v324 = vrot.slane %v323, 4
        %v326 = vshll.u32 %v287, 16
        %v328 = vrot.slane %v326, 5
        %v329 = vsel %vm305, %v324, %v328
        %v331 = vshrl.u32 %v241, 16
        %v333 = vrot.slane %v331, 4
        %v334 = vshll.u32 %v241, 16
        %v336 = vrot.slane %v334, 5
        %v337 = vor.u32 %v333, %v336
        %v338 = vrot.slane %v337, 4
        %v340 = vshll.u32 %v242, 16
        %v342 = vrot.slane %v340, 5
        %v343 = vsel %vm305, %v338, %v342
        %v344 = vshrl.u32 %v242, 16
        %v346 = vrot.slane %v344, 4
        %v347 = vor.u32 %v346, %v342
        %v348 = vrot.slane %v347, 4
        %v350 = vshll.u32 %v288, 16
        %v352 = vrot.slane %v350, 5
        %v353 = vsel %vm305, %v348, %v352
        %v355 = vshrl.u32 %v243, 16
        %v357 = vrot.slane %v355, 4
        %v358 = vshll.u32 %v243, 16
        %v360 = vrot.slane %v358, 5
        %v361 = vor.u32 %v357, %v360
        %v362 = vrot.slane %v361, 4
        %v364 = vshll.u32 %v244, 16
        %v366 = vrot.slane %v364, 5
        %v367 = vsel %vm305, %v362, %v366
        %v368 = vshrl.u32 %v244, 16
        %v370 = vrot.slane %v368, 4
        %v371 = vor.u32 %v370, %v366
        %v372 = vrot.slane %v371, 4
        %v374 = vshll.u32 %v289, 16
        %v376 = vrot.slane %v374, 5
        %v377 = vsel %vm305, %v372, %v376
        %v379 = vshrl.u32 %v245, 16
        %v381 = vrot.slane %v379, 4
        %v382 = vshll.u32 %v245, 16
        %v384 = vrot.slane %v382, 5
        %v385 = vor.u32 %v381, %v384
        %v386 = vrot.slane %v385, 4
        %v388 = vshll.u32 %v246, 16
        %v390 = vrot.slane %v388, 5
        %v391 = vsel %vm305, %v386, %v390
        %v392 = vshrl.u32 %v246, 16
        %v394 = vrot.slane %v392, 4
        %v395 = vor.u32 %v394, %v390
        %v396 = vrot.slane %v395, 4
        %v398 = vshll.u32 %v290, 16
        %v400 = vrot.slane %v398, 5
        %v401 = vsel %vm305, %v396, %v400
        %v403 = vshrl.u32 %v247, 16
        %v405 = vrot.slane %v403, 4
        %v406 = vshll.u32 %v247, 16
        %v408 = vrot.slane %v406, 5
        %v409 = vor.u32 %v405, %v408
        %v410 = vrot.slane %v409, 4
        %v412 = vshll.u32 %v248, 16
        %v414 = vrot.slane %v412, 5
        %v415 = vsel %vm305, %v410, %v414
        %v416 = vshrl.u32 %v248, 16
        %v418 = vrot.slane %v416, 4
        %v419 = vor.u32 %v418, %v414
        %v420 = vrot.slane %v419, 4
        %v422 = vshll.u32 %v291, 16
        %v424 = vrot.slane %v422, 5
        %v425 = vsel %vm305, %v420, %v424
        %v427 = vshrl.u32 %v249, 16
        %v429 = vrot.slane %v427, 4
        %v430 = vshll.u32 %v249, 16
        %v432 = vrot.slane %v430, 5
        %v433 = vor.u32 %v429, %v432
        %v434 = vrot.slane %v433, 4
        %v436 = vshll.u32 %v250, 16
        %v438 = vrot.slane %v436, 5
        %v439 = vsel %vm305, %v434, %v438
        %v440 = vshrl.u32 %v250, 16
        %v442 = vrot.slane %v440, 4
        %v443 = vor.u32 %v442, %v438
        %v444 = vrot.slane %v443, 4
        %v446 = vshll.u32 %v292, 16
        %v448 = vrot.slane %v446, 5
        %v449 = vsel %vm305, %v444, %v448
        %v451 = vshrl.u32 %v251, 16
        %v453 = vrot.slane %v451, 4
        %v454 = vshll.u32 %v251, 16
        %v456 = vrot.slane %v454, 5
        %v457 = vor.u32 %v453, %v456
        %v458 = vrot.slane %v457, 4
        %v460 = vshll.u32 %v252, 16
        %v462 = vrot.slane %v460, 5
        %v463 = vsel %vm305, %v458, %v462
        %v464 = vshrl.u32 %v252, 16
        %v466 = vrot.slane %v464, 4
        %v467 = vor.u32 %v466, %v462
        %v468 = vrot.slane %v467, 4
        %v470 = vshll.u32 %v293, 16
        %v472 = vrot.slane %v470, 5
        %v473 = vsel %vm305, %v468, %v472
        %v475 = vshrl.u32 %v253, 16
        %v477 = vrot.slane %v475, 4
        %v478 = vshll.u32 %v253, 16
        %v480 = vrot.slane %v478, 5
        %v481 = vor.u32 %v477, %v480
        %v482 = vrot.slane %v481, 4
        %v484 = vshll.u32 %v254, 16
        %v486 = vrot.slane %v484, 5
        %v487 = vsel %vm305, %v482, %v486
        %v488 = vshrl.u32 %v254, 16
        %v490 = vrot.slane %v488, 4
        %v491 = vor.u32 %v490, %v486
        %v492 = vrot.slane %v491, 4
        %v494 = vshll.u32 %v294, 16
        %v496 = vrot.slane %v494, 5
        %v497 = vsel %vm305, %v492, %v496
        %v499 = vshrl.u32 %v255, 16
        %v501 = vrot.slane %v499, 4
        %v502 = vshll.u32 %v255, 16
        %v504 = vrot.slane %v502, 5
        %v505 = vor.u32 %v501, %v504
        %v506 = vrot.slane %v505, 4
        %v508 = vshll.u32 %v256, 16
        %v510 = vrot.slane %v508, 5
        %v511 = vsel %vm305, %v506, %v510
        %v512 = vshrl.u32 %v256, 16
        %v514 = vrot.slane %v512, 4
        %v515 = vor.u32 %v514, %v510
        %v516 = vrot.slane %v515, 4
        %v518 = vshll.u32 %v295, 16
        %v520 = vrot.slane %v518, 5
        %v521 = vsel %vm305, %v516, %v520
        %v523 = vshrl.u32 %v257, 16
        %v525 = vrot.slane %v523, 4
        %v526 = vshll.u32 %v257, 16
        %v528 = vrot.slane %v526, 5
        %v529 = vor.u32 %v525, %v528
        %v530 = vrot.slane %v529, 4
        %v532 = vshll.u32 %v258, 16
        %v534 = vrot.slane %v532, 5
        %v535 = vsel %vm305, %v530, %v534
        %v536 = vshrl.u32 %v258, 16
        %v538 = vrot.slane %v536, 4
        %v539 = vor.u32 %v538, %v534
        %v540 = vrot.slane %v539, 4
        %v542 = vshll.u32 %v296, 16
        %v544 = vrot.slane %v542, 5
        %v545 = vsel %vm305, %v540, %v544
        %v547 = vshrl.u32 %v259, 16
        %v549 = vrot.slane %v547, 4
        %v550 = vshll.u32 %v259, 16
        %v552 = vrot.slane %v550, 5
        %v553 = vor.u32 %v549, %v552
        %v554 = vrot.slane %v553, 4
        %v556 = vshll.u32 %v260, 16
        %v558 = vrot.slane %v556, 5
        %v559 = vsel %vm305, %v554, %v558
        %v560 = vshrl.u32 %v260, 16
        %v562 = vrot.slane %v560, 4
        %v563 = vor.u32 %v562, %v558
        %v564 = vrot.slane %v563, 4
        %v566 = vshll.u32 %v297, 16
        %v568 = vrot.slane %v566, 5
        %v569 = vsel %vm305, %v564, %v568
        %v571 = vshrl.u32 %v261, 16
        %v573 = vrot.slane %v571, 4
        %v574 = vshll.u32 %v261, 16
        %v576 = vrot.slane %v574, 5
        %v577 = vor.u32 %v573, %v576
        %v578 = vrot.slane %v577, 4
        %v580 = vshll.u32 %v262, 16
        %v582 = vrot.slane %v580, 5
        %v583 = vsel %vm305, %v578, %v582
        %v584 = vshrl.u32 %v262, 16
        %v586 = vrot.slane %v584, 4
        %v587 = vor.u32 %v586, %v582
        %v588 = vrot.slane %v587, 4
        %v590 = vshll.u32 %v298, 16
        %v592 = vrot.slane %v590, 5
        %v593 = vsel %vm305, %v588, %v592
        %v595 = vshrl.u32 %v263, 16
        %v597 = vrot.slane %v595, 4
        %v598 = vshll.u32 %v263, 16
        %v600 = vrot.slane %v598, 5
        %v601 = vor.u32 %v597, %v600
        %v602 = vrot.slane %v601, 4
        %v604 = vshll.u32 %v264, 16
        %v606 = vrot.slane %v604, 5
        %v607 = vsel %vm305, %v602, %v606
        %v608 = vshrl.u32 %v264, 16
        %v610 = vrot.slane %v608, 4
        %v611 = vor.u32 %v610, %v606
        %v612 = vrot.slane %v611, 4
        %v614 = vshll.u32 %v299, 16
        %v616 = vrot.slane %v614, 5
        %v617 = vsel %vm305, %v612, %v616
        %v619 = vshrl.u32 %v265, 16
        %v621 = vrot.slane %v619, 4
        %v622 = vshll.u32 %v265, 16
        %v624 = vrot.slane %v622, 5
        %v625 = vor.u32 %v621, %v624
        %v626 = vrot.slane %v625, 4
        %v628 = vshll.u32 %v266, 16
        %v630 = vrot.slane %v628, 5
        %v631 = vsel %vm305, %v626, %v630
        %v632 = vshrl.u32 %v266, 16
        %v634 = vrot.slane %v632, 4
        %v635 = vor.u32 %v634, %v630
        %v636 = vrot.slane %v635, 4
        %v638 = vshll.u32 %v300, 16
        %v640 = vrot.slane %v638, 5
        %v641 = vsel %vm305, %v636, %v640
        %v643 = vshrl.u32 %v267, 16
        %v645 = vrot.slane %v643, 4
        %v646 = vshll.u32 %v267, 16
        %v648 = vrot.slane %v646, 5
        %v649 = vor.u32 %v645, %v648
        %v650 = vrot.slane %v649, 4
        %v652 = vshll.u32 %v268, 16
        %v654 = vrot.slane %v652, 5
        %v655 = vsel %vm305, %v650, %v654
        %v656 = vshrl.u32 %v268, 16
        %v658 = vrot.slane %v656, 4
        %v659 = vor.u32 %v658, %v654
        %v660 = vrot.slane %v659, 4
        %v662 = vshll.u32 %v301, 16
        %v664 = vrot.slane %v662, 5
        %v665 = vsel %vm305, %v660, %v664
        %v667 = vshrl.u32 %v269, 16
        %v669 = vrot.slane %v667, 4
        %v670 = vshll.u32 %v269, 16
        %v672 = vrot.slane %v670, 5
        %v673 = vor.u32 %v669, %v672
        %v674 = vrot.slane %v673, 4
        %v676 = vshll.u32 %v270, 16
        %v678 = vrot.slane %v676, 5
        %v679 = vsel %vm305, %v674, %v678
        %v680 = vshrl.u32 %v270, 16
        %v682 = vrot.slane %v680, 4
        %v683 = vor.u32 %v682, %v678
        %v684 = vrot.slane %v683, 4
        %v686 = vshll.u32 %v302, 16
        %v688 = vrot.slane %v686, 5
        %v689 = vsel %vm305, %v684, %v688
        %s690 = scalar_lea.vmem %s1, 64
        %v691 = vld [vmem:[%s690] sm:$0xf]
        %v692 = vld [vmem:[%s690 + $0x4] sm:$0xf]
        %v693 = vld [vmem:[%s690 + $0x8] sm:$0xf]
        %v694 = vld [vmem:[%s690 + $0xc] sm:$0xf]
        %v695 = vld [vmem:[%s690 + $0x10] sm:$0xf]
        %v696 = vld [vmem:[%s690 + $0x14] sm:$0xf]
        %v697 = vld [vmem:[%s690 + $0x18] sm:$0xf]
        %v698 = vld [vmem:[%s690 + $0x1c] sm:$0xf]
        %v699 = vld [vmem:[%s690 + $0x20] sm:$0xf]
        %v700 = vld [vmem:[%s690 + $0x24] sm:$0xf]
        %v701 = vld [vmem:[%s690 + $0x28] sm:$0xf]
        %v702 = vld [vmem:[%s690 + $0x2c] sm:$0xf]
        %v703 = vld [vmem:[%s690 + $0x30] sm:$0xf]
        %v704 = vld [vmem:[%s690 + $0x34] sm:$0xf]
        %v705 = vld [vmem:[%s690 + $0x38] sm:$0xf]
        %v706 = vld [vmem:[%s690 + $0x3c] sm:$0xf]
        %v707 = vunpack.c.l.b16 %v319
        %v708 = vunpack.c.l.b16 %v329
        %v709 = vunpack.c.l.b16 %v343
        %v710 = vunpack.c.l.b16 %v353
        %v711 = vunpack.c.l.b16 %v367
        %v712 = vunpack.c.l.b16 %v377
        %v713 = vunpack.c.l.b16 %v391
        %v714 = vunpack.c.l.b16 %v401
        %v715 = vunpack.c.l.b16 %v415
        %v716 = vunpack.c.l.b16 %v425
        %v717 = vunpack.c.l.b16 %v439
        %v718 = vunpack.c.l.b16 %v449
        %v719 = vunpack.c.l.b16 %v463
        %v720 = vunpack.c.l.b16 %v473
        %v721 = vunpack.c.l.b16 %v487
        %v722 = vunpack.c.l.b16 %v497
        %v723 = vunpack.c.l.b16 %v511
        %v724 = vunpack.c.l.b16 %v521
        %v725 = vunpack.c.l.b16 %v535
        %v726 = vunpack.c.l.b16 %v545
        %v727 = vunpack.c.l.b16 %v559
        %v728 = vunpack.c.l.b16 %v569
        %v729 = vunpack.c.l.b16 %v583
        %v730 = vunpack.c.l.b16 %v593
        %v731 = vunpack.c.l.b16 %v607
        %v732 = vunpack.c.l.b16 %v617
        %v733 = vunpack.c.l.b16 %v631
        %v734 = vunpack.c.l.b16 %v641
        %v735 = vunpack.c.l.b16 %v655
        %v736 = vunpack.c.l.b16 %v665
        %v737 = vunpack.c.l.b16 %v679
        %v738 = vunpack.c.l.b16 %v689
        %v739 = vpack.c.b16 %v708, %v707
        %v740 = vpack.c.b16 %v710, %v709
        %v741 = vpack.c.b16 %v712, %v711
        %v742 = vpack.c.b16 %v714, %v713
        %v743 = vpack.c.b16 %v716, %v715
        %v744 = vpack.c.b16 %v718, %v717
        %v745 = vpack.c.b16 %v720, %v719
        %v746 = vpack.c.b16 %v722, %v721
        %v747 = vpack.c.b16 %v724, %v723
        %v748 = vpack.c.b16 %v726, %v725
        %v749 = vpack.c.b16 %v728, %v727
        %v750 = vpack.c.b16 %v730, %v729
        %v751 = vpack.c.b16 %v732, %v731
        %v752 = vpack.c.b16 %v734, %v733
        %v753 = vpack.c.b16 %v736, %v735
        %v754 = vpack.c.b16 %v738, %v737
        %v787 = vunpack.c.l.b16 %v691
        %v788 = vunpack.c.l.b16 %v692
        %v789 = vunpack.c.l.b16 %v693
        %v790 = vunpack.c.l.b16 %v694
        %v791 = vunpack.c.l.b16 %v695
        %v792 = vunpack.c.l.b16 %v696
        %v793 = vunpack.c.l.b16 %v697
        %v794 = vunpack.c.l.b16 %v698
        %v795 = vunpack.c.l.b16 %v699
        %v796 = vunpack.c.l.b16 %v700
        %v797 = vunpack.c.l.b16 %v701
        %v798 = vunpack.c.l.b16 %v702
        %v799 = vunpack.c.l.b16 %v703
        %v800 = vunpack.c.l.b16 %v704
        %v801 = vunpack.c.l.b16 %v705
        %v802 = vunpack.c.l.b16 %v706
        %v803 = vpack.c.b16 %v788, %v787
        %v804 = vpack.c.b16 %v790, %v789
        %v805 = vpack.c.b16 %v792, %v791
        %v806 = vpack.c.b16 %v794, %v793
        %v807 = vpack.c.b16 %v796, %v795
        %v808 = vpack.c.b16 %v798, %v797
        %v809 = vpack.c.b16 %v800, %v799
        %v810 = vpack.c.b16 %v802, %v801
        %819 = vmatprep.subr.bf16.mxu0 0
        %820 = vmatpush1.bf16.msra.mxu0 %v810
        %821 = vmatprep.subr.bf16.mxu0 0
        %822 = vmatpush1.bf16.msra.mxu0 %v809
        %823 = vmatprep.subr.bf16.mxu0 0
        %824 = vmatpush1.bf16.msra.mxu0 %v808
        %825 = vmatprep.subr.bf16.mxu0 0
        %826 = vmatpush1.bf16.msra.mxu0 %v807
        %827 = vmatprep.subr.bf16.mxu0 0
        %828 = vmatpush1.bf16.msra.mxu0 %v806
        %829 = vmatprep.subr.bf16.mxu0 0
        %830 = vmatpush1.bf16.msra.mxu0 %v805
        %831 = vmatprep.subr.bf16.mxu0 0
        %832 = vmatpush1.bf16.msra.mxu0 %v804
        %833 = vmatprep.subr.bf16.mxu0 0
        %834 = vmatpush1.bf16.msra.mxu0 %v803
        %835 = vmatprep.subr.bf16.mxu0 0
        %836 = vmatpush2.bf16.msra.mxu0 0
        %837 = vmatprep.subr.bf16.mxu0 0
        %838 = vmatpush2.bf16.msra.mxu0 0
        %839 = vmatprep.subr.bf16.mxu0 0
        %840 = vmatpush2.bf16.msra.mxu0 0
        %841 = vmatprep.subr.bf16.mxu0 0
        %842 = vmatpush2.bf16.msra.mxu0 0
        %843 = vmatprep.subr.bf16.mxu0 0
        %844 = vmatpush2.bf16.msra.mxu0 0
        %845 = vmatprep.subr.bf16.mxu0 0
        %846 = vmatpush2.bf16.msra.mxu0 0
        %847 = vmatprep.subr.bf16.mxu0 0
        %848 = vmatpush2.bf16.msra.mxu0 0
        %849 = vmatprep.subr.bf16.mxu0 0
        %850 = vmatpush2.bf16.msra.mxu0 0
        %851 = vmatprep.mubr.bf16.mxu0 0
        %852 = vmatmul.mubr.bf16.gmra.mxu0 %v739
        %v853 = vpop.f32.mrf.mxu0
        %v854 = vadd.f32 0.0, %v853
        %v855 = vpop.f32.mrf.mxu0
        %v856 = vpop.f32.mrf.mxu0
        %v857 = vadd.f32 0.0, %v856
        %v858 = vpop.f32.mrf.mxu0
        %859 = vmatprep.mubr.bf16.mxu0 0
        %860 = vmatmul.mubr.bf16.gmra.mxu0 %v740
        %v861 = vpop.f32.mrf.mxu0
        %v862 = vadd.f32 0.0, %v861
        %v863 = vpop.f32.mrf.mxu0
        %v864 = vpop.f32.mrf.mxu0
        %v865 = vadd.f32 0.0, %v864
        %v866 = vpop.f32.mrf.mxu0
        %867 = vmatprep.mubr.bf16.mxu0 0
        %868 = vmatmul.mubr.bf16.gmra.mxu0 %v741
        %v869 = vpop.f32.mrf.mxu0
        %v870 = vadd.f32 0.0, %v869
        %v871 = vpop.f32.mrf.mxu0
        %v872 = vpop.f32.mrf.mxu0
        %v873 = vadd.f32 0.0, %v872
        %v874 = vpop.f32.mrf.mxu0
        %875 = vmatprep.mubr.bf16.mxu0 0
        %876 = vmatmul.mubr.bf16.gmra.mxu0 %v742
        %v877 = vpop.f32.mrf.mxu0
        %v878 = vadd.f32 0.0, %v877
        %v879 = vpop.f32.mrf.mxu0
        %v880 = vpop.f32.mrf.mxu0
        %v881 = vadd.f32 0.0, %v880
        %v882 = vpop.f32.mrf.mxu0
        %883 = vmatprep.mubr.bf16.mxu0 0
        %884 = vmatmul.mubr.bf16.gmra.mxu0 %v743
        %v885 = vpop.f32.mrf.mxu0
        %v886 = vadd.f32 0.0, %v885
        %v887 = vpop.f32.mrf.mxu0
        %v888 = vpop.f32.mrf.mxu0
        %v889 = vadd.f32 0.0, %v888
        %v890 = vpop.f32.mrf.mxu0
        %891 = vmatprep.mubr.bf16.mxu0 0
        %892 = vmatmul.mubr.bf16.gmra.mxu0 %v744
        %v893 = vpop.f32.mrf.mxu0
        %v894 = vadd.f32 0.0, %v893
        %v895 = vpop.f32.mrf.mxu0
        %v896 = vpop.f32.mrf.mxu0
        %v897 = vadd.f32 0.0, %v896
        %v898 = vpop.f32.mrf.mxu0
        %899 = vmatprep.mubr.bf16.mxu0 0
        %900 = vmatmul.mubr.bf16.gmra.mxu0 %v745
        %v901 = vpop.f32.mrf.mxu0
        %v902 = vadd.f32 0.0, %v901
        %v903 = vpop.f32.mrf.mxu0
        %v904 = vpop.f32.mrf.mxu0
        %v905 = vadd.f32 0.0, %v904
        %v906 = vpop.f32.mrf.mxu0
        %907 = vmatprep.mubr.bf16.mxu0 0
        %908 = vmatmul.mubr.bf16.gmra.mxu0 %v746
        %v909 = vpop.f32.mrf.mxu0
        %v910 = vadd.f32 0.0, %v909
        %v911 = vpop.f32.mrf.mxu0
        %v912 = vpop.f32.mrf.mxu0
        %v913 = vadd.f32 0.0, %v912
        %v914 = vpop.f32.mrf.mxu0
        %915 = vmatprep.mubr.bf16.mxu0 0
        %916 = vmatmul.mubr.bf16.gmra.mxu0 %v747
        %v917 = vpop.f32.mrf.mxu0
        %v918 = vadd.f32 0.0, %v917
        %v919 = vpop.f32.mrf.mxu0
        %v920 = vpop.f32.mrf.mxu0
        %v921 = vadd.f32 0.0, %v920
        %v922 = vpop.f32.mrf.mxu0
        %923 = vmatprep.mubr.bf16.mxu0 0
        %924 = vmatmul.mubr.bf16.gmra.mxu0 %v748
        %v925 = vpop.f32.mrf.mxu0
        %v926 = vadd.f32 0.0, %v925
        %v927 = vpop.f32.mrf.mxu0
        %v928 = vpop.f32.mrf.mxu0
        %v929 = vadd.f32 0.0, %v928
        %v930 = vpop.f32.mrf.mxu0
        %931 = vmatprep.mubr.bf16.mxu0 0
        %932 = vmatmul.mubr.bf16.gmra.mxu0 %v749
        %v933 = vpop.f32.mrf.mxu0
        %v934 = vadd.f32 0.0, %v933
        %v935 = vpop.f32.mrf.mxu0
        %v936 = vpop.f32.mrf.mxu0
        %v937 = vadd.f32 0.0, %v936
        %v938 = vpop.f32.mrf.mxu0
        %939 = vmatprep.mubr.bf16.mxu0 0
        %940 = vmatmul.mubr.bf16.gmra.mxu0 %v750
        %v941 = vpop.f32.mrf.mxu0
        %v942 = vadd.f32 0.0, %v941
        %v943 = vpop.f32.mrf.mxu0
        %v944 = vpop.f32.mrf.mxu0
        %v945 = vadd.f32 0.0, %v944
        %v946 = vpop.f32.mrf.mxu0
        %947 = vmatprep.mubr.bf16.mxu0 0
        %948 = vmatmul.mubr.bf16.gmra.mxu0 %v751
        %v949 = vpop.f32.mrf.mxu0
        %v950 = vadd.f32 0.0, %v949
        %v951 = vpop.f32.mrf.mxu0
        %v952 = vpop.f32.mrf.mxu0
        %v953 = vadd.f32 0.0, %v952
        %v954 = vpop.f32.mrf.mxu0
        %955 = vmatprep.mubr.bf16.mxu0 0
        %956 = vmatmul.mubr.bf16.gmra.mxu0 %v752
        %v957 = vpop.f32.mrf.mxu0
        %v958 = vadd.f32 0.0, %v957
        %v959 = vpop.f32.mrf.mxu0
        %v960 = vpop.f32.mrf.mxu0
        %v961 = vadd.f32 0.0, %v960
        %v962 = vpop.f32.mrf.mxu0
        %963 = vmatprep.mubr.bf16.mxu0 0
        %964 = vmatmul.mubr.bf16.gmra.mxu0 %v753
        %v965 = vpop.f32.mrf.mxu0
        %v966 = vadd.f32 0.0, %v965
        %v967 = vpop.f32.mrf.mxu0
        %v968 = vpop.f32.mrf.mxu0
        %v969 = vadd.f32 0.0, %v968
        %v970 = vpop.f32.mrf.mxu0
        %971 = vmatprep.mubr.bf16.mxu0 0
        %972 = vmatmul.mubr.bf16.gmra.mxu0 %v754
        %v973 = vpop.f32.mrf.mxu0
        %v974 = vadd.f32 0.0, %v973
        %v975 = vpop.f32.mrf.mxu0
        %v976 = vpop.f32.mrf.mxu0
        %v977 = vadd.f32 0.0, %v976
        %v978 = vpop.f32.mrf.mxu0
        %979 = vdwg.mxu0
        %v1012 = vunpack.c.l.b16 %v239
        %v1013 = vunpack.c.l.b16 %v240
        %v1014 = vunpack.c.l.b16 %v241
        %v1015 = vunpack.c.l.b16 %v242
        %v1016 = vunpack.c.l.b16 %v243
        %v1017 = vunpack.c.l.b16 %v244
        %v1018 = vunpack.c.l.b16 %v245
        %v1019 = vunpack.c.l.b16 %v246
        %v1020 = vunpack.c.l.b16 %v247
        %v1021 = vunpack.c.l.b16 %v248
        %v1022 = vunpack.c.l.b16 %v249
        %v1023 = vunpack.c.l.b16 %v250
        %v1024 = vunpack.c.l.b16 %v251
        %v1025 = vunpack.c.l.b16 %v252
        %v1026 = vunpack.c.l.b16 %v253
        %v1027 = vunpack.c.l.b16 %v254
        %v1028 = vunpack.c.l.b16 %v255
        %v1029 = vunpack.c.l.b16 %v256
        %v1030 = vunpack.c.l.b16 %v257
        %v1031 = vunpack.c.l.b16 %v258
        %v1032 = vunpack.c.l.b16 %v259
        %v1033 = vunpack.c.l.b16 %v260
        %v1034 = vunpack.c.l.b16 %v261
        %v1035 = vunpack.c.l.b16 %v262
        %v1036 = vunpack.c.l.b16 %v263
        %v1037 = vunpack.c.l.b16 %v264
        %v1038 = vunpack.c.l.b16 %v265
        %v1039 = vunpack.c.l.b16 %v266
        %v1040 = vunpack.c.l.b16 %v267
        %v1041 = vunpack.c.l.b16 %v268
        %v1042 = vunpack.c.l.b16 %v269
        %v1043 = vunpack.c.l.b16 %v270
        %v1044 = vpack.c.b16 %v1013, %v1012
        %v1045 = vpack.c.b16 %v1015, %v1014
        %v1046 = vpack.c.b16 %v1017, %v1016
        %v1047 = vpack.c.b16 %v1019, %v1018
        %v1048 = vpack.c.b16 %v1021, %v1020
        %v1049 = vpack.c.b16 %v1023, %v1022
        %v1050 = vpack.c.b16 %v1025, %v1024
        %v1051 = vpack.c.b16 %v1027, %v1026
        %v1052 = vpack.c.b16 %v1029, %v1028
        %v1053 = vpack.c.b16 %v1031, %v1030
        %v1054 = vpack.c.b16 %v1033, %v1032
        %v1055 = vpack.c.b16 %v1035, %v1034
        %v1056 = vpack.c.b16 %v1037, %v1036
        %v1057 = vpack.c.b16 %v1039, %v1038
        %v1058 = vpack.c.b16 %v1041, %v1040
        %v1059 = vpack.c.b16 %v1043, %v1042
        %v1092 = vunpack.c.l.b16 %v271
        %v1093 = vunpack.c.l.b16 %v272
        %v1094 = vunpack.c.l.b16 %v273
        %v1095 = vunpack.c.l.b16 %v274
        %v1096 = vunpack.c.l.b16 %v275
        %v1097 = vunpack.c.l.b16 %v276
        %v1098 = vunpack.c.l.b16 %v277
        %v1099 = vunpack.c.l.b16 %v278
        %v1100 = vunpack.c.l.b16 %v279
        %v1101 = vunpack.c.l.b16 %v280
        %v1102 = vunpack.c.l.b16 %v281
        %v1103 = vunpack.c.l.b16 %v282
        %v1104 = vunpack.c.l.b16 %v283
        %v1105 = vunpack.c.l.b16 %v284
        %v1106 = vunpack.c.l.b16 %v285
        %v1107 = vunpack.c.l.b16 %v286
        %v1108 = vpack.c.b16 %v1093, %v1092
        %v1109 = vpack.c.b16 %v1095, %v1094
        %v1110 = vpack.c.b16 %v1097, %v1096
        %v1111 = vpack.c.b16 %v1099, %v1098
        %v1112 = vpack.c.b16 %v1101, %v1100
        %v1113 = vpack.c.b16 %v1103, %v1102
        %v1114 = vpack.c.b16 %v1105, %v1104
        %v1115 = vpack.c.b16 %v1107, %v1106
        %1124 = vmatprep.subr.bf16.mxu0 0
        %1125 = vmatpush1.bf16.msra.mxu0 %v1115
        %1126 = vmatprep.subr.bf16.mxu0 0
        %1127 = vmatpush1.bf16.msra.mxu0 %v1114
        %1128 = vmatprep.subr.bf16.mxu0 0
        %1129 = vmatpush1.bf16.msra.mxu0 %v1113
        %1130 = vmatprep.subr.bf16.mxu0 0
        %1131 = vmatpush1.bf16.msra.mxu0 %v1112
        %1132 = vmatprep.subr.bf16.mxu0 0
        %1133 = vmatpush1.bf16.msra.mxu0 %v1111
        %1134 = vmatprep.subr.bf16.mxu0 0
        %1135 = vmatpush1.bf16.msra.mxu0 %v1110
        %1136 = vmatprep.subr.bf16.mxu0 0
        %1137 = vmatpush1.bf16.msra.mxu0 %v1109
        %1138 = vmatprep.subr.bf16.mxu0 0
        %1139 = vmatpush1.bf16.msra.mxu0 %v1108
        %1140 = vmatprep.subr.bf16.mxu0 0
        %1141 = vmatpush2.bf16.msra.mxu0 0
        %1142 = vmatprep.subr.bf16.mxu0 0
        %1143 = vmatpush2.bf16.msra.mxu0 0
        %1144 = vmatprep.subr.bf16.mxu0 0
        %1145 = vmatpush2.bf16.msra.mxu0 0
        %1146 = vmatprep.subr.bf16.mxu0 0
        %1147 = vmatpush2.bf16.msra.mxu0 0
        %1148 = vmatprep.subr.bf16.mxu0 0
        %1149 = vmatpush2.bf16.msra.mxu0 0
        %1150 = vmatprep.subr.bf16.mxu0 0
        %1151 = vmatpush2.bf16.msra.mxu0 0
        %1152 = vmatprep.subr.bf16.mxu0 0
        %1153 = vmatpush2.bf16.msra.mxu0 0
        %1154 = vmatprep.subr.bf16.mxu0 0
        %1155 = vmatpush2.bf16.msra.mxu0 0
        %1156 = vmatprep.mubr.bf16.mxu0 0
        %1157 = vmatmul.mubr.bf16.gmra.mxu0 %v1044
        %v1158 = vpop.f32.mrf.mxu0
        %v1159 = vadd.f32 %v854, %v1158
        %v1160 = vpop.f32.mrf.mxu0
        %v1161 = vpop.f32.mrf.mxu0
        %v1162 = vadd.f32 %v857, %v1161
        %v1163 = vpop.f32.mrf.mxu0
        %1164 = vmatprep.mubr.bf16.mxu0 0
        %1165 = vmatmul.mubr.bf16.gmra.mxu0 %v1045
        %v1166 = vpop.f32.mrf.mxu0
        %v1167 = vadd.f32 %v862, %v1166
        %v1168 = vpop.f32.mrf.mxu0
        %v1169 = vpop.f32.mrf.mxu0
        %v1170 = vadd.f32 %v865, %v1169
        %v1171 = vpop.f32.mrf.mxu0
        %1172 = vmatprep.mubr.bf16.mxu0 0
        %1173 = vmatmul.mubr.bf16.gmra.mxu0 %v1046
        %v1174 = vpop.f32.mrf.mxu0
        %v1175 = vadd.f32 %v870, %v1174
        %v1176 = vpop.f32.mrf.mxu0
        %v1177 = vpop.f32.mrf.mxu0
        %v1178 = vadd.f32 %v873, %v1177
        %v1179 = vpop.f32.mrf.mxu0
        %1180 = vmatprep.mubr.bf16.mxu0 0
        %1181 = vmatmul.mubr.bf16.gmra.mxu0 %v1047
        %v1182 = vpop.f32.mrf.mxu0
        %v1183 = vadd.f32 %v878, %v1182
        %v1184 = vpop.f32.mrf.mxu0
        %v1185 = vpop.f32.mrf.mxu0
        %v1186 = vadd.f32 %v881, %v1185
        %v1187 = vpop.f32.mrf.mxu0
        %1188 = vmatprep.mubr.bf16.mxu0 0
        %1189 = vmatmul.mubr.bf16.gmra.mxu0 %v1048
        %v1190 = vpop.f32.mrf.mxu0
        %v1191 = vadd.f32 %v886, %v1190
        %v1192 = vpop.f32.mrf.mxu0
        %v1193 = vpop.f32.mrf.mxu0
        %v1194 = vadd.f32 %v889, %v1193
        %v1195 = vpop.f32.mrf.mxu0
        %1196 = vmatprep.mubr.bf16.mxu0 0
        %1197 = vmatmul.mubr.bf16.gmra.mxu0 %v1049
        %v1198 = vpop.f32.mrf.mxu0
        %v1199 = vadd.f32 %v894, %v1198
        %v1200 = vpop.f32.mrf.mxu0
        %v1201 = vpop.f32.mrf.mxu0
        %v1202 = vadd.f32 %v897, %v1201
        %v1203 = vpop.f32.mrf.mxu0
        %1204 = vmatprep.mubr.bf16.mxu0 0
        %1205 = vmatmul.mubr.bf16.gmra.mxu0 %v1050
        %v1206 = vpop.f32.mrf.mxu0
        %v1207 = vadd.f32 %v902, %v1206
        %v1208 = vpop.f32.mrf.mxu0
        %v1209 = vpop.f32.mrf.mxu0
        %v1210 = vadd.f32 %v905, %v1209
        %v1211 = vpop.f32.mrf.mxu0
        %1212 = vmatprep.mubr.bf16.mxu0 0
        %1213 = vmatmul.mubr.bf16.gmra.mxu0 %v1051
        %v1214 = vpop.f32.mrf.mxu0
        %v1215 = vadd.f32 %v910, %v1214
        %v1216 = vpop.f32.mrf.mxu0
        %v1217 = vpop.f32.mrf.mxu0
        %v1218 = vadd.f32 %v913, %v1217
        %v1219 = vpop.f32.mrf.mxu0
        %1220 = vmatprep.mubr.bf16.mxu0 0
        %1221 = vmatmul.mubr.bf16.gmra.mxu0 %v1052
        %v1222 = vpop.f32.mrf.mxu0
        %v1223 = vadd.f32 %v918, %v1222
        %v1224 = vpop.f32.mrf.mxu0
        %v1225 = vpop.f32.mrf.mxu0
        %v1226 = vadd.f32 %v921, %v1225
        %v1227 = vpop.f32.mrf.mxu0
        %1228 = vmatprep.mubr.bf16.mxu0 0
        %1229 = vmatmul.mubr.bf16.gmra.mxu0 %v1053
        %v1230 = vpop.f32.mrf.mxu0
        %v1231 = vadd.f32 %v926, %v1230
        %v1232 = vpop.f32.mrf.mxu0
        %v1233 = vpop.f32.mrf.mxu0
        %v1234 = vadd.f32 %v929, %v1233
        %v1235 = vpop.f32.mrf.mxu0
        %1236 = vmatprep.mubr.bf16.mxu0 0
        %1237 = vmatmul.mubr.bf16.gmra.mxu0 %v1054
        %v1238 = vpop.f32.mrf.mxu0
        %v1239 = vadd.f32 %v934, %v1238
        %v1240 = vpop.f32.mrf.mxu0
        %v1241 = vpop.f32.mrf.mxu0
        %v1242 = vadd.f32 %v937, %v1241
        %v1243 = vpop.f32.mrf.mxu0
        %1244 = vmatprep.mubr.bf16.mxu0 0
        %1245 = vmatmul.mubr.bf16.gmra.mxu0 %v1055
        %v1246 = vpop.f32.mrf.mxu0
        %v1247 = vadd.f32 %v942, %v1246
        %v1248 = vpop.f32.mrf.mxu0
        %v1249 = vpop.f32.mrf.mxu0
        %v1250 = vadd.f32 %v945, %v1249
        %v1251 = vpop.f32.mrf.mxu0
        %1252 = vmatprep.mubr.bf16.mxu0 0
        %1253 = vmatmul.mubr.bf16.gmra.mxu0 %v1056
        %v1254 = vpop.f32.mrf.mxu0
        %v1255 = vadd.f32 %v950, %v1254
        %v1256 = vpop.f32.mrf.mxu0
        %v1257 = vpop.f32.mrf.mxu0
        %v1258 = vadd.f32 %v953, %v1257
        %v1259 = vpop.f32.mrf.mxu0
        %1260 = vmatprep.mubr.bf16.mxu0 0
        %1261 = vmatmul.mubr.bf16.gmra.mxu0 %v1057
        %v1262 = vpop.f32.mrf.mxu0
        %v1263 = vadd.f32 %v958, %v1262
        %v1264 = vpop.f32.mrf.mxu0
        %v1265 = vpop.f32.mrf.mxu0
        %v1266 = vadd.f32 %v961, %v1265
        %v1267 = vpop.f32.mrf.mxu0
        %1268 = vmatprep.mubr.bf16.mxu0 0
        %1269 = vmatmul.mubr.bf16.gmra.mxu0 %v1058
        %v1270 = vpop.f32.mrf.mxu0
        %v1271 = vadd.f32 %v966, %v1270
        %v1272 = vpop.f32.mrf.mxu0
        %v1273 = vpop.f32.mrf.mxu0
        %v1274 = vadd.f32 %v969, %v1273
        %v1275 = vpop.f32.mrf.mxu0
        %1276 = vmatprep.mubr.bf16.mxu0 0
        %1277 = vmatmul.mubr.bf16.gmra.mxu0 %v1059
        %v1278 = vpop.f32.mrf.mxu0
        %v1279 = vadd.f32 %v974, %v1278
        %v1280 = vpop.f32.mrf.mxu0
        %v1281 = vpop.f32.mrf.mxu0
        %v1282 = vadd.f32 %v977, %v1281
        %v1283 = vpop.f32.mrf.mxu0
        %1284 = vdwg.mxu0
        %v1285 = vld [vmem:[%s237] sm:$0xe]
        %v1286 = vld [vmem:[%s237 + $0xc] sm:$0xe]
        %v1287 = vld [vmem:[%s237 + $0x18] sm:$0xe]
        %v1288 = vld [vmem:[%s237 + $0x24] sm:$0xe]
        %v1289 = vld [vmem:[%s237 + $0x30] sm:$0xe]
        %v1290 = vld [vmem:[%s237 + $0x3c] sm:$0xe]
        %v1291 = vld [vmem:[%s237 + $0x48] sm:$0xe]
        %v1292 = vld [vmem:[%s237 + $0x54] sm:$0xe]
        %v1293 = vld [vmem:[%s237 + $0x60] sm:$0xe]
        %v1294 = vld [vmem:[%s237 + $0x6c] sm:$0xe]
        %v1295 = vld [vmem:[%s237 + $0x78] sm:$0xe]
        %v1296 = vld [vmem:[%s237 + $0x84] sm:$0xe]
        %v1297 = vld [vmem:[%s237 + $0x90] sm:$0xe]
        %v1298 = vld [vmem:[%s237 + $0x9c] sm:$0xe]
        %v1299 = vld [vmem:[%s237 + $0xa8] sm:$0xe]
        %v1300 = vld [vmem:[%s237 + $0xb4] sm:$0xe]
        %vm1333 = vcmask 1042432
        %vm1334 = vcmask 1046532
        %vm1335 = vmor %vm1333, %vm1334
        %v1336 = vrot.slane %v1285, 5
        %v1337 = vrot.slane %v1336, 4
        %v1338 = vrot.slane %v240, 5
        %v1339 = vsel %vm1335, %v1337, %v1338
        %v1340 = vrot.slane %v1338, 4
        %v1341 = vrot.slane %v287, 5
        %v1342 = vsel %vm1335, %v1340, %v1341
        %v1343 = vrot.slane %v1286, 5
        %v1344 = vrot.slane %v1343, 4
        %v1345 = vrot.slane %v242, 5
        %v1346 = vsel %vm1335, %v1344, %v1345
        %v1347 = vrot.slane %v1345, 4
        %v1348 = vrot.slane %v288, 5
        %v1349 = vsel %vm1335, %v1347, %v1348
        %v1350 = vrot.slane %v1287, 5
        %v1351 = vrot.slane %v1350, 4
        %v1352 = vrot.slane %v244, 5
        %v1353 = vsel %vm1335, %v1351, %v1352
        %v1354 = vrot.slane %v1352, 4
        %v1355 = vrot.slane %v289, 5
        %v1356 = vsel %vm1335, %v1354, %v1355
        %v1357 = vrot.slane %v1288, 5
        %v1358 = vrot.slane %v1357, 4
        %v1359 = vrot.slane %v246, 5
        %v1360 = vsel %vm1335, %v1358, %v1359
        %v1361 = vrot.slane %v1359, 4
        %v1362 = vrot.slane %v290, 5
        %v1363 = vsel %vm1335, %v1361, %v1362
        %v1364 = vrot.slane %v1289, 5
        %v1365 = vrot.slane %v1364, 4
        %v1366 = vrot.slane %v248, 5
        %v1367 = vsel %vm1335, %v1365, %v1366
        %v1368 = vrot.slane %v1366, 4
        %v1369 = vrot.slane %v291, 5
        %v1370 = vsel %vm1335, %v1368, %v1369
        %v1371 = vrot.slane %v1290, 5
        %v1372 = vrot.slane %v1371, 4
        %v1373 = vrot.slane %v250, 5
        %v1374 = vsel %vm1335, %v1372, %v1373
        %v1375 = vrot.slane %v1373, 4
        %v1376 = vrot.slane %v292, 5
        %v1377 = vsel %vm1335, %v1375, %v1376
        %v1378 = vrot.slane %v1291, 5
        %v1379 = vrot.slane %v1378, 4
        %v1380 = vrot.slane %v252, 5
        %v1381 = vsel %vm1335, %v1379, %v1380
        %v1382 = vrot.slane %v1380, 4
        %v1383 = vrot.slane %v293, 5
        %v1384 = vsel %vm1335, %v1382, %v1383
        %v1385 = vrot.slane %v1292, 5
        %v1386 = vrot.slane %v1385, 4
        %v1387 = vrot.slane %v254, 5
        %v1388 = vsel %vm1335, %v1386, %v1387
        %v1389 = vrot.slane %v1387, 4
        %v1390 = vrot.slane %v294, 5
        %v1391 = vsel %vm1335, %v1389, %v1390
        %v1392 = vrot.slane %v1293, 5
        %v1393 = vrot.slane %v1392, 4
        %v1394 = vrot.slane %v256, 5
        %v1395 = vsel %vm1335, %v1393, %v1394
        %v1396 = vrot.slane %v1394, 4
        %v1397 = vrot.slane %v295, 5
        %v1398 = vsel %vm1335, %v1396, %v1397
        %v1399 = vrot.slane %v1294, 5
        %v1400 = vrot.slane %v1399, 4
        %v1401 = vrot.slane %v258, 5
        %v1402 = vsel %vm1335, %v1400, %v1401
        %v1403 = vrot.slane %v1401, 4
        %v1404 = vrot.slane %v296, 5
        %v1405 = vsel %vm1335, %v1403, %v1404
        %v1406 = vrot.slane %v1295, 5
        %v1407 = vrot.slane %v1406, 4
        %v1408 = vrot.slane %v260, 5
        %v1409 = vsel %vm1335, %v1407, %v1408
        %v1410 = vrot.slane %v1408, 4
        %v1411 = vrot.slane %v297, 5
        %v1412 = vsel %vm1335, %v1410, %v1411
        %v1413 = vrot.slane %v1296, 5
        %v1414 = vrot.slane %v1413, 4
        %v1415 = vrot.slane %v262, 5
        %v1416 = vsel %vm1335, %v1414, %v1415
        %v1417 = vrot.slane %v1415, 4
        %v1418 = vrot.slane %v298, 5
        %v1419 = vsel %vm1335, %v1417, %v1418
        %v1420 = vrot.slane %v1297, 5
        %v1421 = vrot.slane %v1420, 4
        %v1422 = vrot.slane %v264, 5
        %v1423 = vsel %vm1335, %v1421, %v1422
        %v1424 = vrot.slane %v1422, 4
        %v1425 = vrot.slane %v299, 5
        %v1426 = vsel %vm1335, %v1424, %v1425
        %v1427 = vrot.slane %v1298, 5
        %v1428 = vrot.slane %v1427, 4
        %v1429 = vrot.slane %v266, 5
        %v1430 = vsel %vm1335, %v1428, %v1429
        %v1431 = vrot.slane %v1429, 4
        %v1432 = vrot.slane %v300, 5
        %v1433 = vsel %vm1335, %v1431, %v1432
        %v1434 = vrot.slane %v1299, 5
        %v1435 = vrot.slane %v1434, 4
        %v1436 = vrot.slane %v268, 5
        %v1437 = vsel %vm1335, %v1435, %v1436
        %v1438 = vrot.slane %v1436, 4
        %v1439 = vrot.slane %v301, 5
        %v1440 = vsel %vm1335, %v1438, %v1439
        %v1441 = vrot.slane %v1300, 5
        %v1442 = vrot.slane %v1441, 4
        %v1443 = vrot.slane %v270, 5
        %v1444 = vsel %vm1335, %v1442, %v1443
        %v1445 = vrot.slane %v1443, 4
        %v1446 = vrot.slane %v302, 5
        %v1447 = vsel %vm1335, %v1445, %v1446
        %s1448 = scalar_lea.vmem %s1, 128
        %v1449 = vld [vmem:[%s1448] sm:$0xf]
        %v1450 = vld [vmem:[%s1448 + $0x4] sm:$0xf]
        %v1451 = vld [vmem:[%s1448 + $0x8] sm:$0xf]
        %v1452 = vld [vmem:[%s1448 + $0xc] sm:$0xf]
        %v1453 = vld [vmem:[%s1448 + $0x10] sm:$0xf]
        %v1454 = vld [vmem:[%s1448 + $0x14] sm:$0xf]
        %v1455 = vld [vmem:[%s1448 + $0x18] sm:$0xf]
        %v1456 = vld [vmem:[%s1448 + $0x1c] sm:$0xf]
        %v1457 = vld [vmem:[%s1448 + $0x20] sm:$0xf]
        %v1458 = vld [vmem:[%s1448 + $0x24] sm:$0xf]
        %v1459 = vld [vmem:[%s1448 + $0x28] sm:$0xf]
        %v1460 = vld [vmem:[%s1448 + $0x2c] sm:$0xf]
        %v1461 = vld [vmem:[%s1448 + $0x30] sm:$0xf]
        %v1462 = vld [vmem:[%s1448 + $0x34] sm:$0xf]
        %v1463 = vld [vmem:[%s1448 + $0x38] sm:$0xf]
        %v1464 = vld [vmem:[%s1448 + $0x3c] sm:$0xf]
        %v1465 = vunpack.c.l.b16 %v1339
        %v1466 = vunpack.c.l.b16 %v1342
        %v1467 = vunpack.c.l.b16 %v1346
        %v1468 = vunpack.c.l.b16 %v1349
        %v1469 = vunpack.c.l.b16 %v1353
        %v1470 = vunpack.c.l.b16 %v1356
        %v1471 = vunpack.c.l.b16 %v1360
        %v1472 = vunpack.c.l.b16 %v1363
        %v1473 = vunpack.c.l.b16 %v1367
        %v1474 = vunpack.c.l.b16 %v1370
        %v1475 = vunpack.c.l.b16 %v1374
        %v1476 = vunpack.c.l.b16 %v1377
        %v1477 = vunpack.c.l.b16 %v1381
        %v1478 = vunpack.c.l.b16 %v1384
        %v1479 = vunpack.c.l.b16 %v1388
        %v1480 = vunpack.c.l.b16 %v1391
        %v1481 = vunpack.c.l.b16 %v1395
        %v1482 = vunpack.c.l.b16 %v1398
        %v1483 = vunpack.c.l.b16 %v1402
        %v1484 = vunpack.c.l.b16 %v1405
        %v1485 = vunpack.c.l.b16 %v1409
        %v1486 = vunpack.c.l.b16 %v1412
        %v1487 = vunpack.c.l.b16 %v1416
        %v1488 = vunpack.c.l.b16 %v1419
        %v1489 = vunpack.c.l.b16 %v1423
        %v1490 = vunpack.c.l.b16 %v1426
        %v1491 = vunpack.c.l.b16 %v1430
        %v1492 = vunpack.c.l.b16 %v1433
        %v1493 = vunpack.c.l.b16 %v1437
        %v1494 = vunpack.c.l.b16 %v1440
        %v1495 = vunpack.c.l.b16 %v1444
        %v1496 = vunpack.c.l.b16 %v1447
        %v1497 = vpack.c.b16 %v1466, %v1465
        %v1498 = vpack.c.b16 %v1468, %v1467
        %v1499 = vpack.c.b16 %v1470, %v1469
        %v1500 = vpack.c.b16 %v1472, %v1471
        %v1501 = vpack.c.b16 %v1474, %v1473
        %v1502 = vpack.c.b16 %v1476, %v1475
        %v1503 = vpack.c.b16 %v1478, %v1477
        %v1504 = vpack.c.b16 %v1480, %v1479
        %v1505 = vpack.c.b16 %v1482, %v1481
        %v1506 = vpack.c.b16 %v1484, %v1483
        %v1507 = vpack.c.b16 %v1486, %v1485
        %v1508 = vpack.c.b16 %v1488, %v1487
        %v1509 = vpack.c.b16 %v1490, %v1489
        %v1510 = vpack.c.b16 %v1492, %v1491
        %v1511 = vpack.c.b16 %v1494, %v1493
        %v1512 = vpack.c.b16 %v1496, %v1495
        %v1545 = vunpack.c.l.b16 %v1449
        %v1546 = vunpack.c.l.b16 %v1450
        %v1547 = vunpack.c.l.b16 %v1451
        %v1548 = vunpack.c.l.b16 %v1452
        %v1549 = vunpack.c.l.b16 %v1453
        %v1550 = vunpack.c.l.b16 %v1454
        %v1551 = vunpack.c.l.b16 %v1455
        %v1552 = vunpack.c.l.b16 %v1456
        %v1553 = vunpack.c.l.b16 %v1457
        %v1554 = vunpack.c.l.b16 %v1458
        %v1555 = vunpack.c.l.b16 %v1459
        %v1556 = vunpack.c.l.b16 %v1460
        %v1557 = vunpack.c.l.b16 %v1461
        %v1558 = vunpack.c.l.b16 %v1462
        %v1559 = vunpack.c.l.b16 %v1463
        %v1560 = vunpack.c.l.b16 %v1464
        %v1561 = vpack.c.b16 %v1546, %v1545
        %v1562 = vpack.c.b16 %v1548, %v1547
        %v1563 = vpack.c.b16 %v1550, %v1549
        %v1564 = vpack.c.b16 %v1552, %v1551
        %v1565 = vpack.c.b16 %v1554, %v1553
        %v1566 = vpack.c.b16 %v1556, %v1555
        %v1567 = vpack.c.b16 %v1558, %v1557
        %v1568 = vpack.c.b16 %v1560, %v1559
        %1577 = vmatprep.subr.bf16.mxu0 0
        %1578 = vmatpush1.bf16.msra.mxu0 %v1568
        %1579 = vmatprep.subr.bf16.mxu0 0
        %1580 = vmatpush1.bf16.msra.mxu0 %v1567
        %1581 = vmatprep.subr.bf16.mxu0 0
        %1582 = vmatpush1.bf16.msra.mxu0 %v1566
        %1583 = vmatprep.subr.bf16.mxu0 0
        %1584 = vmatpush1.bf16.msra.mxu0 %v1565
        %1585 = vmatprep.subr.bf16.mxu0 0
        %1586 = vmatpush1.bf16.msra.mxu0 %v1564
        %1587 = vmatprep.subr.bf16.mxu0 0
        %1588 = vmatpush1.bf16.msra.mxu0 %v1563
        %1589 = vmatprep.subr.bf16.mxu0 0
        %1590 = vmatpush1.bf16.msra.mxu0 %v1562
        %1591 = vmatprep.subr.bf16.mxu0 0
        %1592 = vmatpush1.bf16.msra.mxu0 %v1561
        %1593 = vmatprep.subr.bf16.mxu0 0
        %1594 = vmatpush2.bf16.msra.mxu0 0
        %1595 = vmatprep.subr.bf16.mxu0 0
        %1596 = vmatpush2.bf16.msra.mxu0 0
        %1597 = vmatprep.subr.bf16.mxu0 0
        %1598 = vmatpush2.bf16.msra.mxu0 0
        %1599 = vmatprep.subr.bf16.mxu0 0
        %1600 = vmatpush2.bf16.msra.mxu0 0
        %1601 = vmatprep.subr.bf16.mxu0 0
        %1602 = vmatpush2.bf16.msra.mxu0 0
        %1603 = vmatprep.subr.bf16.mxu0 0
        %1604 = vmatpush2.bf16.msra.mxu0 0
        %1605 = vmatprep.subr.bf16.mxu0 0
        %1606 = vmatpush2.bf16.msra.mxu0 0
        %1607 = vmatprep.subr.bf16.mxu0 0
        %1608 = vmatpush2.bf16.msra.mxu0 0
        %1609 = vmatprep.mubr.bf16.mxu0 0
        %1610 = vmatmul.mubr.bf16.gmra.mxu0 %v1497
        %v1611 = vpop.f32.mrf.mxu0
        %v1612 = vadd.f32 0.0, %v1611
        %v1613 = vpop.f32.mrf.mxu0
        %v1614 = vpop.f32.mrf.mxu0
        %v1615 = vadd.f32 0.0, %v1614
        %v1616 = vpop.f32.mrf.mxu0
        %1617 = vmatprep.mubr.bf16.mxu0 0
        %1618 = vmatmul.mubr.bf16.gmra.mxu0 %v1498
        %v1619 = vpop.f32.mrf.mxu0
        %v1620 = vadd.f32 0.0, %v1619
        %v1621 = vpop.f32.mrf.mxu0
        %v1622 = vpop.f32.mrf.mxu0
        %v1623 = vadd.f32 0.0, %v1622
        %v1624 = vpop.f32.mrf.mxu0
        %1625 = vmatprep.mubr.bf16.mxu0 0
        %1626 = vmatmul.mubr.bf16.gmra.mxu0 %v1499
        %v1627 = vpop.f32.mrf.mxu0
        %v1628 = vadd.f32 0.0, %v1627
        %v1629 = vpop.f32.mrf.mxu0
        %v1630 = vpop.f32.mrf.mxu0
        %v1631 = vadd.f32 0.0, %v1630
        %v1632 = vpop.f32.mrf.mxu0
        %1633 = vmatprep.mubr.bf16.mxu0 0
        %1634 = vmatmul.mubr.bf16.gmra.mxu0 %v1500
        %v1635 = vpop.f32.mrf.mxu0
        %v1636 = vadd.f32 0.0, %v1635
        %v1637 = vpop.f32.mrf.mxu0
        %v1638 = vpop.f32.mrf.mxu0
        %v1639 = vadd.f32 0.0, %v1638
        %v1640 = vpop.f32.mrf.mxu0
        %1641 = vmatprep.mubr.bf16.mxu0 0
        %1642 = vmatmul.mubr.bf16.gmra.mxu0 %v1501
        %v1643 = vpop.f32.mrf.mxu0
        %v1644 = vadd.f32 0.0, %v1643
        %v1645 = vpop.f32.mrf.mxu0
        %v1646 = vpop.f32.mrf.mxu0
        %v1647 = vadd.f32 0.0, %v1646
        %v1648 = vpop.f32.mrf.mxu0
        %1649 = vmatprep.mubr.bf16.mxu0 0
        %1650 = vmatmul.mubr.bf16.gmra.mxu0 %v1502
        %v1651 = vpop.f32.mrf.mxu0
        %v1652 = vadd.f32 0.0, %v1651
        %v1653 = vpop.f32.mrf.mxu0
        %v1654 = vpop.f32.mrf.mxu0
        %v1655 = vadd.f32 0.0, %v1654
        %v1656 = vpop.f32.mrf.mxu0
        %1657 = vmatprep.mubr.bf16.mxu0 0
        %1658 = vmatmul.mubr.bf16.gmra.mxu0 %v1503
        %v1659 = vpop.f32.mrf.mxu0
        %v1660 = vadd.f32 0.0, %v1659
        %v1661 = vpop.f32.mrf.mxu0
        %v1662 = vpop.f32.mrf.mxu0
        %v1663 = vadd.f32 0.0, %v1662
        %v1664 = vpop.f32.mrf.mxu0
        %1665 = vmatprep.mubr.bf16.mxu0 0
        %1666 = vmatmul.mubr.bf16.gmra.mxu0 %v1504
        %v1667 = vpop.f32.mrf.mxu0
        %v1668 = vadd.f32 0.0, %v1667
        %v1669 = vpop.f32.mrf.mxu0
        %v1670 = vpop.f32.mrf.mxu0
        %v1671 = vadd.f32 0.0, %v1670
        %v1672 = vpop.f32.mrf.mxu0
        %1673 = vmatprep.mubr.bf16.mxu0 0
        %1674 = vmatmul.mubr.bf16.gmra.mxu0 %v1505
        %v1675 = vpop.f32.mrf.mxu0
        %v1676 = vadd.f32 0.0, %v1675
        %v1677 = vpop.f32.mrf.mxu0
        %v1678 = vpop.f32.mrf.mxu0
        %v1679 = vadd.f32 0.0, %v1678
        %v1680 = vpop.f32.mrf.mxu0
        %1681 = vmatprep.mubr.bf16.mxu0 0
        %1682 = vmatmul.mubr.bf16.gmra.mxu0 %v1506
        %v1683 = vpop.f32.mrf.mxu0
        %v1684 = vadd.f32 0.0, %v1683
        %v1685 = vpop.f32.mrf.mxu0
        %v1686 = vpop.f32.mrf.mxu0
        %v1687 = vadd.f32 0.0, %v1686
        %v1688 = vpop.f32.mrf.mxu0
        %1689 = vmatprep.mubr.bf16.mxu0 0
        %1690 = vmatmul.mubr.bf16.gmra.mxu0 %v1507
        %v1691 = vpop.f32.mrf.mxu0
        %v1692 = vadd.f32 0.0, %v1691
        %v1693 = vpop.f32.mrf.mxu0
        %v1694 = vpop.f32.mrf.mxu0
        %v1695 = vadd.f32 0.0, %v1694
        %v1696 = vpop.f32.mrf.mxu0
        %1697 = vmatprep.mubr.bf16.mxu0 0
        %1698 = vmatmul.mubr.bf16.gmra.mxu0 %v1508
        %v1699 = vpop.f32.mrf.mxu0
        %v1700 = vadd.f32 0.0, %v1699
        %v1701 = vpop.f32.mrf.mxu0
        %v1702 = vpop.f32.mrf.mxu0
        %v1703 = vadd.f32 0.0, %v1702
        %v1704 = vpop.f32.mrf.mxu0
        %1705 = vmatprep.mubr.bf16.mxu0 0
        %1706 = vmatmul.mubr.bf16.gmra.mxu0 %v1509
        %v1707 = vpop.f32.mrf.mxu0
        %v1708 = vadd.f32 0.0, %v1707
        %v1709 = vpop.f32.mrf.mxu0
        %v1710 = vpop.f32.mrf.mxu0
        %v1711 = vadd.f32 0.0, %v1710
        %v1712 = vpop.f32.mrf.mxu0
        %1713 = vmatprep.mubr.bf16.mxu0 0
        %1714 = vmatmul.mubr.bf16.gmra.mxu0 %v1510
        %v1715 = vpop.f32.mrf.mxu0
        %v1716 = vadd.f32 0.0, %v1715
        %v1717 = vpop.f32.mrf.mxu0
        %v1718 = vpop.f32.mrf.mxu0
        %v1719 = vadd.f32 0.0, %v1718
        %v1720 = vpop.f32.mrf.mxu0
        %1721 = vmatprep.mubr.bf16.mxu0 0
        %1722 = vmatmul.mubr.bf16.gmra.mxu0 %v1511
        %v1723 = vpop.f32.mrf.mxu0
        %v1724 = vadd.f32 0.0, %v1723
        %v1725 = vpop.f32.mrf.mxu0
        %v1726 = vpop.f32.mrf.mxu0
        %v1727 = vadd.f32 0.0, %v1726
        %v1728 = vpop.f32.mrf.mxu0
        %1729 = vmatprep.mubr.bf16.mxu0 0
        %1730 = vmatmul.mubr.bf16.gmra.mxu0 %v1512
        %v1731 = vpop.f32.mrf.mxu0
        %v1732 = vadd.f32 0.0, %v1731
        %v1733 = vpop.f32.mrf.mxu0
        %v1734 = vpop.f32.mrf.mxu0
        %v1735 = vadd.f32 0.0, %v1734
        %v1736 = vpop.f32.mrf.mxu0
        %1737 = vdwg.mxu0
        %v1738 = vadd.f32 %v1159, %v1612
        %v1739 = vadd.f32 %v1162, %v1615
        %v1740 = vadd.f32 %v1167, %v1620
        %v1741 = vadd.f32 %v1170, %v1623
        %v1742 = vadd.f32 %v1175, %v1628
        %v1743 = vadd.f32 %v1178, %v1631
        %v1744 = vadd.f32 %v1183, %v1636
        %v1745 = vadd.f32 %v1186, %v1639
        %v1746 = vadd.f32 %v1191, %v1644
        %v1747 = vadd.f32 %v1194, %v1647
        %v1748 = vadd.f32 %v1199, %v1652
        %v1749 = vadd.f32 %v1202, %v1655
        %v1750 = vadd.f32 %v1207, %v1660
        %v1751 = vadd.f32 %v1210, %v1663
        %v1752 = vadd.f32 %v1215, %v1668
        %v1753 = vadd.f32 %v1218, %v1671
        %v1754 = vadd.f32 %v1223, %v1676
        %v1755 = vadd.f32 %v1226, %v1679
        %v1756 = vadd.f32 %v1231, %v1684
        %v1757 = vadd.f32 %v1234, %v1687
        %v1758 = vadd.f32 %v1239, %v1692
        %v1759 = vadd.f32 %v1242, %v1695
        %v1760 = vadd.f32 %v1247, %v1700
        %v1761 = vadd.f32 %v1250, %v1703
        %v1762 = vadd.f32 %v1255, %v1708
        %v1763 = vadd.f32 %v1258, %v1711
        %v1764 = vadd.f32 %v1263, %v1716
        %v1765 = vadd.f32 %v1266, %v1719
        %v1766 = vadd.f32 %v1271, %v1724
        %v1767 = vadd.f32 %v1274, %v1727
        %v1768 = vadd.f32 %v1279, %v1732
        %v1769 = vadd.f32 %v1282, %v1735
        %s1770 = scalar_lea.vmem %s237, 12
        %v1771 = vld [vmem:[%s1770] sm:$0xf]
        %v1772 = vld [vmem:[%s1770 + $0x4] sm:$0xf]
        %v1773 = vld [vmem:[%s1770 + $0xc] sm:$0xf]
        %v1774 = vld [vmem:[%s1770 + $0x10] sm:$0xf]
        %v1775 = vld [vmem:[%s1770 + $0x18] sm:$0xf]
        %v1776 = vld [vmem:[%s1770 + $0x1c] sm:$0xf]
        %v1777 = vld [vmem:[%s1770 + $0x24] sm:$0xf]
        %v1778 = vld [vmem:[%s1770 + $0x28] sm:$0xf]
        %v1779 = vld [vmem:[%s1770 + $0x30] sm:$0xf]
        %v1780 = vld [vmem:[%s1770 + $0x34] sm:$0xf]
        %v1781 = vld [vmem:[%s1770 + $0x3c] sm:$0xf]
        %v1782 = vld [vmem:[%s1770 + $0x40] sm:$0xf]
        %v1783 = vld [vmem:[%s1770 + $0x48] sm:$0xf]
        %v1784 = vld [vmem:[%s1770 + $0x4c] sm:$0xf]
        %v1785 = vld [vmem:[%s1770 + $0x54] sm:$0xf]
        %v1786 = vld [vmem:[%s1770 + $0x58] sm:$0xf]
        %v1787 = vld [vmem:[%s1770 + $0x60] sm:$0xf]
        %v1788 = vld [vmem:[%s1770 + $0x64] sm:$0xf]
        %v1789 = vld [vmem:[%s1770 + $0x6c] sm:$0xf]
        %v1790 = vld [vmem:[%s1770 + $0x70] sm:$0xf]
        %v1791 = vld [vmem:[%s1770 + $0x78] sm:$0xf]
        %v1792 = vld [vmem:[%s1770 + $0x7c] sm:$0xf]
        %v1793 = vld [vmem:[%s1770 + $0x84] sm:$0xf]
        %v1794 = vld [vmem:[%s1770 + $0x88] sm:$0xf]
        %v1795 = vld [vmem:[%s1770 + $0x90] sm:$0xf]
        %v1796 = vld [vmem:[%s1770 + $0x94] sm:$0xf]
        %v1797 = vld [vmem:[%s1770 + $0x9c] sm:$0xf]
        %v1798 = vld [vmem:[%s1770 + $0xa0] sm:$0xf]
        %v1799 = vld [vmem:[%s1770 + $0xa8] sm:$0xf]
        %v1800 = vld [vmem:[%s1770 + $0xac] sm:$0xf]
        %v1801 = vld [vmem:[%s1770 + $0xb4] sm:$0xf]
        %v1802 = vld [vmem:[%s1770 + $0xb8] sm:$0xf]
        %s1803 = scalar_lea.vmem %s1, 192
        %v1804 = vld [vmem:[%s1803] sm:$0xf]
        %v1805 = vld [vmem:[%s1803 + $0x4] sm:$0xf]
        %v1806 = vld [vmem:[%s1803 + $0x8] sm:$0xf]
        %v1807 = vld [vmem:[%s1803 + $0xc] sm:$0xf]
        %v1808 = vld [vmem:[%s1803 + $0x10] sm:$0xf]
        %v1809 = vld [vmem:[%s1803 + $0x14] sm:$0xf]
        %v1810 = vld [vmem:[%s1803 + $0x18] sm:$0xf]
        %v1811 = vld [vmem:[%s1803 + $0x1c] sm:$0xf]
        %v1812 = vld [vmem:[%s1803 + $0x20] sm:$0xf]
        %v1813 = vld [vmem:[%s1803 + $0x24] sm:$0xf]
        %v1814 = vld [vmem:[%s1803 + $0x28] sm:$0xf]
        %v1815 = vld [vmem:[%s1803 + $0x2c] sm:$0xf]
        %v1816 = vld [vmem:[%s1803 + $0x30] sm:$0xf]
        %v1817 = vld [vmem:[%s1803 + $0x34] sm:$0xf]
        %v1818 = vld [vmem:[%s1803 + $0x38] sm:$0xf]
        %v1819 = vld [vmem:[%s1803 + $0x3c] sm:$0xf]
        %v1852 = vunpack.c.l.b16 %v1771
        %v1853 = vunpack.c.l.b16 %v1772
        %v1854 = vunpack.c.l.b16 %v1773
        %v1855 = vunpack.c.l.b16 %v1774
        %v1856 = vunpack.c.l.b16 %v1775
        %v1857 = vunpack.c.l.b16 %v1776
        %v1858 = vunpack.c.l.b16 %v1777
        %v1859 = vunpack.c.l.b16 %v1778
        %v1860 = vunpack.c.l.b16 %v1779
        %v1861 = vunpack.c.l.b16 %v1780
        %v1862 = vunpack.c.l.b16 %v1781
        %v1863 = vunpack.c.l.b16 %v1782
        %v1864 = vunpack.c.l.b16 %v1783
        %v1865 = vunpack.c.l.b16 %v1784
        %v1866 = vunpack.c.l.b16 %v1785
        %v1867 = vunpack.c.l.b16 %v1786
        %v1868 = vunpack.c.l.b16 %v1787
        %v1869 = vunpack.c.l.b16 %v1788
        %v1870 = vunpack.c.l.b16 %v1789
        %v1871 = vunpack.c.l.b16 %v1790
        %v1872 = vunpack.c.l.b16 %v1791
        %v1873 = vunpack.c.l.b16 %v1792
        %v1874 = vunpack.c.l.b16 %v1793
        %v1875 = vunpack.c.l.b16 %v1794
        %v1876 = vunpack.c.l.b16 %v1795
        %v1877 = vunpack.c.l.b16 %v1796
        %v1878 = vunpack.c.l.b16 %v1797
        %v1879 = vunpack.c.l.b16 %v1798
        %v1880 = vunpack.c.l.b16 %v1799
        %v1881 = vunpack.c.l.b16 %v1800
        %v1882 = vunpack.c.l.b16 %v1801
        %v1883 = vunpack.c.l.b16 %v1802
        %v1884 = vpack.c.b16 %v1853, %v1852
        %v1885 = vpack.c.b16 %v1855, %v1854
        %v1886 = vpack.c.b16 %v1857, %v1856
        %v1887 = vpack.c.b16 %v1859, %v1858
        %v1888 = vpack.c.b16 %v1861, %v1860
        %v1889 = vpack.c.b16 %v1863, %v1862
        %v1890 = vpack.c.b16 %v1865, %v1864
        %v1891 = vpack.c.b16 %v1867, %v1866
        %v1892 = vpack.c.b16 %v1869, %v1868
        %v1893 = vpack.c.b16 %v1871, %v1870
        %v1894 = vpack.c.b16 %v1873, %v1872
        %v1895 = vpack.c.b16 %v1875, %v1874
        %v1896 = vpack.c.b16 %v1877, %v1876
        %v1897 = vpack.c.b16 %v1879, %v1878
        %v1898 = vpack.c.b16 %v1881, %v1880
        %v1899 = vpack.c.b16 %v1883, %v1882
        %v1932 = vunpack.c.l.b16 %v1804
        %v1933 = vunpack.c.l.b16 %v1805
        %v1934 = vunpack.c.l.b16 %v1806
        %v1935 = vunpack.c.l.b16 %v1807
        %v1936 = vunpack.c.l.b16 %v1808
        %v1937 = vunpack.c.l.b16 %v1809
        %v1938 = vunpack.c.l.b16 %v1810
        %v1939 = vunpack.c.l.b16 %v1811
        %v1940 = vunpack.c.l.b16 %v1812
        %v1941 = vunpack.c.l.b16 %v1813
        %v1942 = vunpack.c.l.b16 %v1814
        %v1943 = vunpack.c.l.b16 %v1815
        %v1944 = vunpack.c.l.b16 %v1816
        %v1945 = vunpack.c.l.b16 %v1817
        %v1946 = vunpack.c.l.b16 %v1818
        %v1947 = vunpack.c.l.b16 %v1819
        %v1948 = vpack.c.b16 %v1933, %v1932
        %v1949 = vpack.c.b16 %v1935, %v1934
        %v1950 = vpack.c.b16 %v1937, %v1936
        %v1951 = vpack.c.b16 %v1939, %v1938
        %v1952 = vpack.c.b16 %v1941, %v1940
        %v1953 = vpack.c.b16 %v1943, %v1942
        %v1954 = vpack.c.b16 %v1945, %v1944
        %v1955 = vpack.c.b16 %v1947, %v1946
        %1964 = vmatprep.subr.bf16.mxu0 0
        %1965 = vmatpush1.bf16.msra.mxu0 %v1955
        %1966 = vmatprep.subr.bf16.mxu0 0
        %1967 = vmatpush1.bf16.msra.mxu0 %v1954
        %1968 = vmatprep.subr.bf16.mxu0 0
        %1969 = vmatpush1.bf16.msra.mxu0 %v1953
        %1970 = vmatprep.subr.bf16.mxu0 0
        %1971 = vmatpush1.bf16.msra.mxu0 %v1952
        %1972 = vmatprep.subr.bf16.mxu0 0
        %1973 = vmatpush1.bf16.msra.mxu0 %v1951
        %1974 = vmatprep.subr.bf16.mxu0 0
        %1975 = vmatpush1.bf16.msra.mxu0 %v1950
        %1976 = vmatprep.subr.bf16.mxu0 0
        %1977 = vmatpush1.bf16.msra.mxu0 %v1949
        %1978 = vmatprep.subr.bf16.mxu0 0
        %1979 = vmatpush1.bf16.msra.mxu0 %v1948
        %1980 = vmatprep.subr.bf16.mxu0 0
        %1981 = vmatpush2.bf16.msra.mxu0 0
        %1982 = vmatprep.subr.bf16.mxu0 0
        %1983 = vmatpush2.bf16.msra.mxu0 0
        %1984 = vmatprep.subr.bf16.mxu0 0
        %1985 = vmatpush2.bf16.msra.mxu0 0
        %1986 = vmatprep.subr.bf16.mxu0 0
        %1987 = vmatpush2.bf16.msra.mxu0 0
        %1988 = vmatprep.subr.bf16.mxu0 0
        %1989 = vmatpush2.bf16.msra.mxu0 0
        %1990 = vmatprep.subr.bf16.mxu0 0
        %1991 = vmatpush2.bf16.msra.mxu0 0
        %1992 = vmatprep.subr.bf16.mxu0 0
        %1993 = vmatpush2.bf16.msra.mxu0 0
        %1994 = vmatprep.subr.bf16.mxu0 0
        %1995 = vmatpush2.bf16.msra.mxu0 0
        %1996 = vmatprep.mubr.bf16.mxu0 0
        %1997 = vmatmul.mubr.bf16.gmra.mxu0 %v1884
        %v1998 = vpop.f32.mrf.mxu0
        %v1999 = vadd.f32 0.0, %v1998
        %v2000 = vpop.f32.mrf.mxu0
        %v2001 = vpop.f32.mrf.mxu0
        %v2002 = vadd.f32 0.0, %v2001
        %v2003 = vpop.f32.mrf.mxu0
        %2004 = vmatprep.mubr.bf16.mxu0 0
        %2005 = vmatmul.mubr.bf16.gmra.mxu0 %v1885
        %v2006 = vpop.f32.mrf.mxu0
        %v2007 = vadd.f32 0.0, %v2006
        %v2008 = vpop.f32.mrf.mxu0
        %v2009 = vpop.f32.mrf.mxu0
        %v2010 = vadd.f32 0.0, %v2009
        %v2011 = vpop.f32.mrf.mxu0
        %2012 = vmatprep.mubr.bf16.mxu0 0
        %2013 = vmatmul.mubr.bf16.gmra.mxu0 %v1886
        %v2014 = vpop.f32.mrf.mxu0
        %v2015 = vadd.f32 0.0, %v2014
        %v2016 = vpop.f32.mrf.mxu0
        %v2017 = vpop.f32.mrf.mxu0
        %v2018 = vadd.f32 0.0, %v2017
        %v2019 = vpop.f32.mrf.mxu0
        %2020 = vmatprep.mubr.bf16.mxu0 0
        %2021 = vmatmul.mubr.bf16.gmra.mxu0 %v1887
        %v2022 = vpop.f32.mrf.mxu0
        %v2023 = vadd.f32 0.0, %v2022
        %v2024 = vpop.f32.mrf.mxu0
        %v2025 = vpop.f32.mrf.mxu0
        %v2026 = vadd.f32 0.0, %v2025
        %v2027 = vpop.f32.mrf.mxu0
        %2028 = vmatprep.mubr.bf16.mxu0 0
        %2029 = vmatmul.mubr.bf16.gmra.mxu0 %v1888
        %v2030 = vpop.f32.mrf.mxu0
        %v2031 = vadd.f32 0.0, %v2030
        %v2032 = vpop.f32.mrf.mxu0
        %v2033 = vpop.f32.mrf.mxu0
        %v2034 = vadd.f32 0.0, %v2033
        %v2035 = vpop.f32.mrf.mxu0
        %2036 = vmatprep.mubr.bf16.mxu0 0
        %2037 = vmatmul.mubr.bf16.gmra.mxu0 %v1889
        %v2038 = vpop.f32.mrf.mxu0
        %v2039 = vadd.f32 0.0, %v2038
        %v2040 = vpop.f32.mrf.mxu0
        %v2041 = vpop.f32.mrf.mxu0
        %v2042 = vadd.f32 0.0, %v2041
        %v2043 = vpop.f32.mrf.mxu0
        %2044 = vmatprep.mubr.bf16.mxu0 0
        %2045 = vmatmul.mubr.bf16.gmra.mxu0 %v1890
        %v2046 = vpop.f32.mrf.mxu0
        %v2047 = vadd.f32 0.0, %v2046
        %v2048 = vpop.f32.mrf.mxu0
        %v2049 = vpop.f32.mrf.mxu0
        %v2050 = vadd.f32 0.0, %v2049
        %v2051 = vpop.f32.mrf.mxu0
        %2052 = vmatprep.mubr.bf16.mxu0 0
        %2053 = vmatmul.mubr.bf16.gmra.mxu0 %v1891
        %v2054 = vpop.f32.mrf.mxu0
        %v2055 = vadd.f32 0.0, %v2054
        %v2056 = vpop.f32.mrf.mxu0
        %v2057 = vpop.f32.mrf.mxu0
        %v2058 = vadd.f32 0.0, %v2057
        %v2059 = vpop.f32.mrf.mxu0
        %2060 = vmatprep.mubr.bf16.mxu0 0
        %2061 = vmatmul.mubr.bf16.gmra.mxu0 %v1892
        %v2062 = vpop.f32.mrf.mxu0
        %v2063 = vadd.f32 0.0, %v2062
        %v2064 = vpop.f32.mrf.mxu0
        %v2065 = vpop.f32.mrf.mxu0
        %v2066 = vadd.f32 0.0, %v2065
        %v2067 = vpop.f32.mrf.mxu0
        %2068 = vmatprep.mubr.bf16.mxu0 0
        %2069 = vmatmul.mubr.bf16.gmra.mxu0 %v1893
        %v2070 = vpop.f32.mrf.mxu0
        %v2071 = vadd.f32 0.0, %v2070
        %v2072 = vpop.f32.mrf.mxu0
        %v2073 = vpop.f32.mrf.mxu0
        %v2074 = vadd.f32 0.0, %v2073
        %v2075 = vpop.f32.mrf.mxu0
        %2076 = vmatprep.mubr.bf16.mxu0 0
        %2077 = vmatmul.mubr.bf16.gmra.mxu0 %v1894
        %v2078 = vpop.f32.mrf.mxu0
        %v2079 = vadd.f32 0.0, %v2078
        %v2080 = vpop.f32.mrf.mxu0
        %v2081 = vpop.f32.mrf.mxu0
        %v2082 = vadd.f32 0.0, %v2081
        %v2083 = vpop.f32.mrf.mxu0
        %2084 = vmatprep.mubr.bf16.mxu0 0
        %2085 = vmatmul.mubr.bf16.gmra.mxu0 %v1895
        %v2086 = vpop.f32.mrf.mxu0
        %v2087 = vadd.f32 0.0, %v2086
        %v2088 = vpop.f32.mrf.mxu0
        %v2089 = vpop.f32.mrf.mxu0
        %v2090 = vadd.f32 0.0, %v2089
        %v2091 = vpop.f32.mrf.mxu0
        %2092 = vmatprep.mubr.bf16.mxu0 0
        %2093 = vmatmul.mubr.bf16.gmra.mxu0 %v1896
        %v2094 = vpop.f32.mrf.mxu0
        %v2095 = vadd.f32 0.0, %v2094
        %v2096 = vpop.f32.mrf.mxu0
        %v2097 = vpop.f32.mrf.mxu0
        %v2098 = vadd.f32 0.0, %v2097
        %v2099 = vpop.f32.mrf.mxu0
        %2100 = vmatprep.mubr.bf16.mxu0 0
        %2101 = vmatmul.mubr.bf16.gmra.mxu0 %v1897
        %v2102 = vpop.f32.mrf.mxu0
        %v2103 = vadd.f32 0.0, %v2102
        %v2104 = vpop.f32.mrf.mxu0
        %v2105 = vpop.f32.mrf.mxu0
        %v2106 = vadd.f32 0.0, %v2105
        %v2107 = vpop.f32.mrf.mxu0
        %2108 = vmatprep.mubr.bf16.mxu0 0
        %2109 = vmatmul.mubr.bf16.gmra.mxu0 %v1898
        %v2110 = vpop.f32.mrf.mxu0
        %v2111 = vadd.f32 0.0, %v2110
        %v2112 = vpop.f32.mrf.mxu0
        %v2113 = vpop.f32.mrf.mxu0
        %v2114 = vadd.f32 0.0, %v2113
        %v2115 = vpop.f32.mrf.mxu0
        %2116 = vmatprep.mubr.bf16.mxu0 0
        %2117 = vmatmul.mubr.bf16.gmra.mxu0 %v1899
        %v2118 = vpop.f32.mrf.mxu0
        %v2119 = vadd.f32 0.0, %v2118
        %v2120 = vpop.f32.mrf.mxu0
        %v2121 = vpop.f32.mrf.mxu0
        %v2122 = vadd.f32 0.0, %v2121
        %v2123 = vpop.f32.mrf.mxu0
        %2124 = vdwg.mxu0
        %v2125 = vadd.f32 %v1738, %v1999
        %v2126 = vadd.f32 %v1739, %v2002
        %v2127 = vadd.f32 %v1740, %v2007
        %v2128 = vadd.f32 %v1741, %v2010
        %v2129 = vadd.f32 %v1742, %v2015
        %v2130 = vadd.f32 %v1743, %v2018
        %v2131 = vadd.f32 %v1744, %v2023
        %v2132 = vadd.f32 %v1745, %v2026
        %v2133 = vadd.f32 %v1746, %v2031
        %v2134 = vadd.f32 %v1747, %v2034
        %v2135 = vadd.f32 %v1748, %v2039
        %v2136 = vadd.f32 %v1749, %v2042
        %v2137 = vadd.f32 %v1750, %v2047
        %v2138 = vadd.f32 %v1751, %v2050
        %v2139 = vadd.f32 %v1752, %v2055
        %v2140 = vadd.f32 %v1753, %v2058
        %v2141 = vadd.f32 %v1754, %v2063
        %v2142 = vadd.f32 %v1755, %v2066
        %v2143 = vadd.f32 %v1756, %v2071
        %v2144 = vadd.f32 %v1757, %v2074
        %v2145 = vadd.f32 %v1758, %v2079
        %v2146 = vadd.f32 %v1759, %v2082
        %v2147 = vadd.f32 %v1760, %v2087
        %v2148 = vadd.f32 %v1761, %v2090
        %v2149 = vadd.f32 %v1762, %v2095
        %v2150 = vadd.f32 %v1763, %v2098
        %v2151 = vadd.f32 %v1764, %v2103
        %v2152 = vadd.f32 %v1765, %v2106
        %v2153 = vadd.f32 %v1766, %v2111
        %v2154 = vadd.f32 %v1767, %v2114
        %v2155 = vadd.f32 %v1768, %v2119
        %v2156 = vadd.f32 %v1769, %v2122
        %v2157 = vld [vmem:[%s1770] sm:$0xf]
        %v2158 = vld [vmem:[%s1770 + $0x4] sm:$0xf]
        %v2159 = vld [vmem:[%s1770 + $0x8] sm:$0x1]
        %v2160 = vld [vmem:[%s1770 + $0xc] sm:$0xf]
        %v2161 = vld [vmem:[%s1770 + $0x10] sm:$0xf]
        %v2162 = vld [vmem:[%s1770 + $0x14] sm:$0x1]
        %v2163 = vld [vmem:[%s1770 + $0x18] sm:$0xf]
        %v2164 = vld [vmem:[%s1770 + $0x1c] sm:$0xf]
        %v2165 = vld [vmem:[%s1770 + $0x20] sm:$0x1]
        %v2166 = vld [vmem:[%s1770 + $0x24] sm:$0xf]
        %v2167 = vld [vmem:[%s1770 + $0x28] sm:$0xf]
        %v2168 = vld [vmem:[%s1770 + $0x2c] sm:$0x1]
        %v2169 = vld [vmem:[%s1770 + $0x30] sm:$0xf]
        %v2170 = vld [vmem:[%s1770 + $0x34] sm:$0xf]
        %v2171 = vld [vmem:[%s1770 + $0x38] sm:$0x1]
        %v2172 = vld [vmem:[%s1770 + $0x3c] sm:$0xf]
        %v2173 = vld [vmem:[%s1770 + $0x40] sm:$0xf]
        %v2174 = vld [vmem:[%s1770 + $0x44] sm:$0x1]
        %v2175 = vld [vmem:[%s1770 + $0x48] sm:$0xf]
        %v2176 = vld [vmem:[%s1770 + $0x4c] sm:$0xf]
        %v2177 = vld [vmem:[%s1770 + $0x50] sm:$0x1]
        %v2178 = vld [vmem:[%s1770 + $0x54] sm:$0xf]
        %v2179 = vld [vmem:[%s1770 + $0x58] sm:$0xf]
        %v2180 = vld [vmem:[%s1770 + $0x5c] sm:$0x1]
        %v2181 = vld [vmem:[%s1770 + $0x60] sm:$0xf]
        %v2182 = vld [vmem:[%s1770 + $0x64] sm:$0xf]
        %v2183 = vld [vmem:[%s1770 + $0x68] sm:$0x1]
        %v2184 = vld [vmem:[%s1770 + $0x6c] sm:$0xf]
        %v2185 = vld [vmem:[%s1770 + $0x70] sm:$0xf]
        %v2186 = vld [vmem:[%s1770 + $0x74] sm:$0x1]
        %v2187 = vld [vmem:[%s1770 + $0x78] sm:$0xf]
        %v2188 = vld [vmem:[%s1770 + $0x7c] sm:$0xf]
        %v2189 = vld [vmem:[%s1770 + $0x80] sm:$0x1]
        %v2190 = vld [vmem:[%s1770 + $0x84] sm:$0xf]
        %v2191 = vld [vmem:[%s1770 + $0x88] sm:$0xf]
        %v2192 = vld [vmem:[%s1770 + $0x8c] sm:$0x1]
        %v2193 = vld [vmem:[%s1770 + $0x90] sm:$0xf]
        %v2194 = vld [vmem:[%s1770 + $0x94] sm:$0xf]
        %v2195 = vld [vmem:[%s1770 + $0x98] sm:$0x1]
        %v2196 = vld [vmem:[%s1770 + $0x9c] sm:$0xf]
        %v2197 = vld [vmem:[%s1770 + $0xa0] sm:$0xf]
        %v2198 = vld [vmem:[%s1770 + $0xa4] sm:$0x1]
        %v2199 = vld [vmem:[%s1770 + $0xa8] sm:$0xf]
        %v2200 = vld [vmem:[%s1770 + $0xac] sm:$0xf]
        %v2201 = vld [vmem:[%s1770 + $0xb0] sm:$0x1]
        %v2202 = vld [vmem:[%s1770 + $0xb4] sm:$0xf]
        %v2203 = vld [vmem:[%s1770 + $0xb8] sm:$0xf]
        %v2204 = vld [vmem:[%s1770 + $0xbc] sm:$0x1]
        %v2206 = vshrl.u32 %v2157, 16
        %v2208 = vrot.slane %v2206, 4
        %v2209 = vshll.u32 %v2157, 16
        %v2211 = vrot.slane %v2209, 5
        %v2212 = vor.u32 %v2208, %v2211
        %v2213 = vrot.slane %v2212, 4
        %v2215 = vshll.u32 %v2158, 16
        %v2217 = vrot.slane %v2215, 5
        %v2218 = vsel %vm305, %v2213, %v2217
        %v2219 = vshrl.u32 %v2158, 16
        %v2221 = vrot.slane %v2219, 4
        %v2222 = vor.u32 %v2221, %v2217
        %v2223 = vrot.slane %v2222, 4
        %v2225 = vshll.u32 %v2159, 16
        %v2227 = vrot.slane %v2225, 5
        %v2228 = vsel %vm305, %v2223, %v2227
        %v2230 = vshrl.u32 %v2160, 16
        %v2232 = vrot.slane %v2230, 4
        %v2233 = vshll.u32 %v2160, 16
        %v2235 = vrot.slane %v2233, 5
        %v2236 = vor.u32 %v2232, %v2235
        %v2237 = vrot.slane %v2236, 4
        %v2239 = vshll.u32 %v2161, 16
        %v2241 = vrot.slane %v2239, 5
        %v2242 = vsel %vm305, %v2237, %v2241
        %v2243 = vshrl.u32 %v2161, 16
        %v2245 = vrot.slane %v2243, 4
        %v2246 = vor.u32 %v2245, %v2241
        %v2247 = vrot.slane %v2246, 4
        %v2249 = vshll.u32 %v2162, 16
        %v2251 = vrot.slane %v2249, 5
        %v2252 = vsel %vm305, %v2247, %v2251
        %v2254 = vshrl.u32 %v2163, 16
        %v2256 = vrot.slane %v2254, 4
        %v2257 = vshll.u32 %v2163, 16
        %v2259 = vrot.slane %v2257, 5
        %v2260 = vor.u32 %v2256, %v2259
        %v2261 = vrot.slane %v2260, 4
        %v2263 = vshll.u32 %v2164, 16
        %v2265 = vrot.slane %v2263, 5
        %v2266 = vsel %vm305, %v2261, %v2265
        %v2267 = vshrl.u32 %v2164, 16
        %v2269 = vrot.slane %v2267, 4
        %v2270 = vor.u32 %v2269, %v2265
        %v2271 = vrot.slane %v2270, 4
        %v2273 = vshll.u32 %v2165, 16
        %v2275 = vrot.slane %v2273, 5
        %v2276 = vsel %vm305, %v2271, %v2275
        %v2278 = vshrl.u32 %v2166, 16
        %v2280 = vrot.slane %v2278, 4
        %v2281 = vshll.u32 %v2166, 16
        %v2283 = vrot.slane %v2281, 5
        %v2284 = vor.u32 %v2280, %v2283
        %v2285 = vrot.slane %v2284, 4
        %v2287 = vshll.u32 %v2167, 16
        %v2289 = vrot.slane %v2287, 5
        %v2290 = vsel %vm305, %v2285, %v2289
        %v2291 = vshrl.u32 %v2167, 16
        %v2293 = vrot.slane %v2291, 4
        %v2294 = vor.u32 %v2293, %v2289
        %v2295 = vrot.slane %v2294, 4
        %v2297 = vshll.u32 %v2168, 16
        %v2299 = vrot.slane %v2297, 5
        %v2300 = vsel %vm305, %v2295, %v2299
        %v2302 = vshrl.u32 %v2169, 16
        %v2304 = vrot.slane %v2302, 4
        %v2305 = vshll.u32 %v2169, 16
        %v2307 = vrot.slane %v2305, 5
        %v2308 = vor.u32 %v2304, %v2307
        %v2309 = vrot.slane %v2308, 4
        %v2311 = vshll.u32 %v2170, 16
        %v2313 = vrot.slane %v2311, 5
        %v2314 = vsel %vm305, %v2309, %v2313
        %v2315 = vshrl.u32 %v2170, 16
        %v2317 = vrot.slane %v2315, 4
        %v2318 = vor.u32 %v2317, %v2313
        %v2319 = vrot.slane %v2318, 4
        %v2321 = vshll.u32 %v2171, 16
        %v2323 = vrot.slane %v2321, 5
        %v2324 = vsel %vm305, %v2319, %v2323
        %v2326 = vshrl.u32 %v2172, 16
        %v2328 = vrot.slane %v2326, 4
        %v2329 = vshll.u32 %v2172, 16
        %v2331 = vrot.slane %v2329, 5
        %v2332 = vor.u32 %v2328, %v2331
        %v2333 = vrot.slane %v2332, 4
        %v2335 = vshll.u32 %v2173, 16
        %v2337 = vrot.slane %v2335, 5
        %v2338 = vsel %vm305, %v2333, %v2337
        %v2339 = vshrl.u32 %v2173, 16
        %v2341 = vrot.slane %v2339, 4
        %v2342 = vor.u32 %v2341, %v2337
        %v2343 = vrot.slane %v2342, 4
        %v2345 = vshll.u32 %v2174, 16
        %v2347 = vrot.slane %v2345, 5
        %v2348 = vsel %vm305, %v2343, %v2347
        %v2350 = vshrl.u32 %v2175, 16
        %v2352 = vrot.slane %v2350, 4
        %v2353 = vshll.u32 %v2175, 16
        %v2355 = vrot.slane %v2353, 5
        %v2356 = vor.u32 %v2352, %v2355
        %v2357 = vrot.slane %v2356, 4
        %v2359 = vshll.u32 %v2176, 16
        %v2361 = vrot.slane %v2359, 5
        %v2362 = vsel %vm305, %v2357, %v2361
        %v2363 = vshrl.u32 %v2176, 16
        %v2365 = vrot.slane %v2363, 4
        %v2366 = vor.u32 %v2365, %v2361
        %v2367 = vrot.slane %v2366, 4
        %v2369 = vshll.u32 %v2177, 16
        %v2371 = vrot.slane %v2369, 5
        %v2372 = vsel %vm305, %v2367, %v2371
        %v2374 = vshrl.u32 %v2178, 16
        %v2376 = vrot.slane %v2374, 4
        %v2377 = vshll.u32 %v2178, 16
        %v2379 = vrot.slane %v2377, 5
        %v2380 = vor.u32 %v2376, %v2379
        %v2381 = vrot.slane %v2380, 4
        %v2383 = vshll.u32 %v2179, 16
        %v2385 = vrot.slane %v2383, 5
        %v2386 = vsel %vm305, %v2381, %v2385
        %v2387 = vshrl.u32 %v2179, 16
        %v2389 = vrot.slane %v2387, 4
        %v2390 = vor.u32 %v2389, %v2385
        %v2391 = vrot.slane %v2390, 4
        %v2393 = vshll.u32 %v2180, 16
        %v2395 = vrot.slane %v2393, 5
        %v2396 = vsel %vm305, %v2391, %v2395
        %v2398 = vshrl.u32 %v2181, 16
        %v2400 = vrot.slane %v2398, 4
        %v2401 = vshll.u32 %v2181, 16
        %v2403 = vrot.slane %v2401, 5
        %v2404 = vor.u32 %v2400, %v2403
        %v2405 = vrot.slane %v2404, 4
        %v2407 = vshll.u32 %v2182, 16
        %v2409 = vrot.slane %v2407, 5
        %v2410 = vsel %vm305, %v2405, %v2409
        %v2411 = vshrl.u32 %v2182, 16
        %v2413 = vrot.slane %v2411, 4
        %v2414 = vor.u32 %v2413, %v2409
        %v2415 = vrot.slane %v2414, 4
        %v2417 = vshll.u32 %v2183, 16
        %v2419 = vrot.slane %v2417, 5
        %v2420 = vsel %vm305, %v2415, %v2419
        %v2422 = vshrl.u32 %v2184, 16
        %v2424 = vrot.slane %v2422, 4
        %v2425 = vshll.u32 %v2184, 16
        %v2427 = vrot.slane %v2425, 5
        %v2428 = vor.u32 %v2424, %v2427
        %v2429 = vrot.slane %v2428, 4
        %v2431 = vshll.u32 %v2185, 16
        %v2433 = vrot.slane %v2431, 5
        %v2434 = vsel %vm305, %v2429, %v2433
        %v2435 = vshrl.u32 %v2185, 16
        %v2437 = vrot.slane %v2435, 4
        %v2438 = vor.u32 %v2437, %v2433
        %v2439 = vrot.slane %v2438, 4
        %v2441 = vshll.u32 %v2186, 16
        %v2443 = vrot.slane %v2441, 5
        %v2444 = vsel %vm305, %v2439, %v2443
        %v2446 = vshrl.u32 %v2187, 16
        %v2448 = vrot.slane %v2446, 4
        %v2449 = vshll.u32 %v2187, 16
        %v2451 = vrot.slane %v2449, 5
        %v2452 = vor.u32 %v2448, %v2451
        %v2453 = vrot.slane %v2452, 4
        %v2455 = vshll.u32 %v2188, 16
        %v2457 = vrot.slane %v2455, 5
        %v2458 = vsel %vm305, %v2453, %v2457
        %v2459 = vshrl.u32 %v2188, 16
        %v2461 = vrot.slane %v2459, 4
        %v2462 = vor.u32 %v2461, %v2457
        %v2463 = vrot.slane %v2462, 4
        %v2465 = vshll.u32 %v2189, 16
        %v2467 = vrot.slane %v2465, 5
        %v2468 = vsel %vm305, %v2463, %v2467
        %v2470 = vshrl.u32 %v2190, 16
        %v2472 = vrot.slane %v2470, 4
        %v2473 = vshll.u32 %v2190, 16
        %v2475 = vrot.slane %v2473, 5
        %v2476 = vor.u32 %v2472, %v2475
        %v2477 = vrot.slane %v2476, 4
        %v2479 = vshll.u32 %v2191, 16
        %v2481 = vrot.slane %v2479, 5
        %v2482 = vsel %vm305, %v2477, %v2481
        %v2483 = vshrl.u32 %v2191, 16
        %v2485 = vrot.slane %v2483, 4
        %v2486 = vor.u32 %v2485, %v2481
        %v2487 = vrot.slane %v2486, 4
        %v2489 = vshll.u32 %v2192, 16
        %v2491 = vrot.slane %v2489, 5
        %v2492 = vsel %vm305, %v2487, %v2491
        %v2494 = vshrl.u32 %v2193, 16
        %v2496 = vrot.slane %v2494, 4
        %v2497 = vshll.u32 %v2193, 16
        %v2499 = vrot.slane %v2497, 5
        %v2500 = vor.u32 %v2496, %v2499
        %v2501 = vrot.slane %v2500, 4
        %v2503 = vshll.u32 %v2194, 16
        %v2505 = vrot.slane %v2503, 5
        %v2506 = vsel %vm305, %v2501, %v2505
        %v2507 = vshrl.u32 %v2194, 16
        %v2509 = vrot.slane %v2507, 4
        %v2510 = vor.u32 %v2509, %v2505
        %v2511 = vrot.slane %v2510, 4
        %v2513 = vshll.u32 %v2195, 16
        %v2515 = vrot.slane %v2513, 5
        %v2516 = vsel %vm305, %v2511, %v2515
        %v2518 = vshrl.u32 %v2196, 16
        %v2520 = vrot.slane %v2518, 4
        %v2521 = vshll.u32 %v2196, 16
        %v2523 = vrot.slane %v2521, 5
        %v2524 = vor.u32 %v2520, %v2523
        %v2525 = vrot.slane %v2524, 4
        %v2527 = vshll.u32 %v2197, 16
        %v2529 = vrot.slane %v2527, 5
        %v2530 = vsel %vm305, %v2525, %v2529
        %v2531 = vshrl.u32 %v2197, 16
        %v2533 = vrot.slane %v2531, 4
        %v2534 = vor.u32 %v2533, %v2529
        %v2535 = vrot.slane %v2534, 4
        %v2537 = vshll.u32 %v2198, 16
        %v2539 = vrot.slane %v2537, 5
        %v2540 = vsel %vm305, %v2535, %v2539
        %v2542 = vshrl.u32 %v2199, 16
        %v2544 = vrot.slane %v2542, 4
        %v2545 = vshll.u32 %v2199, 16
        %v2547 = vrot.slane %v2545, 5
        %v2548 = vor.u32 %v2544, %v2547
        %v2549 = vrot.slane %v2548, 4
        %v2551 = vshll.u32 %v2200, 16
        %v2553 = vrot.slane %v2551, 5
        %v2554 = vsel %vm305, %v2549, %v2553
        %v2555 = vshrl.u32 %v2200, 16
        %v2557 = vrot.slane %v2555, 4
        %v2558 = vor.u32 %v2557, %v2553
        %v2559 = vrot.slane %v2558, 4
        %v2561 = vshll.u32 %v2201, 16
        %v2563 = vrot.slane %v2561, 5
        %v2564 = vsel %vm305, %v2559, %v2563
        %v2566 = vshrl.u32 %v2202, 16
        %v2568 = vrot.slane %v2566, 4
        %v2569 = vshll.u32 %v2202, 16
        %v2571 = vrot.slane %v2569, 5
        %v2572 = vor.u32 %v2568, %v2571
        %v2573 = vrot.slane %v2572, 4
        %v2575 = vshll.u32 %v2203, 16
        %v2577 = vrot.slane %v2575, 5
        %v2578 = vsel %vm305, %v2573, %v2577
        %v2579 = vshrl.u32 %v2203, 16
        %v2581 = vrot.slane %v2579, 4
        %v2582 = vor.u32 %v2581, %v2577
        %v2583 = vrot.slane %v2582, 4
        %v2585 = vshll.u32 %v2204, 16
        %v2587 = vrot.slane %v2585, 5
        %v2588 = vsel %vm305, %v2583, %v2587
        %s2589 = scalar_lea.vmem %s1, 256
        %v2590 = vld [vmem:[%s2589] sm:$0xf]
        %v2591 = vld [vmem:[%s2589 + $0x4] sm:$0xf]
        %v2592 = vld [vmem:[%s2589 + $0x8] sm:$0xf]
        %v2593 = vld [vmem:[%s2589 + $0xc] sm:$0xf]
        %v2594 = vld [vmem:[%s2589 + $0x10] sm:$0xf]
        %v2595 = vld [vmem:[%s2589 + $0x14] sm:$0xf]
        %v2596 = vld [vmem:[%s2589 + $0x18] sm:$0xf]
        %v2597 = vld [vmem:[%s2589 + $0x1c] sm:$0xf]
        %v2598 = vld [vmem:[%s2589 + $0x20] sm:$0xf]
        %v2599 = vld [vmem:[%s2589 + $0x24] sm:$0xf]
        %v2600 = vld [vmem:[%s2589 + $0x28] sm:$0xf]
        %v2601 = vld [vmem:[%s2589 + $0x2c] sm:$0xf]
        %v2602 = vld [vmem:[%s2589 + $0x30] sm:$0xf]
        %v2603 = vld [vmem:[%s2589 + $0x34] sm:$0xf]
        %v2604 = vld [vmem:[%s2589 + $0x38] sm:$0xf]
        %v2605 = vld [vmem:[%s2589 + $0x3c] sm:$0xf]
        %v2606 = vunpack.c.l.b16 %v2218
        %v2607 = vunpack.c.l.b16 %v2228
        %v2608 = vunpack.c.l.b16 %v2242
        %v2609 = vunpack.c.l.b16 %v2252
        %v2610 = vunpack.c.l.b16 %v2266
        %v2611 = vunpack.c.l.b16 %v2276
        %v2612 = vunpack.c.l.b16 %v2290
        %v2613 = vunpack.c.l.b16 %v2300
        %v2614 = vunpack.c.l.b16 %v2314
        %v2615 = vunpack.c.l.b16 %v2324
        %v2616 = vunpack.c.l.b16 %v2338
        %v2617 = vunpack.c.l.b16 %v2348
        %v2618 = vunpack.c.l.b16 %v2362
        %v2619 = vunpack.c.l.b16 %v2372
        %v2620 = vunpack.c.l.b16 %v2386
        %v2621 = vunpack.c.l.b16 %v2396
        %v2622 = vunpack.c.l.b16 %v2410
        %v2623 = vunpack.c.l.b16 %v2420
        %v2624 = vunpack.c.l.b16 %v2434
        %v2625 = vunpack.c.l.b16 %v2444
        %v2626 = vunpack.c.l.b16 %v2458
        %v2627 = vunpack.c.l.b16 %v2468
        %v2628 = vunpack.c.l.b16 %v2482
        %v2629 = vunpack.c.l.b16 %v2492
        %v2630 = vunpack.c.l.b16 %v2506
        %v2631 = vunpack.c.l.b16 %v2516
        %v2632 = vunpack.c.l.b16 %v2530
        %v2633 = vunpack.c.l.b16 %v2540
        %v2634 = vunpack.c.l.b16 %v2554
        %v2635 = vunpack.c.l.b16 %v2564
        %v2636 = vunpack.c.l.b16 %v2578
        %v2637 = vunpack.c.l.b16 %v2588
        %v2638 = vpack.c.b16 %v2607, %v2606
        %v2639 = vpack.c.b16 %v2609, %v2608
        %v2640 = vpack.c.b16 %v2611, %v2610
        %v2641 = vpack.c.b16 %v2613, %v2612
        %v2642 = vpack.c.b16 %v2615, %v2614
        %v2643 = vpack.c.b16 %v2617, %v2616
        %v2644 = vpack.c.b16 %v2619, %v2618
        %v2645 = vpack.c.b16 %v2621, %v2620
        %v2646 = vpack.c.b16 %v2623, %v2622
        %v2647 = vpack.c.b16 %v2625, %v2624
        %v2648 = vpack.c.b16 %v2627, %v2626
        %v2649 = vpack.c.b16 %v2629, %v2628
        %v2650 = vpack.c.b16 %v2631, %v2630
        %v2651 = vpack.c.b16 %v2633, %v2632
        %v2652 = vpack.c.b16 %v2635, %v2634
        %v2653 = vpack.c.b16 %v2637, %v2636
        %v2686 = vunpack.c.l.b16 %v2590
        %v2687 = vunpack.c.l.b16 %v2591
        %v2688 = vunpack.c.l.b16 %v2592
        %v2689 = vunpack.c.l.b16 %v2593
        %v2690 = vunpack.c.l.b16 %v2594
        %v2691 = vunpack.c.l.b16 %v2595
        %v2692 = vunpack.c.l.b16 %v2596
        %v2693 = vunpack.c.l.b16 %v2597
        %v2694 = vunpack.c.l.b16 %v2598
        %v2695 = vunpack.c.l.b16 %v2599
        %v2696 = vunpack.c.l.b16 %v2600
        %v2697 = vunpack.c.l.b16 %v2601
        %v2698 = vunpack.c.l.b16 %v2602
        %v2699 = vunpack.c.l.b16 %v2603
        %v2700 = vunpack.c.l.b16 %v2604
        %v2701 = vunpack.c.l.b16 %v2605
        %v2702 = vpack.c.b16 %v2687, %v2686
        %v2703 = vpack.c.b16 %v2689, %v2688
        %v2704 = vpack.c.b16 %v2691, %v2690
        %v2705 = vpack.c.b16 %v2693, %v2692
        %v2706 = vpack.c.b16 %v2695, %v2694
        %v2707 = vpack.c.b16 %v2697, %v2696
        %v2708 = vpack.c.b16 %v2699, %v2698
        %v2709 = vpack.c.b16 %v2701, %v2700
        %2718 = vmatprep.subr.bf16.mxu0 0
        %2719 = vmatpush1.bf16.msra.mxu0 %v2709
        %2720 = vmatprep.subr.bf16.mxu0 0
        %2721 = vmatpush1.bf16.msra.mxu0 %v2708
        %2722 = vmatprep.subr.bf16.mxu0 0
        %2723 = vmatpush1.bf16.msra.mxu0 %v2707
        %2724 = vmatprep.subr.bf16.mxu0 0
        %2725 = vmatpush1.bf16.msra.mxu0 %v2706
        %2726 = vmatprep.subr.bf16.mxu0 0
        %2727 = vmatpush1.bf16.msra.mxu0 %v2705
        %2728 = vmatprep.subr.bf16.mxu0 0
        %2729 = vmatpush1.bf16.msra.mxu0 %v2704
        %2730 = vmatprep.subr.bf16.mxu0 0
        %2731 = vmatpush1.bf16.msra.mxu0 %v2703
        %2732 = vmatprep.subr.bf16.mxu0 0
        %2733 = vmatpush1.bf16.msra.mxu0 %v2702
        %2734 = vmatprep.subr.bf16.mxu0 0
        %2735 = vmatpush2.bf16.msra.mxu0 0
        %2736 = vmatprep.subr.bf16.mxu0 0
        %2737 = vmatpush2.bf16.msra.mxu0 0
        %2738 = vmatprep.subr.bf16.mxu0 0
        %2739 = vmatpush2.bf16.msra.mxu0 0
        %2740 = vmatprep.subr.bf16.mxu0 0
        %2741 = vmatpush2.bf16.msra.mxu0 0
        %2742 = vmatprep.subr.bf16.mxu0 0
        %2743 = vmatpush2.bf16.msra.mxu0 0
        %2744 = vmatprep.subr.bf16.mxu0 0
        %2745 = vmatpush2.bf16.msra.mxu0 0
        %2746 = vmatprep.subr.bf16.mxu0 0
        %2747 = vmatpush2.bf16.msra.mxu0 0
        %2748 = vmatprep.subr.bf16.mxu0 0
        %2749 = vmatpush2.bf16.msra.mxu0 0
        %2750 = vmatprep.mubr.bf16.mxu0 0
        %2751 = vmatmul.mubr.bf16.gmra.mxu0 %v2638
        %v2752 = vpop.f32.mrf.mxu0
        %v2753 = vadd.f32 0.0, %v2752
        %v2754 = vpop.f32.mrf.mxu0
        %v2755 = vpop.f32.mrf.mxu0
        %v2756 = vadd.f32 0.0, %v2755
        %v2757 = vpop.f32.mrf.mxu0
        %2758 = vmatprep.mubr.bf16.mxu0 0
        %2759 = vmatmul.mubr.bf16.gmra.mxu0 %v2639
        %v2760 = vpop.f32.mrf.mxu0
        %v2761 = vadd.f32 0.0, %v2760
        %v2762 = vpop.f32.mrf.mxu0
        %v2763 = vpop.f32.mrf.mxu0
        %v2764 = vadd.f32 0.0, %v2763
        %v2765 = vpop.f32.mrf.mxu0
        %2766 = vmatprep.mubr.bf16.mxu0 0
        %2767 = vmatmul.mubr.bf16.gmra.mxu0 %v2640
        %v2768 = vpop.f32.mrf.mxu0
        %v2769 = vadd.f32 0.0, %v2768
        %v2770 = vpop.f32.mrf.mxu0
        %v2771 = vpop.f32.mrf.mxu0
        %v2772 = vadd.f32 0.0, %v2771
        %v2773 = vpop.f32.mrf.mxu0
        %2774 = vmatprep.mubr.bf16.mxu0 0
        %2775 = vmatmul.mubr.bf16.gmra.mxu0 %v2641
        %v2776 = vpop.f32.mrf.mxu0
        %v2777 = vadd.f32 0.0, %v2776
        %v2778 = vpop.f32.mrf.mxu0
        %v2779 = vpop.f32.mrf.mxu0
        %v2780 = vadd.f32 0.0, %v2779
        %v2781 = vpop.f32.mrf.mxu0
        %2782 = vmatprep.mubr.bf16.mxu0 0
        %2783 = vmatmul.mubr.bf16.gmra.mxu0 %v2642
        %v2784 = vpop.f32.mrf.mxu0
        %v2785 = vadd.f32 0.0, %v2784
        %v2786 = vpop.f32.mrf.mxu0
        %v2787 = vpop.f32.mrf.mxu0
        %v2788 = vadd.f32 0.0, %v2787
        %v2789 = vpop.f32.mrf.mxu0
        %2790 = vmatprep.mubr.bf16.mxu0 0
        %2791 = vmatmul.mubr.bf16.gmra.mxu0 %v2643
        %v2792 = vpop.f32.mrf.mxu0
        %v2793 = vadd.f32 0.0, %v2792
        %v2794 = vpop.f32.mrf.mxu0
        %v2795 = vpop.f32.mrf.mxu0
        %v2796 = vadd.f32 0.0, %v2795
        %v2797 = vpop.f32.mrf.mxu0
        %2798 = vmatprep.mubr.bf16.mxu0 0
        %2799 = vmatmul.mubr.bf16.gmra.mxu0 %v2644
        %v2800 = vpop.f32.mrf.mxu0
        %v2801 = vadd.f32 0.0, %v2800
        %v2802 = vpop.f32.mrf.mxu0
        %v2803 = vpop.f32.mrf.mxu0
        %v2804 = vadd.f32 0.0, %v2803
        %v2805 = vpop.f32.mrf.mxu0
        %2806 = vmatprep.mubr.bf16.mxu0 0
        %2807 = vmatmul.mubr.bf16.gmra.mxu0 %v2645
        %v2808 = vpop.f32.mrf.mxu0
        %v2809 = vadd.f32 0.0, %v2808
        %v2810 = vpop.f32.mrf.mxu0
        %v2811 = vpop.f32.mrf.mxu0
        %v2812 = vadd.f32 0.0, %v2811
        %v2813 = vpop.f32.mrf.mxu0
        %2814 = vmatprep.mubr.bf16.mxu0 0
        %2815 = vmatmul.mubr.bf16.gmra.mxu0 %v2646
        %v2816 = vpop.f32.mrf.mxu0
        %v2817 = vadd.f32 0.0, %v2816
        %v2818 = vpop.f32.mrf.mxu0
        %v2819 = vpop.f32.mrf.mxu0
        %v2820 = vadd.f32 0.0, %v2819
        %v2821 = vpop.f32.mrf.mxu0
        %2822 = vmatprep.mubr.bf16.mxu0 0
        %2823 = vmatmul.mubr.bf16.gmra.mxu0 %v2647
        %v2824 = vpop.f32.mrf.mxu0
        %v2825 = vadd.f32 0.0, %v2824
        %v2826 = vpop.f32.mrf.mxu0
        %v2827 = vpop.f32.mrf.mxu0
        %v2828 = vadd.f32 0.0, %v2827
        %v2829 = vpop.f32.mrf.mxu0
        %2830 = vmatprep.mubr.bf16.mxu0 0
        %2831 = vmatmul.mubr.bf16.gmra.mxu0 %v2648
        %v2832 = vpop.f32.mrf.mxu0
        %v2833 = vadd.f32 0.0, %v2832
        %v2834 = vpop.f32.mrf.mxu0
        %v2835 = vpop.f32.mrf.mxu0
        %v2836 = vadd.f32 0.0, %v2835
        %v2837 = vpop.f32.mrf.mxu0
        %2838 = vmatprep.mubr.bf16.mxu0 0
        %2839 = vmatmul.mubr.bf16.gmra.mxu0 %v2649
        %v2840 = vpop.f32.mrf.mxu0
        %v2841 = vadd.f32 0.0, %v2840
        %v2842 = vpop.f32.mrf.mxu0
        %v2843 = vpop.f32.mrf.mxu0
        %v2844 = vadd.f32 0.0, %v2843
        %v2845 = vpop.f32.mrf.mxu0
        %2846 = vmatprep.mubr.bf16.mxu0 0
        %2847 = vmatmul.mubr.bf16.gmra.mxu0 %v2650
        %v2848 = vpop.f32.mrf.mxu0
        %v2849 = vadd.f32 0.0, %v2848
        %v2850 = vpop.f32.mrf.mxu0
        %v2851 = vpop.f32.mrf.mxu0
        %v2852 = vadd.f32 0.0, %v2851
        %v2853 = vpop.f32.mrf.mxu0
        %2854 = vmatprep.mubr.bf16.mxu0 0
        %2855 = vmatmul.mubr.bf16.gmra.mxu0 %v2651
        %v2856 = vpop.f32.mrf.mxu0
        %v2857 = vadd.f32 0.0, %v2856
        %v2858 = vpop.f32.mrf.mxu0
        %v2859 = vpop.f32.mrf.mxu0
        %v2860 = vadd.f32 0.0, %v2859
        %v2861 = vpop.f32.mrf.mxu0
        %2862 = vmatprep.mubr.bf16.mxu0 0
        %2863 = vmatmul.mubr.bf16.gmra.mxu0 %v2652
        %v2864 = vpop.f32.mrf.mxu0
        %v2865 = vadd.f32 0.0, %v2864
        %v2866 = vpop.f32.mrf.mxu0
        %v2867 = vpop.f32.mrf.mxu0
        %v2868 = vadd.f32 0.0, %v2867
        %v2869 = vpop.f32.mrf.mxu0
        %2870 = vmatprep.mubr.bf16.mxu0 0
        %2871 = vmatmul.mubr.bf16.gmra.mxu0 %v2653
        %v2872 = vpop.f32.mrf.mxu0
        %v2873 = vadd.f32 0.0, %v2872
        %v2874 = vpop.f32.mrf.mxu0
        %v2875 = vpop.f32.mrf.mxu0
        %v2876 = vadd.f32 0.0, %v2875
        %v2877 = vpop.f32.mrf.mxu0
        %2878 = vdwg.mxu0
        %v2879 = vadd.f32 %v2125, %v2753
        %v2880 = vadd.f32 %v2126, %v2756
        %v2881 = vadd.f32 %v2127, %v2761
        %v2882 = vadd.f32 %v2128, %v2764
        %v2883 = vadd.f32 %v2129, %v2769
        %v2884 = vadd.f32 %v2130, %v2772
        %v2885 = vadd.f32 %v2131, %v2777
        %v2886 = vadd.f32 %v2132, %v2780
        %v2887 = vadd.f32 %v2133, %v2785
        %v2888 = vadd.f32 %v2134, %v2788
        %v2889 = vadd.f32 %v2135, %v2793
        %v2890 = vadd.f32 %v2136, %v2796
        %v2891 = vadd.f32 %v2137, %v2801
        %v2892 = vadd.f32 %v2138, %v2804
        %v2893 = vadd.f32 %v2139, %v2809
        %v2894 = vadd.f32 %v2140, %v2812
        %v2895 = vadd.f32 %v2141, %v2817
        %v2896 = vadd.f32 %v2142, %v2820
        %v2897 = vadd.f32 %v2143, %v2825
        %v2898 = vadd.f32 %v2144, %v2828
        %v2899 = vadd.f32 %v2145, %v2833
        %v2900 = vadd.f32 %v2146, %v2836
        %v2901 = vadd.f32 %v2147, %v2841
        %v2902 = vadd.f32 %v2148, %v2844
        %v2903 = vadd.f32 %v2149, %v2849
        %v2904 = vadd.f32 %v2150, %v2852
        %v2905 = vadd.f32 %v2151, %v2857
        %v2906 = vadd.f32 %v2152, %v2860
        %v2907 = vadd.f32 %v2153, %v2865
        %v2908 = vadd.f32 %v2154, %v2868
        %v2909 = vadd.f32 %v2155, %v2873
        %v2910 = vadd.f32 %v2156, %v2876
        %v2911 = vld [vmem:[%s1770] sm:$0xe]
        %v2912 = vld [vmem:[%s1770 + $0xc] sm:$0xe]
        %v2913 = vld [vmem:[%s1770 + $0x18] sm:$0xe]
        %v2914 = vld [vmem:[%s1770 + $0x24] sm:$0xe]
        %v2915 = vld [vmem:[%s1770 + $0x30] sm:$0xe]
        %v2916 = vld [vmem:[%s1770 + $0x3c] sm:$0xe]
        %v2917 = vld [vmem:[%s1770 + $0x48] sm:$0xe]
        %v2918 = vld [vmem:[%s1770 + $0x54] sm:$0xe]
        %v2919 = vld [vmem:[%s1770 + $0x60] sm:$0xe]
        %v2920 = vld [vmem:[%s1770 + $0x6c] sm:$0xe]
        %v2921 = vld [vmem:[%s1770 + $0x78] sm:$0xe]
        %v2922 = vld [vmem:[%s1770 + $0x84] sm:$0xe]
        %v2923 = vld [vmem:[%s1770 + $0x90] sm:$0xe]
        %v2924 = vld [vmem:[%s1770 + $0x9c] sm:$0xe]
        %v2925 = vld [vmem:[%s1770 + $0xa8] sm:$0xe]
        %v2926 = vld [vmem:[%s1770 + $0xb4] sm:$0xe]
        %v2975 = vrot.slane %v2911, 5
        %v2976 = vrot.slane %v2975, 4
        %v2977 = vrot.slane %v2158, 5
        %v2978 = vsel %vm1335, %v2976, %v2977
        %v2979 = vrot.slane %v2977, 4
        %v2980 = vrot.slane %v2159, 5
        %v2981 = vsel %vm1335, %v2979, %v2980
        %v2982 = vrot.slane %v2912, 5
        %v2983 = vrot.slane %v2982, 4
        %v2984 = vrot.slane %v2161, 5
        %v2985 = vsel %vm1335, %v2983, %v2984
        %v2986 = vrot.slane %v2984, 4
        %v2987 = vrot.slane %v2162, 5
        %v2988 = vsel %vm1335, %v2986, %v2987
        %v2989 = vrot.slane %v2913, 5
        %v2990 = vrot.slane %v2989, 4
        %v2991 = vrot.slane %v2164, 5
        %v2992 = vsel %vm1335, %v2990, %v2991
        %v2993 = vrot.slane %v2991, 4
        %v2994 = vrot.slane %v2165, 5
        %v2995 = vsel %vm1335, %v2993, %v2994
        %v2996 = vrot.slane %v2914, 5
        %v2997 = vrot.slane %v2996, 4
        %v2998 = vrot.slane %v2167, 5
        %v2999 = vsel %vm1335, %v2997, %v2998
        %v3000 = vrot.slane %v2998, 4
        %v3001 = vrot.slane %v2168, 5
        %v3002 = vsel %vm1335, %v3000, %v3001
        %v3003 = vrot.slane %v2915, 5
        %v3004 = vrot.slane %v3003, 4
        %v3005 = vrot.slane %v2170, 5
        %v3006 = vsel %vm1335, %v3004, %v3005
        %v3007 = vrot.slane %v3005, 4
        %v3008 = vrot.slane %v2171, 5
        %v3009 = vsel %vm1335, %v3007, %v3008
        %v3010 = vrot.slane %v2916, 5
        %v3011 = vrot.slane %v3010, 4
        %v3012 = vrot.slane %v2173, 5
        %v3013 = vsel %vm1335, %v3011, %v3012
        %v3014 = vrot.slane %v3012, 4
        %v3015 = vrot.slane %v2174, 5
        %v3016 = vsel %vm1335, %v3014, %v3015
        %v3017 = vrot.slane %v2917, 5
        %v3018 = vrot.slane %v3017, 4
        %v3019 = vrot.slane %v2176, 5
        %v3020 = vsel %vm1335, %v3018, %v3019
        %v3021 = vrot.slane %v3019, 4
        %v3022 = vrot.slane %v2177, 5
        %v3023 = vsel %vm1335, %v3021, %v3022
        %v3024 = vrot.slane %v2918, 5
        %v3025 = vrot.slane %v3024, 4
        %v3026 = vrot.slane %v2179, 5
        %v3027 = vsel %vm1335, %v3025, %v3026
        %v3028 = vrot.slane %v3026, 4
        %v3029 = vrot.slane %v2180, 5
        %v3030 = vsel %vm1335, %v3028, %v3029
        %v3031 = vrot.slane %v2919, 5
        %v3032 = vrot.slane %v3031, 4
        %v3033 = vrot.slane %v2182, 5
        %v3034 = vsel %vm1335, %v3032, %v3033
        %v3035 = vrot.slane %v3033, 4
        %v3036 = vrot.slane %v2183, 5
        %v3037 = vsel %vm1335, %v3035, %v3036
        %v3038 = vrot.slane %v2920, 5
        %v3039 = vrot.slane %v3038, 4
        %v3040 = vrot.slane %v2185, 5
        %v3041 = vsel %vm1335, %v3039, %v3040
        %v3042 = vrot.slane %v3040, 4
        %v3043 = vrot.slane %v2186, 5
        %v3044 = vsel %vm1335, %v3042, %v3043
        %v3045 = vrot.slane %v2921, 5
        %v3046 = vrot.slane %v3045, 4
        %v3047 = vrot.slane %v2188, 5
        %v3048 = vsel %vm1335, %v3046, %v3047
        %v3049 = vrot.slane %v3047, 4
        %v3050 = vrot.slane %v2189, 5
        %v3051 = vsel %vm1335, %v3049, %v3050
        %v3052 = vrot.slane %v2922, 5
        %v3053 = vrot.slane %v3052, 4
        %v3054 = vrot.slane %v2191, 5
        %v3055 = vsel %vm1335, %v3053, %v3054
        %v3056 = vrot.slane %v3054, 4
        %v3057 = vrot.slane %v2192, 5
        %v3058 = vsel %vm1335, %v3056, %v3057
        %v3059 = vrot.slane %v2923, 5
        %v3060 = vrot.slane %v3059, 4
        %v3061 = vrot.slane %v2194, 5
        %v3062 = vsel %vm1335, %v3060, %v3061
        %v3063 = vrot.slane %v3061, 4
        %v3064 = vrot.slane %v2195, 5
        %v3065 = vsel %vm1335, %v3063, %v3064
        %v3066 = vrot.slane %v2924, 5
        %v3067 = vrot.slane %v3066, 4
        %v3068 = vrot.slane %v2197, 5
        %v3069 = vsel %vm1335, %v3067, %v3068
        %v3070 = vrot.slane %v3068, 4
        %v3071 = vrot.slane %v2198, 5
        %v3072 = vsel %vm1335, %v3070, %v3071
        %v3073 = vrot.slane %v2925, 5
        %v3074 = vrot.slane %v3073, 4
        %v3075 = vrot.slane %v2200, 5
        %v3076 = vsel %vm1335, %v3074, %v3075
        %v3077 = vrot.slane %v3075, 4
        %v3078 = vrot.slane %v2201, 5
        %v3079 = vsel %vm1335, %v3077, %v3078
        %v3080 = vrot.slane %v2926, 5
        %v3081 = vrot.slane %v3080, 4
        %v3082 = vrot.slane %v2203, 5
        %v3083 = vsel %vm1335, %v3081, %v3082
        %v3084 = vrot.slane %v3082, 4
        %v3085 = vrot.slane %v2204, 5
        %v3086 = vsel %vm1335, %v3084, %v3085
        %s3087 = scalar_lea.vmem %s1, 320
        %v3088 = vld [vmem:[%s3087] sm:$0xf]
        %v3089 = vld [vmem:[%s3087 + $0x4] sm:$0xf]
        %v3090 = vld [vmem:[%s3087 + $0x8] sm:$0xf]
        %v3091 = vld [vmem:[%s3087 + $0xc] sm:$0xf]
        %v3092 = vld [vmem:[%s3087 + $0x10] sm:$0xf]
        %v3093 = vld [vmem:[%s3087 + $0x14] sm:$0xf]
        %v3094 = vld [vmem:[%s3087 + $0x18] sm:$0xf]
        %v3095 = vld [vmem:[%s3087 + $0x1c] sm:$0xf]
        %v3096 = vld [vmem:[%s3087 + $0x20] sm:$0xf]
        %v3097 = vld [vmem:[%s3087 + $0x24] sm:$0xf]
        %v3098 = vld [vmem:[%s3087 + $0x28] sm:$0xf]
        %v3099 = vld [vmem:[%s3087 + $0x2c] sm:$0xf]
        %v3100 = vld [vmem:[%s3087 + $0x30] sm:$0xf]
        %v3101 = vld [vmem:[%s3087 + $0x34] sm:$0xf]
        %v3102 = vld [vmem:[%s3087 + $0x38] sm:$0xf]
        %v3103 = vld [vmem:[%s3087 + $0x3c] sm:$0xf]
        %v3104 = vunpack.c.l.b16 %v2978
        %v3105 = vunpack.c.l.b16 %v2981
        %v3106 = vunpack.c.l.b16 %v2985
        %v3107 = vunpack.c.l.b16 %v2988
        %v3108 = vunpack.c.l.b16 %v2992
        %v3109 = vunpack.c.l.b16 %v2995
        %v3110 = vunpack.c.l.b16 %v2999
        %v3111 = vunpack.c.l.b16 %v3002
        %v3112 = vunpack.c.l.b16 %v3006
        %v3113 = vunpack.c.l.b16 %v3009
        %v3114 = vunpack.c.l.b16 %v3013
        %v3115 = vunpack.c.l.b16 %v3016
        %v3116 = vunpack.c.l.b16 %v3020
        %v3117 = vunpack.c.l.b16 %v3023
        %v3118 = vunpack.c.l.b16 %v3027
        %v3119 = vunpack.c.l.b16 %v3030
        %v3120 = vunpack.c.l.b16 %v3034
        %v3121 = vunpack.c.l.b16 %v3037
        %v3122 = vunpack.c.l.b16 %v3041
        %v3123 = vunpack.c.l.b16 %v3044
        %v3124 = vunpack.c.l.b16 %v3048
        %v3125 = vunpack.c.l.b16 %v3051
        %v3126 = vunpack.c.l.b16 %v3055
        %v3127 = vunpack.c.l.b16 %v3058
        %v3128 = vunpack.c.l.b16 %v3062
        %v3129 = vunpack.c.l.b16 %v3065
        %v3130 = vunpack.c.l.b16 %v3069
        %v3131 = vunpack.c.l.b16 %v3072
        %v3132 = vunpack.c.l.b16 %v3076
        %v3133 = vunpack.c.l.b16 %v3079
        %v3134 = vunpack.c.l.b16 %v3083
        %v3135 = vunpack.c.l.b16 %v3086
        %v3136 = vpack.c.b16 %v3105, %v3104
        %v3137 = vpack.c.b16 %v3107, %v3106
        %v3138 = vpack.c.b16 %v3109, %v3108
        %v3139 = vpack.c.b16 %v3111, %v3110
        %v3140 = vpack.c.b16 %v3113, %v3112
        %v3141 = vpack.c.b16 %v3115, %v3114
        %v3142 = vpack.c.b16 %v3117, %v3116
        %v3143 = vpack.c.b16 %v3119, %v3118
        %v3144 = vpack.c.b16 %v3121, %v3120
        %v3145 = vpack.c.b16 %v3123, %v3122
        %v3146 = vpack.c.b16 %v3125, %v3124
        %v3147 = vpack.c.b16 %v3127, %v3126
        %v3148 = vpack.c.b16 %v3129, %v3128
        %v3149 = vpack.c.b16 %v3131, %v3130
        %v3150 = vpack.c.b16 %v3133, %v3132
        %v3151 = vpack.c.b16 %v3135, %v3134
        %v3184 = vunpack.c.l.b16 %v3088
        %v3185 = vunpack.c.l.b16 %v3089
        %v3186 = vunpack.c.l.b16 %v3090
        %v3187 = vunpack.c.l.b16 %v3091
        %v3188 = vunpack.c.l.b16 %v3092
        %v3189 = vunpack.c.l.b16 %v3093
        %v3190 = vunpack.c.l.b16 %v3094
        %v3191 = vunpack.c.l.b16 %v3095
        %v3192 = vunpack.c.l.b16 %v3096
        %v3193 = vunpack.c.l.b16 %v3097
        %v3194 = vunpack.c.l.b16 %v3098
        %v3195 = vunpack.c.l.b16 %v3099
        %v3196 = vunpack.c.l.b16 %v3100
        %v3197 = vunpack.c.l.b16 %v3101
        %v3198 = vunpack.c.l.b16 %v3102
        %v3199 = vunpack.c.l.b16 %v3103
        %v3200 = vpack.c.b16 %v3185, %v3184
        %v3201 = vpack.c.b16 %v3187, %v3186
        %v3202 = vpack.c.b16 %v3189, %v3188
        %v3203 = vpack.c.b16 %v3191, %v3190
        %v3204 = vpack.c.b16 %v3193, %v3192
        %v3205 = vpack.c.b16 %v3195, %v3194
        %v3206 = vpack.c.b16 %v3197, %v3196
        %v3207 = vpack.c.b16 %v3199, %v3198
        %3216 = vmatprep.subr.bf16.mxu0 0
        %3217 = vmatpush1.bf16.msra.mxu0 %v3207
        %3218 = vmatprep.subr.bf16.mxu0 0
        %3219 = vmatpush1.bf16.msra.mxu0 %v3206
        %3220 = vmatprep.subr.bf16.mxu0 0
        %3221 = vmatpush1.bf16.msra.mxu0 %v3205
        %3222 = vmatprep.subr.bf16.mxu0 0
        %3223 = vmatpush1.bf16.msra.mxu0 %v3204
        %3224 = vmatprep.subr.bf16.mxu0 0
        %3225 = vmatpush1.bf16.msra.mxu0 %v3203
        %3226 = vmatprep.subr.bf16.mxu0 0
        %3227 = vmatpush1.bf16.msra.mxu0 %v3202
        %3228 = vmatprep.subr.bf16.mxu0 0
        %3229 = vmatpush1.bf16.msra.mxu0 %v3201
        %3230 = vmatprep.subr.bf16.mxu0 0
        %3231 = vmatpush1.bf16.msra.mxu0 %v3200
        %3232 = vmatprep.subr.bf16.mxu0 0
        %3233 = vmatpush2.bf16.msra.mxu0 0
        %3234 = vmatprep.subr.bf16.mxu0 0
        %3235 = vmatpush2.bf16.msra.mxu0 0
        %3236 = vmatprep.subr.bf16.mxu0 0
        %3237 = vmatpush2.bf16.msra.mxu0 0
        %3238 = vmatprep.subr.bf16.mxu0 0
        %3239 = vmatpush2.bf16.msra.mxu0 0
        %3240 = vmatprep.subr.bf16.mxu0 0
        %3241 = vmatpush2.bf16.msra.mxu0 0
        %3242 = vmatprep.subr.bf16.mxu0 0
        %3243 = vmatpush2.bf16.msra.mxu0 0
        %3244 = vmatprep.subr.bf16.mxu0 0
        %3245 = vmatpush2.bf16.msra.mxu0 0
        %3246 = vmatprep.subr.bf16.mxu0 0
        %3247 = vmatpush2.bf16.msra.mxu0 0
        %3248 = vmatprep.mubr.bf16.mxu0 0
        %3249 = vmatmul.mubr.bf16.gmra.mxu0 %v3136
        %v3250 = vpop.f32.mrf.mxu0
        %v3251 = vadd.f32 0.0, %v3250
        %v3252 = vpop.f32.mrf.mxu0
        %v3253 = vpop.f32.mrf.mxu0
        %v3254 = vadd.f32 0.0, %v3253
        %v3255 = vpop.f32.mrf.mxu0
        %3256 = vmatprep.mubr.bf16.mxu0 0
        %3257 = vmatmul.mubr.bf16.gmra.mxu0 %v3137
        %v3258 = vpop.f32.mrf.mxu0
        %v3259 = vadd.f32 0.0, %v3258
        %v3260 = vpop.f32.mrf.mxu0
        %v3261 = vpop.f32.mrf.mxu0
        %v3262 = vadd.f32 0.0, %v3261
        %v3263 = vpop.f32.mrf.mxu0
        %3264 = vmatprep.mubr.bf16.mxu0 0
        %3265 = vmatmul.mubr.bf16.gmra.mxu0 %v3138
        %v3266 = vpop.f32.mrf.mxu0
        %v3267 = vadd.f32 0.0, %v3266
        %v3268 = vpop.f32.mrf.mxu0
        %v3269 = vpop.f32.mrf.mxu0
        %v3270 = vadd.f32 0.0, %v3269
        %v3271 = vpop.f32.mrf.mxu0
        %3272 = vmatprep.mubr.bf16.mxu0 0
        %3273 = vmatmul.mubr.bf16.gmra.mxu0 %v3139
        %v3274 = vpop.f32.mrf.mxu0
        %v3275 = vadd.f32 0.0, %v3274
        %v3276 = vpop.f32.mrf.mxu0
        %v3277 = vpop.f32.mrf.mxu0
        %v3278 = vadd.f32 0.0, %v3277
        %v3279 = vpop.f32.mrf.mxu0
        %3280 = vmatprep.mubr.bf16.mxu0 0
        %3281 = vmatmul.mubr.bf16.gmra.mxu0 %v3140
        %v3282 = vpop.f32.mrf.mxu0
        %v3283 = vadd.f32 0.0, %v3282
        %v3284 = vpop.f32.mrf.mxu0
        %v3285 = vpop.f32.mrf.mxu0
        %v3286 = vadd.f32 0.0, %v3285
        %v3287 = vpop.f32.mrf.mxu0
        %3288 = vmatprep.mubr.bf16.mxu0 0
        %3289 = vmatmul.mubr.bf16.gmra.mxu0 %v3141
        %v3290 = vpop.f32.mrf.mxu0
        %v3291 = vadd.f32 0.0, %v3290
        %v3292 = vpop.f32.mrf.mxu0
        %v3293 = vpop.f32.mrf.mxu0
        %v3294 = vadd.f32 0.0, %v3293
        %v3295 = vpop.f32.mrf.mxu0
        %3296 = vmatprep.mubr.bf16.mxu0 0
        %3297 = vmatmul.mubr.bf16.gmra.mxu0 %v3142
        %v3298 = vpop.f32.mrf.mxu0
        %v3299 = vadd.f32 0.0, %v3298
        %v3300 = vpop.f32.mrf.mxu0
        %v3301 = vpop.f32.mrf.mxu0
        %v3302 = vadd.f32 0.0, %v3301
        %v3303 = vpop.f32.mrf.mxu0
        %3304 = vmatprep.mubr.bf16.mxu0 0
        %3305 = vmatmul.mubr.bf16.gmra.mxu0 %v3143
        %v3306 = vpop.f32.mrf.mxu0
        %v3307 = vadd.f32 0.0, %v3306
        %v3308 = vpop.f32.mrf.mxu0
        %v3309 = vpop.f32.mrf.mxu0
        %v3310 = vadd.f32 0.0, %v3309
        %v3311 = vpop.f32.mrf.mxu0
        %3312 = vmatprep.mubr.bf16.mxu0 0
        %3313 = vmatmul.mubr.bf16.gmra.mxu0 %v3144
        %v3314 = vpop.f32.mrf.mxu0
        %v3315 = vadd.f32 0.0, %v3314
        %v3316 = vpop.f32.mrf.mxu0
        %v3317 = vpop.f32.mrf.mxu0
        %v3318 = vadd.f32 0.0, %v3317
        %v3319 = vpop.f32.mrf.mxu0
        %3320 = vmatprep.mubr.bf16.mxu0 0
        %3321 = vmatmul.mubr.bf16.gmra.mxu0 %v3145
        %v3322 = vpop.f32.mrf.mxu0
        %v3323 = vadd.f32 0.0, %v3322
        %v3324 = vpop.f32.mrf.mxu0
        %v3325 = vpop.f32.mrf.mxu0
        %v3326 = vadd.f32 0.0, %v3325
        %v3327 = vpop.f32.mrf.mxu0
        %3328 = vmatprep.mubr.bf16.mxu0 0
        %3329 = vmatmul.mubr.bf16.gmra.mxu0 %v3146
        %v3330 = vpop.f32.mrf.mxu0
        %v3331 = vadd.f32 0.0, %v3330
        %v3332 = vpop.f32.mrf.mxu0
        %v3333 = vpop.f32.mrf.mxu0
        %v3334 = vadd.f32 0.0, %v3333
        %v3335 = vpop.f32.mrf.mxu0
        %3336 = vmatprep.mubr.bf16.mxu0 0
        %3337 = vmatmul.mubr.bf16.gmra.mxu0 %v3147
        %v3338 = vpop.f32.mrf.mxu0
        %v3339 = vadd.f32 0.0, %v3338
        %v3340 = vpop.f32.mrf.mxu0
        %v3341 = vpop.f32.mrf.mxu0
        %v3342 = vadd.f32 0.0, %v3341
        %v3343 = vpop.f32.mrf.mxu0
        %3344 = vmatprep.mubr.bf16.mxu0 0
        %3345 = vmatmul.mubr.bf16.gmra.mxu0 %v3148
        %v3346 = vpop.f32.mrf.mxu0
        %v3347 = vadd.f32 0.0, %v3346
        %v3348 = vpop.f32.mrf.mxu0
        %v3349 = vpop.f32.mrf.mxu0
        %v3350 = vadd.f32 0.0, %v3349
        %v3351 = vpop.f32.mrf.mxu0
        %3352 = vmatprep.mubr.bf16.mxu0 0
        %3353 = vmatmul.mubr.bf16.gmra.mxu0 %v3149
        %v3354 = vpop.f32.mrf.mxu0
        %v3355 = vadd.f32 0.0, %v3354
        %v3356 = vpop.f32.mrf.mxu0
        %v3357 = vpop.f32.mrf.mxu0
        %v3358 = vadd.f32 0.0, %v3357
        %v3359 = vpop.f32.mrf.mxu0
        %3360 = vmatprep.mubr.bf16.mxu0 0
        %3361 = vmatmul.mubr.bf16.gmra.mxu0 %v3150
        %v3362 = vpop.f32.mrf.mxu0
        %v3363 = vadd.f32 0.0, %v3362
        %v3364 = vpop.f32.mrf.mxu0
        %v3365 = vpop.f32.mrf.mxu0
        %v3366 = vadd.f32 0.0, %v3365
        %v3367 = vpop.f32.mrf.mxu0
        %3368 = vmatprep.mubr.bf16.mxu0 0
        %3369 = vmatmul.mubr.bf16.gmra.mxu0 %v3151
        %v3370 = vpop.f32.mrf.mxu0
        %v3371 = vadd.f32 0.0, %v3370
        %v3372 = vpop.f32.mrf.mxu0
        %v3373 = vpop.f32.mrf.mxu0
        %v3374 = vadd.f32 0.0, %v3373
        %v3375 = vpop.f32.mrf.mxu0
        %3376 = vdwg.mxu0
        %v3377 = vadd.f32 %v2879, %v3251
        %v3378 = vadd.f32 %v2880, %v3254
        %v3379 = vadd.f32 %v2881, %v3259
        %v3380 = vadd.f32 %v2882, %v3262
        %v3381 = vadd.f32 %v2883, %v3267
        %v3382 = vadd.f32 %v2884, %v3270
        %v3383 = vadd.f32 %v2885, %v3275
        %v3384 = vadd.f32 %v2886, %v3278
        %v3385 = vadd.f32 %v2887, %v3283
        %v3386 = vadd.f32 %v2888, %v3286
        %v3387 = vadd.f32 %v2889, %v3291
        %v3388 = vadd.f32 %v2890, %v3294
        %v3389 = vadd.f32 %v2891, %v3299
        %v3390 = vadd.f32 %v2892, %v3302
        %v3391 = vadd.f32 %v2893, %v3307
        %v3392 = vadd.f32 %v2894, %v3310
        %v3393 = vadd.f32 %v2895, %v3315
        %v3394 = vadd.f32 %v2896, %v3318
        %v3395 = vadd.f32 %v2897, %v3323
        %v3396 = vadd.f32 %v2898, %v3326
        %v3397 = vadd.f32 %v2899, %v3331
        %v3398 = vadd.f32 %v2900, %v3334
        %v3399 = vadd.f32 %v2901, %v3339
        %v3400 = vadd.f32 %v2902, %v3342
        %v3401 = vadd.f32 %v2903, %v3347
        %v3402 = vadd.f32 %v2904, %v3350
        %v3403 = vadd.f32 %v2905, %v3355
        %v3404 = vadd.f32 %v2906, %v3358
        %v3405 = vadd.f32 %v2907, %v3363
        %v3406 = vadd.f32 %v2908, %v3366
        %v3407 = vadd.f32 %v2909, %v3371
        %v3408 = vadd.f32 %v2910, %v3374
        %s3409 = scalar_lea.vmem %s237, 24
        %v3410 = vld [vmem:[%s3409] sm:$0xf]
        %v3411 = vld [vmem:[%s3409 + $0x4] sm:$0xf]
        %v3412 = vld [vmem:[%s3409 + $0xc] sm:$0xf]
        %v3413 = vld [vmem:[%s3409 + $0x10] sm:$0xf]
        %v3414 = vld [vmem:[%s3409 + $0x18] sm:$0xf]
        %v3415 = vld [vmem:[%s3409 + $0x1c] sm:$0xf]
        %v3416 = vld [vmem:[%s3409 + $0x24] sm:$0xf]
        %v3417 = vld [vmem:[%s3409 + $0x28] sm:$0xf]
        %v3418 = vld [vmem:[%s3409 + $0x30] sm:$0xf]
        %v3419 = vld [vmem:[%s3409 + $0x34] sm:$0xf]
        %v3420 = vld [vmem:[%s3409 + $0x3c] sm:$0xf]
        %v3421 = vld [vmem:[%s3409 + $0x40] sm:$0xf]
        %v3422 = vld [vmem:[%s3409 + $0x48] sm:$0xf]
        %v3423 = vld [vmem:[%s3409 + $0x4c] sm:$0xf]
        %v3424 = vld [vmem:[%s3409 + $0x54] sm:$0xf]
        %v3425 = vld [vmem:[%s3409 + $0x58] sm:$0xf]
        %v3426 = vld [vmem:[%s3409 + $0x60] sm:$0xf]
        %v3427 = vld [vmem:[%s3409 + $0x64] sm:$0xf]
        %v3428 = vld [vmem:[%s3409 + $0x6c] sm:$0xf]
        %v3429 = vld [vmem:[%s3409 + $0x70] sm:$0xf]
        %v3430 = vld [vmem:[%s3409 + $0x78] sm:$0xf]
        %v3431 = vld [vmem:[%s3409 + $0x7c] sm:$0xf]
        %v3432 = vld [vmem:[%s3409 + $0x84] sm:$0xf]
        %v3433 = vld [vmem:[%s3409 + $0x88] sm:$0xf]
        %v3434 = vld [vmem:[%s3409 + $0x90] sm:$0xf]
        %v3435 = vld [vmem:[%s3409 + $0x94] sm:$0xf]
        %v3436 = vld [vmem:[%s3409 + $0x9c] sm:$0xf]
        %v3437 = vld [vmem:[%s3409 + $0xa0] sm:$0xf]
        %v3438 = vld [vmem:[%s3409 + $0xa8] sm:$0xf]
        %v3439 = vld [vmem:[%s3409 + $0xac] sm:$0xf]
        %v3440 = vld [vmem:[%s3409 + $0xb4] sm:$0xf]
        %v3441 = vld [vmem:[%s3409 + $0xb8] sm:$0xf]
        %s3442 = scalar_lea.vmem %s1, 384
        %v3443 = vld [vmem:[%s3442] sm:$0xf]
        %v3444 = vld [vmem:[%s3442 + $0x4] sm:$0xf]
        %v3445 = vld [vmem:[%s3442 + $0x8] sm:$0xf]
        %v3446 = vld [vmem:[%s3442 + $0xc] sm:$0xf]
        %v3447 = vld [vmem:[%s3442 + $0x10] sm:$0xf]
        %v3448 = vld [vmem:[%s3442 + $0x14] sm:$0xf]
        %v3449 = vld [vmem:[%s3442 + $0x18] sm:$0xf]
        %v3450 = vld [vmem:[%s3442 + $0x1c] sm:$0xf]
        %v3451 = vld [vmem:[%s3442 + $0x20] sm:$0xf]
        %v3452 = vld [vmem:[%s3442 + $0x24] sm:$0xf]
        %v3453 = vld [vmem:[%s3442 + $0x28] sm:$0xf]
        %v3454 = vld [vmem:[%s3442 + $0x2c] sm:$0xf]
        %v3455 = vld [vmem:[%s3442 + $0x30] sm:$0xf]
        %v3456 = vld [vmem:[%s3442 + $0x34] sm:$0xf]
        %v3457 = vld [vmem:[%s3442 + $0x38] sm:$0xf]
        %v3458 = vld [vmem:[%s3442 + $0x3c] sm:$0xf]
        %v3491 = vunpack.c.l.b16 %v3410
        %v3492 = vunpack.c.l.b16 %v3411
        %v3493 = vunpack.c.l.b16 %v3412
        %v3494 = vunpack.c.l.b16 %v3413
        %v3495 = vunpack.c.l.b16 %v3414
        %v3496 = vunpack.c.l.b16 %v3415
        %v3497 = vunpack.c.l.b16 %v3416
        %v3498 = vunpack.c.l.b16 %v3417
        %v3499 = vunpack.c.l.b16 %v3418
        %v3500 = vunpack.c.l.b16 %v3419
        %v3501 = vunpack.c.l.b16 %v3420
        %v3502 = vunpack.c.l.b16 %v3421
        %v3503 = vunpack.c.l.b16 %v3422
        %v3504 = vunpack.c.l.b16 %v3423
        %v3505 = vunpack.c.l.b16 %v3424
        %v3506 = vunpack.c.l.b16 %v3425
        %v3507 = vunpack.c.l.b16 %v3426
        %v3508 = vunpack.c.l.b16 %v3427
        %v3509 = vunpack.c.l.b16 %v3428
        %v3510 = vunpack.c.l.b16 %v3429
        %v3511 = vunpack.c.l.b16 %v3430
        %v3512 = vunpack.c.l.b16 %v3431
        %v3513 = vunpack.c.l.b16 %v3432
        %v3514 = vunpack.c.l.b16 %v3433
        %v3515 = vunpack.c.l.b16 %v3434
        %v3516 = vunpack.c.l.b16 %v3435
        %v3517 = vunpack.c.l.b16 %v3436
        %v3518 = vunpack.c.l.b16 %v3437
        %v3519 = vunpack.c.l.b16 %v3438
        %v3520 = vunpack.c.l.b16 %v3439
        %v3521 = vunpack.c.l.b16 %v3440
        %v3522 = vunpack.c.l.b16 %v3441
        %v3523 = vpack.c.b16 %v3492, %v3491
        %v3524 = vpack.c.b16 %v3494, %v3493
        %v3525 = vpack.c.b16 %v3496, %v3495
        %v3526 = vpack.c.b16 %v3498, %v3497
        %v3527 = vpack.c.b16 %v3500, %v3499
        %v3528 = vpack.c.b16 %v3502, %v3501
        %v3529 = vpack.c.b16 %v3504, %v3503
        %v3530 = vpack.c.b16 %v3506, %v3505
        %v3531 = vpack.c.b16 %v3508, %v3507
        %v3532 = vpack.c.b16 %v3510, %v3509
        %v3533 = vpack.c.b16 %v3512, %v3511
        %v3534 = vpack.c.b16 %v3514, %v3513
        %v3535 = vpack.c.b16 %v3516, %v3515
        %v3536 = vpack.c.b16 %v3518, %v3517
        %v3537 = vpack.c.b16 %v3520, %v3519
        %v3538 = vpack.c.b16 %v3522, %v3521
        %v3571 = vunpack.c.l.b16 %v3443
        %v3572 = vunpack.c.l.b16 %v3444
        %v3573 = vunpack.c.l.b16 %v3445
        %v3574 = vunpack.c.l.b16 %v3446
        %v3575 = vunpack.c.l.b16 %v3447
        %v3576 = vunpack.c.l.b16 %v3448
        %v3577 = vunpack.c.l.b16 %v3449
        %v3578 = vunpack.c.l.b16 %v3450
        %v3579 = vunpack.c.l.b16 %v3451
        %v3580 = vunpack.c.l.b16 %v3452
        %v3581 = vunpack.c.l.b16 %v3453
        %v3582 = vunpack.c.l.b16 %v3454
        %v3583 = vunpack.c.l.b16 %v3455
        %v3584 = vunpack.c.l.b16 %v3456
        %v3585 = vunpack.c.l.b16 %v3457
        %v3586 = vunpack.c.l.b16 %v3458
        %v3587 = vpack.c.b16 %v3572, %v3571
        %v3588 = vpack.c.b16 %v3574, %v3573
        %v3589 = vpack.c.b16 %v3576, %v3575
        %v3590 = vpack.c.b16 %v3578, %v3577
        %v3591 = vpack.c.b16 %v3580, %v3579
        %v3592 = vpack.c.b16 %v3582, %v3581
        %v3593 = vpack.c.b16 %v3584, %v3583
        %v3594 = vpack.c.b16 %v3586, %v3585
        %3603 = vmatprep.subr.bf16.mxu0 0
        %3604 = vmatpush1.bf16.msra.mxu0 %v3594
        %3605 = vmatprep.subr.bf16.mxu0 0
        %3606 = vmatpush1.bf16.msra.mxu0 %v3593
        %3607 = vmatprep.subr.bf16.mxu0 0
        %3608 = vmatpush1.bf16.msra.mxu0 %v3592
        %3609 = vmatprep.subr.bf16.mxu0 0
        %3610 = vmatpush1.bf16.msra.mxu0 %v3591
        %3611 = vmatprep.subr.bf16.mxu0 0
        %3612 = vmatpush1.bf16.msra.mxu0 %v3590
        %3613 = vmatprep.subr.bf16.mxu0 0
        %3614 = vmatpush1.bf16.msra.mxu0 %v3589
        %3615 = vmatprep.subr.bf16.mxu0 0
        %3616 = vmatpush1.bf16.msra.mxu0 %v3588
        %3617 = vmatprep.subr.bf16.mxu0 0
        %3618 = vmatpush1.bf16.msra.mxu0 %v3587
        %3619 = vmatprep.subr.bf16.mxu0 0
        %3620 = vmatpush2.bf16.msra.mxu0 0
        %3621 = vmatprep.subr.bf16.mxu0 0
        %3622 = vmatpush2.bf16.msra.mxu0 0
        %3623 = vmatprep.subr.bf16.mxu0 0
        %3624 = vmatpush2.bf16.msra.mxu0 0
        %3625 = vmatprep.subr.bf16.mxu0 0
        %3626 = vmatpush2.bf16.msra.mxu0 0
        %3627 = vmatprep.subr.bf16.mxu0 0
        %3628 = vmatpush2.bf16.msra.mxu0 0
        %3629 = vmatprep.subr.bf16.mxu0 0
        %3630 = vmatpush2.bf16.msra.mxu0 0
        %3631 = vmatprep.subr.bf16.mxu0 0
        %3632 = vmatpush2.bf16.msra.mxu0 0
        %3633 = vmatprep.subr.bf16.mxu0 0
        %3634 = vmatpush2.bf16.msra.mxu0 0
        %3635 = vmatprep.mubr.bf16.mxu0 0
        %3636 = vmatmul.mubr.bf16.gmra.mxu0 %v3523
        %v3637 = vpop.f32.mrf.mxu0
        %v3638 = vadd.f32 0.0, %v3637
        %v3639 = vpop.f32.mrf.mxu0
        %v3640 = vpop.f32.mrf.mxu0
        %v3641 = vadd.f32 0.0, %v3640
        %v3642 = vpop.f32.mrf.mxu0
        %3643 = vmatprep.mubr.bf16.mxu0 0
        %3644 = vmatmul.mubr.bf16.gmra.mxu0 %v3524
        %v3645 = vpop.f32.mrf.mxu0
        %v3646 = vadd.f32 0.0, %v3645
        %v3647 = vpop.f32.mrf.mxu0
        %v3648 = vpop.f32.mrf.mxu0
        %v3649 = vadd.f32 0.0, %v3648
        %v3650 = vpop.f32.mrf.mxu0
        %3651 = vmatprep.mubr.bf16.mxu0 0
        %3652 = vmatmul.mubr.bf16.gmra.mxu0 %v3525
        %v3653 = vpop.f32.mrf.mxu0
        %v3654 = vadd.f32 0.0, %v3653
        %v3655 = vpop.f32.mrf.mxu0
        %v3656 = vpop.f32.mrf.mxu0
        %v3657 = vadd.f32 0.0, %v3656
        %v3658 = vpop.f32.mrf.mxu0
        %3659 = vmatprep.mubr.bf16.mxu0 0
        %3660 = vmatmul.mubr.bf16.gmra.mxu0 %v3526
        %v3661 = vpop.f32.mrf.mxu0
        %v3662 = vadd.f32 0.0, %v3661
        %v3663 = vpop.f32.mrf.mxu0
        %v3664 = vpop.f32.mrf.mxu0
        %v3665 = vadd.f32 0.0, %v3664
        %v3666 = vpop.f32.mrf.mxu0
        %3667 = vmatprep.mubr.bf16.mxu0 0
        %3668 = vmatmul.mubr.bf16.gmra.mxu0 %v3527
        %v3669 = vpop.f32.mrf.mxu0
        %v3670 = vadd.f32 0.0, %v3669
        %v3671 = vpop.f32.mrf.mxu0
        %v3672 = vpop.f32.mrf.mxu0
        %v3673 = vadd.f32 0.0, %v3672
        %v3674 = vpop.f32.mrf.mxu0
        %3675 = vmatprep.mubr.bf16.mxu0 0
        %3676 = vmatmul.mubr.bf16.gmra.mxu0 %v3528
        %v3677 = vpop.f32.mrf.mxu0
        %v3678 = vadd.f32 0.0, %v3677
        %v3679 = vpop.f32.mrf.mxu0
        %v3680 = vpop.f32.mrf.mxu0
        %v3681 = vadd.f32 0.0, %v3680
        %v3682 = vpop.f32.mrf.mxu0
        %3683 = vmatprep.mubr.bf16.mxu0 0
        %3684 = vmatmul.mubr.bf16.gmra.mxu0 %v3529
        %v3685 = vpop.f32.mrf.mxu0
        %v3686 = vadd.f32 0.0, %v3685
        %v3687 = vpop.f32.mrf.mxu0
        %v3688 = vpop.f32.mrf.mxu0
        %v3689 = vadd.f32 0.0, %v3688
        %v3690 = vpop.f32.mrf.mxu0
        %3691 = vmatprep.mubr.bf16.mxu0 0
        %3692 = vmatmul.mubr.bf16.gmra.mxu0 %v3530
        %v3693 = vpop.f32.mrf.mxu0
        %v3694 = vadd.f32 0.0, %v3693
        %v3695 = vpop.f32.mrf.mxu0
        %v3696 = vpop.f32.mrf.mxu0
        %v3697 = vadd.f32 0.0, %v3696
        %v3698 = vpop.f32.mrf.mxu0
        %3699 = vmatprep.mubr.bf16.mxu0 0
        %3700 = vmatmul.mubr.bf16.gmra.mxu0 %v3531
        %v3701 = vpop.f32.mrf.mxu0
        %v3702 = vadd.f32 0.0, %v3701
        %v3703 = vpop.f32.mrf.mxu0
        %v3704 = vpop.f32.mrf.mxu0
        %v3705 = vadd.f32 0.0, %v3704
        %v3706 = vpop.f32.mrf.mxu0
        %3707 = vmatprep.mubr.bf16.mxu0 0
        %3708 = vmatmul.mubr.bf16.gmra.mxu0 %v3532
        %v3709 = vpop.f32.mrf.mxu0
        %v3710 = vadd.f32 0.0, %v3709
        %v3711 = vpop.f32.mrf.mxu0
        %v3712 = vpop.f32.mrf.mxu0
        %v3713 = vadd.f32 0.0, %v3712
        %v3714 = vpop.f32.mrf.mxu0
        %3715 = vmatprep.mubr.bf16.mxu0 0
        %3716 = vmatmul.mubr.bf16.gmra.mxu0 %v3533
        %v3717 = vpop.f32.mrf.mxu0
        %v3718 = vadd.f32 0.0, %v3717
        %v3719 = vpop.f32.mrf.mxu0
        %v3720 = vpop.f32.mrf.mxu0
        %v3721 = vadd.f32 0.0, %v3720
        %v3722 = vpop.f32.mrf.mxu0
        %3723 = vmatprep.mubr.bf16.mxu0 0
        %3724 = vmatmul.mubr.bf16.gmra.mxu0 %v3534
        %v3725 = vpop.f32.mrf.mxu0
        %v3726 = vadd.f32 0.0, %v3725
        %v3727 = vpop.f32.mrf.mxu0
        %v3728 = vpop.f32.mrf.mxu0
        %v3729 = vadd.f32 0.0, %v3728
        %v3730 = vpop.f32.mrf.mxu0
        %3731 = vmatprep.mubr.bf16.mxu0 0
        %3732 = vmatmul.mubr.bf16.gmra.mxu0 %v3535
        %v3733 = vpop.f32.mrf.mxu0
        %v3734 = vadd.f32 0.0, %v3733
        %v3735 = vpop.f32.mrf.mxu0
        %v3736 = vpop.f32.mrf.mxu0
        %v3737 = vadd.f32 0.0, %v3736
        %v3738 = vpop.f32.mrf.mxu0
        %3739 = vmatprep.mubr.bf16.mxu0 0
        %3740 = vmatmul.mubr.bf16.gmra.mxu0 %v3536
        %v3741 = vpop.f32.mrf.mxu0
        %v3742 = vadd.f32 0.0, %v3741
        %v3743 = vpop.f32.mrf.mxu0
        %v3744 = vpop.f32.mrf.mxu0
        %v3745 = vadd.f32 0.0, %v3744
        %v3746 = vpop.f32.mrf.mxu0
        %3747 = vmatprep.mubr.bf16.mxu0 0
        %3748 = vmatmul.mubr.bf16.gmra.mxu0 %v3537
        %v3749 = vpop.f32.mrf.mxu0
        %v3750 = vadd.f32 0.0, %v3749
        %v3751 = vpop.f32.mrf.mxu0
        %v3752 = vpop.f32.mrf.mxu0
        %v3753 = vadd.f32 0.0, %v3752
        %v3754 = vpop.f32.mrf.mxu0
        %3755 = vmatprep.mubr.bf16.mxu0 0
        %3756 = vmatmul.mubr.bf16.gmra.mxu0 %v3538
        %v3757 = vpop.f32.mrf.mxu0
        %v3758 = vadd.f32 0.0, %v3757
        %v3759 = vpop.f32.mrf.mxu0
        %v3760 = vpop.f32.mrf.mxu0
        %v3761 = vadd.f32 0.0, %v3760
        %v3762 = vpop.f32.mrf.mxu0
        %3763 = vdwg.mxu0
        %v3764 = vadd.f32 %v3377, %v3638
        %v3765 = vadd.f32 %v3378, %v3641
        %v3766 = vadd.f32 %v3379, %v3646
        %v3767 = vadd.f32 %v3380, %v3649
        %v3768 = vadd.f32 %v3381, %v3654
        %v3769 = vadd.f32 %v3382, %v3657
        %v3770 = vadd.f32 %v3383, %v3662
        %v3771 = vadd.f32 %v3384, %v3665
        %v3772 = vadd.f32 %v3385, %v3670
        %v3773 = vadd.f32 %v3386, %v3673
        %v3774 = vadd.f32 %v3387, %v3678
        %v3775 = vadd.f32 %v3388, %v3681
        %v3776 = vadd.f32 %v3389, %v3686
        %v3777 = vadd.f32 %v3390, %v3689
        %v3778 = vadd.f32 %v3391, %v3694
        %v3779 = vadd.f32 %v3392, %v3697
        %v3780 = vadd.f32 %v3393, %v3702
        %v3781 = vadd.f32 %v3394, %v3705
        %v3782 = vadd.f32 %v3395, %v3710
        %v3783 = vadd.f32 %v3396, %v3713
        %v3784 = vadd.f32 %v3397, %v3718
        %v3785 = vadd.f32 %v3398, %v3721
        %v3786 = vadd.f32 %v3399, %v3726
        %v3787 = vadd.f32 %v3400, %v3729
        %v3788 = vadd.f32 %v3401, %v3734
        %v3789 = vadd.f32 %v3402, %v3737
        %v3790 = vadd.f32 %v3403, %v3742
        %v3791 = vadd.f32 %v3404, %v3745
        %v3792 = vadd.f32 %v3405, %v3750
        %v3793 = vadd.f32 %v3406, %v3753
        %v3794 = vadd.f32 %v3407, %v3758
        %v3795 = vadd.f32 %v3408, %v3761
        %v3796 = vld [vmem:[%s3409] sm:$0xf]
        %v3797 = vld [vmem:[%s3409 + $0x4] sm:$0xf]
        %v3798 = vld [vmem:[%s3409 + $0x8] sm:$0x1]
        %v3799 = vld [vmem:[%s3409 + $0xc] sm:$0xf]
        %v3800 = vld [vmem:[%s3409 + $0x10] sm:$0xf]
        %v3801 = vld [vmem:[%s3409 + $0x14] sm:$0x1]
        %v3802 = vld [vmem:[%s3409 + $0x18] sm:$0xf]
        %v3803 = vld [vmem:[%s3409 + $0x1c] sm:$0xf]
        %v3804 = vld [vmem:[%s3409 + $0x20] sm:$0x1]
        %v3805 = vld [vmem:[%s3409 + $0x24] sm:$0xf]
        %v3806 = vld [vmem:[%s3409 + $0x28] sm:$0xf]
        %v3807 = vld [vmem:[%s3409 + $0x2c] sm:$0x1]
        %v3808 = vld [vmem:[%s3409 + $0x30] sm:$0xf]
        %v3809 = vld [vmem:[%s3409 + $0x34] sm:$0xf]
        %v3810 = vld [vmem:[%s3409 + $0x38] sm:$0x1]
        %v3811 = vld [vmem:[%s3409 + $0x3c] sm:$0xf]
        %v3812 = vld [vmem:[%s3409 + $0x40] sm:$0xf]
        %v3813 = vld [vmem:[%s3409 + $0x44] sm:$0x1]
        %v3814 = vld [vmem:[%s3409 + $0x48] sm:$0xf]
        %v3815 = vld [vmem:[%s3409 + $0x4c] sm:$0xf]
        %v3816 = vld [vmem:[%s3409 + $0x50] sm:$0x1]
        %v3817 = vld [vmem:[%s3409 + $0x54] sm:$0xf]
        %v3818 = vld [vmem:[%s3409 + $0x58] sm:$0xf]
        %v3819 = vld [vmem:[%s3409 + $0x5c] sm:$0x1]
        %v3820 = vld [vmem:[%s3409 + $0x60] sm:$0xf]
        %v3821 = vld [vmem:[%s3409 + $0x64] sm:$0xf]
        %v3822 = vld [vmem:[%s3409 + $0x68] sm:$0x1]
        %v3823 = vld [vmem:[%s3409 + $0x6c] sm:$0xf]
        %v3824 = vld [vmem:[%s3409 + $0x70] sm:$0xf]
        %v3825 = vld [vmem:[%s3409 + $0x74] sm:$0x1]
        %v3826 = vld [vmem:[%s3409 + $0x78] sm:$0xf]
        %v3827 = vld [vmem:[%s3409 + $0x7c] sm:$0xf]
        %v3828 = vld [vmem:[%s3409 + $0x80] sm:$0x1]
        %v3829 = vld [vmem:[%s3409 + $0x84] sm:$0xf]
        %v3830 = vld [vmem:[%s3409 + $0x88] sm:$0xf]
        %v3831 = vld [vmem:[%s3409 + $0x8c] sm:$0x1]
        %v3832 = vld [vmem:[%s3409 + $0x90] sm:$0xf]
        %v3833 = vld [vmem:[%s3409 + $0x94] sm:$0xf]
        %v3834 = vld [vmem:[%s3409 + $0x98] sm:$0x1]
        %v3835 = vld [vmem:[%s3409 + $0x9c] sm:$0xf]
        %v3836 = vld [vmem:[%s3409 + $0xa0] sm:$0xf]
        %v3837 = vld [vmem:[%s3409 + $0xa4] sm:$0x1]
        %v3838 = vld [vmem:[%s3409 + $0xa8] sm:$0xf]
        %v3839 = vld [vmem:[%s3409 + $0xac] sm:$0xf]
        %v3840 = vld [vmem:[%s3409 + $0xb0] sm:$0x1]
        %v3841 = vld [vmem:[%s3409 + $0xb4] sm:$0xf]
        %v3842 = vld [vmem:[%s3409 + $0xb8] sm:$0xf]
        %v3843 = vld [vmem:[%s3409 + $0xbc] sm:$0x1]
        %v3845 = vshrl.u32 %v3796, 16
        %v3847 = vrot.slane %v3845, 4
        %v3848 = vshll.u32 %v3796, 16
        %v3850 = vrot.slane %v3848, 5
        %v3851 = vor.u32 %v3847, %v3850
        %v3852 = vrot.slane %v3851, 4
        %v3854 = vshll.u32 %v3797, 16
        %v3856 = vrot.slane %v3854, 5
        %v3857 = vsel %vm305, %v3852, %v3856
        %v3858 = vshrl.u32 %v3797, 16
        %v3860 = vrot.slane %v3858, 4
        %v3861 = vor.u32 %v3860, %v3856
        %v3862 = vrot.slane %v3861, 4
        %v3864 = vshll.u32 %v3798, 16
        %v3866 = vrot.slane %v3864, 5
        %v3867 = vsel %vm305, %v3862, %v3866
        %v3869 = vshrl.u32 %v3799, 16
        %v3871 = vrot.slane %v3869, 4
        %v3872 = vshll.u32 %v3799, 16
        %v3874 = vrot.slane %v3872, 5
        %v3875 = vor.u32 %v3871, %v3874
        %v3876 = vrot.slane %v3875, 4
        %v3878 = vshll.u32 %v3800, 16
        %v3880 = vrot.slane %v3878, 5
        %v3881 = vsel %vm305, %v3876, %v3880
        %v3882 = vshrl.u32 %v3800, 16
        %v3884 = vrot.slane %v3882, 4
        %v3885 = vor.u32 %v3884, %v3880
        %v3886 = vrot.slane %v3885, 4
        %v3888 = vshll.u32 %v3801, 16
        %v3890 = vrot.slane %v3888, 5
        %v3891 = vsel %vm305, %v3886, %v3890
        %v3893 = vshrl.u32 %v3802, 16
        %v3895 = vrot.slane %v3893, 4
        %v3896 = vshll.u32 %v3802, 16
        %v3898 = vrot.slane %v3896, 5
        %v3899 = vor.u32 %v3895, %v3898
        %v3900 = vrot.slane %v3899, 4
        %v3902 = vshll.u32 %v3803, 16
        %v3904 = vrot.slane %v3902, 5
        %v3905 = vsel %vm305, %v3900, %v3904
        %v3906 = vshrl.u32 %v3803, 16
        %v3908 = vrot.slane %v3906, 4
        %v3909 = vor.u32 %v3908, %v3904
        %v3910 = vrot.slane %v3909, 4
        %v3912 = vshll.u32 %v3804, 16
        %v3914 = vrot.slane %v3912, 5
        %v3915 = vsel %vm305, %v3910, %v3914
        %v3917 = vshrl.u32 %v3805, 16
        %v3919 = vrot.slane %v3917, 4
        %v3920 = vshll.u32 %v3805, 16
        %v3922 = vrot.slane %v3920, 5
        %v3923 = vor.u32 %v3919, %v3922
        %v3924 = vrot.slane %v3923, 4
        %v3926 = vshll.u32 %v3806, 16
        %v3928 = vrot.slane %v3926, 5
        %v3929 = vsel %vm305, %v3924, %v3928
        %v3930 = vshrl.u32 %v3806, 16
        %v3932 = vrot.slane %v3930, 4
        %v3933 = vor.u32 %v3932, %v3928
        %v3934 = vrot.slane %v3933, 4
        %v3936 = vshll.u32 %v3807, 16
        %v3938 = vrot.slane %v3936, 5
        %v3939 = vsel %vm305, %v3934, %v3938
        %v3941 = vshrl.u32 %v3808, 16
        %v3943 = vrot.slane %v3941, 4
        %v3944 = vshll.u32 %v3808, 16
        %v3946 = vrot.slane %v3944, 5
        %v3947 = vor.u32 %v3943, %v3946
        %v3948 = vrot.slane %v3947, 4
        %v3950 = vshll.u32 %v3809, 16
        %v3952 = vrot.slane %v3950, 5
        %v3953 = vsel %vm305, %v3948, %v3952
        %v3954 = vshrl.u32 %v3809, 16
        %v3956 = vrot.slane %v3954, 4
        %v3957 = vor.u32 %v3956, %v3952
        %v3958 = vrot.slane %v3957, 4
        %v3960 = vshll.u32 %v3810, 16
        %v3962 = vrot.slane %v3960, 5
        %v3963 = vsel %vm305, %v3958, %v3962
        %v3965 = vshrl.u32 %v3811, 16
        %v3967 = vrot.slane %v3965, 4
        %v3968 = vshll.u32 %v3811, 16
        %v3970 = vrot.slane %v3968, 5
        %v3971 = vor.u32 %v3967, %v3970
        %v3972 = vrot.slane %v3971, 4
        %v3974 = vshll.u32 %v3812, 16
        %v3976 = vrot.slane %v3974, 5
        %v3977 = vsel %vm305, %v3972, %v3976
        %v3978 = vshrl.u32 %v3812, 16
        %v3980 = vrot.slane %v3978, 4
        %v3981 = vor.u32 %v3980, %v3976
        %v3982 = vrot.slane %v3981, 4
        %v3984 = vshll.u32 %v3813, 16
        %v3986 = vrot.slane %v3984, 5
        %v3987 = vsel %vm305, %v3982, %v3986
        %v3989 = vshrl.u32 %v3814, 16
        %v3991 = vrot.slane %v3989, 4
        %v3992 = vshll.u32 %v3814, 16
        %v3994 = vrot.slane %v3992, 5
        %v3995 = vor.u32 %v3991, %v3994
        %v3996 = vrot.slane %v3995, 4
        %v3998 = vshll.u32 %v3815, 16
        %v4000 = vrot.slane %v3998, 5
        %v4001 = vsel %vm305, %v3996, %v4000
        %v4002 = vshrl.u32 %v3815, 16
        %v4004 = vrot.slane %v4002, 4
        %v4005 = vor.u32 %v4004, %v4000
        %v4006 = vrot.slane %v4005, 4
        %v4008 = vshll.u32 %v3816, 16
        %v4010 = vrot.slane %v4008, 5
        %v4011 = vsel %vm305, %v4006, %v4010
        %v4013 = vshrl.u32 %v3817, 16
        %v4015 = vrot.slane %v4013, 4
        %v4016 = vshll.u32 %v3817, 16
        %v4018 = vrot.slane %v4016, 5
        %v4019 = vor.u32 %v4015, %v4018
        %v4020 = vrot.slane %v4019, 4
        %v4022 = vshll.u32 %v3818, 16
        %v4024 = vrot.slane %v4022, 5
        %v4025 = vsel %vm305, %v4020, %v4024
        %v4026 = vshrl.u32 %v3818, 16
        %v4028 = vrot.slane %v4026, 4
        %v4029 = vor.u32 %v4028, %v4024
        %v4030 = vrot.slane %v4029, 4
        %v4032 = vshll.u32 %v3819, 16
        %v4034 = vrot.slane %v4032, 5
        %v4035 = vsel %vm305, %v4030, %v4034
        %v4037 = vshrl.u32 %v3820, 16
        %v4039 = vrot.slane %v4037, 4
        %v4040 = vshll.u32 %v3820, 16
        %v4042 = vrot.slane %v4040, 5
        %v4043 = vor.u32 %v4039, %v4042
        %v4044 = vrot.slane %v4043, 4
        %v4046 = vshll.u32 %v3821, 16
        %v4048 = vrot.slane %v4046, 5
        %v4049 = vsel %vm305, %v4044, %v4048
        %v4050 = vshrl.u32 %v3821, 16
        %v4052 = vrot.slane %v4050, 4
        %v4053 = vor.u32 %v4052, %v4048
        %v4054 = vrot.slane %v4053, 4
        %v4056 = vshll.u32 %v3822, 16
        %v4058 = vrot.slane %v4056, 5
        %v4059 = vsel %vm305, %v4054, %v4058
        %v4061 = vshrl.u32 %v3823, 16
        %v4063 = vrot.slane %v4061, 4
        %v4064 = vshll.u32 %v3823, 16
        %v4066 = vrot.slane %v4064, 5
        %v4067 = vor.u32 %v4063, %v4066
        %v4068 = vrot.slane %v4067, 4
        %v4070 = vshll.u32 %v3824, 16
        %v4072 = vrot.slane %v4070, 5
        %v4073 = vsel %vm305, %v4068, %v4072
        %v4074 = vshrl.u32 %v3824, 16
        %v4076 = vrot.slane %v4074, 4
        %v4077 = vor.u32 %v4076, %v4072
        %v4078 = vrot.slane %v4077, 4
        %v4080 = vshll.u32 %v3825, 16
        %v4082 = vrot.slane %v4080, 5
        %v4083 = vsel %vm305, %v4078, %v4082
        %v4085 = vshrl.u32 %v3826, 16
        %v4087 = vrot.slane %v4085, 4
        %v4088 = vshll.u32 %v3826, 16
        %v4090 = vrot.slane %v4088, 5
        %v4091 = vor.u32 %v4087, %v4090
        %v4092 = vrot.slane %v4091, 4
        %v4094 = vshll.u32 %v3827, 16
        %v4096 = vrot.slane %v4094, 5
        %v4097 = vsel %vm305, %v4092, %v4096
        %v4098 = vshrl.u32 %v3827, 16
        %v4100 = vrot.slane %v4098, 4
        %v4101 = vor.u32 %v4100, %v4096
        %v4102 = vrot.slane %v4101, 4
        %v4104 = vshll.u32 %v3828, 16
        %v4106 = vrot.slane %v4104, 5
        %v4107 = vsel %vm305, %v4102, %v4106
        %v4109 = vshrl.u32 %v3829, 16
        %v4111 = vrot.slane %v4109, 4
        %v4112 = vshll.u32 %v3829, 16
        %v4114 = vrot.slane %v4112, 5
        %v4115 = vor.u32 %v4111, %v4114
        %v4116 = vrot.slane %v4115, 4
        %v4118 = vshll.u32 %v3830, 16
        %v4120 = vrot.slane %v4118, 5
        %v4121 = vsel %vm305, %v4116, %v4120
        %v4122 = vshrl.u32 %v3830, 16
        %v4124 = vrot.slane %v4122, 4
        %v4125 = vor.u32 %v4124, %v4120
        %v4126 = vrot.slane %v4125, 4
        %v4128 = vshll.u32 %v3831, 16
        %v4130 = vrot.slane %v4128, 5
        %v4131 = vsel %vm305, %v4126, %v4130
        %v4133 = vshrl.u32 %v3832, 16
        %v4135 = vrot.slane %v4133, 4
        %v4136 = vshll.u32 %v3832, 16
        %v4138 = vrot.slane %v4136, 5
        %v4139 = vor.u32 %v4135, %v4138
        %v4140 = vrot.slane %v4139, 4
        %v4142 = vshll.u32 %v3833, 16
        %v4144 = vrot.slane %v4142, 5
        %v4145 = vsel %vm305, %v4140, %v4144
        %v4146 = vshrl.u32 %v3833, 16
        %v4148 = vrot.slane %v4146, 4
        %v4149 = vor.u32 %v4148, %v4144
        %v4150 = vrot.slane %v4149, 4
        %v4152 = vshll.u32 %v3834, 16
        %v4154 = vrot.slane %v4152, 5
        %v4155 = vsel %vm305, %v4150, %v4154
        %v4157 = vshrl.u32 %v3835, 16
        %v4159 = vrot.slane %v4157, 4
        %v4160 = vshll.u32 %v3835, 16
        %v4162 = vrot.slane %v4160, 5
        %v4163 = vor.u32 %v4159, %v4162
        %v4164 = vrot.slane %v4163, 4
        %v4166 = vshll.u32 %v3836, 16
        %v4168 = vrot.slane %v4166, 5
        %v4169 = vsel %vm305, %v4164, %v4168
        %v4170 = vshrl.u32 %v3836, 16
        %v4172 = vrot.slane %v4170, 4
        %v4173 = vor.u32 %v4172, %v4168
        %v4174 = vrot.slane %v4173, 4
        %v4176 = vshll.u32 %v3837, 16
        %v4178 = vrot.slane %v4176, 5
        %v4179 = vsel %vm305, %v4174, %v4178
        %v4181 = vshrl.u32 %v3838, 16
        %v4183 = vrot.slane %v4181, 4
        %v4184 = vshll.u32 %v3838, 16
        %v4186 = vrot.slane %v4184, 5
        %v4187 = vor.u32 %v4183, %v4186
        %v4188 = vrot.slane %v4187, 4
        %v4190 = vshll.u32 %v3839, 16
        %v4192 = vrot.slane %v4190, 5
        %v4193 = vsel %vm305, %v4188, %v4192
        %v4194 = vshrl.u32 %v3839, 16
        %v4196 = vrot.slane %v4194, 4
        %v4197 = vor.u32 %v4196, %v4192
        %v4198 = vrot.slane %v4197, 4
        %v4200 = vshll.u32 %v3840, 16
        %v4202 = vrot.slane %v4200, 5
        %v4203 = vsel %vm305, %v4198, %v4202
        %v4205 = vshrl.u32 %v3841, 16
        %v4207 = vrot.slane %v4205, 4
        %v4208 = vshll.u32 %v3841, 16
        %v4210 = vrot.slane %v4208, 5
        %v4211 = vor.u32 %v4207, %v4210
        %v4212 = vrot.slane %v4211, 4
        %v4214 = vshll.u32 %v3842, 16
        %v4216 = vrot.slane %v4214, 5
        %v4217 = vsel %vm305, %v4212, %v4216
        %v4218 = vshrl.u32 %v3842, 16
        %v4220 = vrot.slane %v4218, 4
        %v4221 = vor.u32 %v4220, %v4216
        %v4222 = vrot.slane %v4221, 4
        %v4224 = vshll.u32 %v3843, 16
        %v4226 = vrot.slane %v4224, 5
        %v4227 = vsel %vm305, %v4222, %v4226
        %s4228 = scalar_lea.vmem %s1, 448
        %v4229 = vld [vmem:[%s4228] sm:$0xf]
        %v4230 = vld [vmem:[%s4228 + $0x4] sm:$0xf]
        %v4231 = vld [vmem:[%s4228 + $0x8] sm:$0xf]
        %v4232 = vld [vmem:[%s4228 + $0xc] sm:$0xf]
        %v4233 = vld [vmem:[%s4228 + $0x10] sm:$0xf]
        %v4234 = vld [vmem:[%s4228 + $0x14] sm:$0xf]
        %v4235 = vld [vmem:[%s4228 + $0x18] sm:$0xf]
        %v4236 = vld [vmem:[%s4228 + $0x1c] sm:$0xf]
        %v4237 = vld [vmem:[%s4228 + $0x20] sm:$0xf]
        %v4238 = vld [vmem:[%s4228 + $0x24] sm:$0xf]
        %v4239 = vld [vmem:[%s4228 + $0x28] sm:$0xf]
        %v4240 = vld [vmem:[%s4228 + $0x2c] sm:$0xf]
        %v4241 = vld [vmem:[%s4228 + $0x30] sm:$0xf]
        %v4242 = vld [vmem:[%s4228 + $0x34] sm:$0xf]
        %v4243 = vld [vmem:[%s4228 + $0x38] sm:$0xf]
        %v4244 = vld [vmem:[%s4228 + $0x3c] sm:$0xf]
        %v4245 = vunpack.c.l.b16 %v3857
        %v4246 = vunpack.c.l.b16 %v3867
        %v4247 = vunpack.c.l.b16 %v3881
        %v4248 = vunpack.c.l.b16 %v3891
        %v4249 = vunpack.c.l.b16 %v3905
        %v4250 = vunpack.c.l.b16 %v3915
        %v4251 = vunpack.c.l.b16 %v3929
        %v4252 = vunpack.c.l.b16 %v3939
        %v4253 = vunpack.c.l.b16 %v3953
        %v4254 = vunpack.c.l.b16 %v3963
        %v4255 = vunpack.c.l.b16 %v3977
        %v4256 = vunpack.c.l.b16 %v3987
        %v4257 = vunpack.c.l.b16 %v4001
        %v4258 = vunpack.c.l.b16 %v4011
        %v4259 = vunpack.c.l.b16 %v4025
        %v4260 = vunpack.c.l.b16 %v4035
        %v4261 = vunpack.c.l.b16 %v4049
        %v4262 = vunpack.c.l.b16 %v4059
        %v4263 = vunpack.c.l.b16 %v4073
        %v4264 = vunpack.c.l.b16 %v4083
        %v4265 = vunpack.c.l.b16 %v4097
        %v4266 = vunpack.c.l.b16 %v4107
        %v4267 = vunpack.c.l.b16 %v4121
        %v4268 = vunpack.c.l.b16 %v4131
        %v4269 = vunpack.c.l.b16 %v4145
        %v4270 = vunpack.c.l.b16 %v4155
        %v4271 = vunpack.c.l.b16 %v4169
        %v4272 = vunpack.c.l.b16 %v4179
        %v4273 = vunpack.c.l.b16 %v4193
        %v4274 = vunpack.c.l.b16 %v4203
        %v4275 = vunpack.c.l.b16 %v4217
        %v4276 = vunpack.c.l.b16 %v4227
        %v4277 = vpack.c.b16 %v4246, %v4245
        %v4278 = vpack.c.b16 %v4248, %v4247
        %v4279 = vpack.c.b16 %v4250, %v4249
        %v4280 = vpack.c.b16 %v4252, %v4251
        %v4281 = vpack.c.b16 %v4254, %v4253
        %v4282 = vpack.c.b16 %v4256, %v4255
        %v4283 = vpack.c.b16 %v4258, %v4257
        %v4284 = vpack.c.b16 %v4260, %v4259
        %v4285 = vpack.c.b16 %v4262, %v4261
        %v4286 = vpack.c.b16 %v4264, %v4263
        %v4287 = vpack.c.b16 %v4266, %v4265
        %v4288 = vpack.c.b16 %v4268, %v4267
        %v4289 = vpack.c.b16 %v4270, %v4269
        %v4290 = vpack.c.b16 %v4272, %v4271
        %v4291 = vpack.c.b16 %v4274, %v4273
        %v4292 = vpack.c.b16 %v4276, %v4275
        %v4325 = vunpack.c.l.b16 %v4229
        %v4326 = vunpack.c.l.b16 %v4230
        %v4327 = vunpack.c.l.b16 %v4231
        %v4328 = vunpack.c.l.b16 %v4232
        %v4329 = vunpack.c.l.b16 %v4233
        %v4330 = vunpack.c.l.b16 %v4234
        %v4331 = vunpack.c.l.b16 %v4235
        %v4332 = vunpack.c.l.b16 %v4236
        %v4333 = vunpack.c.l.b16 %v4237
        %v4334 = vunpack.c.l.b16 %v4238
        %v4335 = vunpack.c.l.b16 %v4239
        %v4336 = vunpack.c.l.b16 %v4240
        %v4337 = vunpack.c.l.b16 %v4241
        %v4338 = vunpack.c.l.b16 %v4242
        %v4339 = vunpack.c.l.b16 %v4243
        %v4340 = vunpack.c.l.b16 %v4244
        %v4341 = vpack.c.b16 %v4326, %v4325
        %v4342 = vpack.c.b16 %v4328, %v4327
        %v4343 = vpack.c.b16 %v4330, %v4329
        %v4344 = vpack.c.b16 %v4332, %v4331
        %v4345 = vpack.c.b16 %v4334, %v4333
        %v4346 = vpack.c.b16 %v4336, %v4335
        %v4347 = vpack.c.b16 %v4338, %v4337
        %v4348 = vpack.c.b16 %v4340, %v4339
        %4357 = vmatprep.subr.bf16.mxu0 0
        %4358 = vmatpush1.bf16.msra.mxu0 %v4348
        %4359 = vmatprep.subr.bf16.mxu0 0
        %4360 = vmatpush1.bf16.msra.mxu0 %v4347
        %4361 = vmatprep.subr.bf16.mxu0 0
        %4362 = vmatpush1.bf16.msra.mxu0 %v4346
        %4363 = vmatprep.subr.bf16.mxu0 0
        %4364 = vmatpush1.bf16.msra.mxu0 %v4345
        %4365 = vmatprep.subr.bf16.mxu0 0
        %4366 = vmatpush1.bf16.msra.mxu0 %v4344
        %4367 = vmatprep.subr.bf16.mxu0 0
        %4368 = vmatpush1.bf16.msra.mxu0 %v4343
        %4369 = vmatprep.subr.bf16.mxu0 0
        %4370 = vmatpush1.bf16.msra.mxu0 %v4342
        %4371 = vmatprep.subr.bf16.mxu0 0
        %4372 = vmatpush1.bf16.msra.mxu0 %v4341
        %4373 = vmatprep.subr.bf16.mxu0 0
        %4374 = vmatpush2.bf16.msra.mxu0 0
        %4375 = vmatprep.subr.bf16.mxu0 0
        %4376 = vmatpush2.bf16.msra.mxu0 0
        %4377 = vmatprep.subr.bf16.mxu0 0
        %4378 = vmatpush2.bf16.msra.mxu0 0
        %4379 = vmatprep.subr.bf16.mxu0 0
        %4380 = vmatpush2.bf16.msra.mxu0 0
        %4381 = vmatprep.subr.bf16.mxu0 0
        %4382 = vmatpush2.bf16.msra.mxu0 0
        %4383 = vmatprep.subr.bf16.mxu0 0
        %4384 = vmatpush2.bf16.msra.mxu0 0
        %4385 = vmatprep.subr.bf16.mxu0 0
        %4386 = vmatpush2.bf16.msra.mxu0 0
        %4387 = vmatprep.subr.bf16.mxu0 0
        %4388 = vmatpush2.bf16.msra.mxu0 0
        %4389 = vmatprep.mubr.bf16.mxu0 0
        %4390 = vmatmul.mubr.bf16.gmra.mxu0 %v4277
        %v4391 = vpop.f32.mrf.mxu0
        %v4392 = vadd.f32 0.0, %v4391
        %v4393 = vpop.f32.mrf.mxu0
        %v4394 = vpop.f32.mrf.mxu0
        %v4395 = vadd.f32 0.0, %v4394
        %v4396 = vpop.f32.mrf.mxu0
        %4397 = vmatprep.mubr.bf16.mxu0 0
        %4398 = vmatmul.mubr.bf16.gmra.mxu0 %v4278
        %v4399 = vpop.f32.mrf.mxu0
        %v4400 = vadd.f32 0.0, %v4399
        %v4401 = vpop.f32.mrf.mxu0
        %v4402 = vpop.f32.mrf.mxu0
        %v4403 = vadd.f32 0.0, %v4402
        %v4404 = vpop.f32.mrf.mxu0
        %4405 = vmatprep.mubr.bf16.mxu0 0
        %4406 = vmatmul.mubr.bf16.gmra.mxu0 %v4279
        %v4407 = vpop.f32.mrf.mxu0
        %v4408 = vadd.f32 0.0, %v4407
        %v4409 = vpop.f32.mrf.mxu0
        %v4410 = vpop.f32.mrf.mxu0
        %v4411 = vadd.f32 0.0, %v4410
        %v4412 = vpop.f32.mrf.mxu0
        %4413 = vmatprep.mubr.bf16.mxu0 0
        %4414 = vmatmul.mubr.bf16.gmra.mxu0 %v4280
        %v4415 = vpop.f32.mrf.mxu0
        %v4416 = vadd.f32 0.0, %v4415
        %v4417 = vpop.f32.mrf.mxu0
        %v4418 = vpop.f32.mrf.mxu0
        %v4419 = vadd.f32 0.0, %v4418
        %v4420 = vpop.f32.mrf.mxu0
        %4421 = vmatprep.mubr.bf16.mxu0 0
        %4422 = vmatmul.mubr.bf16.gmra.mxu0 %v4281
        %v4423 = vpop.f32.mrf.mxu0
        %v4424 = vadd.f32 0.0, %v4423
        %v4425 = vpop.f32.mrf.mxu0
        %v4426 = vpop.f32.mrf.mxu0
        %v4427 = vadd.f32 0.0, %v4426
        %v4428 = vpop.f32.mrf.mxu0
        %4429 = vmatprep.mubr.bf16.mxu0 0
        %4430 = vmatmul.mubr.bf16.gmra.mxu0 %v4282
        %v4431 = vpop.f32.mrf.mxu0
        %v4432 = vadd.f32 0.0, %v4431
        %v4433 = vpop.f32.mrf.mxu0
        %v4434 = vpop.f32.mrf.mxu0
        %v4435 = vadd.f32 0.0, %v4434
        %v4436 = vpop.f32.mrf.mxu0
        %4437 = vmatprep.mubr.bf16.mxu0 0
        %4438 = vmatmul.mubr.bf16.gmra.mxu0 %v4283
        %v4439 = vpop.f32.mrf.mxu0
        %v4440 = vadd.f32 0.0, %v4439
        %v4441 = vpop.f32.mrf.mxu0
        %v4442 = vpop.f32.mrf.mxu0
        %v4443 = vadd.f32 0.0, %v4442
        %v4444 = vpop.f32.mrf.mxu0
        %4445 = vmatprep.mubr.bf16.mxu0 0
        %4446 = vmatmul.mubr.bf16.gmra.mxu0 %v4284
        %v4447 = vpop.f32.mrf.mxu0
        %v4448 = vadd.f32 0.0, %v4447
        %v4449 = vpop.f32.mrf.mxu0
        %v4450 = vpop.f32.mrf.mxu0
        %v4451 = vadd.f32 0.0, %v4450
        %v4452 = vpop.f32.mrf.mxu0
        %4453 = vmatprep.mubr.bf16.mxu0 0
        %4454 = vmatmul.mubr.bf16.gmra.mxu0 %v4285
        %v4455 = vpop.f32.mrf.mxu0
        %v4456 = vadd.f32 0.0, %v4455
        %v4457 = vpop.f32.mrf.mxu0
        %v4458 = vpop.f32.mrf.mxu0
        %v4459 = vadd.f32 0.0, %v4458
        %v4460 = vpop.f32.mrf.mxu0
        %4461 = vmatprep.mubr.bf16.mxu0 0
        %4462 = vmatmul.mubr.bf16.gmra.mxu0 %v4286
        %v4463 = vpop.f32.mrf.mxu0
        %v4464 = vadd.f32 0.0, %v4463
        %v4465 = vpop.f32.mrf.mxu0
        %v4466 = vpop.f32.mrf.mxu0
        %v4467 = vadd.f32 0.0, %v4466
        %v4468 = vpop.f32.mrf.mxu0
        %4469 = vmatprep.mubr.bf16.mxu0 0
        %4470 = vmatmul.mubr.bf16.gmra.mxu0 %v4287
        %v4471 = vpop.f32.mrf.mxu0
        %v4472 = vadd.f32 0.0, %v4471
        %v4473 = vpop.f32.mrf.mxu0
        %v4474 = vpop.f32.mrf.mxu0
        %v4475 = vadd.f32 0.0, %v4474
        %v4476 = vpop.f32.mrf.mxu0
        %4477 = vmatprep.mubr.bf16.mxu0 0
        %4478 = vmatmul.mubr.bf16.gmra.mxu0 %v4288
        %v4479 = vpop.f32.mrf.mxu0
        %v4480 = vadd.f32 0.0, %v4479
        %v4481 = vpop.f32.mrf.mxu0
        %v4482 = vpop.f32.mrf.mxu0
        %v4483 = vadd.f32 0.0, %v4482
        %v4484 = vpop.f32.mrf.mxu0
        %4485 = vmatprep.mubr.bf16.mxu0 0
        %4486 = vmatmul.mubr.bf16.gmra.mxu0 %v4289
        %v4487 = vpop.f32.mrf.mxu0
        %v4488 = vadd.f32 0.0, %v4487
        %v4489 = vpop.f32.mrf.mxu0
        %v4490 = vpop.f32.mrf.mxu0
        %v4491 = vadd.f32 0.0, %v4490
        %v4492 = vpop.f32.mrf.mxu0
        %4493 = vmatprep.mubr.bf16.mxu0 0
        %4494 = vmatmul.mubr.bf16.gmra.mxu0 %v4290
        %v4495 = vpop.f32.mrf.mxu0
        %v4496 = vadd.f32 0.0, %v4495
        %v4497 = vpop.f32.mrf.mxu0
        %v4498 = vpop.f32.mrf.mxu0
        %v4499 = vadd.f32 0.0, %v4498
        %v4500 = vpop.f32.mrf.mxu0
        %4501 = vmatprep.mubr.bf16.mxu0 0
        %4502 = vmatmul.mubr.bf16.gmra.mxu0 %v4291
        %v4503 = vpop.f32.mrf.mxu0
        %v4504 = vadd.f32 0.0, %v4503
        %v4505 = vpop.f32.mrf.mxu0
        %v4506 = vpop.f32.mrf.mxu0
        %v4507 = vadd.f32 0.0, %v4506
        %v4508 = vpop.f32.mrf.mxu0
        %4509 = vmatprep.mubr.bf16.mxu0 0
        %4510 = vmatmul.mubr.bf16.gmra.mxu0 %v4292
        %v4511 = vpop.f32.mrf.mxu0
        %v4512 = vadd.f32 0.0, %v4511
        %v4513 = vpop.f32.mrf.mxu0
        %v4514 = vpop.f32.mrf.mxu0
        %v4515 = vadd.f32 0.0, %v4514
        %v4516 = vpop.f32.mrf.mxu0
        %4517 = vdwg.mxu0
        %v4518 = vadd.f32 %v3764, %v4392
        %v4519 = vadd.f32 %v3765, %v4395
        %v4520 = vadd.f32 %v3766, %v4400
        %v4521 = vadd.f32 %v3767, %v4403
        %v4522 = vadd.f32 %v3768, %v4408
        %v4523 = vadd.f32 %v3769, %v4411
        %v4524 = vadd.f32 %v3770, %v4416
        %v4525 = vadd.f32 %v3771, %v4419
        %v4526 = vadd.f32 %v3772, %v4424
        %v4527 = vadd.f32 %v3773, %v4427
        %v4528 = vadd.f32 %v3774, %v4432
        %v4529 = vadd.f32 %v3775, %v4435
        %v4530 = vadd.f32 %v3776, %v4440
        %v4531 = vadd.f32 %v3777, %v4443
        %v4532 = vadd.f32 %v3778, %v4448
        %v4533 = vadd.f32 %v3779, %v4451
        %v4534 = vadd.f32 %v3780, %v4456
        %v4535 = vadd.f32 %v3781, %v4459
        %v4536 = vadd.f32 %v3782, %v4464
        %v4537 = vadd.f32 %v3783, %v4467
        %v4538 = vadd.f32 %v3784, %v4472
        %v4539 = vadd.f32 %v3785, %v4475
        %v4540 = vadd.f32 %v3786, %v4480
        %v4541 = vadd.f32 %v3787, %v4483
        %v4542 = vadd.f32 %v3788, %v4488
        %v4543 = vadd.f32 %v3789, %v4491
        %v4544 = vadd.f32 %v3790, %v4496
        %v4545 = vadd.f32 %v3791, %v4499
        %v4546 = vadd.f32 %v3792, %v4504
        %v4547 = vadd.f32 %v3793, %v4507
        %v4548 = vadd.f32 %v3794, %v4512
        %v4549 = vadd.f32 %v3795, %v4515
        %v4550 = vld [vmem:[%s3409] sm:$0xe]
        %v4551 = vld [vmem:[%s3409 + $0xc] sm:$0xe]
        %v4552 = vld [vmem:[%s3409 + $0x18] sm:$0xe]
        %v4553 = vld [vmem:[%s3409 + $0x24] sm:$0xe]
        %v4554 = vld [vmem:[%s3409 + $0x30] sm:$0xe]
        %v4555 = vld [vmem:[%s3409 + $0x3c] sm:$0xe]
        %v4556 = vld [vmem:[%s3409 + $0x48] sm:$0xe]
        %v4557 = vld [vmem:[%s3409 + $0x54] sm:$0xe]
        %v4558 = vld [vmem:[%s3409 + $0x60] sm:$0xe]
        %v4559 = vld [vmem:[%s3409 + $0x6c] sm:$0xe]
        %v4560 = vld [vmem:[%s3409 + $0x78] sm:$0xe]
        %v4561 = vld [vmem:[%s3409 + $0x84] sm:$0xe]
        %v4562 = vld [vmem:[%s3409 + $0x90] sm:$0xe]
        %v4563 = vld [vmem:[%s3409 + $0x9c] sm:$0xe]
        %v4564 = vld [vmem:[%s3409 + $0xa8] sm:$0xe]
        %v4565 = vld [vmem:[%s3409 + $0xb4] sm:$0xe]
        %v4614 = vrot.slane %v4550, 5
        %v4615 = vrot.slane %v4614, 4
        %v4616 = vrot.slane %v3797, 5
        %v4617 = vsel %vm1335, %v4615, %v4616
        %v4618 = vrot.slane %v4616, 4
        %v4619 = vrot.slane %v3798, 5
        %v4620 = vsel %vm1335, %v4618, %v4619
        %v4621 = vrot.slane %v4551, 5
        %v4622 = vrot.slane %v4621, 4
        %v4623 = vrot.slane %v3800, 5
        %v4624 = vsel %vm1335, %v4622, %v4623
        %v4625 = vrot.slane %v4623, 4
        %v4626 = vrot.slane %v3801, 5
        %v4627 = vsel %vm1335, %v4625, %v4626
        %v4628 = vrot.slane %v4552, 5
        %v4629 = vrot.slane %v4628, 4
        %v4630 = vrot.slane %v3803, 5
        %v4631 = vsel %vm1335, %v4629, %v4630
        %v4632 = vrot.slane %v4630, 4
        %v4633 = vrot.slane %v3804, 5
        %v4634 = vsel %vm1335, %v4632, %v4633
        %v4635 = vrot.slane %v4553, 5
        %v4636 = vrot.slane %v4635, 4
        %v4637 = vrot.slane %v3806, 5
        %v4638 = vsel %vm1335, %v4636, %v4637
        %v4639 = vrot.slane %v4637, 4
        %v4640 = vrot.slane %v3807, 5
        %v4641 = vsel %vm1335, %v4639, %v4640
        %v4642 = vrot.slane %v4554, 5
        %v4643 = vrot.slane %v4642, 4
        %v4644 = vrot.slane %v3809, 5
        %v4645 = vsel %vm1335, %v4643, %v4644
        %v4646 = vrot.slane %v4644, 4
        %v4647 = vrot.slane %v3810, 5
        %v4648 = vsel %vm1335, %v4646, %v4647
        %v4649 = vrot.slane %v4555, 5
        %v4650 = vrot.slane %v4649, 4
        %v4651 = vrot.slane %v3812, 5
        %v4652 = vsel %vm1335, %v4650, %v4651
        %v4653 = vrot.slane %v4651, 4
        %v4654 = vrot.slane %v3813, 5
        %v4655 = vsel %vm1335, %v4653, %v4654
        %v4656 = vrot.slane %v4556, 5
        %v4657 = vrot.slane %v4656, 4
        %v4658 = vrot.slane %v3815, 5
        %v4659 = vsel %vm1335, %v4657, %v4658
        %v4660 = vrot.slane %v4658, 4
        %v4661 = vrot.slane %v3816, 5
        %v4662 = vsel %vm1335, %v4660, %v4661
        %v4663 = vrot.slane %v4557, 5
        %v4664 = vrot.slane %v4663, 4
        %v4665 = vrot.slane %v3818, 5
        %v4666 = vsel %vm1335, %v4664, %v4665
        %v4667 = vrot.slane %v4665, 4
        %v4668 = vrot.slane %v3819, 5
        %v4669 = vsel %vm1335, %v4667, %v4668
        %v4670 = vrot.slane %v4558, 5
        %v4671 = vrot.slane %v4670, 4
        %v4672 = vrot.slane %v3821, 5
        %v4673 = vsel %vm1335, %v4671, %v4672
        %v4674 = vrot.slane %v4672, 4
        %v4675 = vrot.slane %v3822, 5
        %v4676 = vsel %vm1335, %v4674, %v4675
        %v4677 = vrot.slane %v4559, 5
        %v4678 = vrot.slane %v4677, 4
        %v4679 = vrot.slane %v3824, 5
        %v4680 = vsel %vm1335, %v4678, %v4679
        %v4681 = vrot.slane %v4679, 4
        %v4682 = vrot.slane %v3825, 5
        %v4683 = vsel %vm1335, %v4681, %v4682
        %v4684 = vrot.slane %v4560, 5
        %v4685 = vrot.slane %v4684, 4
        %v4686 = vrot.slane %v3827, 5
        %v4687 = vsel %vm1335, %v4685, %v4686
        %v4688 = vrot.slane %v4686, 4
        %v4689 = vrot.slane %v3828, 5
        %v4690 = vsel %vm1335, %v4688, %v4689
        %v4691 = vrot.slane %v4561, 5
        %v4692 = vrot.slane %v4691, 4
        %v4693 = vrot.slane %v3830, 5
        %v4694 = vsel %vm1335, %v4692, %v4693
        %v4695 = vrot.slane %v4693, 4
        %v4696 = vrot.slane %v3831, 5
        %v4697 = vsel %vm1335, %v4695, %v4696
        %v4698 = vrot.slane %v4562, 5
        %v4699 = vrot.slane %v4698, 4
        %v4700 = vrot.slane %v3833, 5
        %v4701 = vsel %vm1335, %v4699, %v4700
        %v4702 = vrot.slane %v4700, 4
        %v4703 = vrot.slane %v3834, 5
        %v4704 = vsel %vm1335, %v4702, %v4703
        %v4705 = vrot.slane %v4563, 5
        %v4706 = vrot.slane %v4705, 4
        %v4707 = vrot.slane %v3836, 5
        %v4708 = vsel %vm1335, %v4706, %v4707
        %v4709 = vrot.slane %v4707, 4
        %v4710 = vrot.slane %v3837, 5
        %v4711 = vsel %vm1335, %v4709, %v4710
        %v4712 = vrot.slane %v4564, 5
        %v4713 = vrot.slane %v4712, 4
        %v4714 = vrot.slane %v3839, 5
        %v4715 = vsel %vm1335, %v4713, %v4714
        %v4716 = vrot.slane %v4714, 4
        %v4717 = vrot.slane %v3840, 5
        %v4718 = vsel %vm1335, %v4716, %v4717
        %v4719 = vrot.slane %v4565, 5
        %v4720 = vrot.slane %v4719, 4
        %v4721 = vrot.slane %v3842, 5
        %v4722 = vsel %vm1335, %v4720, %v4721
        %v4723 = vrot.slane %v4721, 4
        %v4724 = vrot.slane %v3843, 5
        %v4725 = vsel %vm1335, %v4723, %v4724
        %s4726 = scalar_lea.vmem %s1, 512
        %v4727 = vld [vmem:[%s4726] sm:$0xf]
        %v4728 = vld [vmem:[%s4726 + $0x4] sm:$0xf]
        %v4729 = vld [vmem:[%s4726 + $0x8] sm:$0xf]
        %v4730 = vld [vmem:[%s4726 + $0xc] sm:$0xf]
        %v4731 = vld [vmem:[%s4726 + $0x10] sm:$0xf]
        %v4732 = vld [vmem:[%s4726 + $0x14] sm:$0xf]
        %v4733 = vld [vmem:[%s4726 + $0x18] sm:$0xf]
        %v4734 = vld [vmem:[%s4726 + $0x1c] sm:$0xf]
        %v4735 = vld [vmem:[%s4726 + $0x20] sm:$0xf]
        %v4736 = vld [vmem:[%s4726 + $0x24] sm:$0xf]
        %v4737 = vld [vmem:[%s4726 + $0x28] sm:$0xf]
        %v4738 = vld [vmem:[%s4726 + $0x2c] sm:$0xf]
        %v4739 = vld [vmem:[%s4726 + $0x30] sm:$0xf]
        %v4740 = vld [vmem:[%s4726 + $0x34] sm:$0xf]
        %v4741 = vld [vmem:[%s4726 + $0x38] sm:$0xf]
        %v4742 = vld [vmem:[%s4726 + $0x3c] sm:$0xf]
        %v4743 = vunpack.c.l.b16 %v4617
        %v4744 = vunpack.c.l.b16 %v4620
        %v4745 = vunpack.c.l.b16 %v4624
        %v4746 = vunpack.c.l.b16 %v4627
        %v4747 = vunpack.c.l.b16 %v4631
        %v4748 = vunpack.c.l.b16 %v4634
        %v4749 = vunpack.c.l.b16 %v4638
        %v4750 = vunpack.c.l.b16 %v4641
        %v4751 = vunpack.c.l.b16 %v4645
        %v4752 = vunpack.c.l.b16 %v4648
        %v4753 = vunpack.c.l.b16 %v4652
        %v4754 = vunpack.c.l.b16 %v4655
        %v4755 = vunpack.c.l.b16 %v4659
        %v4756 = vunpack.c.l.b16 %v4662
        %v4757 = vunpack.c.l.b16 %v4666
        %v4758 = vunpack.c.l.b16 %v4669
        %v4759 = vunpack.c.l.b16 %v4673
        %v4760 = vunpack.c.l.b16 %v4676
        %v4761 = vunpack.c.l.b16 %v4680
        %v4762 = vunpack.c.l.b16 %v4683
        %v4763 = vunpack.c.l.b16 %v4687
        %v4764 = vunpack.c.l.b16 %v4690
        %v4765 = vunpack.c.l.b16 %v4694
        %v4766 = vunpack.c.l.b16 %v4697
        %v4767 = vunpack.c.l.b16 %v4701
        %v4768 = vunpack.c.l.b16 %v4704
        %v4769 = vunpack.c.l.b16 %v4708
        %v4770 = vunpack.c.l.b16 %v4711
        %v4771 = vunpack.c.l.b16 %v4715
        %v4772 = vunpack.c.l.b16 %v4718
        %v4773 = vunpack.c.l.b16 %v4722
        %v4774 = vunpack.c.l.b16 %v4725
        %v4775 = vpack.c.b16 %v4744, %v4743
        %v4776 = vpack.c.b16 %v4746, %v4745
        %v4777 = vpack.c.b16 %v4748, %v4747
        %v4778 = vpack.c.b16 %v4750, %v4749
        %v4779 = vpack.c.b16 %v4752, %v4751
        %v4780 = vpack.c.b16 %v4754, %v4753
        %v4781 = vpack.c.b16 %v4756, %v4755
        %v4782 = vpack.c.b16 %v4758, %v4757
        %v4783 = vpack.c.b16 %v4760, %v4759
        %v4784 = vpack.c.b16 %v4762, %v4761
        %v4785 = vpack.c.b16 %v4764, %v4763
        %v4786 = vpack.c.b16 %v4766, %v4765
        %v4787 = vpack.c.b16 %v4768, %v4767
        %v4788 = vpack.c.b16 %v4770, %v4769
        %v4789 = vpack.c.b16 %v4772, %v4771
        %v4790 = vpack.c.b16 %v4774, %v4773
        %v4823 = vunpack.c.l.b16 %v4727
        %v4824 = vunpack.c.l.b16 %v4728
        %v4825 = vunpack.c.l.b16 %v4729
        %v4826 = vunpack.c.l.b16 %v4730
        %v4827 = vunpack.c.l.b16 %v4731
        %v4828 = vunpack.c.l.b16 %v4732
        %v4829 = vunpack.c.l.b16 %v4733
        %v4830 = vunpack.c.l.b16 %v4734
        %v4831 = vunpack.c.l.b16 %v4735
        %v4832 = vunpack.c.l.b16 %v4736
        %v4833 = vunpack.c.l.b16 %v4737
        %v4834 = vunpack.c.l.b16 %v4738
        %v4835 = vunpack.c.l.b16 %v4739
        %v4836 = vunpack.c.l.b16 %v4740
        %v4837 = vunpack.c.l.b16 %v4741
        %v4838 = vunpack.c.l.b16 %v4742
        %v4839 = vpack.c.b16 %v4824, %v4823
        %v4840 = vpack.c.b16 %v4826, %v4825
        %v4841 = vpack.c.b16 %v4828, %v4827
        %v4842 = vpack.c.b16 %v4830, %v4829
        %v4843 = vpack.c.b16 %v4832, %v4831
        %v4844 = vpack.c.b16 %v4834, %v4833
        %v4845 = vpack.c.b16 %v4836, %v4835
        %v4846 = vpack.c.b16 %v4838, %v4837
        %4855 = vmatprep.subr.bf16.mxu0 0
        %4856 = vmatpush1.bf16.msra.mxu0 %v4846
        %4857 = vmatprep.subr.bf16.mxu0 0
        %4858 = vmatpush1.bf16.msra.mxu0 %v4845
        %4859 = vmatprep.subr.bf16.mxu0 0
        %4860 = vmatpush1.bf16.msra.mxu0 %v4844
        %4861 = vmatprep.subr.bf16.mxu0 0
        %4862 = vmatpush1.bf16.msra.mxu0 %v4843
        %4863 = vmatprep.subr.bf16.mxu0 0
        %4864 = vmatpush1.bf16.msra.mxu0 %v4842
        %4865 = vmatprep.subr.bf16.mxu0 0
        %4866 = vmatpush1.bf16.msra.mxu0 %v4841
        %4867 = vmatprep.subr.bf16.mxu0 0
        %4868 = vmatpush1.bf16.msra.mxu0 %v4840
        %4869 = vmatprep.subr.bf16.mxu0 0
        %4870 = vmatpush1.bf16.msra.mxu0 %v4839
        %4871 = vmatprep.subr.bf16.mxu0 0
        %4872 = vmatpush2.bf16.msra.mxu0 0
        %4873 = vmatprep.subr.bf16.mxu0 0
        %4874 = vmatpush2.bf16.msra.mxu0 0
        %4875 = vmatprep.subr.bf16.mxu0 0
        %4876 = vmatpush2.bf16.msra.mxu0 0
        %4877 = vmatprep.subr.bf16.mxu0 0
        %4878 = vmatpush2.bf16.msra.mxu0 0
        %4879 = vmatprep.subr.bf16.mxu0 0
        %4880 = vmatpush2.bf16.msra.mxu0 0
        %4881 = vmatprep.subr.bf16.mxu0 0
        %4882 = vmatpush2.bf16.msra.mxu0 0
        %4883 = vmatprep.subr.bf16.mxu0 0
        %4884 = vmatpush2.bf16.msra.mxu0 0
        %4885 = vmatprep.subr.bf16.mxu0 0
        %4886 = vmatpush2.bf16.msra.mxu0 0
        %4887 = vmatprep.mubr.bf16.mxu0 0
        %4888 = vmatmul.mubr.bf16.gmra.mxu0 %v4775
        %v4889 = vpop.f32.mrf.mxu0
        %v4890 = vadd.f32 0.0, %v4889
        %v4891 = vpop.f32.mrf.mxu0
        %v4892 = vpop.f32.mrf.mxu0
        %v4893 = vadd.f32 0.0, %v4892
        %v4894 = vpop.f32.mrf.mxu0
        %4895 = vmatprep.mubr.bf16.mxu0 0
        %4896 = vmatmul.mubr.bf16.gmra.mxu0 %v4776
        %v4897 = vpop.f32.mrf.mxu0
        %v4898 = vadd.f32 0.0, %v4897
        %v4899 = vpop.f32.mrf.mxu0
        %v4900 = vpop.f32.mrf.mxu0
        %v4901 = vadd.f32 0.0, %v4900
        %v4902 = vpop.f32.mrf.mxu0
        %4903 = vmatprep.mubr.bf16.mxu0 0
        %4904 = vmatmul.mubr.bf16.gmra.mxu0 %v4777
        %v4905 = vpop.f32.mrf.mxu0
        %v4906 = vadd.f32 0.0, %v4905
        %v4907 = vpop.f32.mrf.mxu0
        %v4908 = vpop.f32.mrf.mxu0
        %v4909 = vadd.f32 0.0, %v4908
        %v4910 = vpop.f32.mrf.mxu0
        %4911 = vmatprep.mubr.bf16.mxu0 0
        %4912 = vmatmul.mubr.bf16.gmra.mxu0 %v4778
        %v4913 = vpop.f32.mrf.mxu0
        %v4914 = vadd.f32 0.0, %v4913
        %v4915 = vpop.f32.mrf.mxu0
        %v4916 = vpop.f32.mrf.mxu0
        %v4917 = vadd.f32 0.0, %v4916
        %v4918 = vpop.f32.mrf.mxu0
        %4919 = vmatprep.mubr.bf16.mxu0 0
        %4920 = vmatmul.mubr.bf16.gmra.mxu0 %v4779
        %v4921 = vpop.f32.mrf.mxu0
        %v4922 = vadd.f32 0.0, %v4921
        %v4923 = vpop.f32.mrf.mxu0
        %v4924 = vpop.f32.mrf.mxu0
        %v4925 = vadd.f32 0.0, %v4924
        %v4926 = vpop.f32.mrf.mxu0
        %4927 = vmatprep.mubr.bf16.mxu0 0
        %4928 = vmatmul.mubr.bf16.gmra.mxu0 %v4780
        %v4929 = vpop.f32.mrf.mxu0
        %v4930 = vadd.f32 0.0, %v4929
        %v4931 = vpop.f32.mrf.mxu0
        %v4932 = vpop.f32.mrf.mxu0
        %v4933 = vadd.f32 0.0, %v4932
        %v4934 = vpop.f32.mrf.mxu0
        %4935 = vmatprep.mubr.bf16.mxu0 0
        %4936 = vmatmul.mubr.bf16.gmra.mxu0 %v4781
        %v4937 = vpop.f32.mrf.mxu0
        %v4938 = vadd.f32 0.0, %v4937
        %v4939 = vpop.f32.mrf.mxu0
        %v4940 = vpop.f32.mrf.mxu0
        %v4941 = vadd.f32 0.0, %v4940
        %v4942 = vpop.f32.mrf.mxu0
        %4943 = vmatprep.mubr.bf16.mxu0 0
        %4944 = vmatmul.mubr.bf16.gmra.mxu0 %v4782
        %v4945 = vpop.f32.mrf.mxu0
        %v4946 = vadd.f32 0.0, %v4945
        %v4947 = vpop.f32.mrf.mxu0
        %v4948 = vpop.f32.mrf.mxu0
        %v4949 = vadd.f32 0.0, %v4948
        %v4950 = vpop.f32.mrf.mxu0
        %4951 = vmatprep.mubr.bf16.mxu0 0
        %4952 = vmatmul.mubr.bf16.gmra.mxu0 %v4783
        %v4953 = vpop.f32.mrf.mxu0
        %v4954 = vadd.f32 0.0, %v4953
        %v4955 = vpop.f32.mrf.mxu0
        %v4956 = vpop.f32.mrf.mxu0
        %v4957 = vadd.f32 0.0, %v4956
        %v4958 = vpop.f32.mrf.mxu0
        %4959 = vmatprep.mubr.bf16.mxu0 0
        %4960 = vmatmul.mubr.bf16.gmra.mxu0 %v4784
        %v4961 = vpop.f32.mrf.mxu0
        %v4962 = vadd.f32 0.0, %v4961
        %v4963 = vpop.f32.mrf.mxu0
        %v4964 = vpop.f32.mrf.mxu0
        %v4965 = vadd.f32 0.0, %v4964
        %v4966 = vpop.f32.mrf.mxu0
        %4967 = vmatprep.mubr.bf16.mxu0 0
        %4968 = vmatmul.mubr.bf16.gmra.mxu0 %v4785
        %v4969 = vpop.f32.mrf.mxu0
        %v4970 = vadd.f32 0.0, %v4969
        %v4971 = vpop.f32.mrf.mxu0
        %v4972 = vpop.f32.mrf.mxu0
        %v4973 = vadd.f32 0.0, %v4972
        %v4974 = vpop.f32.mrf.mxu0
        %4975 = vmatprep.mubr.bf16.mxu0 0
        %4976 = vmatmul.mubr.bf16.gmra.mxu0 %v4786
        %v4977 = vpop.f32.mrf.mxu0
        %v4978 = vadd.f32 0.0, %v4977
        %v4979 = vpop.f32.mrf.mxu0
        %v4980 = vpop.f32.mrf.mxu0
        %v4981 = vadd.f32 0.0, %v4980
        %v4982 = vpop.f32.mrf.mxu0
        %4983 = vmatprep.mubr.bf16.mxu0 0
        %4984 = vmatmul.mubr.bf16.gmra.mxu0 %v4787
        %v4985 = vpop.f32.mrf.mxu0
        %v4986 = vadd.f32 0.0, %v4985
        %v4987 = vpop.f32.mrf.mxu0
        %v4988 = vpop.f32.mrf.mxu0
        %v4989 = vadd.f32 0.0, %v4988
        %v4990 = vpop.f32.mrf.mxu0
        %4991 = vmatprep.mubr.bf16.mxu0 0
        %4992 = vmatmul.mubr.bf16.gmra.mxu0 %v4788
        %v4993 = vpop.f32.mrf.mxu0
        %v4994 = vadd.f32 0.0, %v4993
        %v4995 = vpop.f32.mrf.mxu0
        %v4996 = vpop.f32.mrf.mxu0
        %v4997 = vadd.f32 0.0, %v4996
        %v4998 = vpop.f32.mrf.mxu0
        %4999 = vmatprep.mubr.bf16.mxu0 0
        %5000 = vmatmul.mubr.bf16.gmra.mxu0 %v4789
        %v5001 = vpop.f32.mrf.mxu0
        %v5002 = vadd.f32 0.0, %v5001
        %v5003 = vpop.f32.mrf.mxu0
        %v5004 = vpop.f32.mrf.mxu0
        %v5005 = vadd.f32 0.0, %v5004
        %v5006 = vpop.f32.mrf.mxu0
        %5007 = vmatprep.mubr.bf16.mxu0 0
        %5008 = vmatmul.mubr.bf16.gmra.mxu0 %v4790
        %v5009 = vpop.f32.mrf.mxu0
        %v5010 = vadd.f32 0.0, %v5009
        %v5011 = vpop.f32.mrf.mxu0
        %v5012 = vpop.f32.mrf.mxu0
        %v5013 = vadd.f32 0.0, %v5012
        %v5014 = vpop.f32.mrf.mxu0
        %5015 = vdwg.mxu0
        %v5016 = vadd.f32 %v4518, %v4890
        %v5017 = vadd.f32 %v4519, %v4893
        %v5018 = vadd.f32 %v4520, %v4898
        %v5019 = vadd.f32 %v4521, %v4901
        %v5020 = vadd.f32 %v4522, %v4906
        %v5021 = vadd.f32 %v4523, %v4909
        %v5022 = vadd.f32 %v4524, %v4914
        %v5023 = vadd.f32 %v4525, %v4917
        %v5024 = vadd.f32 %v4526, %v4922
        %v5025 = vadd.f32 %v4527, %v4925
        %v5026 = vadd.f32 %v4528, %v4930
        %v5027 = vadd.f32 %v4529, %v4933
        %v5028 = vadd.f32 %v4530, %v4938
        %v5029 = vadd.f32 %v4531, %v4941
        %v5030 = vadd.f32 %v4532, %v4946
        %v5031 = vadd.f32 %v4533, %v4949
        %v5032 = vadd.f32 %v4534, %v4954
        %v5033 = vadd.f32 %v4535, %v4957
        %v5034 = vadd.f32 %v4536, %v4962
        %v5035 = vadd.f32 %v4537, %v4965
        %v5036 = vadd.f32 %v4538, %v4970
        %v5037 = vadd.f32 %v4539, %v4973
        %v5038 = vadd.f32 %v4540, %v4978
        %v5039 = vadd.f32 %v4541, %v4981
        %v5040 = vadd.f32 %v4542, %v4986
        %v5041 = vadd.f32 %v4543, %v4989
        %v5042 = vadd.f32 %v4544, %v4994
        %v5043 = vadd.f32 %v4545, %v4997
        %v5044 = vadd.f32 %v4546, %v5002
        %v5045 = vadd.f32 %v4547, %v5005
        %v5046 = vadd.f32 %v4548, %v5010
        %v5047 = vadd.f32 %v4549, %v5013
        %v5048 = vld [vmem:[%s2] sm:$0x1]
        %v5050 = vlaneseq
        %v5051 = vshrl.u32 %v5050, 7
        %v5052 = vsub.s32 0, %v5051
        %v5053 = vrot.slane %v5048, %v5052
        %v5055 = vadd.f32 %v5016, %v5053
        %v5056 = vadd.f32 %v5017, %v5053
        %v5057 = vadd.f32 %v5018, %v5053
        %v5058 = vadd.f32 %v5019, %v5053
        %v5059 = vadd.f32 %v5020, %v5053
        %v5060 = vadd.f32 %v5021, %v5053
        %v5061 = vadd.f32 %v5022, %v5053
        %v5062 = vadd.f32 %v5023, %v5053
        %v5063 = vadd.f32 %v5024, %v5053
        %v5064 = vadd.f32 %v5025, %v5053
        %v5065 = vadd.f32 %v5026, %v5053
        %v5066 = vadd.f32 %v5027, %v5053
        %v5067 = vadd.f32 %v5028, %v5053
        %v5068 = vadd.f32 %v5029, %v5053
        %v5069 = vadd.f32 %v5030, %v5053
        %v5070 = vadd.f32 %v5031, %v5053
        %v5071 = vadd.f32 %v5032, %v5053
        %v5072 = vadd.f32 %v5033, %v5053
        %v5073 = vadd.f32 %v5034, %v5053
        %v5074 = vadd.f32 %v5035, %v5053
        %v5075 = vadd.f32 %v5036, %v5053
        %v5076 = vadd.f32 %v5037, %v5053
        %v5077 = vadd.f32 %v5038, %v5053
        %v5078 = vadd.f32 %v5039, %v5053
        %v5079 = vadd.f32 %v5040, %v5053
        %v5080 = vadd.f32 %v5041, %v5053
        %v5081 = vadd.f32 %v5042, %v5053
        %v5082 = vadd.f32 %v5043, %v5053
        %v5083 = vadd.f32 %v5044, %v5053
        %v5084 = vadd.f32 %v5045, %v5053
        %v5085 = vadd.f32 %v5046, %v5053
        %v5086 = vadd.f32 %v5047, %v5053
        %v5087 = vmax.f32 %v5055, 0.0
        %v5088 = vmax.f32 %v5056, 0.0
        %v5089 = vmax.f32 %v5057, 0.0
        %v5090 = vmax.f32 %v5058, 0.0
        %v5091 = vmax.f32 %v5059, 0.0
        %v5092 = vmax.f32 %v5060, 0.0
        %v5093 = vmax.f32 %v5061, 0.0
        %v5094 = vmax.f32 %v5062, 0.0
        %v5095 = vmax.f32 %v5063, 0.0
        %v5096 = vmax.f32 %v5064, 0.0
        %v5097 = vmax.f32 %v5065, 0.0
        %v5098 = vmax.f32 %v5066, 0.0
        %v5099 = vmax.f32 %v5067, 0.0
        %v5100 = vmax.f32 %v5068, 0.0
        %v5101 = vmax.f32 %v5069, 0.0
        %v5102 = vmax.f32 %v5070, 0.0
        %v5103 = vmax.f32 %v5071, 0.0
        %v5104 = vmax.f32 %v5072, 0.0
        %v5105 = vmax.f32 %v5073, 0.0
        %v5106 = vmax.f32 %v5074, 0.0
        %v5107 = vmax.f32 %v5075, 0.0
        %v5108 = vmax.f32 %v5076, 0.0
        %v5109 = vmax.f32 %v5077, 0.0
        %v5110 = vmax.f32 %v5078, 0.0
        %v5111 = vmax.f32 %v5079, 0.0
        %v5112 = vmax.f32 %v5080, 0.0
        %v5113 = vmax.f32 %v5081, 0.0
        %v5114 = vmax.f32 %v5082, 0.0
        %v5115 = vmax.f32 %v5083, 0.0
        %v5116 = vmax.f32 %v5084, 0.0
        %v5117 = vmax.f32 %v5085, 0.0
        %v5118 = vmax.f32 %v5086, 0.0
        %v5119 = vpack.c.bf16 %v5088, %v5087
        %v5120 = vpack.c.bf16 %v5090, %v5089
        %v5121 = vpack.c.bf16 %v5092, %v5091
        %v5122 = vpack.c.bf16 %v5094, %v5093
        %v5123 = vpack.c.bf16 %v5096, %v5095
        %v5124 = vpack.c.bf16 %v5098, %v5097
        %v5125 = vpack.c.bf16 %v5100, %v5099
        %v5126 = vpack.c.bf16 %v5102, %v5101
        %v5127 = vpack.c.bf16 %v5104, %v5103
        %v5128 = vpack.c.bf16 %v5106, %v5105
        %v5129 = vpack.c.bf16 %v5108, %v5107
        %v5130 = vpack.c.bf16 %v5110, %v5109
        %v5131 = vpack.c.bf16 %v5112, %v5111
        %v5132 = vpack.c.bf16 %v5114, %v5113
        %v5133 = vpack.c.bf16 %v5116, %v5115
        %v5134 = vpack.c.bf16 %v5118, %v5117
        %5135 = vst [vmem:[#allocation2] sm:$0xf] 0
        %5136 = vst [vmem:[#allocation2 + $0x4] sm:$0xf] 0
        %5137 = vst [vmem:[#allocation2 + $0x8] sm:$0x1] 0
        %s5138 = scalar_lea.vmem [#allocation2], 204
        %5139 = vst [vmem:[%s5138] sm:$0xf] 0
        %5140 = vst [vmem:[%s5138 + $0x4] sm:$0xf] 0
        %5141 = vst [vmem:[%s5138 + $0x8] sm:$0x1] 0
        %s5142 = scalar_lea.vmem [#allocation2], 12
        %vm5143 = vcmask 1040384
        %vm5144 = vsmask.f32 256
        %vm5145 = vmand %vm5143, %vm5144
        %v5146 = vld [vmem:[%s5142] sm:$0x1]
        %v5147 = vsel %vm5145, 0, %v5146
        %5148 = vst [vmem:[%s5142] sm:$0x1] %v5147
        %v5149 = vld [vmem:[%s5142 + $0xc] sm:$0x1]
        %v5150 = vsel %vm5145, 0, %v5149
        %5151 = vst [vmem:[%s5142 + $0xc] sm:$0x1] %v5150
        %v5152 = vld [vmem:[%s5142 + $0x18] sm:$0x1]
        %v5153 = vsel %vm5145, 0, %v5152
        %5154 = vst [vmem:[%s5142 + $0x18] sm:$0x1] %v5153
        %v5155 = vld [vmem:[%s5142 + $0x24] sm:$0x1]
        %v5156 = vsel %vm5145, 0, %v5155
        %5157 = vst [vmem:[%s5142 + $0x24] sm:$0x1] %v5156
        %v5158 = vld [vmem:[%s5142 + $0x30] sm:$0x1]
        %v5159 = vsel %vm5145, 0, %v5158
        %5160 = vst [vmem:[%s5142 + $0x30] sm:$0x1] %v5159
        %v5161 = vld [vmem:[%s5142 + $0x3c] sm:$0x1]
        %v5162 = vsel %vm5145, 0, %v5161
        %5163 = vst [vmem:[%s5142 + $0x3c] sm:$0x1] %v5162
        %v5164 = vld [vmem:[%s5142 + $0x48] sm:$0x1]
        %v5165 = vsel %vm5145, 0, %v5164
        %5166 = vst [vmem:[%s5142 + $0x48] sm:$0x1] %v5165
        %v5167 = vld [vmem:[%s5142 + $0x54] sm:$0x1]
        %v5168 = vsel %vm5145, 0, %v5167
        %5169 = vst [vmem:[%s5142 + $0x54] sm:$0x1] %v5168
        %v5170 = vld [vmem:[%s5142 + $0x60] sm:$0x1]
        %v5171 = vsel %vm5145, 0, %v5170
        %5172 = vst [vmem:[%s5142 + $0x60] sm:$0x1] %v5171
        %v5173 = vld [vmem:[%s5142 + $0x6c] sm:$0x1]
        %v5174 = vsel %vm5145, 0, %v5173
        %5175 = vst [vmem:[%s5142 + $0x6c] sm:$0x1] %v5174
        %v5176 = vld [vmem:[%s5142 + $0x78] sm:$0x1]
        %v5177 = vsel %vm5145, 0, %v5176
        %5178 = vst [vmem:[%s5142 + $0x78] sm:$0x1] %v5177
        %v5179 = vld [vmem:[%s5142 + $0x84] sm:$0x1]
        %v5180 = vsel %vm5145, 0, %v5179
        %5181 = vst [vmem:[%s5142 + $0x84] sm:$0x1] %v5180
        %v5182 = vld [vmem:[%s5142 + $0x90] sm:$0x1]
        %v5183 = vsel %vm5145, 0, %v5182
        %5184 = vst [vmem:[%s5142 + $0x90] sm:$0x1] %v5183
        %v5185 = vld [vmem:[%s5142 + $0x9c] sm:$0x1]
        %v5186 = vsel %vm5145, 0, %v5185
        %5187 = vst [vmem:[%s5142 + $0x9c] sm:$0x1] %v5186
        %v5188 = vld [vmem:[%s5142 + $0xa8] sm:$0x1]
        %v5189 = vsel %vm5145, 0, %v5188
        %5190 = vst [vmem:[%s5142 + $0xa8] sm:$0x1] %v5189
        %v5191 = vld [vmem:[%s5142 + $0xb4] sm:$0x1]
        %v5192 = vsel %vm5145, 0, %v5191
        %5193 = vst [vmem:[%s5142 + $0xb4] sm:$0x1] %v5192
        %vm5194 = vsmask.f32 7938
        %vm5195 = vmand %vm5143, %vm5194
        %v5196 = vld [vmem:[%s5142 + $0x8] sm:$0x1]
        %v5197 = vsel %vm5195, 0, %v5196
        %5198 = vst [vmem:[%s5142 + $0x8] sm:$0x1] %v5197
        %v5199 = vld [vmem:[%s5142 + $0x14] sm:$0x1]
        %v5200 = vsel %vm5195, 0, %v5199
        %5201 = vst [vmem:[%s5142 + $0x14] sm:$0x1] %v5200
        %v5202 = vld [vmem:[%s5142 + $0x20] sm:$0x1]
        %v5203 = vsel %vm5195, 0, %v5202
        %5204 = vst [vmem:[%s5142 + $0x20] sm:$0x1] %v5203
        %v5205 = vld [vmem:[%s5142 + $0x2c] sm:$0x1]
        %v5206 = vsel %vm5195, 0, %v5205
        %5207 = vst [vmem:[%s5142 + $0x2c] sm:$0x1] %v5206
        %v5208 = vld [vmem:[%s5142 + $0x38] sm:$0x1]
        %v5209 = vsel %vm5195, 0, %v5208
        %5210 = vst [vmem:[%s5142 + $0x38] sm:$0x1] %v5209
        %v5211 = vld [vmem:[%s5142 + $0x44] sm:$0x1]
        %v5212 = vsel %vm5195, 0, %v5211
        %5213 = vst [vmem:[%s5142 + $0x44] sm:$0x1] %v5212
        %v5214 = vld [vmem:[%s5142 + $0x50] sm:$0x1]
        %v5215 = vsel %vm5195, 0, %v5214
        %5216 = vst [vmem:[%s5142 + $0x50] sm:$0x1] %v5215
        %v5217 = vld [vmem:[%s5142 + $0x5c] sm:$0x1]
        %v5218 = vsel %vm5195, 0, %v5217
        %5219 = vst [vmem:[%s5142 + $0x5c] sm:$0x1] %v5218
        %v5220 = vld [vmem:[%s5142 + $0x68] sm:$0x1]
        %v5221 = vsel %vm5195, 0, %v5220
        %5222 = vst [vmem:[%s5142 + $0x68] sm:$0x1] %v5221
        %v5223 = vld [vmem:[%s5142 + $0x74] sm:$0x1]
        %v5224 = vsel %vm5195, 0, %v5223
        %5225 = vst [vmem:[%s5142 + $0x74] sm:$0x1] %v5224
        %v5226 = vld [vmem:[%s5142 + $0x80] sm:$0x1]
        %v5227 = vsel %vm5195, 0, %v5226
        %5228 = vst [vmem:[%s5142 + $0x80] sm:$0x1] %v5227
        %v5229 = vld [vmem:[%s5142 + $0x8c] sm:$0x1]
        %v5230 = vsel %vm5195, 0, %v5229
        %5231 = vst [vmem:[%s5142 + $0x8c] sm:$0x1] %v5230
        %v5232 = vld [vmem:[%s5142 + $0x98] sm:$0x1]
        %v5233 = vsel %vm5195, 0, %v5232
        %5234 = vst [vmem:[%s5142 + $0x98] sm:$0x1] %v5233
        %v5235 = vld [vmem:[%s5142 + $0xa4] sm:$0x1]
        %v5236 = vsel %vm5195, 0, %v5235
        %5237 = vst [vmem:[%s5142 + $0xa4] sm:$0x1] %v5236
        %v5238 = vld [vmem:[%s5142 + $0xb0] sm:$0x1]
        %v5239 = vsel %vm5195, 0, %v5238
        %5240 = vst [vmem:[%s5142 + $0xb0] sm:$0x1] %v5239
        %v5241 = vld [vmem:[%s5142 + $0xbc] sm:$0x1]
        %v5242 = vsel %vm5195, 0, %v5241
        %5243 = vst [vmem:[%s5142 + $0xbc] sm:$0x1] %v5242
        %v5260 = vunpack.c.l.b16 %v5119
        %v5261 = vunpack.c.h.b16 %v5119
        %v5262 = vunpack.c.l.b16 %v5120
        %v5263 = vunpack.c.h.b16 %v5120
        %v5264 = vunpack.c.l.b16 %v5121
        %v5265 = vunpack.c.h.b16 %v5121
        %v5266 = vunpack.c.l.b16 %v5122
        %v5267 = vunpack.c.h.b16 %v5122
        %v5268 = vunpack.c.l.b16 %v5123
        %v5269 = vunpack.c.h.b16 %v5123
        %v5270 = vunpack.c.l.b16 %v5124
        %v5271 = vunpack.c.h.b16 %v5124
        %v5272 = vunpack.c.l.b16 %v5125
        %v5273 = vunpack.c.h.b16 %v5125
        %v5274 = vunpack.c.l.b16 %v5126
        %v5275 = vunpack.c.h.b16 %v5126
        %v5276 = vunpack.c.l.b16 %v5127
        %v5277 = vunpack.c.h.b16 %v5127
        %v5278 = vunpack.c.l.b16 %v5128
        %v5279 = vunpack.c.h.b16 %v5128
        %v5280 = vunpack.c.l.b16 %v5129
        %v5281 = vunpack.c.h.b16 %v5129
        %v5282 = vunpack.c.l.b16 %v5130
        %v5283 = vunpack.c.h.b16 %v5130
        %v5284 = vunpack.c.l.b16 %v5131
        %v5285 = vunpack.c.h.b16 %v5131
        %v5286 = vunpack.c.l.b16 %v5132
        %v5287 = vunpack.c.h.b16 %v5132
        %v5288 = vunpack.c.l.b16 %v5133
        %v5289 = vunpack.c.h.b16 %v5133
        %v5290 = vunpack.c.l.b16 %v5134
        %v5291 = vunpack.c.h.b16 %v5134
        %v5292 = vpack.c.b16 %v5260, %v5260
        %v5293 = vpack.c.b16 %v5261, %v5261
        %v5294 = vpack.c.b16 %v5262, %v5262
        %v5295 = vpack.c.b16 %v5263, %v5263
        %v5296 = vpack.c.b16 %v5264, %v5264
        %v5297 = vpack.c.b16 %v5265, %v5265
        %v5298 = vpack.c.b16 %v5266, %v5266
        %v5299 = vpack.c.b16 %v5267, %v5267
        %v5300 = vpack.c.b16 %v5268, %v5268
        %v5301 = vpack.c.b16 %v5269, %v5269
        %v5302 = vpack.c.b16 %v5270, %v5270
        %v5303 = vpack.c.b16 %v5271, %v5271
        %v5304 = vpack.c.b16 %v5272, %v5272
        %v5305 = vpack.c.b16 %v5273, %v5273
        %v5306 = vpack.c.b16 %v5274, %v5274
        %v5307 = vpack.c.b16 %v5275, %v5275
        %v5308 = vpack.c.b16 %v5276, %v5276
        %v5309 = vpack.c.b16 %v5277, %v5277
        %v5310 = vpack.c.b16 %v5278, %v5278
        %v5311 = vpack.c.b16 %v5279, %v5279
        %v5312 = vpack.c.b16 %v5280, %v5280
        %v5313 = vpack.c.b16 %v5281, %v5281
        %v5314 = vpack.c.b16 %v5282, %v5282
        %v5315 = vpack.c.b16 %v5283, %v5283
        %v5316 = vpack.c.b16 %v5284, %v5284
        %v5317 = vpack.c.b16 %v5285, %v5285
        %v5318 = vpack.c.b16 %v5286, %v5286
        %v5319 = vpack.c.b16 %v5287, %v5287
        %v5320 = vpack.c.b16 %v5288, %v5288
        %v5321 = vpack.c.b16 %v5289, %v5289
        %v5322 = vpack.c.b16 %v5290, %v5290
        %v5323 = vpack.c.b16 %v5291, %v5291
        %vm5324 = vsmask.f32 4368
        %vm5325 = vmor %vm5144, %vm5324
        %v5327 = vshrl.u32 %v5292, 16
        %v5329 = vrot.slane %v5327, 7
        %v5330 = vshll.u32 %v5292, 16
        %v5332 = vor.u32 %v5329, %v5330
        %v5333 = vrot.slane %v5329, 4
        %v5335 = vshrl.u32 %v5293, 16
        %v5337 = vrot.slane %v5335, 7
        %v5338 = vshll.u32 %v5293, 16
        %v5340 = vor.u32 %v5337, %v5338
        %v5341 = vsel %vm5325, %v5333, %v5340
        %v5342 = vrot.slane %v5337, 4
        %v5344 = vshrl.u32 %v5294, 16
        %v5346 = vrot.slane %v5344, 7
        %v5347 = vshll.u32 %v5294, 16
        %v5349 = vor.u32 %v5346, %v5347
        %v5350 = vrot.slane %v5346, 4
        %v5352 = vshrl.u32 %v5295, 16
        %v5354 = vrot.slane %v5352, 7
        %v5355 = vshll.u32 %v5295, 16
        %v5357 = vor.u32 %v5354, %v5355
        %v5358 = vsel %vm5325, %v5350, %v5357
        %v5359 = vrot.slane %v5354, 4
        %v5361 = vshrl.u32 %v5296, 16
        %v5363 = vrot.slane %v5361, 7
        %v5364 = vshll.u32 %v5296, 16
        %v5366 = vor.u32 %v5363, %v5364
        %v5367 = vrot.slane %v5363, 4
        %v5369 = vshrl.u32 %v5297, 16
        %v5371 = vrot.slane %v5369, 7
        %v5372 = vshll.u32 %v5297, 16
        %v5374 = vor.u32 %v5371, %v5372
        %v5375 = vsel %vm5325, %v5367, %v5374
        %v5376 = vrot.slane %v5371, 4
        %v5378 = vshrl.u32 %v5298, 16
        %v5380 = vrot.slane %v5378, 7
        %v5381 = vshll.u32 %v5298, 16
        %v5383 = vor.u32 %v5380, %v5381
        %v5384 = vrot.slane %v5380, 4
        %v5386 = vshrl.u32 %v5299, 16
        %v5388 = vrot.slane %v5386, 7
        %v5389 = vshll.u32 %v5299, 16
        %v5391 = vor.u32 %v5388, %v5389
        %v5392 = vsel %vm5325, %v5384, %v5391
        %v5393 = vrot.slane %v5388, 4
        %v5395 = vshrl.u32 %v5300, 16
        %v5397 = vrot.slane %v5395, 7
        %v5398 = vshll.u32 %v5300, 16
        %v5400 = vor.u32 %v5397, %v5398
        %v5401 = vrot.slane %v5397, 4
        %v5403 = vshrl.u32 %v5301, 16
        %v5405 = vrot.slane %v5403, 7
        %v5406 = vshll.u32 %v5301, 16
        %v5408 = vor.u32 %v5405, %v5406
        %v5409 = vsel %vm5325, %v5401, %v5408
        %v5410 = vrot.slane %v5405, 4
        %v5412 = vshrl.u32 %v5302, 16
        %v5414 = vrot.slane %v5412, 7
        %v5415 = vshll.u32 %v5302, 16
        %v5417 = vor.u32 %v5414, %v5415
        %v5418 = vrot.slane %v5414, 4
        %v5420 = vshrl.u32 %v5303, 16
        %v5422 = vrot.slane %v5420, 7
        %v5423 = vshll.u32 %v5303, 16
        %v5425 = vor.u32 %v5422, %v5423
        %v5426 = vsel %vm5325, %v5418, %v5425
        %v5427 = vrot.slane %v5422, 4
        %v5429 = vshrl.u32 %v5304, 16
        %v5431 = vrot.slane %v5429, 7
        %v5432 = vshll.u32 %v5304, 16
        %v5434 = vor.u32 %v5431, %v5432
        %v5435 = vrot.slane %v5431, 4
        %v5437 = vshrl.u32 %v5305, 16
        %v5439 = vrot.slane %v5437, 7
        %v5440 = vshll.u32 %v5305, 16
        %v5442 = vor.u32 %v5439, %v5440
        %v5443 = vsel %vm5325, %v5435, %v5442
        %v5444 = vrot.slane %v5439, 4
        %v5446 = vshrl.u32 %v5306, 16
        %v5448 = vrot.slane %v5446, 7
        %v5449 = vshll.u32 %v5306, 16
        %v5451 = vor.u32 %v5448, %v5449
        %v5452 = vrot.slane %v5448, 4
        %v5454 = vshrl.u32 %v5307, 16
        %v5456 = vrot.slane %v5454, 7
        %v5457 = vshll.u32 %v5307, 16
        %v5459 = vor.u32 %v5456, %v5457
        %v5460 = vsel %vm5325, %v5452, %v5459
        %v5461 = vrot.slane %v5456, 4
        %v5463 = vshrl.u32 %v5308, 16
        %v5465 = vrot.slane %v5463, 7
        %v5466 = vshll.u32 %v5308, 16
        %v5468 = vor.u32 %v5465, %v5466
        %v5469 = vrot.slane %v5465, 4
        %v5471 = vshrl.u32 %v5309, 16
        %v5473 = vrot.slane %v5471, 7
        %v5474 = vshll.u32 %v5309, 16
        %v5476 = vor.u32 %v5473, %v5474
        %v5477 = vsel %vm5325, %v5469, %v5476
        %v5478 = vrot.slane %v5473, 4
        %v5480 = vshrl.u32 %v5310, 16
        %v5482 = vrot.slane %v5480, 7
        %v5483 = vshll.u32 %v5310, 16
        %v5485 = vor.u32 %v5482, %v5483
        %v5486 = vrot.slane %v5482, 4
        %v5488 = vshrl.u32 %v5311, 16
        %v5490 = vrot.slane %v5488, 7
        %v5491 = vshll.u32 %v5311, 16
        %v5493 = vor.u32 %v5490, %v5491
        %v5494 = vsel %vm5325, %v5486, %v5493
        %v5495 = vrot.slane %v5490, 4
        %v5497 = vshrl.u32 %v5312, 16
        %v5499 = vrot.slane %v5497, 7
        %v5500 = vshll.u32 %v5312, 16
        %v5502 = vor.u32 %v5499, %v5500
        %v5503 = vrot.slane %v5499, 4
        %v5505 = vshrl.u32 %v5313, 16
        %v5507 = vrot.slane %v5505, 7
        %v5508 = vshll.u32 %v5313, 16
        %v5510 = vor.u32 %v5507, %v5508
        %v5511 = vsel %vm5325, %v5503, %v5510
        %v5512 = vrot.slane %v5507, 4
        %v5514 = vshrl.u32 %v5314, 16
        %v5516 = vrot.slane %v5514, 7
        %v5517 = vshll.u32 %v5314, 16
        %v5519 = vor.u32 %v5516, %v5517
        %v5520 = vrot.slane %v5516, 4
        %v5522 = vshrl.u32 %v5315, 16
        %v5524 = vrot.slane %v5522, 7
        %v5525 = vshll.u32 %v5315, 16
        %v5527 = vor.u32 %v5524, %v5525
        %v5528 = vsel %vm5325, %v5520, %v5527
        %v5529 = vrot.slane %v5524, 4
        %v5531 = vshrl.u32 %v5316, 16
        %v5533 = vrot.slane %v5531, 7
        %v5534 = vshll.u32 %v5316, 16
        %v5536 = vor.u32 %v5533, %v5534
        %v5537 = vrot.slane %v5533, 4
        %v5539 = vshrl.u32 %v5317, 16
        %v5541 = vrot.slane %v5539, 7
        %v5542 = vshll.u32 %v5317, 16
        %v5544 = vor.u32 %v5541, %v5542
        %v5545 = vsel %vm5325, %v5537, %v5544
        %v5546 = vrot.slane %v5541, 4
        %v5548 = vshrl.u32 %v5318, 16
        %v5550 = vrot.slane %v5548, 7
        %v5551 = vshll.u32 %v5318, 16
        %v5553 = vor.u32 %v5550, %v5551
        %v5554 = vrot.slane %v5550, 4
        %v5556 = vshrl.u32 %v5319, 16
        %v5558 = vrot.slane %v5556, 7
        %v5559 = vshll.u32 %v5319, 16
        %v5561 = vor.u32 %v5558, %v5559
        %v5562 = vsel %vm5325, %v5554, %v5561
        %v5563 = vrot.slane %v5558, 4
        %v5565 = vshrl.u32 %v5320, 16
        %v5567 = vrot.slane %v5565, 7
        %v5568 = vshll.u32 %v5320, 16
        %v5570 = vor.u32 %v5567, %v5568
        %v5571 = vrot.slane %v5567, 4
        %v5573 = vshrl.u32 %v5321, 16
        %v5575 = vrot.slane %v5573, 7
        %v5576 = vshll.u32 %v5321, 16
        %v5578 = vor.u32 %v5575, %v5576
        %v5579 = vsel %vm5325, %v5571, %v5578
        %v5580 = vrot.slane %v5575, 4
        %v5582 = vshrl.u32 %v5322, 16
        %v5584 = vrot.slane %v5582, 7
        %v5585 = vshll.u32 %v5322, 16
        %v5587 = vor.u32 %v5584, %v5585
        %v5588 = vrot.slane %v5584, 4
        %v5590 = vshrl.u32 %v5323, 16
        %v5592 = vrot.slane %v5590, 7
        %v5593 = vshll.u32 %v5323, 16
        %v5595 = vor.u32 %v5592, %v5593
        %v5596 = vsel %vm5325, %v5588, %v5595
        %v5597 = vrot.slane %v5592, 4
        %vm5646 = vcmask 1043456
        %vm5647 = vmand %vm5646, %vm5194
        %v5648 = vld [vmem:[%s5142] sm:$0xf]
        %v5649 = vsel %vm5647, %v5332, %v5648
        %5650 = vst [vmem:[%s5142] sm:$0xf] %v5649
        %5651 = vst [vmem:[%s5142 + $0x4] sm:$0xf] %v5341
        %v5652 = vld [vmem:[%s5142 + $0x8] sm:$0x1]
        %v5653 = vsel %vm5145, %v5342, %v5652
        %5654 = vst [vmem:[%s5142 + $0x8] sm:$0x1] %v5653
        %v5655 = vld [vmem:[%s5142 + $0xc] sm:$0xf]
        %v5656 = vsel %vm5647, %v5349, %v5655
        %5657 = vst [vmem:[%s5142 + $0xc] sm:$0xf] %v5656
        %5658 = vst [vmem:[%s5142 + $0x10] sm:$0xf] %v5358
        %v5659 = vld [vmem:[%s5142 + $0x14] sm:$0x1]
        %v5660 = vsel %vm5145, %v5359, %v5659
        %5661 = vst [vmem:[%s5142 + $0x14] sm:$0x1] %v5660
        %v5662 = vld [vmem:[%s5142 + $0x18] sm:$0xf]
        %v5663 = vsel %vm5647, %v5366, %v5662
        %5664 = vst [vmem:[%s5142 + $0x18] sm:$0xf] %v5663
        %5665 = vst [vmem:[%s5142 + $0x1c] sm:$0xf] %v5375
        %v5666 = vld [vmem:[%s5142 + $0x20] sm:$0x1]
        %v5667 = vsel %vm5145, %v5376, %v5666
        %5668 = vst [vmem:[%s5142 + $0x20] sm:$0x1] %v5667
        %v5669 = vld [vmem:[%s5142 + $0x24] sm:$0xf]
        %v5670 = vsel %vm5647, %v5383, %v5669
        %5671 = vst [vmem:[%s5142 + $0x24] sm:$0xf] %v5670
        %5672 = vst [vmem:[%s5142 + $0x28] sm:$0xf] %v5392
        %v5673 = vld [vmem:[%s5142 + $0x2c] sm:$0x1]
        %v5674 = vsel %vm5145, %v5393, %v5673
        %5675 = vst [vmem:[%s5142 + $0x2c] sm:$0x1] %v5674
        %v5676 = vld [vmem:[%s5142 + $0x30] sm:$0xf]
        %v5677 = vsel %vm5647, %v5400, %v5676
        %5678 = vst [vmem:[%s5142 + $0x30] sm:$0xf] %v5677
        %5679 = vst [vmem:[%s5142 + $0x34] sm:$0xf] %v5409
        %v5680 = vld [vmem:[%s5142 + $0x38] sm:$0x1]
        %v5681 = vsel %vm5145, %v5410, %v5680
        %5682 = vst [vmem:[%s5142 + $0x38] sm:$0x1] %v5681
        %v5683 = vld [vmem:[%s5142 + $0x3c] sm:$0xf]
        %v5684 = vsel %vm5647, %v5417, %v5683
        %5685 = vst [vmem:[%s5142 + $0x3c] sm:$0xf] %v5684
        %5686 = vst [vmem:[%s5142 + $0x40] sm:$0xf] %v5426
        %v5687 = vld [vmem:[%s5142 + $0x44] sm:$0x1]
        %v5688 = vsel %vm5145, %v5427, %v5687
        %5689 = vst [vmem:[%s5142 + $0x44] sm:$0x1] %v5688
        %v5690 = vld [vmem:[%s5142 + $0x48] sm:$0xf]
        %v5691 = vsel %vm5647, %v5434, %v5690
        %5692 = vst [vmem:[%s5142 + $0x48] sm:$0xf] %v5691
        %5693 = vst [vmem:[%s5142 + $0x4c] sm:$0xf] %v5443
        %v5694 = vld [vmem:[%s5142 + $0x50] sm:$0x1]
        %v5695 = vsel %vm5145, %v5444, %v5694
        %5696 = vst [vmem:[%s5142 + $0x50] sm:$0x1] %v5695
        %v5697 = vld [vmem:[%s5142 + $0x54] sm:$0xf]
        %v5698 = vsel %vm5647, %v5451, %v5697
        %5699 = vst [vmem:[%s5142 + $0x54] sm:$0xf] %v5698
        %5700 = vst [vmem:[%s5142 + $0x58] sm:$0xf] %v5460
        %v5701 = vld [vmem:[%s5142 + $0x5c] sm:$0x1]
        %v5702 = vsel %vm5145, %v5461, %v5701
        %5703 = vst [vmem:[%s5142 + $0x5c] sm:$0x1] %v5702
        %v5704 = vld [vmem:[%s5142 + $0x60] sm:$0xf]
        %v5705 = vsel %vm5647, %v5468, %v5704
        %5706 = vst [vmem:[%s5142 + $0x60] sm:$0xf] %v5705
        %5707 = vst [vmem:[%s5142 + $0x64] sm:$0xf] %v5477
        %v5708 = vld [vmem:[%s5142 + $0x68] sm:$0x1]
        %v5709 = vsel %vm5145, %v5478, %v5708
        %5710 = vst [vmem:[%s5142 + $0x68] sm:$0x1] %v5709
        %v5711 = vld [vmem:[%s5142 + $0x6c] sm:$0xf]
        %v5712 = vsel %vm5647, %v5485, %v5711
        %5713 = vst [vmem:[%s5142 + $0x6c] sm:$0xf] %v5712
        %5714 = vst [vmem:[%s5142 + $0x70] sm:$0xf] %v5494
        %v5715 = vld [vmem:[%s5142 + $0x74] sm:$0x1]
        %v5716 = vsel %vm5145, %v5495, %v5715
        %5717 = vst [vmem:[%s5142 + $0x74] sm:$0x1] %v5716
        %v5718 = vld [vmem:[%s5142 + $0x78] sm:$0xf]
        %v5719 = vsel %vm5647, %v5502, %v5718
        %5720 = vst [vmem:[%s5142 + $0x78] sm:$0xf] %v5719
        %5721 = vst [vmem:[%s5142 + $0x7c] sm:$0xf] %v5511
        %v5722 = vld [vmem:[%s5142 + $0x80] sm:$0x1]
        %v5723 = vsel %vm5145, %v5512, %v5722
        %5724 = vst [vmem:[%s5142 + $0x80] sm:$0x1] %v5723
        %v5725 = vld [vmem:[%s5142 + $0x84] sm:$0xf]
        %v5726 = vsel %vm5647, %v5519, %v5725
        %5727 = vst [vmem:[%s5142 + $0x84] sm:$0xf] %v5726
        %5728 = vst [vmem:[%s5142 + $0x88] sm:$0xf] %v5528
        %v5729 = vld [vmem:[%s5142 + $0x8c] sm:$0x1]
        %v5730 = vsel %vm5145, %v5529, %v5729
        %5731 = vst [vmem:[%s5142 + $0x8c] sm:$0x1] %v5730
        %v5732 = vld [vmem:[%s5142 + $0x90] sm:$0xf]
        %v5733 = vsel %vm5647, %v5536, %v5732
        %5734 = vst [vmem:[%s5142 + $0x90] sm:$0xf] %v5733
        %5735 = vst [vmem:[%s5142 + $0x94] sm:$0xf] %v5545
        %v5736 = vld [vmem:[%s5142 + $0x98] sm:$0x1]
        %v5737 = vsel %vm5145, %v5546, %v5736
        %5738 = vst [vmem:[%s5142 + $0x98] sm:$0x1] %v5737
        %v5739 = vld [vmem:[%s5142 + $0x9c] sm:$0xf]
        %v5740 = vsel %vm5647, %v5553, %v5739
        %5741 = vst [vmem:[%s5142 + $0x9c] sm:$0xf] %v5740
        %5742 = vst [vmem:[%s5142 + $0xa0] sm:$0xf] %v5562
        %v5743 = vld [vmem:[%s5142 + $0xa4] sm:$0x1]
        %v5744 = vsel %vm5145, %v5563, %v5743
        %5745 = vst [vmem:[%s5142 + $0xa4] sm:$0x1] %v5744
        %v5746 = vld [vmem:[%s5142 + $0xa8] sm:$0xf]
        %v5747 = vsel %vm5647, %v5570, %v5746
        %5748 = vst [vmem:[%s5142 + $0xa8] sm:$0xf] %v5747
        %5749 = vst [vmem:[%s5142 + $0xac] sm:$0xf] %v5579
        %v5750 = vld [vmem:[%s5142 + $0xb0] sm:$0x1]
        %v5751 = vsel %vm5145, %v5580, %v5750
        %5752 = vst [vmem:[%s5142 + $0xb0] sm:$0x1] %v5751
        %v5753 = vld [vmem:[%s5142 + $0xb4] sm:$0xf]
        %v5754 = vsel %vm5647, %v5587, %v5753
        %5755 = vst [vmem:[%s5142 + $0xb4] sm:$0xf] %v5754
        %5756 = vst [vmem:[%s5142 + $0xb8] sm:$0xf] %v5596
        %v5757 = vld [vmem:[%s5142 + $0xbc] sm:$0x1]
        %v5758 = vsel %vm5145, %v5597, %v5757
        %5759 = vst [vmem:[%s5142 + $0xbc] sm:$0x1] %v5758
        %v5760 = vld [vmem:[#allocation2] sm:$0xf]
        %v5761 = vld [vmem:[#allocation2 + $0x4] sm:$0xf]
        %v5762 = vld [vmem:[#allocation2 + $0xc] sm:$0xf]
        %v5763 = vld [vmem:[#allocation2 + $0x10] sm:$0xf]
        %v5764 = vld [vmem:[#allocation2 + $0x18] sm:$0xf]
        %v5765 = vld [vmem:[#allocation2 + $0x1c] sm:$0xf]
        %v5766 = vld [vmem:[#allocation2 + $0x24] sm:$0xf]
        %v5767 = vld [vmem:[#allocation2 + $0x28] sm:$0xf]
        %v5768 = vld [vmem:[#allocation2 + $0x30] sm:$0xf]
        %v5769 = vld [vmem:[#allocation2 + $0x34] sm:$0xf]
        %v5770 = vld [vmem:[#allocation2 + $0x3c] sm:$0xf]
        %v5771 = vld [vmem:[#allocation2 + $0x40] sm:$0xf]
        %v5772 = vld [vmem:[#allocation2 + $0x48] sm:$0xf]
        %v5773 = vld [vmem:[#allocation2 + $0x4c] sm:$0xf]
        %v5774 = vld [vmem:[#allocation2 + $0x54] sm:$0xf]
        %v5775 = vld [vmem:[#allocation2 + $0x58] sm:$0xf]
        %v5776 = vld [vmem:[#allocation2 + $0x60] sm:$0xf]
        %v5777 = vld [vmem:[#allocation2 + $0x64] sm:$0xf]
        %v5778 = vld [vmem:[#allocation2 + $0x6c] sm:$0xf]
        %v5779 = vld [vmem:[#allocation2 + $0x70] sm:$0xf]
        %v5780 = vld [vmem:[#allocation2 + $0x78] sm:$0xf]
        %v5781 = vld [vmem:[#allocation2 + $0x7c] sm:$0xf]
        %v5782 = vld [vmem:[#allocation2 + $0x84] sm:$0xf]
        %v5783 = vld [vmem:[#allocation2 + $0x88] sm:$0xf]
        %v5784 = vld [vmem:[#allocation2 + $0x90] sm:$0xf]
        %v5785 = vld [vmem:[#allocation2 + $0x94] sm:$0xf]
        %v5786 = vld [vmem:[#allocation2 + $0x9c] sm:$0xf]
        %v5787 = vld [vmem:[#allocation2 + $0xa0] sm:$0xf]
        %v5788 = vld [vmem:[#allocation2 + $0xa8] sm:$0xf]
        %v5789 = vld [vmem:[#allocation2 + $0xac] sm:$0xf]
        %v5790 = vld [vmem:[#allocation2 + $0xb4] sm:$0xf]
        %v5791 = vld [vmem:[#allocation2 + $0xb8] sm:$0xf]
        %v5792 = vld [vmem:[#allocation3] sm:$0xf]
        %v5793 = vld [vmem:[#allocation3 + $0x4] sm:$0xf]
        %v5794 = vld [vmem:[#allocation3 + $0x8] sm:$0xf]
        %v5795 = vld [vmem:[#allocation3 + $0xc] sm:$0xf]
        %v5796 = vld [vmem:[#allocation3 + $0x10] sm:$0xf]
        %v5797 = vld [vmem:[#allocation3 + $0x14] sm:$0xf]
        %v5798 = vld [vmem:[#allocation3 + $0x18] sm:$0xf]
        %v5799 = vld [vmem:[#allocation3 + $0x1c] sm:$0xf]
        %v5800 = vld [vmem:[#allocation3 + $0x20] sm:$0xf]
        %v5801 = vld [vmem:[#allocation3 + $0x24] sm:$0xf]
        %v5802 = vld [vmem:[#allocation3 + $0x28] sm:$0xf]
        %v5803 = vld [vmem:[#allocation3 + $0x2c] sm:$0xf]
        %v5804 = vld [vmem:[#allocation3 + $0x30] sm:$0xf]
        %v5805 = vld [vmem:[#allocation3 + $0x34] sm:$0xf]
        %v5806 = vld [vmem:[#allocation3 + $0x38] sm:$0xf]
        %v5807 = vld [vmem:[#allocation3 + $0x3c] sm:$0xf]
        %v5808 = vld [vmem:[#allocation2 + $0x8] sm:$0x1]
        %v5809 = vld [vmem:[#allocation2 + $0x14] sm:$0x1]
        %v5810 = vld [vmem:[#allocation2 + $0x20] sm:$0x1]
        %v5811 = vld [vmem:[#allocation2 + $0x2c] sm:$0x1]
        %v5812 = vld [vmem:[#allocation2 + $0x38] sm:$0x1]
        %v5813 = vld [vmem:[#allocation2 + $0x44] sm:$0x1]
        %v5814 = vld [vmem:[#allocation2 + $0x50] sm:$0x1]
        %v5815 = vld [vmem:[#allocation2 + $0x5c] sm:$0x1]
        %v5816 = vld [vmem:[#allocation2 + $0x68] sm:$0x1]
        %v5817 = vld [vmem:[#allocation2 + $0x74] sm:$0x1]
        %v5818 = vld [vmem:[#allocation2 + $0x80] sm:$0x1]
        %v5819 = vld [vmem:[#allocation2 + $0x8c] sm:$0x1]
        %v5820 = vld [vmem:[#allocation2 + $0x98] sm:$0x1]
        %v5821 = vld [vmem:[#allocation2 + $0xa4] sm:$0x1]
        %v5822 = vld [vmem:[#allocation2 + $0xb0] sm:$0x1]
        %v5823 = vld [vmem:[#allocation2 + $0xbc] sm:$0x1]
        %v5825 = vshrl.u32 %v5760, 16
        %v5827 = vrot.slane %v5825, 4
        %v5828 = vshll.u32 %v5760, 16
        %v5830 = vrot.slane %v5828, 5
        %v5831 = vor.u32 %v5827, %v5830
        %v5832 = vrot.slane %v5831, 4
        %v5834 = vshll.u32 %v5761, 16
        %v5836 = vrot.slane %v5834, 5
        %v5837 = vsel %vm305, %v5832, %v5836
        %v5838 = vshrl.u32 %v5761, 16
        %v5840 = vrot.slane %v5838, 4
        %v5841 = vor.u32 %v5840, %v5836
        %v5842 = vrot.slane %v5841, 4
        %v5844 = vshll.u32 %v5808, 16
        %v5846 = vrot.slane %v5844, 5
        %v5847 = vsel %vm305, %v5842, %v5846
        %v5849 = vshrl.u32 %v5762, 16
        %v5851 = vrot.slane %v5849, 4
        %v5852 = vshll.u32 %v5762, 16
        %v5854 = vrot.slane %v5852, 5
        %v5855 = vor.u32 %v5851, %v5854
        %v5856 = vrot.slane %v5855, 4
        %v5858 = vshll.u32 %v5763, 16
        %v5860 = vrot.slane %v5858, 5
        %v5861 = vsel %vm305, %v5856, %v5860
        %v5862 = vshrl.u32 %v5763, 16
        %v5864 = vrot.slane %v5862, 4
        %v5865 = vor.u32 %v5864, %v5860
        %v5866 = vrot.slane %v5865, 4
        %v5868 = vshll.u32 %v5809, 16
        %v5870 = vrot.slane %v5868, 5
        %v5871 = vsel %vm305, %v5866, %v5870
        %v5873 = vshrl.u32 %v5764, 16
        %v5875 = vrot.slane %v5873, 4
        %v5876 = vshll.u32 %v5764, 16
        %v5878 = vrot.slane %v5876, 5
        %v5879 = vor.u32 %v5875, %v5878
        %v5880 = vrot.slane %v5879, 4
        %v5882 = vshll.u32 %v5765, 16
        %v5884 = vrot.slane %v5882, 5
        %v5885 = vsel %vm305, %v5880, %v5884
        %v5886 = vshrl.u32 %v5765, 16
        %v5888 = vrot.slane %v5886, 4
        %v5889 = vor.u32 %v5888, %v5884
        %v5890 = vrot.slane %v5889, 4
        %v5892 = vshll.u32 %v5810, 16
        %v5894 = vrot.slane %v5892, 5
        %v5895 = vsel %vm305, %v5890, %v5894
        %v5897 = vshrl.u32 %v5766, 16
        %v5899 = vrot.slane %v5897, 4
        %v5900 = vshll.u32 %v5766, 16
        %v5902 = vrot.slane %v5900, 5
        %v5903 = vor.u32 %v5899, %v5902
        %v5904 = vrot.slane %v5903, 4
        %v5906 = vshll.u32 %v5767, 16
        %v5908 = vrot.slane %v5906, 5
        %v5909 = vsel %vm305, %v5904, %v5908
        %v5910 = vshrl.u32 %v5767, 16
        %v5912 = vrot.slane %v5910, 4
        %v5913 = vor.u32 %v5912, %v5908
        %v5914 = vrot.slane %v5913, 4
        %v5916 = vshll.u32 %v5811, 16
        %v5918 = vrot.slane %v5916, 5
        %v5919 = vsel %vm305, %v5914, %v5918
        %v5921 = vshrl.u32 %v5768, 16
        %v5923 = vrot.slane %v5921, 4
        %v5924 = vshll.u32 %v5768, 16
        %v5926 = vrot.slane %v5924, 5
        %v5927 = vor.u32 %v5923, %v5926
        %v5928 = vrot.slane %v5927, 4
        %v5930 = vshll.u32 %v5769, 16
        %v5932 = vrot.slane %v5930, 5
        %v5933 = vsel %vm305, %v5928, %v5932
        %v5934 = vshrl.u32 %v5769, 16
        %v5936 = vrot.slane %v5934, 4
        %v5937 = vor.u32 %v5936, %v5932
        %v5938 = vrot.slane %v5937, 4
        %v5940 = vshll.u32 %v5812, 16
        %v5942 = vrot.slane %v5940, 5
        %v5943 = vsel %vm305, %v5938, %v5942
        %v5945 = vshrl.u32 %v5770, 16
        %v5947 = vrot.slane %v5945, 4
        %v5948 = vshll.u32 %v5770, 16
        %v5950 = vrot.slane %v5948, 5
        %v5951 = vor.u32 %v5947, %v5950
        %v5952 = vrot.slane %v5951, 4
        %v5954 = vshll.u32 %v5771, 16
        %v5956 = vrot.slane %v5954, 5
        %v5957 = vsel %vm305, %v5952, %v5956
        %v5958 = vshrl.u32 %v5771, 16
        %v5960 = vrot.slane %v5958, 4
        %v5961 = vor.u32 %v5960, %v5956
        %v5962 = vrot.slane %v5961, 4
        %v5964 = vshll.u32 %v5813, 16
        %v5966 = vrot.slane %v5964, 5
        %v5967 = vsel %vm305, %v5962, %v5966
        %v5969 = vshrl.u32 %v5772, 16
        %v5971 = vrot.slane %v5969, 4
        %v5972 = vshll.u32 %v5772, 16
        %v5974 = vrot.slane %v5972, 5
        %v5975 = vor.u32 %v5971, %v5974
        %v5976 = vrot.slane %v5975, 4
        %v5978 = vshll.u32 %v5773, 16
        %v5980 = vrot.slane %v5978, 5
        %v5981 = vsel %vm305, %v5976, %v5980
        %v5982 = vshrl.u32 %v5773, 16
        %v5984 = vrot.slane %v5982, 4
        %v5985 = vor.u32 %v5984, %v5980
        %v5986 = vrot.slane %v5985, 4
        %v5988 = vshll.u32 %v5814, 16
        %v5990 = vrot.slane %v5988, 5
        %v5991 = vsel %vm305, %v5986, %v5990
        %v5993 = vshrl.u32 %v5774, 16
        %v5995 = vrot.slane %v5993, 4
        %v5996 = vshll.u32 %v5774, 16
        %v5998 = vrot.slane %v5996, 5
        %v5999 = vor.u32 %v5995, %v5998
        %v6000 = vrot.slane %v5999, 4
        %v6002 = vshll.u32 %v5775, 16
        %v6004 = vrot.slane %v6002, 5
        %v6005 = vsel %vm305, %v6000, %v6004
        %v6006 = vshrl.u32 %v5775, 16
        %v6008 = vrot.slane %v6006, 4
        %v6009 = vor.u32 %v6008, %v6004
        %v6010 = vrot.slane %v6009, 4
        %v6012 = vshll.u32 %v5815, 16
        %v6014 = vrot.slane %v6012, 5
        %v6015 = vsel %vm305, %v6010, %v6014
        %v6017 = vshrl.u32 %v5776, 16
        %v6019 = vrot.slane %v6017, 4
        %v6020 = vshll.u32 %v5776, 16
        %v6022 = vrot.slane %v6020, 5
        %v6023 = vor.u32 %v6019, %v6022
        %v6024 = vrot.slane %v6023, 4
        %v6026 = vshll.u32 %v5777, 16
        %v6028 = vrot.slane %v6026, 5
        %v6029 = vsel %vm305, %v6024, %v6028
        %v6030 = vshrl.u32 %v5777, 16
        %v6032 = vrot.slane %v6030, 4
        %v6033 = vor.u32 %v6032, %v6028
        %v6034 = vrot.slane %v6033, 4
        %v6036 = vshll.u32 %v5816, 16
        %v6038 = vrot.slane %v6036, 5
        %v6039 = vsel %vm305, %v6034, %v6038
        %v6041 = vshrl.u32 %v5778, 16
        %v6043 = vrot.slane %v6041, 4
        %v6044 = vshll.u32 %v5778, 16
        %v6046 = vrot.slane %v6044, 5
        %v6047 = vor.u32 %v6043, %v6046
        %v6048 = vrot.slane %v6047, 4
        %v6050 = vshll.u32 %v5779, 16
        %v6052 = vrot.slane %v6050, 5
        %v6053 = vsel %vm305, %v6048, %v6052
        %v6054 = vshrl.u32 %v5779, 16
        %v6056 = vrot.slane %v6054, 4
        %v6057 = vor.u32 %v6056, %v6052
        %v6058 = vrot.slane %v6057, 4
        %v6060 = vshll.u32 %v5817, 16
        %v6062 = vrot.slane %v6060, 5
        %v6063 = vsel %vm305, %v6058, %v6062
        %v6065 = vshrl.u32 %v5780, 16
        %v6067 = vrot.slane %v6065, 4
        %v6068 = vshll.u32 %v5780, 16
        %v6070 = vrot.slane %v6068, 5
        %v6071 = vor.u32 %v6067, %v6070
        %v6072 = vrot.slane %v6071, 4
        %v6074 = vshll.u32 %v5781, 16
        %v6076 = vrot.slane %v6074, 5
        %v6077 = vsel %vm305, %v6072, %v6076
        %v6078 = vshrl.u32 %v5781, 16
        %v6080 = vrot.slane %v6078, 4
        %v6081 = vor.u32 %v6080, %v6076
        %v6082 = vrot.slane %v6081, 4
        %v6084 = vshll.u32 %v5818, 16
        %v6086 = vrot.slane %v6084, 5
        %v6087 = vsel %vm305, %v6082, %v6086
        %v6089 = vshrl.u32 %v5782, 16
        %v6091 = vrot.slane %v6089, 4
        %v6092 = vshll.u32 %v5782, 16
        %v6094 = vrot.slane %v6092, 5
        %v6095 = vor.u32 %v6091, %v6094
        %v6096 = vrot.slane %v6095, 4
        %v6098 = vshll.u32 %v5783, 16
        %v6100 = vrot.slane %v6098, 5
        %v6101 = vsel %vm305, %v6096, %v6100
        %v6102 = vshrl.u32 %v5783, 16
        %v6104 = vrot.slane %v6102, 4
        %v6105 = vor.u32 %v6104, %v6100
        %v6106 = vrot.slane %v6105, 4
        %v6108 = vshll.u32 %v5819, 16
        %v6110 = vrot.slane %v6108, 5
        %v6111 = vsel %vm305, %v6106, %v6110
        %v6113 = vshrl.u32 %v5784, 16
        %v6115 = vrot.slane %v6113, 4
        %v6116 = vshll.u32 %v5784, 16
        %v6118 = vrot.slane %v6116, 5
        %v6119 = vor.u32 %v6115, %v6118
        %v6120 = vrot.slane %v6119, 4
        %v6122 = vshll.u32 %v5785, 16
        %v6124 = vrot.slane %v6122, 5
        %v6125 = vsel %vm305, %v6120, %v6124
        %v6126 = vshrl.u32 %v5785, 16
        %v6128 = vrot.slane %v6126, 4
        %v6129 = vor.u32 %v6128, %v6124
        %v6130 = vrot.slane %v6129, 4
        %v6132 = vshll.u32 %v5820, 16
        %v6134 = vrot.slane %v6132, 5
        %v6135 = vsel %vm305, %v6130, %v6134
        %v6137 = vshrl.u32 %v5786, 16
        %v6139 = vrot.slane %v6137, 4
        %v6140 = vshll.u32 %v5786, 16
        %v6142 = vrot.slane %v6140, 5
        %v6143 = vor.u32 %v6139, %v6142
        %v6144 = vrot.slane %v6143, 4
        %v6146 = vshll.u32 %v5787, 16
        %v6148 = vrot.slane %v6146, 5
        %v6149 = vsel %vm305, %v6144, %v6148
        %v6150 = vshrl.u32 %v5787, 16
        %v6152 = vrot.slane %v6150, 4
        %v6153 = vor.u32 %v6152, %v6148
        %v6154 = vrot.slane %v6153, 4
        %v6156 = vshll.u32 %v5821, 16
        %v6158 = vrot.slane %v6156, 5
        %v6159 = vsel %vm305, %v6154, %v6158
        %v6161 = vshrl.u32 %v5788, 16
        %v6163 = vrot.slane %v6161, 4
        %v6164 = vshll.u32 %v5788, 16
        %v6166 = vrot.slane %v6164, 5
        %v6167 = vor.u32 %v6163, %v6166
        %v6168 = vrot.slane %v6167, 4
        %v6170 = vshll.u32 %v5789, 16
        %v6172 = vrot.slane %v6170, 5
        %v6173 = vsel %vm305, %v6168, %v6172
        %v6174 = vshrl.u32 %v5789, 16
        %v6176 = vrot.slane %v6174, 4
        %v6177 = vor.u32 %v6176, %v6172
        %v6178 = vrot.slane %v6177, 4
        %v6180 = vshll.u32 %v5822, 16
        %v6182 = vrot.slane %v6180, 5
        %v6183 = vsel %vm305, %v6178, %v6182
        %v6185 = vshrl.u32 %v5790, 16
        %v6187 = vrot.slane %v6185, 4
        %v6188 = vshll.u32 %v5790, 16
        %v6190 = vrot.slane %v6188, 5
        %v6191 = vor.u32 %v6187, %v6190
        %v6192 = vrot.slane %v6191, 4
        %v6194 = vshll.u32 %v5791, 16
        %v6196 = vrot.slane %v6194, 5
        %v6197 = vsel %vm305, %v6192, %v6196
        %v6198 = vshrl.u32 %v5791, 16
        %v6200 = vrot.slane %v6198, 4
        %v6201 = vor.u32 %v6200, %v6196
        %v6202 = vrot.slane %v6201, 4
        %v6204 = vshll.u32 %v5823, 16
        %v6206 = vrot.slane %v6204, 5
        %v6207 = vsel %vm305, %v6202, %v6206
        %s6208 = scalar_lea.vmem [#allocation3], 64
        %v6209 = vld [vmem:[%s6208] sm:$0xf]
        %v6210 = vld [vmem:[%s6208 + $0x4] sm:$0xf]
        %v6211 = vld [vmem:[%s6208 + $0x8] sm:$0xf]
        %v6212 = vld [vmem:[%s6208 + $0xc] sm:$0xf]
        %v6213 = vld [vmem:[%s6208 + $0x10] sm:$0xf]
        %v6214 = vld [vmem:[%s6208 + $0x14] sm:$0xf]
        %v6215 = vld [vmem:[%s6208 + $0x18] sm:$0xf]
        %v6216 = vld [vmem:[%s6208 + $0x1c] sm:$0xf]
        %v6217 = vld [vmem:[%s6208 + $0x20] sm:$0xf]
        %v6218 = vld [vmem:[%s6208 + $0x24] sm:$0xf]
        %v6219 = vld [vmem:[%s6208 + $0x28] sm:$0xf]
        %v6220 = vld [vmem:[%s6208 + $0x2c] sm:$0xf]
        %v6221 = vld [vmem:[%s6208 + $0x30] sm:$0xf]
        %v6222 = vld [vmem:[%s6208 + $0x34] sm:$0xf]
        %v6223 = vld [vmem:[%s6208 + $0x38] sm:$0xf]
        %v6224 = vld [vmem:[%s6208 + $0x3c] sm:$0xf]
        %v6225 = vunpack.c.l.b16 %v5837
        %v6226 = vunpack.c.l.b16 %v5847
        %v6227 = vunpack.c.l.b16 %v5861
        %v6228 = vunpack.c.l.b16 %v5871
        %v6229 = vunpack.c.l.b16 %v5885
        %v6230 = vunpack.c.l.b16 %v5895
        %v6231 = vunpack.c.l.b16 %v5909
        %v6232 = vunpack.c.l.b16 %v5919
        %v6233 = vunpack.c.l.b16 %v5933
        %v6234 = vunpack.c.l.b16 %v5943
        %v6235 = vunpack.c.l.b16 %v5957
        %v6236 = vunpack.c.l.b16 %v5967
        %v6237 = vunpack.c.l.b16 %v5981
        %v6238 = vunpack.c.l.b16 %v5991
        %v6239 = vunpack.c.l.b16 %v6005
        %v6240 = vunpack.c.l.b16 %v6015
        %v6241 = vunpack.c.l.b16 %v6029
        %v6242 = vunpack.c.l.b16 %v6039
        %v6243 = vunpack.c.l.b16 %v6053
        %v6244 = vunpack.c.l.b16 %v6063
        %v6245 = vunpack.c.l.b16 %v6077
        %v6246 = vunpack.c.l.b16 %v6087
        %v6247 = vunpack.c.l.b16 %v6101
        %v6248 = vunpack.c.l.b16 %v6111
        %v6249 = vunpack.c.l.b16 %v6125
        %v6250 = vunpack.c.l.b16 %v6135
        %v6251 = vunpack.c.l.b16 %v6149
        %v6252 = vunpack.c.l.b16 %v6159
        %v6253 = vunpack.c.l.b16 %v6173
        %v6254 = vunpack.c.l.b16 %v6183
        %v6255 = vunpack.c.l.b16 %v6197
        %v6256 = vunpack.c.l.b16 %v6207
        %v6257 = vpack.c.b16 %v6226, %v6225
        %v6258 = vpack.c.b16 %v6228, %v6227
        %v6259 = vpack.c.b16 %v6230, %v6229
        %v6260 = vpack.c.b16 %v6232, %v6231
        %v6261 = vpack.c.b16 %v6234, %v6233
        %v6262 = vpack.c.b16 %v6236, %v6235
        %v6263 = vpack.c.b16 %v6238, %v6237
        %v6264 = vpack.c.b16 %v6240, %v6239
        %v6265 = vpack.c.b16 %v6242, %v6241
        %v6266 = vpack.c.b16 %v6244, %v6243
        %v6267 = vpack.c.b16 %v6246, %v6245
        %v6268 = vpack.c.b16 %v6248, %v6247
        %v6269 = vpack.c.b16 %v6250, %v6249
        %v6270 = vpack.c.b16 %v6252, %v6251
        %v6271 = vpack.c.b16 %v6254, %v6253
        %v6272 = vpack.c.b16 %v6256, %v6255
        %v6305 = vunpack.c.l.b16 %v6209
        %v6306 = vunpack.c.l.b16 %v6210
        %v6307 = vunpack.c.l.b16 %v6211
        %v6308 = vunpack.c.l.b16 %v6212
        %v6309 = vunpack.c.l.b16 %v6213
        %v6310 = vunpack.c.l.b16 %v6214
        %v6311 = vunpack.c.l.b16 %v6215
        %v6312 = vunpack.c.l.b16 %v6216
        %v6313 = vunpack.c.l.b16 %v6217
        %v6314 = vunpack.c.l.b16 %v6218
        %v6315 = vunpack.c.l.b16 %v6219
        %v6316 = vunpack.c.l.b16 %v6220
        %v6317 = vunpack.c.l.b16 %v6221
        %v6318 = vunpack.c.l.b16 %v6222
        %v6319 = vunpack.c.l.b16 %v6223
        %v6320 = vunpack.c.l.b16 %v6224
        %v6321 = vpack.c.b16 %v6306, %v6305
        %v6322 = vpack.c.b16 %v6308, %v6307
        %v6323 = vpack.c.b16 %v6310, %v6309
        %v6324 = vpack.c.b16 %v6312, %v6311
        %v6325 = vpack.c.b16 %v6314, %v6313
        %v6326 = vpack.c.b16 %v6316, %v6315
        %v6327 = vpack.c.b16 %v6318, %v6317
        %v6328 = vpack.c.b16 %v6320, %v6319
        %6337 = vmatprep.subr.bf16.mxu0 0
        %6338 = vmatpush1.bf16.msra.mxu0 %v6328
        %6339 = vmatprep.subr.bf16.mxu0 0
        %6340 = vmatpush1.bf16.msra.mxu0 %v6327
        %6341 = vmatprep.subr.bf16.mxu0 0
        %6342 = vmatpush1.bf16.msra.mxu0 %v6326
        %6343 = vmatprep.subr.bf16.mxu0 0
        %6344 = vmatpush1.bf16.msra.mxu0 %v6325
        %6345 = vmatprep.subr.bf16.mxu0 0
        %6346 = vmatpush1.bf16.msra.mxu0 %v6324
        %6347 = vmatprep.subr.bf16.mxu0 0
        %6348 = vmatpush1.bf16.msra.mxu0 %v6323
        %6349 = vmatprep.subr.bf16.mxu0 0
        %6350 = vmatpush1.bf16.msra.mxu0 %v6322
        %6351 = vmatprep.subr.bf16.mxu0 0
        %6352 = vmatpush1.bf16.msra.mxu0 %v6321
        %6353 = vmatprep.subr.bf16.mxu0 0
        %6354 = vmatpush2.bf16.msra.mxu0 0
        %6355 = vmatprep.subr.bf16.mxu0 0
        %6356 = vmatpush2.bf16.msra.mxu0 0
        %6357 = vmatprep.subr.bf16.mxu0 0
        %6358 = vmatpush2.bf16.msra.mxu0 0
        %6359 = vmatprep.subr.bf16.mxu0 0
        %6360 = vmatpush2.bf16.msra.mxu0 0
        %6361 = vmatprep.subr.bf16.mxu0 0
        %6362 = vmatpush2.bf16.msra.mxu0 0
        %6363 = vmatprep.subr.bf16.mxu0 0
        %6364 = vmatpush2.bf16.msra.mxu0 0
        %6365 = vmatprep.subr.bf16.mxu0 0
        %6366 = vmatpush2.bf16.msra.mxu0 0
        %6367 = vmatprep.subr.bf16.mxu0 0
        %6368 = vmatpush2.bf16.msra.mxu0 0
        %6369 = vmatprep.mubr.bf16.mxu0 0
        %6370 = vmatmul.mubr.bf16.gmra.mxu0 %v6257
        %v6371 = vpop.f32.mrf.mxu0
        %v6372 = vadd.f32 0.0, %v6371
        %v6373 = vpop.f32.mrf.mxu0
        %v6374 = vpop.f32.mrf.mxu0
        %v6375 = vadd.f32 0.0, %v6374
        %v6376 = vpop.f32.mrf.mxu0
        %6377 = vmatprep.mubr.bf16.mxu0 0
        %6378 = vmatmul.mubr.bf16.gmra.mxu0 %v6258
        %v6379 = vpop.f32.mrf.mxu0
        %v6380 = vadd.f32 0.0, %v6379
        %v6381 = vpop.f32.mrf.mxu0
        %v6382 = vpop.f32.mrf.mxu0
        %v6383 = vadd.f32 0.0, %v6382
        %v6384 = vpop.f32.mrf.mxu0
        %6385 = vmatprep.mubr.bf16.mxu0 0
        %6386 = vmatmul.mubr.bf16.gmra.mxu0 %v6259
        %v6387 = vpop.f32.mrf.mxu0
        %v6388 = vadd.f32 0.0, %v6387
        %v6389 = vpop.f32.mrf.mxu0
        %v6390 = vpop.f32.mrf.mxu0
        %v6391 = vadd.f32 0.0, %v6390
        %v6392 = vpop.f32.mrf.mxu0
        %6393 = vmatprep.mubr.bf16.mxu0 0
        %6394 = vmatmul.mubr.bf16.gmra.mxu0 %v6260
        %v6395 = vpop.f32.mrf.mxu0
        %v6396 = vadd.f32 0.0, %v6395
        %v6397 = vpop.f32.mrf.mxu0
        %v6398 = vpop.f32.mrf.mxu0
        %v6399 = vadd.f32 0.0, %v6398
        %v6400 = vpop.f32.mrf.mxu0
        %6401 = vmatprep.mubr.bf16.mxu0 0
        %6402 = vmatmul.mubr.bf16.gmra.mxu0 %v6261
        %v6403 = vpop.f32.mrf.mxu0
        %v6404 = vadd.f32 0.0, %v6403
        %v6405 = vpop.f32.mrf.mxu0
        %v6406 = vpop.f32.mrf.mxu0
        %v6407 = vadd.f32 0.0, %v6406
        %v6408 = vpop.f32.mrf.mxu0
        %6409 = vmatprep.mubr.bf16.mxu0 0
        %6410 = vmatmul.mubr.bf16.gmra.mxu0 %v6262
        %v6411 = vpop.f32.mrf.mxu0
        %v6412 = vadd.f32 0.0, %v6411
        %v6413 = vpop.f32.mrf.mxu0
        %v6414 = vpop.f32.mrf.mxu0
        %v6415 = vadd.f32 0.0, %v6414
        %v6416 = vpop.f32.mrf.mxu0
        %6417 = vmatprep.mubr.bf16.mxu0 0
        %6418 = vmatmul.mubr.bf16.gmra.mxu0 %v6263
        %v6419 = vpop.f32.mrf.mxu0
        %v6420 = vadd.f32 0.0, %v6419
        %v6421 = vpop.f32.mrf.mxu0
        %v6422 = vpop.f32.mrf.mxu0
        %v6423 = vadd.f32 0.0, %v6422
        %v6424 = vpop.f32.mrf.mxu0
        %6425 = vmatprep.mubr.bf16.mxu0 0
        %6426 = vmatmul.mubr.bf16.gmra.mxu0 %v6264
        %v6427 = vpop.f32.mrf.mxu0
        %v6428 = vadd.f32 0.0, %v6427
        %v6429 = vpop.f32.mrf.mxu0
        %v6430 = vpop.f32.mrf.mxu0
        %v6431 = vadd.f32 0.0, %v6430
        %v6432 = vpop.f32.mrf.mxu0
        %6433 = vmatprep.mubr.bf16.mxu0 0
        %6434 = vmatmul.mubr.bf16.gmra.mxu0 %v6265
        %v6435 = vpop.f32.mrf.mxu0
        %v6436 = vadd.f32 0.0, %v6435
        %v6437 = vpop.f32.mrf.mxu0
        %v6438 = vpop.f32.mrf.mxu0
        %v6439 = vadd.f32 0.0, %v6438
        %v6440 = vpop.f32.mrf.mxu0
        %6441 = vmatprep.mubr.bf16.mxu0 0
        %6442 = vmatmul.mubr.bf16.gmra.mxu0 %v6266
        %v6443 = vpop.f32.mrf.mxu0
        %v6444 = vadd.f32 0.0, %v6443
        %v6445 = vpop.f32.mrf.mxu0
        %v6446 = vpop.f32.mrf.mxu0
        %v6447 = vadd.f32 0.0, %v6446
        %v6448 = vpop.f32.mrf.mxu0
        %6449 = vmatprep.mubr.bf16.mxu0 0
        %6450 = vmatmul.mubr.bf16.gmra.mxu0 %v6267
        %v6451 = vpop.f32.mrf.mxu0
        %v6452 = vadd.f32 0.0, %v6451
        %v6453 = vpop.f32.mrf.mxu0
        %v6454 = vpop.f32.mrf.mxu0
        %v6455 = vadd.f32 0.0, %v6454
        %v6456 = vpop.f32.mrf.mxu0
        %6457 = vmatprep.mubr.bf16.mxu0 0
        %6458 = vmatmul.mubr.bf16.gmra.mxu0 %v6268
        %v6459 = vpop.f32.mrf.mxu0
        %v6460 = vadd.f32 0.0, %v6459
        %v6461 = vpop.f32.mrf.mxu0
        %v6462 = vpop.f32.mrf.mxu0
        %v6463 = vadd.f32 0.0, %v6462
        %v6464 = vpop.f32.mrf.mxu0
        %6465 = vmatprep.mubr.bf16.mxu0 0
        %6466 = vmatmul.mubr.bf16.gmra.mxu0 %v6269
        %v6467 = vpop.f32.mrf.mxu0
        %v6468 = vadd.f32 0.0, %v6467
        %v6469 = vpop.f32.mrf.mxu0
        %v6470 = vpop.f32.mrf.mxu0
        %v6471 = vadd.f32 0.0, %v6470
        %v6472 = vpop.f32.mrf.mxu0
        %6473 = vmatprep.mubr.bf16.mxu0 0
        %6474 = vmatmul.mubr.bf16.gmra.mxu0 %v6270
        %v6475 = vpop.f32.mrf.mxu0
        %v6476 = vadd.f32 0.0, %v6475
        %v6477 = vpop.f32.mrf.mxu0
        %v6478 = vpop.f32.mrf.mxu0
        %v6479 = vadd.f32 0.0, %v6478
        %v6480 = vpop.f32.mrf.mxu0
        %6481 = vmatprep.mubr.bf16.mxu0 0
        %6482 = vmatmul.mubr.bf16.gmra.mxu0 %v6271
        %v6483 = vpop.f32.mrf.mxu0
        %v6484 = vadd.f32 0.0, %v6483
        %v6485 = vpop.f32.mrf.mxu0
        %v6486 = vpop.f32.mrf.mxu0
        %v6487 = vadd.f32 0.0, %v6486
        %v6488 = vpop.f32.mrf.mxu0
        %6489 = vmatprep.mubr.bf16.mxu0 0
        %6490 = vmatmul.mubr.bf16.gmra.mxu0 %v6272
        %v6491 = vpop.f32.mrf.mxu0
        %v6492 = vadd.f32 0.0, %v6491
        %v6493 = vpop.f32.mrf.mxu0
        %v6494 = vpop.f32.mrf.mxu0
        %v6495 = vadd.f32 0.0, %v6494
        %v6496 = vpop.f32.mrf.mxu0
        %6497 = vdwg.mxu0
        %v6530 = vunpack.c.l.b16 %v5760
        %v6531 = vunpack.c.l.b16 %v5761
        %v6532 = vunpack.c.l.b16 %v5762
        %v6533 = vunpack.c.l.b16 %v5763
        %v6534 = vunpack.c.l.b16 %v5764
        %v6535 = vunpack.c.l.b16 %v5765
        %v6536 = vunpack.c.l.b16 %v5766
        %v6537 = vunpack.c.l.b16 %v5767
        %v6538 = vunpack.c.l.b16 %v5768
        %v6539 = vunpack.c.l.b16 %v5769
        %v6540 = vunpack.c.l.b16 %v5770
        %v6541 = vunpack.c.l.b16 %v5771
        %v6542 = vunpack.c.l.b16 %v5772
        %v6543 = vunpack.c.l.b16 %v5773
        %v6544 = vunpack.c.l.b16 %v5774
        %v6545 = vunpack.c.l.b16 %v5775
        %v6546 = vunpack.c.l.b16 %v5776
        %v6547 = vunpack.c.l.b16 %v5777
        %v6548 = vunpack.c.l.b16 %v5778
        %v6549 = vunpack.c.l.b16 %v5779
        %v6550 = vunpack.c.l.b16 %v5780
        %v6551 = vunpack.c.l.b16 %v5781
        %v6552 = vunpack.c.l.b16 %v5782
        %v6553 = vunpack.c.l.b16 %v5783
        %v6554 = vunpack.c.l.b16 %v5784
        %v6555 = vunpack.c.l.b16 %v5785
        %v6556 = vunpack.c.l.b16 %v5786
        %v6557 = vunpack.c.l.b16 %v5787
        %v6558 = vunpack.c.l.b16 %v5788
        %v6559 = vunpack.c.l.b16 %v5789
        %v6560 = vunpack.c.l.b16 %v5790
        %v6561 = vunpack.c.l.b16 %v5791
        %v6562 = vpack.c.b16 %v6531, %v6530
        %v6563 = vpack.c.b16 %v6533, %v6532
        %v6564 = vpack.c.b16 %v6535, %v6534
        %v6565 = vpack.c.b16 %v6537, %v6536
        %v6566 = vpack.c.b16 %v6539, %v6538
        %v6567 = vpack.c.b16 %v6541, %v6540
        %v6568 = vpack.c.b16 %v6543, %v6542
        %v6569 = vpack.c.b16 %v6545, %v6544
        %v6570 = vpack.c.b16 %v6547, %v6546
        %v6571 = vpack.c.b16 %v6549, %v6548
        %v6572 = vpack.c.b16 %v6551, %v6550
        %v6573 = vpack.c.b16 %v6553, %v6552
        %v6574 = vpack.c.b16 %v6555, %v6554
        %v6575 = vpack.c.b16 %v6557, %v6556
        %v6576 = vpack.c.b16 %v6559, %v6558
        %v6577 = vpack.c.b16 %v6561, %v6560
        %v6610 = vunpack.c.l.b16 %v5792
        %v6611 = vunpack.c.l.b16 %v5793
        %v6612 = vunpack.c.l.b16 %v5794
        %v6613 = vunpack.c.l.b16 %v5795
        %v6614 = vunpack.c.l.b16 %v5796
        %v6615 = vunpack.c.l.b16 %v5797
        %v6616 = vunpack.c.l.b16 %v5798
        %v6617 = vunpack.c.l.b16 %v5799
        %v6618 = vunpack.c.l.b16 %v5800
        %v6619 = vunpack.c.l.b16 %v5801
        %v6620 = vunpack.c.l.b16 %v5802
        %v6621 = vunpack.c.l.b16 %v5803
        %v6622 = vunpack.c.l.b16 %v5804
        %v6623 = vunpack.c.l.b16 %v5805
        %v6624 = vunpack.c.l.b16 %v5806
        %v6625 = vunpack.c.l.b16 %v5807
        %v6626 = vpack.c.b16 %v6611, %v6610
        %v6627 = vpack.c.b16 %v6613, %v6612
        %v6628 = vpack.c.b16 %v6615, %v6614
        %v6629 = vpack.c.b16 %v6617, %v6616
        %v6630 = vpack.c.b16 %v6619, %v6618
        %v6631 = vpack.c.b16 %v6621, %v6620
        %v6632 = vpack.c.b16 %v6623, %v6622
        %v6633 = vpack.c.b16 %v6625, %v6624
        %6642 = vmatprep.subr.bf16.mxu0 0
        %6643 = vmatpush1.bf16.msra.mxu0 %v6633
        %6644 = vmatprep.subr.bf16.mxu0 0
        %6645 = vmatpush1.bf16.msra.mxu0 %v6632
        %6646 = vmatprep.subr.bf16.mxu0 0
        %6647 = vmatpush1.bf16.msra.mxu0 %v6631
        %6648 = vmatprep.subr.bf16.mxu0 0
        %6649 = vmatpush1.bf16.msra.mxu0 %v6630
        %6650 = vmatprep.subr.bf16.mxu0 0
        %6651 = vmatpush1.bf16.msra.mxu0 %v6629
        %6652 = vmatprep.subr.bf16.mxu0 0
        %6653 = vmatpush1.bf16.msra.mxu0 %v6628
        %6654 = vmatprep.subr.bf16.mxu0 0
        %6655 = vmatpush1.bf16.msra.mxu0 %v6627
        %6656 = vmatprep.subr.bf16.mxu0 0
        %6657 = vmatpush1.bf16.msra.mxu0 %v6626
        %6658 = vmatprep.subr.bf16.mxu0 0
        %6659 = vmatpush2.bf16.msra.mxu0 0
        %6660 = vmatprep.subr.bf16.mxu0 0
        %6661 = vmatpush2.bf16.msra.mxu0 0
        %6662 = vmatprep.subr.bf16.mxu0 0
        %6663 = vmatpush2.bf16.msra.mxu0 0
        %6664 = vmatprep.subr.bf16.mxu0 0
        %6665 = vmatpush2.bf16.msra.mxu0 0
        %6666 = vmatprep.subr.bf16.mxu0 0
        %6667 = vmatpush2.bf16.msra.mxu0 0
        %6668 = vmatprep.subr.bf16.mxu0 0
        %6669 = vmatpush2.bf16.msra.mxu0 0
        %6670 = vmatprep.subr.bf16.mxu0 0
        %6671 = vmatpush2.bf16.msra.mxu0 0
        %6672 = vmatprep.subr.bf16.mxu0 0
        %6673 = vmatpush2.bf16.msra.mxu0 0
        %6674 = vmatprep.mubr.bf16.mxu0 0
        %6675 = vmatmul.mubr.bf16.gmra.mxu0 %v6562
        %v6676 = vpop.f32.mrf.mxu0
        %v6677 = vadd.f32 %v6372, %v6676
        %v6678 = vpop.f32.mrf.mxu0
        %v6679 = vpop.f32.mrf.mxu0
        %v6680 = vadd.f32 %v6375, %v6679
        %v6681 = vpop.f32.mrf.mxu0
        %6682 = vmatprep.mubr.bf16.mxu0 0
        %6683 = vmatmul.mubr.bf16.gmra.mxu0 %v6563
        %v6684 = vpop.f32.mrf.mxu0
        %v6685 = vadd.f32 %v6380, %v6684
        %v6686 = vpop.f32.mrf.mxu0
        %v6687 = vpop.f32.mrf.mxu0
        %v6688 = vadd.f32 %v6383, %v6687
        %v6689 = vpop.f32.mrf.mxu0
        %6690 = vmatprep.mubr.bf16.mxu0 0
        %6691 = vmatmul.mubr.bf16.gmra.mxu0 %v6564
        %v6692 = vpop.f32.mrf.mxu0
        %v6693 = vadd.f32 %v6388, %v6692
        %v6694 = vpop.f32.mrf.mxu0
        %v6695 = vpop.f32.mrf.mxu0
        %v6696 = vadd.f32 %v6391, %v6695
        %v6697 = vpop.f32.mrf.mxu0
        %6698 = vmatprep.mubr.bf16.mxu0 0
        %6699 = vmatmul.mubr.bf16.gmra.mxu0 %v6565
        %v6700 = vpop.f32.mrf.mxu0
        %v6701 = vadd.f32 %v6396, %v6700
        %v6702 = vpop.f32.mrf.mxu0
        %v6703 = vpop.f32.mrf.mxu0
        %v6704 = vadd.f32 %v6399, %v6703
        %v6705 = vpop.f32.mrf.mxu0
        %6706 = vmatprep.mubr.bf16.mxu0 0
        %6707 = vmatmul.mubr.bf16.gmra.mxu0 %v6566
        %v6708 = vpop.f32.mrf.mxu0
        %v6709 = vadd.f32 %v6404, %v6708
        %v6710 = vpop.f32.mrf.mxu0
        %v6711 = vpop.f32.mrf.mxu0
        %v6712 = vadd.f32 %v6407, %v6711
        %v6713 = vpop.f32.mrf.mxu0
        %6714 = vmatprep.mubr.bf16.mxu0 0
        %6715 = vmatmul.mubr.bf16.gmra.mxu0 %v6567
        %v6716 = vpop.f32.mrf.mxu0
        %v6717 = vadd.f32 %v6412, %v6716
        %v6718 = vpop.f32.mrf.mxu0
        %v6719 = vpop.f32.mrf.mxu0
        %v6720 = vadd.f32 %v6415, %v6719
        %v6721 = vpop.f32.mrf.mxu0
        %6722 = vmatprep.mubr.bf16.mxu0 0
        %6723 = vmatmul.mubr.bf16.gmra.mxu0 %v6568
        %v6724 = vpop.f32.mrf.mxu0
        %v6725 = vadd.f32 %v6420, %v6724
        %v6726 = vpop.f32.mrf.mxu0
        %v6727 = vpop.f32.mrf.mxu0
        %v6728 = vadd.f32 %v6423, %v6727
        %v6729 = vpop.f32.mrf.mxu0
        %6730 = vmatprep.mubr.bf16.mxu0 0
        %6731 = vmatmul.mubr.bf16.gmra.mxu0 %v6569
        %v6732 = vpop.f32.mrf.mxu0
        %v6733 = vadd.f32 %v6428, %v6732
        %v6734 = vpop.f32.mrf.mxu0
        %v6735 = vpop.f32.mrf.mxu0
        %v6736 = vadd.f32 %v6431, %v6735
        %v6737 = vpop.f32.mrf.mxu0
        %6738 = vmatprep.mubr.bf16.mxu0 0
        %6739 = vmatmul.mubr.bf16.gmra.mxu0 %v6570
        %v6740 = vpop.f32.mrf.mxu0
        %v6741 = vadd.f32 %v6436, %v6740
        %v6742 = vpop.f32.mrf.mxu0
        %v6743 = vpop.f32.mrf.mxu0
        %v6744 = vadd.f32 %v6439, %v6743
        %v6745 = vpop.f32.mrf.mxu0
        %6746 = vmatprep.mubr.bf16.mxu0 0
        %6747 = vmatmul.mubr.bf16.gmra.mxu0 %v6571
        %v6748 = vpop.f32.mrf.mxu0
        %v6749 = vadd.f32 %v6444, %v6748
        %v6750 = vpop.f32.mrf.mxu0
        %v6751 = vpop.f32.mrf.mxu0
        %v6752 = vadd.f32 %v6447, %v6751
        %v6753 = vpop.f32.mrf.mxu0
        %6754 = vmatprep.mubr.bf16.mxu0 0
        %6755 = vmatmul.mubr.bf16.gmra.mxu0 %v6572
        %v6756 = vpop.f32.mrf.mxu0
        %v6757 = vadd.f32 %v6452, %v6756
        %v6758 = vpop.f32.mrf.mxu0
        %v6759 = vpop.f32.mrf.mxu0
        %v6760 = vadd.f32 %v6455, %v6759
        %v6761 = vpop.f32.mrf.mxu0
        %6762 = vmatprep.mubr.bf16.mxu0 0
        %6763 = vmatmul.mubr.bf16.gmra.mxu0 %v6573
        %v6764 = vpop.f32.mrf.mxu0
        %v6765 = vadd.f32 %v6460, %v6764
        %v6766 = vpop.f32.mrf.mxu0
        %v6767 = vpop.f32.mrf.mxu0
        %v6768 = vadd.f32 %v6463, %v6767
        %v6769 = vpop.f32.mrf.mxu0
        %6770 = vmatprep.mubr.bf16.mxu0 0
        %6771 = vmatmul.mubr.bf16.gmra.mxu0 %v6574
        %v6772 = vpop.f32.mrf.mxu0
        %v6773 = vadd.f32 %v6468, %v6772
        %v6774 = vpop.f32.mrf.mxu0
        %v6775 = vpop.f32.mrf.mxu0
        %v6776 = vadd.f32 %v6471, %v6775
        %v6777 = vpop.f32.mrf.mxu0
        %6778 = vmatprep.mubr.bf16.mxu0 0
        %6779 = vmatmul.mubr.bf16.gmra.mxu0 %v6575
        %v6780 = vpop.f32.mrf.mxu0
        %v6781 = vadd.f32 %v6476, %v6780
        %v6782 = vpop.f32.mrf.mxu0
        %v6783 = vpop.f32.mrf.mxu0
        %v6784 = vadd.f32 %v6479, %v6783
        %v6785 = vpop.f32.mrf.mxu0
        %6786 = vmatprep.mubr.bf16.mxu0 0
        %6787 = vmatmul.mubr.bf16.gmra.mxu0 %v6576
        %v6788 = vpop.f32.mrf.mxu0
        %v6789 = vadd.f32 %v6484, %v6788
        %v6790 = vpop.f32.mrf.mxu0
        %v6791 = vpop.f32.mrf.mxu0
        %v6792 = vadd.f32 %v6487, %v6791
        %v6793 = vpop.f32.mrf.mxu0
        %6794 = vmatprep.mubr.bf16.mxu0 0
        %6795 = vmatmul.mubr.bf16.gmra.mxu0 %v6577
        %v6796 = vpop.f32.mrf.mxu0
        %v6797 = vadd.f32 %v6492, %v6796
        %v6798 = vpop.f32.mrf.mxu0
        %v6799 = vpop.f32.mrf.mxu0
        %v6800 = vadd.f32 %v6495, %v6799
        %v6801 = vpop.f32.mrf.mxu0
        %6802 = vdwg.mxu0
        %v6803 = vld [vmem:[#allocation2] sm:$0xe]
        %v6804 = vld [vmem:[#allocation2 + $0xc] sm:$0xe]
        %v6805 = vld [vmem:[#allocation2 + $0x18] sm:$0xe]
        %v6806 = vld [vmem:[#allocation2 + $0x24] sm:$0xe]
        %v6807 = vld [vmem:[#allocation2 + $0x30] sm:$0xe]
        %v6808 = vld [vmem:[#allocation2 + $0x3c] sm:$0xe]
        %v6809 = vld [vmem:[#allocation2 + $0x48] sm:$0xe]
        %v6810 = vld [vmem:[#allocation2 + $0x54] sm:$0xe]
        %v6811 = vld [vmem:[#allocation2 + $0x60] sm:$0xe]
        %v6812 = vld [vmem:[#allocation2 + $0x6c] sm:$0xe]
        %v6813 = vld [vmem:[#allocation2 + $0x78] sm:$0xe]
        %v6814 = vld [vmem:[#allocation2 + $0x84] sm:$0xe]
        %v6815 = vld [vmem:[#allocation2 + $0x90] sm:$0xe]
        %v6816 = vld [vmem:[#allocation2 + $0x9c] sm:$0xe]
        %v6817 = vld [vmem:[#allocation2 + $0xa8] sm:$0xe]
        %v6818 = vld [vmem:[#allocation2 + $0xb4] sm:$0xe]
        %v6851 = vrot.slane %v6803, 5
        %v6852 = vrot.slane %v6851, 4
        %v6853 = vrot.slane %v5761, 5
        %v6854 = vsel %vm1335, %v6852, %v6853
        %v6855 = vrot.slane %v6853, 4
        %v6856 = vrot.slane %v5808, 5
        %v6857 = vsel %vm1335, %v6855, %v6856
        %v6858 = vrot.slane %v6804, 5
        %v6859 = vrot.slane %v6858, 4
        %v6860 = vrot.slane %v5763, 5
        %v6861 = vsel %vm1335, %v6859, %v6860
        %v6862 = vrot.slane %v6860, 4
        %v6863 = vrot.slane %v5809, 5
        %v6864 = vsel %vm1335, %v6862, %v6863
        %v6865 = vrot.slane %v6805, 5
        %v6866 = vrot.slane %v6865, 4
        %v6867 = vrot.slane %v5765, 5
        %v6868 = vsel %vm1335, %v6866, %v6867
        %v6869 = vrot.slane %v6867, 4
        %v6870 = vrot.slane %v5810, 5
        %v6871 = vsel %vm1335, %v6869, %v6870
        %v6872 = vrot.slane %v6806, 5
        %v6873 = vrot.slane %v6872, 4
        %v6874 = vrot.slane %v5767, 5
        %v6875 = vsel %vm1335, %v6873, %v6874
        %v6876 = vrot.slane %v6874, 4
        %v6877 = vrot.slane %v5811, 5
        %v6878 = vsel %vm1335, %v6876, %v6877
        %v6879 = vrot.slane %v6807, 5
        %v6880 = vrot.slane %v6879, 4
        %v6881 = vrot.slane %v5769, 5
        %v6882 = vsel %vm1335, %v6880, %v6881
        %v6883 = vrot.slane %v6881, 4
        %v6884 = vrot.slane %v5812, 5
        %v6885 = vsel %vm1335, %v6883, %v6884
        %v6886 = vrot.slane %v6808, 5
        %v6887 = vrot.slane %v6886, 4
        %v6888 = vrot.slane %v5771, 5
        %v6889 = vsel %vm1335, %v6887, %v6888
        %v6890 = vrot.slane %v6888, 4
        %v6891 = vrot.slane %v5813, 5
        %v6892 = vsel %vm1335, %v6890, %v6891
        %v6893 = vrot.slane %v6809, 5
        %v6894 = vrot.slane %v6893, 4
        %v6895 = vrot.slane %v5773, 5
        %v6896 = vsel %vm1335, %v6894, %v6895
        %v6897 = vrot.slane %v6895, 4
        %v6898 = vrot.slane %v5814, 5
        %v6899 = vsel %vm1335, %v6897, %v6898
        %v6900 = vrot.slane %v6810, 5
        %v6901 = vrot.slane %v6900, 4
        %v6902 = vrot.slane %v5775, 5
        %v6903 = vsel %vm1335, %v6901, %v6902
        %v6904 = vrot.slane %v6902, 4
        %v6905 = vrot.slane %v5815, 5
        %v6906 = vsel %vm1335, %v6904, %v6905
        %v6907 = vrot.slane %v6811, 5
        %v6908 = vrot.slane %v6907, 4
        %v6909 = vrot.slane %v5777, 5
        %v6910 = vsel %vm1335, %v6908, %v6909
        %v6911 = vrot.slane %v6909, 4
        %v6912 = vrot.slane %v5816, 5
        %v6913 = vsel %vm1335, %v6911, %v6912
        %v6914 = vrot.slane %v6812, 5
        %v6915 = vrot.slane %v6914, 4
        %v6916 = vrot.slane %v5779, 5
        %v6917 = vsel %vm1335, %v6915, %v6916
        %v6918 = vrot.slane %v6916, 4
        %v6919 = vrot.slane %v5817, 5
        %v6920 = vsel %vm1335, %v6918, %v6919
        %v6921 = vrot.slane %v6813, 5
        %v6922 = vrot.slane %v6921, 4
        %v6923 = vrot.slane %v5781, 5
        %v6924 = vsel %vm1335, %v6922, %v6923
        %v6925 = vrot.slane %v6923, 4
        %v6926 = vrot.slane %v5818, 5
        %v6927 = vsel %vm1335, %v6925, %v6926
        %v6928 = vrot.slane %v6814, 5
        %v6929 = vrot.slane %v6928, 4
        %v6930 = vrot.slane %v5783, 5
        %v6931 = vsel %vm1335, %v6929, %v6930
        %v6932 = vrot.slane %v6930, 4
        %v6933 = vrot.slane %v5819, 5
        %v6934 = vsel %vm1335, %v6932, %v6933
        %v6935 = vrot.slane %v6815, 5
        %v6936 = vrot.slane %v6935, 4
        %v6937 = vrot.slane %v5785, 5
        %v6938 = vsel %vm1335, %v6936, %v6937
        %v6939 = vrot.slane %v6937, 4
        %v6940 = vrot.slane %v5820, 5
        %v6941 = vsel %vm1335, %v6939, %v6940
        %v6942 = vrot.slane %v6816, 5
        %v6943 = vrot.slane %v6942, 4
        %v6944 = vrot.slane %v5787, 5
        %v6945 = vsel %vm1335, %v6943, %v6944
        %v6946 = vrot.slane %v6944, 4
        %v6947 = vrot.slane %v5821, 5
        %v6948 = vsel %vm1335, %v6946, %v6947
        %v6949 = vrot.slane %v6817, 5
        %v6950 = vrot.slane %v6949, 4
        %v6951 = vrot.slane %v5789, 5
        %v6952 = vsel %vm1335, %v6950, %v6951
        %v6953 = vrot.slane %v6951, 4
        %v6954 = vrot.slane %v5822, 5
        %v6955 = vsel %vm1335, %v6953, %v6954
        %v6956 = vrot.slane %v6818, 5
        %v6957 = vrot.slane %v6956, 4
        %v6958 = vrot.slane %v5791, 5
        %v6959 = vsel %vm1335, %v6957, %v6958
        %v6960 = vrot.slane %v6958, 4
        %v6961 = vrot.slane %v5823, 5
        %v6962 = vsel %vm1335, %v6960, %v6961
        %s6963 = scalar_lea.vmem [#allocation3], 128
        %v6964 = vld [vmem:[%s6963] sm:$0xf]
        %v6965 = vld [vmem:[%s6963 + $0x4] sm:$0xf]
        %v6966 = vld [vmem:[%s6963 + $0x8] sm:$0xf]
        %v6967 = vld [vmem:[%s6963 + $0xc] sm:$0xf]
        %v6968 = vld [vmem:[%s6963 + $0x10] sm:$0xf]
        %v6969 = vld [vmem:[%s6963 + $0x14] sm:$0xf]
        %v6970 = vld [vmem:[%s6963 + $0x18] sm:$0xf]
        %v6971 = vld [vmem:[%s6963 + $0x1c] sm:$0xf]
        %v6972 = vld [vmem:[%s6963 + $0x20] sm:$0xf]
        %v6973 = vld [vmem:[%s6963 + $0x24] sm:$0xf]
        %v6974 = vld [vmem:[%s6963 + $0x28] sm:$0xf]
        %v6975 = vld [vmem:[%s6963 + $0x2c] sm:$0xf]
        %v6976 = vld [vmem:[%s6963 + $0x30] sm:$0xf]
        %v6977 = vld [vmem:[%s6963 + $0x34] sm:$0xf]
        %v6978 = vld [vmem:[%s6963 + $0x38] sm:$0xf]
        %v6979 = vld [vmem:[%s6963 + $0x3c] sm:$0xf]
        %v6980 = vunpack.c.l.b16 %v6854
        %v6981 = vunpack.c.l.b16 %v6857
        %v6982 = vunpack.c.l.b16 %v6861
        %v6983 = vunpack.c.l.b16 %v6864
        %v6984 = vunpack.c.l.b16 %v6868
        %v6985 = vunpack.c.l.b16 %v6871
        %v6986 = vunpack.c.l.b16 %v6875
        %v6987 = vunpack.c.l.b16 %v6878
        %v6988 = vunpack.c.l.b16 %v6882
        %v6989 = vunpack.c.l.b16 %v6885
        %v6990 = vunpack.c.l.b16 %v6889
        %v6991 = vunpack.c.l.b16 %v6892
        %v6992 = vunpack.c.l.b16 %v6896
        %v6993 = vunpack.c.l.b16 %v6899
        %v6994 = vunpack.c.l.b16 %v6903
        %v6995 = vunpack.c.l.b16 %v6906
        %v6996 = vunpack.c.l.b16 %v6910
        %v6997 = vunpack.c.l.b16 %v6913
        %v6998 = vunpack.c.l.b16 %v6917
        %v6999 = vunpack.c.l.b16 %v6920
        %v7000 = vunpack.c.l.b16 %v6924
        %v7001 = vunpack.c.l.b16 %v6927
        %v7002 = vunpack.c.l.b16 %v6931
        %v7003 = vunpack.c.l.b16 %v6934
        %v7004 = vunpack.c.l.b16 %v6938
        %v7005 = vunpack.c.l.b16 %v6941
        %v7006 = vunpack.c.l.b16 %v6945
        %v7007 = vunpack.c.l.b16 %v6948
        %v7008 = vunpack.c.l.b16 %v6952
        %v7009 = vunpack.c.l.b16 %v6955
        %v7010 = vunpack.c.l.b16 %v6959
        %v7011 = vunpack.c.l.b16 %v6962
        %v7012 = vpack.c.b16 %v6981, %v6980
        %v7013 = vpack.c.b16 %v6983, %v6982
        %v7014 = vpack.c.b16 %v6985, %v6984
        %v7015 = vpack.c.b16 %v6987, %v6986
        %v7016 = vpack.c.b16 %v6989, %v6988
        %v7017 = vpack.c.b16 %v6991, %v6990
        %v7018 = vpack.c.b16 %v6993, %v6992
        %v7019 = vpack.c.b16 %v6995, %v6994
        %v7020 = vpack.c.b16 %v6997, %v6996
        %v7021 = vpack.c.b16 %v6999, %v6998
        %v7022 = vpack.c.b16 %v7001, %v7000
        %v7023 = vpack.c.b16 %v7003, %v7002
        %v7024 = vpack.c.b16 %v7005, %v7004
        %v7025 = vpack.c.b16 %v7007, %v7006
        %v7026 = vpack.c.b16 %v7009, %v7008
        %v7027 = vpack.c.b16 %v7011, %v7010
        %v7060 = vunpack.c.l.b16 %v6964
        %v7061 = vunpack.c.l.b16 %v6965
        %v7062 = vunpack.c.l.b16 %v6966
        %v7063 = vunpack.c.l.b16 %v6967
        %v7064 = vunpack.c.l.b16 %v6968
        %v7065 = vunpack.c.l.b16 %v6969
        %v7066 = vunpack.c.l.b16 %v6970
        %v7067 = vunpack.c.l.b16 %v6971
        %v7068 = vunpack.c.l.b16 %v6972
        %v7069 = vunpack.c.l.b16 %v6973
        %v7070 = vunpack.c.l.b16 %v6974
        %v7071 = vunpack.c.l.b16 %v6975
        %v7072 = vunpack.c.l.b16 %v6976
        %v7073 = vunpack.c.l.b16 %v6977
        %v7074 = vunpack.c.l.b16 %v6978
        %v7075 = vunpack.c.l.b16 %v6979
        %v7076 = vpack.c.b16 %v7061, %v7060
        %v7077 = vpack.c.b16 %v7063, %v7062
        %v7078 = vpack.c.b16 %v7065, %v7064
        %v7079 = vpack.c.b16 %v7067, %v7066
        %v7080 = vpack.c.b16 %v7069, %v7068
        %v7081 = vpack.c.b16 %v7071, %v7070
        %v7082 = vpack.c.b16 %v7073, %v7072
        %v7083 = vpack.c.b16 %v7075, %v7074
        %7092 = vmatprep.subr.bf16.mxu0 0
        %7093 = vmatpush1.bf16.msra.mxu0 %v7083
        %7094 = vmatprep.subr.bf16.mxu0 0
        %7095 = vmatpush1.bf16.msra.mxu0 %v7082
        %7096 = vmatprep.subr.bf16.mxu0 0
        %7097 = vmatpush1.bf16.msra.mxu0 %v7081
        %7098 = vmatprep.subr.bf16.mxu0 0
        %7099 = vmatpush1.bf16.msra.mxu0 %v7080
        %7100 = vmatprep.subr.bf16.mxu0 0
        %7101 = vmatpush1.bf16.msra.mxu0 %v7079
        %7102 = vmatprep.subr.bf16.mxu0 0
        %7103 = vmatpush1.bf16.msra.mxu0 %v7078
        %7104 = vmatprep.subr.bf16.mxu0 0
        %7105 = vmatpush1.bf16.msra.mxu0 %v7077
        %7106 = vmatprep.subr.bf16.mxu0 0
        %7107 = vmatpush1.bf16.msra.mxu0 %v7076
        %7108 = vmatprep.subr.bf16.mxu0 0
        %7109 = vmatpush2.bf16.msra.mxu0 0
        %7110 = vmatprep.subr.bf16.mxu0 0
        %7111 = vmatpush2.bf16.msra.mxu0 0
        %7112 = vmatprep.subr.bf16.mxu0 0
        %7113 = vmatpush2.bf16.msra.mxu0 0
        %7114 = vmatprep.subr.bf16.mxu0 0
        %7115 = vmatpush2.bf16.msra.mxu0 0
        %7116 = vmatprep.subr.bf16.mxu0 0
        %7117 = vmatpush2.bf16.msra.mxu0 0
        %7118 = vmatprep.subr.bf16.mxu0 0
        %7119 = vmatpush2.bf16.msra.mxu0 0
        %7120 = vmatprep.subr.bf16.mxu0 0
        %7121 = vmatpush2.bf16.msra.mxu0 0
        %7122 = vmatprep.subr.bf16.mxu0 0
        %7123 = vmatpush2.bf16.msra.mxu0 0
        %7124 = vmatprep.mubr.bf16.mxu0 0
        %7125 = vmatmul.mubr.bf16.gmra.mxu0 %v7012
        %v7126 = vpop.f32.mrf.mxu0
        %v7127 = vadd.f32 0.0, %v7126
        %v7128 = vpop.f32.mrf.mxu0
        %v7129 = vpop.f32.mrf.mxu0
        %v7130 = vadd.f32 0.0, %v7129
        %v7131 = vpop.f32.mrf.mxu0
        %7132 = vmatprep.mubr.bf16.mxu0 0
        %7133 = vmatmul.mubr.bf16.gmra.mxu0 %v7013
        %v7134 = vpop.f32.mrf.mxu0
        %v7135 = vadd.f32 0.0, %v7134
        %v7136 = vpop.f32.mrf.mxu0
        %v7137 = vpop.f32.mrf.mxu0
        %v7138 = vadd.f32 0.0, %v7137
        %v7139 = vpop.f32.mrf.mxu0
        %7140 = vmatprep.mubr.bf16.mxu0 0
        %7141 = vmatmul.mubr.bf16.gmra.mxu0 %v7014
        %v7142 = vpop.f32.mrf.mxu0
        %v7143 = vadd.f32 0.0, %v7142
        %v7144 = vpop.f32.mrf.mxu0
        %v7145 = vpop.f32.mrf.mxu0
        %v7146 = vadd.f32 0.0, %v7145
        %v7147 = vpop.f32.mrf.mxu0
        %7148 = vmatprep.mubr.bf16.mxu0 0
        %7149 = vmatmul.mubr.bf16.gmra.mxu0 %v7015
        %v7150 = vpop.f32.mrf.mxu0
        %v7151 = vadd.f32 0.0, %v7150
        %v7152 = vpop.f32.mrf.mxu0
        %v7153 = vpop.f32.mrf.mxu0
        %v7154 = vadd.f32 0.0, %v7153
        %v7155 = vpop.f32.mrf.mxu0
        %7156 = vmatprep.mubr.bf16.mxu0 0
        %7157 = vmatmul.mubr.bf16.gmra.mxu0 %v7016
        %v7158 = vpop.f32.mrf.mxu0
        %v7159 = vadd.f32 0.0, %v7158
        %v7160 = vpop.f32.mrf.mxu0
        %v7161 = vpop.f32.mrf.mxu0
        %v7162 = vadd.f32 0.0, %v7161
        %v7163 = vpop.f32.mrf.mxu0
        %7164 = vmatprep.mubr.bf16.mxu0 0
        %7165 = vmatmul.mubr.bf16.gmra.mxu0 %v7017
        %v7166 = vpop.f32.mrf.mxu0
        %v7167 = vadd.f32 0.0, %v7166
        %v7168 = vpop.f32.mrf.mxu0
        %v7169 = vpop.f32.mrf.mxu0
        %v7170 = vadd.f32 0.0, %v7169
        %v7171 = vpop.f32.mrf.mxu0
        %7172 = vmatprep.mubr.bf16.mxu0 0
        %7173 = vmatmul.mubr.bf16.gmra.mxu0 %v7018
        %v7174 = vpop.f32.mrf.mxu0
        %v7175 = vadd.f32 0.0, %v7174
        %v7176 = vpop.f32.mrf.mxu0
        %v7177 = vpop.f32.mrf.mxu0
        %v7178 = vadd.f32 0.0, %v7177
        %v7179 = vpop.f32.mrf.mxu0
        %7180 = vmatprep.mubr.bf16.mxu0 0
        %7181 = vmatmul.mubr.bf16.gmra.mxu0 %v7019
        %v7182 = vpop.f32.mrf.mxu0
        %v7183 = vadd.f32 0.0, %v7182
        %v7184 = vpop.f32.mrf.mxu0
        %v7185 = vpop.f32.mrf.mxu0
        %v7186 = vadd.f32 0.0, %v7185
        %v7187 = vpop.f32.mrf.mxu0
        %7188 = vmatprep.mubr.bf16.mxu0 0
        %7189 = vmatmul.mubr.bf16.gmra.mxu0 %v7020
        %v7190 = vpop.f32.mrf.mxu0
        %v7191 = vadd.f32 0.0, %v7190
        %v7192 = vpop.f32.mrf.mxu0
        %v7193 = vpop.f32.mrf.mxu0
        %v7194 = vadd.f32 0.0, %v7193
        %v7195 = vpop.f32.mrf.mxu0
        %7196 = vmatprep.mubr.bf16.mxu0 0
        %7197 = vmatmul.mubr.bf16.gmra.mxu0 %v7021
        %v7198 = vpop.f32.mrf.mxu0
        %v7199 = vadd.f32 0.0, %v7198
        %v7200 = vpop.f32.mrf.mxu0
        %v7201 = vpop.f32.mrf.mxu0
        %v7202 = vadd.f32 0.0, %v7201
        %v7203 = vpop.f32.mrf.mxu0
        %7204 = vmatprep.mubr.bf16.mxu0 0
        %7205 = vmatmul.mubr.bf16.gmra.mxu0 %v7022
        %v7206 = vpop.f32.mrf.mxu0
        %v7207 = vadd.f32 0.0, %v7206
        %v7208 = vpop.f32.mrf.mxu0
        %v7209 = vpop.f32.mrf.mxu0
        %v7210 = vadd.f32 0.0, %v7209
        %v7211 = vpop.f32.mrf.mxu0
        %7212 = vmatprep.mubr.bf16.mxu0 0
        %7213 = vmatmul.mubr.bf16.gmra.mxu0 %v7023
        %v7214 = vpop.f32.mrf.mxu0
        %v7215 = vadd.f32 0.0, %v7214
        %v7216 = vpop.f32.mrf.mxu0
        %v7217 = vpop.f32.mrf.mxu0
        %v7218 = vadd.f32 0.0, %v7217
        %v7219 = vpop.f32.mrf.mxu0
        %7220 = vmatprep.mubr.bf16.mxu0 0
        %7221 = vmatmul.mubr.bf16.gmra.mxu0 %v7024
        %v7222 = vpop.f32.mrf.mxu0
        %v7223 = vadd.f32 0.0, %v7222
        %v7224 = vpop.f32.mrf.mxu0
        %v7225 = vpop.f32.mrf.mxu0
        %v7226 = vadd.f32 0.0, %v7225
        %v7227 = vpop.f32.mrf.mxu0
        %7228 = vmatprep.mubr.bf16.mxu0 0
        %7229 = vmatmul.mubr.bf16.gmra.mxu0 %v7025
        %v7230 = vpop.f32.mrf.mxu0
        %v7231 = vadd.f32 0.0, %v7230
        %v7232 = vpop.f32.mrf.mxu0
        %v7233 = vpop.f32.mrf.mxu0
        %v7234 = vadd.f32 0.0, %v7233
        %v7235 = vpop.f32.mrf.mxu0
        %7236 = vmatprep.mubr.bf16.mxu0 0
        %7237 = vmatmul.mubr.bf16.gmra.mxu0 %v7026
        %v7238 = vpop.f32.mrf.mxu0
        %v7239 = vadd.f32 0.0, %v7238
        %v7240 = vpop.f32.mrf.mxu0
        %v7241 = vpop.f32.mrf.mxu0
        %v7242 = vadd.f32 0.0, %v7241
        %v7243 = vpop.f32.mrf.mxu0
        %7244 = vmatprep.mubr.bf16.mxu0 0
        %7245 = vmatmul.mubr.bf16.gmra.mxu0 %v7027
        %v7246 = vpop.f32.mrf.mxu0
        %v7247 = vadd.f32 0.0, %v7246
        %v7248 = vpop.f32.mrf.mxu0
        %v7249 = vpop.f32.mrf.mxu0
        %v7250 = vadd.f32 0.0, %v7249
        %v7251 = vpop.f32.mrf.mxu0
        %7252 = vdwg.mxu0
        %v7253 = vadd.f32 %v6677, %v7127
        %v7254 = vadd.f32 %v6680, %v7130
        %v7255 = vadd.f32 %v6685, %v7135
        %v7256 = vadd.f32 %v6688, %v7138
        %v7257 = vadd.f32 %v6693, %v7143
        %v7258 = vadd.f32 %v6696, %v7146
        %v7259 = vadd.f32 %v6701, %v7151
        %v7260 = vadd.f32 %v6704, %v7154
        %v7261 = vadd.f32 %v6709, %v7159
        %v7262 = vadd.f32 %v6712, %v7162
        %v7263 = vadd.f32 %v6717, %v7167
        %v7264 = vadd.f32 %v6720, %v7170
        %v7265 = vadd.f32 %v6725, %v7175
        %v7266 = vadd.f32 %v6728, %v7178
        %v7267 = vadd.f32 %v6733, %v7183
        %v7268 = vadd.f32 %v6736, %v7186
        %v7269 = vadd.f32 %v6741, %v7191
        %v7270 = vadd.f32 %v6744, %v7194
        %v7271 = vadd.f32 %v6749, %v7199
        %v7272 = vadd.f32 %v6752, %v7202
        %v7273 = vadd.f32 %v6757, %v7207
        %v7274 = vadd.f32 %v6760, %v7210
        %v7275 = vadd.f32 %v6765, %v7215
        %v7276 = vadd.f32 %v6768, %v7218
        %v7277 = vadd.f32 %v6773, %v7223
        %v7278 = vadd.f32 %v6776, %v7226
        %v7279 = vadd.f32 %v6781, %v7231
        %v7280 = vadd.f32 %v6784, %v7234
        %v7281 = vadd.f32 %v6789, %v7239
        %v7282 = vadd.f32 %v6792, %v7242
        %v7283 = vadd.f32 %v6797, %v7247
        %v7284 = vadd.f32 %v6800, %v7250
        %v7285 = vld [vmem:[%s5142] sm:$0xf]
        %v7286 = vld [vmem:[%s5142 + $0x4] sm:$0xf]
        %v7287 = vld [vmem:[%s5142 + $0xc] sm:$0xf]
        %v7288 = vld [vmem:[%s5142 + $0x10] sm:$0xf]
        %v7289 = vld [vmem:[%s5142 + $0x18] sm:$0xf]
        %v7290 = vld [vmem:[%s5142 + $0x1c] sm:$0xf]
        %v7291 = vld [vmem:[%s5142 + $0x24] sm:$0xf]
        %v7292 = vld [vmem:[%s5142 + $0x28] sm:$0xf]
        %v7293 = vld [vmem:[%s5142 + $0x30] sm:$0xf]
        %v7294 = vld [vmem:[%s5142 + $0x34] sm:$0xf]
        %v7295 = vld [vmem:[%s5142 + $0x3c] sm:$0xf]
        %v7296 = vld [vmem:[%s5142 + $0x40] sm:$0xf]
        %v7297 = vld [vmem:[%s5142 + $0x48] sm:$0xf]
        %v7298 = vld [vmem:[%s5142 + $0x4c] sm:$0xf]
        %v7299 = vld [vmem:[%s5142 + $0x54] sm:$0xf]
        %v7300 = vld [vmem:[%s5142 + $0x58] sm:$0xf]
        %v7301 = vld [vmem:[%s5142 + $0x60] sm:$0xf]
        %v7302 = vld [vmem:[%s5142 + $0x64] sm:$0xf]
        %v7303 = vld [vmem:[%s5142 + $0x6c] sm:$0xf]
        %v7304 = vld [vmem:[%s5142 + $0x70] sm:$0xf]
        %v7305 = vld [vmem:[%s5142 + $0x78] sm:$0xf]
        %v7306 = vld [vmem:[%s5142 + $0x7c] sm:$0xf]
        %v7307 = vld [vmem:[%s5142 + $0x84] sm:$0xf]
        %v7308 = vld [vmem:[%s5142 + $0x88] sm:$0xf]
        %v7309 = vld [vmem:[%s5142 + $0x90] sm:$0xf]
        %v7310 = vld [vmem:[%s5142 + $0x94] sm:$0xf]
        %v7311 = vld [vmem:[%s5142 + $0x9c] sm:$0xf]
        %v7312 = vld [vmem:[%s5142 + $0xa0] sm:$0xf]
        %v7313 = vld [vmem:[%s5142 + $0xa8] sm:$0xf]
        %v7314 = vld [vmem:[%s5142 + $0xac] sm:$0xf]
        %v7315 = vld [vmem:[%s5142 + $0xb4] sm:$0xf]
        %v7316 = vld [vmem:[%s5142 + $0xb8] sm:$0xf]
        %s7317 = scalar_lea.vmem [#allocation3], 192
        %v7318 = vld [vmem:[%s7317] sm:$0xf]
        %v7319 = vld [vmem:[%s7317 + $0x4] sm:$0xf]
        %v7320 = vld [vmem:[%s7317 + $0x8] sm:$0xf]
        %v7321 = vld [vmem:[%s7317 + $0xc] sm:$0xf]
        %v7322 = vld [vmem:[%s7317 + $0x10] sm:$0xf]
        %v7323 = vld [vmem:[%s7317 + $0x14] sm:$0xf]
        %v7324 = vld [vmem:[%s7317 + $0x18] sm:$0xf]
        %v7325 = vld [vmem:[%s7317 + $0x1c] sm:$0xf]
        %v7326 = vld [vmem:[%s7317 + $0x20] sm:$0xf]
        %v7327 = vld [vmem:[%s7317 + $0x24] sm:$0xf]
        %v7328 = vld [vmem:[%s7317 + $0x28] sm:$0xf]
        %v7329 = vld [vmem:[%s7317 + $0x2c] sm:$0xf]
        %v7330 = vld [vmem:[%s7317 + $0x30] sm:$0xf]
        %v7331 = vld [vmem:[%s7317 + $0x34] sm:$0xf]
        %v7332 = vld [vmem:[%s7317 + $0x38] sm:$0xf]
        %v7333 = vld [vmem:[%s7317 + $0x3c] sm:$0xf]
        %v7366 = vunpack.c.l.b16 %v7285
        %v7367 = vunpack.c.l.b16 %v7286
        %v7368 = vunpack.c.l.b16 %v7287
        %v7369 = vunpack.c.l.b16 %v7288
        %v7370 = vunpack.c.l.b16 %v7289
        %v7371 = vunpack.c.l.b16 %v7290
        %v7372 = vunpack.c.l.b16 %v7291
        %v7373 = vunpack.c.l.b16 %v7292
        %v7374 = vunpack.c.l.b16 %v7293
        %v7375 = vunpack.c.l.b16 %v7294
        %v7376 = vunpack.c.l.b16 %v7295
        %v7377 = vunpack.c.l.b16 %v7296
        %v7378 = vunpack.c.l.b16 %v7297
        %v7379 = vunpack.c.l.b16 %v7298
        %v7380 = vunpack.c.l.b16 %v7299
        %v7381 = vunpack.c.l.b16 %v7300
        %v7382 = vunpack.c.l.b16 %v7301
        %v7383 = vunpack.c.l.b16 %v7302
        %v7384 = vunpack.c.l.b16 %v7303
        %v7385 = vunpack.c.l.b16 %v7304
        %v7386 = vunpack.c.l.b16 %v7305
        %v7387 = vunpack.c.l.b16 %v7306
        %v7388 = vunpack.c.l.b16 %v7307
        %v7389 = vunpack.c.l.b16 %v7308
        %v7390 = vunpack.c.l.b16 %v7309
        %v7391 = vunpack.c.l.b16 %v7310
        %v7392 = vunpack.c.l.b16 %v7311
        %v7393 = vunpack.c.l.b16 %v7312
        %v7394 = vunpack.c.l.b16 %v7313
        %v7395 = vunpack.c.l.b16 %v7314
        %v7396 = vunpack.c.l.b16 %v7315
        %v7397 = vunpack.c.l.b16 %v7316
        %v7398 = vpack.c.b16 %v7367, %v7366
        %v7399 = vpack.c.b16 %v7369, %v7368
        %v7400 = vpack.c.b16 %v7371, %v7370
        %v7401 = vpack.c.b16 %v7373, %v7372
        %v7402 = vpack.c.b16 %v7375, %v7374
        %v7403 = vpack.c.b16 %v7377, %v7376
        %v7404 = vpack.c.b16 %v7379, %v7378
        %v7405 = vpack.c.b16 %v7381, %v7380
        %v7406 = vpack.c.b16 %v7383, %v7382
        %v7407 = vpack.c.b16 %v7385, %v7384
        %v7408 = vpack.c.b16 %v7387, %v7386
        %v7409 = vpack.c.b16 %v7389, %v7388
        %v7410 = vpack.c.b16 %v7391, %v7390
        %v7411 = vpack.c.b16 %v7393, %v7392
        %v7412 = vpack.c.b16 %v7395, %v7394
        %v7413 = vpack.c.b16 %v7397, %v7396
        %v7446 = vunpack.c.l.b16 %v7318
        %v7447 = vunpack.c.l.b16 %v7319
        %v7448 = vunpack.c.l.b16 %v7320
        %v7449 = vunpack.c.l.b16 %v7321
        %v7450 = vunpack.c.l.b16 %v7322
        %v7451 = vunpack.c.l.b16 %v7323
        %v7452 = vunpack.c.l.b16 %v7324
        %v7453 = vunpack.c.l.b16 %v7325
        %v7454 = vunpack.c.l.b16 %v7326
        %v7455 = vunpack.c.l.b16 %v7327
        %v7456 = vunpack.c.l.b16 %v7328
        %v7457 = vunpack.c.l.b16 %v7329
        %v7458 = vunpack.c.l.b16 %v7330
        %v7459 = vunpack.c.l.b16 %v7331
        %v7460 = vunpack.c.l.b16 %v7332
        %v7461 = vunpack.c.l.b16 %v7333
        %v7462 = vpack.c.b16 %v7447, %v7446
        %v7463 = vpack.c.b16 %v7449, %v7448
        %v7464 = vpack.c.b16 %v7451, %v7450
        %v7465 = vpack.c.b16 %v7453, %v7452
        %v7466 = vpack.c.b16 %v7455, %v7454
        %v7467 = vpack.c.b16 %v7457, %v7456
        %v7468 = vpack.c.b16 %v7459, %v7458
        %v7469 = vpack.c.b16 %v7461, %v7460
        %7478 = vmatprep.subr.bf16.mxu0 0
        %7479 = vmatpush1.bf16.msra.mxu0 %v7469
        %7480 = vmatprep.subr.bf16.mxu0 0
        %7481 = vmatpush1.bf16.msra.mxu0 %v7468
        %7482 = vmatprep.subr.bf16.mxu0 0
        %7483 = vmatpush1.bf16.msra.mxu0 %v7467
        %7484 = vmatprep.subr.bf16.mxu0 0
        %7485 = vmatpush1.bf16.msra.mxu0 %v7466
        %7486 = vmatprep.subr.bf16.mxu0 0
        %7487 = vmatpush1.bf16.msra.mxu0 %v7465
        %7488 = vmatprep.subr.bf16.mxu0 0
        %7489 = vmatpush1.bf16.msra.mxu0 %v7464
        %7490 = vmatprep.subr.bf16.mxu0 0
        %7491 = vmatpush1.bf16.msra.mxu0 %v7463
        %7492 = vmatprep.subr.bf16.mxu0 0
        %7493 = vmatpush1.bf16.msra.mxu0 %v7462
        %7494 = vmatprep.subr.bf16.mxu0 0
        %7495 = vmatpush2.bf16.msra.mxu0 0
        %7496 = vmatprep.subr.bf16.mxu0 0
        %7497 = vmatpush2.bf16.msra.mxu0 0
        %7498 = vmatprep.subr.bf16.mxu0 0
        %7499 = vmatpush2.bf16.msra.mxu0 0
        %7500 = vmatprep.subr.bf16.mxu0 0
        %7501 = vmatpush2.bf16.msra.mxu0 0
        %7502 = vmatprep.subr.bf16.mxu0 0
        %7503 = vmatpush2.bf16.msra.mxu0 0
        %7504 = vmatprep.subr.bf16.mxu0 0
        %7505 = vmatpush2.bf16.msra.mxu0 0
        %7506 = vmatprep.subr.bf16.mxu0 0
        %7507 = vmatpush2.bf16.msra.mxu0 0
        %7508 = vmatprep.subr.bf16.mxu0 0
        %7509 = vmatpush2.bf16.msra.mxu0 0
        %7510 = vmatprep.mubr.bf16.mxu0 0
        %7511 = vmatmul.mubr.bf16.gmra.mxu0 %v7398
        %v7512 = vpop.f32.mrf.mxu0
        %v7513 = vadd.f32 0.0, %v7512
        %v7514 = vpop.f32.mrf.mxu0
        %v7515 = vpop.f32.mrf.mxu0
        %v7516 = vadd.f32 0.0, %v7515
        %v7517 = vpop.f32.mrf.mxu0
        %7518 = vmatprep.mubr.bf16.mxu0 0
        %7519 = vmatmul.mubr.bf16.gmra.mxu0 %v7399
        %v7520 = vpop.f32.mrf.mxu0
        %v7521 = vadd.f32 0.0, %v7520
        %v7522 = vpop.f32.mrf.mxu0
        %v7523 = vpop.f32.mrf.mxu0
        %v7524 = vadd.f32 0.0, %v7523
        %v7525 = vpop.f32.mrf.mxu0
        %7526 = vmatprep.mubr.bf16.mxu0 0
        %7527 = vmatmul.mubr.bf16.gmra.mxu0 %v7400
        %v7528 = vpop.f32.mrf.mxu0
        %v7529 = vadd.f32 0.0, %v7528
        %v7530 = vpop.f32.mrf.mxu0
        %v7531 = vpop.f32.mrf.mxu0
        %v7532 = vadd.f32 0.0, %v7531
        %v7533 = vpop.f32.mrf.mxu0
        %7534 = vmatprep.mubr.bf16.mxu0 0
        %7535 = vmatmul.mubr.bf16.gmra.mxu0 %v7401
        %v7536 = vpop.f32.mrf.mxu0
        %v7537 = vadd.f32 0.0, %v7536
        %v7538 = vpop.f32.mrf.mxu0
        %v7539 = vpop.f32.mrf.mxu0
        %v7540 = vadd.f32 0.0, %v7539
        %v7541 = vpop.f32.mrf.mxu0
        %7542 = vmatprep.mubr.bf16.mxu0 0
        %7543 = vmatmul.mubr.bf16.gmra.mxu0 %v7402
        %v7544 = vpop.f32.mrf.mxu0
        %v7545 = vadd.f32 0.0, %v7544
        %v7546 = vpop.f32.mrf.mxu0
        %v7547 = vpop.f32.mrf.mxu0
        %v7548 = vadd.f32 0.0, %v7547
        %v7549 = vpop.f32.mrf.mxu0
        %7550 = vmatprep.mubr.bf16.mxu0 0
        %7551 = vmatmul.mubr.bf16.gmra.mxu0 %v7403
        %v7552 = vpop.f32.mrf.mxu0
        %v7553 = vadd.f32 0.0, %v7552
        %v7554 = vpop.f32.mrf.mxu0
        %v7555 = vpop.f32.mrf.mxu0
        %v7556 = vadd.f32 0.0, %v7555
        %v7557 = vpop.f32.mrf.mxu0
        %7558 = vmatprep.mubr.bf16.mxu0 0
        %7559 = vmatmul.mubr.bf16.gmra.mxu0 %v7404
        %v7560 = vpop.f32.mrf.mxu0
        %v7561 = vadd.f32 0.0, %v7560
        %v7562 = vpop.f32.mrf.mxu0
        %v7563 = vpop.f32.mrf.mxu0
        %v7564 = vadd.f32 0.0, %v7563
        %v7565 = vpop.f32.mrf.mxu0
        %7566 = vmatprep.mubr.bf16.mxu0 0
        %7567 = vmatmul.mubr.bf16.gmra.mxu0 %v7405
        %v7568 = vpop.f32.mrf.mxu0
        %v7569 = vadd.f32 0.0, %v7568
        %v7570 = vpop.f32.mrf.mxu0
        %v7571 = vpop.f32.mrf.mxu0
        %v7572 = vadd.f32 0.0, %v7571
        %v7573 = vpop.f32.mrf.mxu0
        %7574 = vmatprep.mubr.bf16.mxu0 0
        %7575 = vmatmul.mubr.bf16.gmra.mxu0 %v7406
        %v7576 = vpop.f32.mrf.mxu0
        %v7577 = vadd.f32 0.0, %v7576
        %v7578 = vpop.f32.mrf.mxu0
        %v7579 = vpop.f32.mrf.mxu0
        %v7580 = vadd.f32 0.0, %v7579
        %v7581 = vpop.f32.mrf.mxu0
        %7582 = vmatprep.mubr.bf16.mxu0 0
        %7583 = vmatmul.mubr.bf16.gmra.mxu0 %v7407
        %v7584 = vpop.f32.mrf.mxu0
        %v7585 = vadd.f32 0.0, %v7584
        %v7586 = vpop.f32.mrf.mxu0
        %v7587 = vpop.f32.mrf.mxu0
        %v7588 = vadd.f32 0.0, %v7587
        %v7589 = vpop.f32.mrf.mxu0
        %7590 = vmatprep.mubr.bf16.mxu0 0
        %7591 = vmatmul.mubr.bf16.gmra.mxu0 %v7408
        %v7592 = vpop.f32.mrf.mxu0
        %v7593 = vadd.f32 0.0, %v7592
        %v7594 = vpop.f32.mrf.mxu0
        %v7595 = vpop.f32.mrf.mxu0
        %v7596 = vadd.f32 0.0, %v7595
        %v7597 = vpop.f32.mrf.mxu0
        %7598 = vmatprep.mubr.bf16.mxu0 0
        %7599 = vmatmul.mubr.bf16.gmra.mxu0 %v7409
        %v7600 = vpop.f32.mrf.mxu0
        %v7601 = vadd.f32 0.0, %v7600
        %v7602 = vpop.f32.mrf.mxu0
        %v7603 = vpop.f32.mrf.mxu0
        %v7604 = vadd.f32 0.0, %v7603
        %v7605 = vpop.f32.mrf.mxu0
        %7606 = vmatprep.mubr.bf16.mxu0 0
        %7607 = vmatmul.mubr.bf16.gmra.mxu0 %v7410
        %v7608 = vpop.f32.mrf.mxu0
        %v7609 = vadd.f32 0.0, %v7608
        %v7610 = vpop.f32.mrf.mxu0
        %v7611 = vpop.f32.mrf.mxu0
        %v7612 = vadd.f32 0.0, %v7611
        %v7613 = vpop.f32.mrf.mxu0
        %7614 = vmatprep.mubr.bf16.mxu0 0
        %7615 = vmatmul.mubr.bf16.gmra.mxu0 %v7411
        %v7616 = vpop.f32.mrf.mxu0
        %v7617 = vadd.f32 0.0, %v7616
        %v7618 = vpop.f32.mrf.mxu0
        %v7619 = vpop.f32.mrf.mxu0
        %v7620 = vadd.f32 0.0, %v7619
        %v7621 = vpop.f32.mrf.mxu0
        %7622 = vmatprep.mubr.bf16.mxu0 0
        %7623 = vmatmul.mubr.bf16.gmra.mxu0 %v7412
        %v7624 = vpop.f32.mrf.mxu0
        %v7625 = vadd.f32 0.0, %v7624
        %v7626 = vpop.f32.mrf.mxu0
        %v7627 = vpop.f32.mrf.mxu0
        %v7628 = vadd.f32 0.0, %v7627
        %v7629 = vpop.f32.mrf.mxu0
        %7630 = vmatprep.mubr.bf16.mxu0 0
        %7631 = vmatmul.mubr.bf16.gmra.mxu0 %v7413
        %v7632 = vpop.f32.mrf.mxu0
        %v7633 = vadd.f32 0.0, %v7632
        %v7634 = vpop.f32.mrf.mxu0
        %v7635 = vpop.f32.mrf.mxu0
        %v7636 = vadd.f32 0.0, %v7635
        %v7637 = vpop.f32.mrf.mxu0
        %7638 = vdwg.mxu0
        %v7639 = vadd.f32 %v7253, %v7513
        %v7640 = vadd.f32 %v7254, %v7516
        %v7641 = vadd.f32 %v7255, %v7521
        %v7642 = vadd.f32 %v7256, %v7524
        %v7643 = vadd.f32 %v7257, %v7529
        %v7644 = vadd.f32 %v7258, %v7532
        %v7645 = vadd.f32 %v7259, %v7537
        %v7646 = vadd.f32 %v7260, %v7540
        %v7647 = vadd.f32 %v7261, %v7545
        %v7648 = vadd.f32 %v7262, %v7548
        %v7649 = vadd.f32 %v7263, %v7553
        %v7650 = vadd.f32 %v7264, %v7556
        %v7651 = vadd.f32 %v7265, %v7561
        %v7652 = vadd.f32 %v7266, %v7564
        %v7653 = vadd.f32 %v7267, %v7569
        %v7654 = vadd.f32 %v7268, %v7572
        %v7655 = vadd.f32 %v7269, %v7577
        %v7656 = vadd.f32 %v7270, %v7580
        %v7657 = vadd.f32 %v7271, %v7585
        %v7658 = vadd.f32 %v7272, %v7588
        %v7659 = vadd.f32 %v7273, %v7593
        %v7660 = vadd.f32 %v7274, %v7596
        %v7661 = vadd.f32 %v7275, %v7601
        %v7662 = vadd.f32 %v7276, %v7604
        %v7663 = vadd.f32 %v7277, %v7609
        %v7664 = vadd.f32 %v7278, %v7612
        %v7665 = vadd.f32 %v7279, %v7617
        %v7666 = vadd.f32 %v7280, %v7620
        %v7667 = vadd.f32 %v7281, %v7625
        %v7668 = vadd.f32 %v7282, %v7628
        %v7669 = vadd.f32 %v7283, %v7633
        %v7670 = vadd.f32 %v7284, %v7636
        %v7671 = vld [vmem:[%s5142] sm:$0xf]
        %v7672 = vld [vmem:[%s5142 + $0x4] sm:$0xf]
        %v7673 = vld [vmem:[%s5142 + $0x8] sm:$0x1]
        %v7674 = vld [vmem:[%s5142 + $0xc] sm:$0xf]
        %v7675 = vld [vmem:[%s5142 + $0x10] sm:$0xf]
        %v7676 = vld [vmem:[%s5142 + $0x14] sm:$0x1]
        %v7677 = vld [vmem:[%s5142 + $0x18] sm:$0xf]
        %v7678 = vld [vmem:[%s5142 + $0x1c] sm:$0xf]
        %v7679 = vld [vmem:[%s5142 + $0x20] sm:$0x1]
        %v7680 = vld [vmem:[%s5142 + $0x24] sm:$0xf]
        %v7681 = vld [vmem:[%s5142 + $0x28] sm:$0xf]
        %v7682 = vld [vmem:[%s5142 + $0x2c] sm:$0x1]
        %v7683 = vld [vmem:[%s5142 + $0x30] sm:$0xf]
        %v7684 = vld [vmem:[%s5142 + $0x34] sm:$0xf]
        %v7685 = vld [vmem:[%s5142 + $0x38] sm:$0x1]
        %v7686 = vld [vmem:[%s5142 + $0x3c] sm:$0xf]
        %v7687 = vld [vmem:[%s5142 + $0x40] sm:$0xf]
        %v7688 = vld [vmem:[%s5142 + $0x44] sm:$0x1]
        %v7689 = vld [vmem:[%s5142 + $0x48] sm:$0xf]
        %v7690 = vld [vmem:[%s5142 + $0x4c] sm:$0xf]
        %v7691 = vld [vmem:[%s5142 + $0x50] sm:$0x1]
        %v7692 = vld [vmem:[%s5142 + $0x54] sm:$0xf]
        %v7693 = vld [vmem:[%s5142 + $0x58] sm:$0xf]
        %v7694 = vld [vmem:[%s5142 + $0x5c] sm:$0x1]
        %v7695 = vld [vmem:[%s5142 + $0x60] sm:$0xf]
        %v7696 = vld [vmem:[%s5142 + $0x64] sm:$0xf]
        %v7697 = vld [vmem:[%s5142 + $0x68] sm:$0x1]
        %v7698 = vld [vmem:[%s5142 + $0x6c] sm:$0xf]
        %v7699 = vld [vmem:[%s5142 + $0x70] sm:$0xf]
        %v7700 = vld [vmem:[%s5142 + $0x74] sm:$0x1]
        %v7701 = vld [vmem:[%s5142 + $0x78] sm:$0xf]
        %v7702 = vld [vmem:[%s5142 + $0x7c] sm:$0xf]
        %v7703 = vld [vmem:[%s5142 + $0x80] sm:$0x1]
        %v7704 = vld [vmem:[%s5142 + $0x84] sm:$0xf]
        %v7705 = vld [vmem:[%s5142 + $0x88] sm:$0xf]
        %v7706 = vld [vmem:[%s5142 + $0x8c] sm:$0x1]
        %v7707 = vld [vmem:[%s5142 + $0x90] sm:$0xf]
        %v7708 = vld [vmem:[%s5142 + $0x94] sm:$0xf]
        %v7709 = vld [vmem:[%s5142 + $0x98] sm:$0x1]
        %v7710 = vld [vmem:[%s5142 + $0x9c] sm:$0xf]
        %v7711 = vld [vmem:[%s5142 + $0xa0] sm:$0xf]
        %v7712 = vld [vmem:[%s5142 + $0xa4] sm:$0x1]
        %v7713 = vld [vmem:[%s5142 + $0xa8] sm:$0xf]
        %v7714 = vld [vmem:[%s5142 + $0xac] sm:$0xf]
        %v7715 = vld [vmem:[%s5142 + $0xb0] sm:$0x1]
        %v7716 = vld [vmem:[%s5142 + $0xb4] sm:$0xf]
        %v7717 = vld [vmem:[%s5142 + $0xb8] sm:$0xf]
        %v7718 = vld [vmem:[%s5142 + $0xbc] sm:$0x1]
        %v7720 = vshrl.u32 %v7671, 16
        %v7722 = vrot.slane %v7720, 4
        %v7723 = vshll.u32 %v7671, 16
        %v7725 = vrot.slane %v7723, 5
        %v7726 = vor.u32 %v7722, %v7725
        %v7727 = vrot.slane %v7726, 4
        %v7729 = vshll.u32 %v7672, 16
        %v7731 = vrot.slane %v7729, 5
        %v7732 = vsel %vm305, %v7727, %v7731
        %v7733 = vshrl.u32 %v7672, 16
        %v7735 = vrot.slane %v7733, 4
        %v7736 = vor.u32 %v7735, %v7731
        %v7737 = vrot.slane %v7736, 4
        %v7739 = vshll.u32 %v7673, 16
        %v7741 = vrot.slane %v7739, 5
        %v7742 = vsel %vm305, %v7737, %v7741
        %v7744 = vshrl.u32 %v7674, 16
        %v7746 = vrot.slane %v7744, 4
        %v7747 = vshll.u32 %v7674, 16
        %v7749 = vrot.slane %v7747, 5
        %v7750 = vor.u32 %v7746, %v7749
        %v7751 = vrot.slane %v7750, 4
        %v7753 = vshll.u32 %v7675, 16
        %v7755 = vrot.slane %v7753, 5
        %v7756 = vsel %vm305, %v7751, %v7755
        %v7757 = vshrl.u32 %v7675, 16
        %v7759 = vrot.slane %v7757, 4
        %v7760 = vor.u32 %v7759, %v7755
        %v7761 = vrot.slane %v7760, 4
        %v7763 = vshll.u32 %v7676, 16
        %v7765 = vrot.slane %v7763, 5
        %v7766 = vsel %vm305, %v7761, %v7765
        %v7768 = vshrl.u32 %v7677, 16
        %v7770 = vrot.slane %v7768, 4
        %v7771 = vshll.u32 %v7677, 16
        %v7773 = vrot.slane %v7771, 5
        %v7774 = vor.u32 %v7770, %v7773
        %v7775 = vrot.slane %v7774, 4
        %v7777 = vshll.u32 %v7678, 16
        %v7779 = vrot.slane %v7777, 5
        %v7780 = vsel %vm305, %v7775, %v7779
        %v7781 = vshrl.u32 %v7678, 16
        %v7783 = vrot.slane %v7781, 4
        %v7784 = vor.u32 %v7783, %v7779
        %v7785 = vrot.slane %v7784, 4
        %v7787 = vshll.u32 %v7679, 16
        %v7789 = vrot.slane %v7787, 5
        %v7790 = vsel %vm305, %v7785, %v7789
        %v7792 = vshrl.u32 %v7680, 16
        %v7794 = vrot.slane %v7792, 4
        %v7795 = vshll.u32 %v7680, 16
        %v7797 = vrot.slane %v7795, 5
        %v7798 = vor.u32 %v7794, %v7797
        %v7799 = vrot.slane %v7798, 4
        %v7801 = vshll.u32 %v7681, 16
        %v7803 = vrot.slane %v7801, 5
        %v7804 = vsel %vm305, %v7799, %v7803
        %v7805 = vshrl.u32 %v7681, 16
        %v7807 = vrot.slane %v7805, 4
        %v7808 = vor.u32 %v7807, %v7803
        %v7809 = vrot.slane %v7808, 4
        %v7811 = vshll.u32 %v7682, 16
        %v7813 = vrot.slane %v7811, 5
        %v7814 = vsel %vm305, %v7809, %v7813
        %v7816 = vshrl.u32 %v7683, 16
        %v7818 = vrot.slane %v7816, 4
        %v7819 = vshll.u32 %v7683, 16
        %v7821 = vrot.slane %v7819, 5
        %v7822 = vor.u32 %v7818, %v7821
        %v7823 = vrot.slane %v7822, 4
        %v7825 = vshll.u32 %v7684, 16
        %v7827 = vrot.slane %v7825, 5
        %v7828 = vsel %vm305, %v7823, %v7827
        %v7829 = vshrl.u32 %v7684, 16
        %v7831 = vrot.slane %v7829, 4
        %v7832 = vor.u32 %v7831, %v7827
        %v7833 = vrot.slane %v7832, 4
        %v7835 = vshll.u32 %v7685, 16
        %v7837 = vrot.slane %v7835, 5
        %v7838 = vsel %vm305, %v7833, %v7837
        %v7840 = vshrl.u32 %v7686, 16
        %v7842 = vrot.slane %v7840, 4
        %v7843 = vshll.u32 %v7686, 16
        %v7845 = vrot.slane %v7843, 5
        %v7846 = vor.u32 %v7842, %v7845
        %v7847 = vrot.slane %v7846, 4
        %v7849 = vshll.u32 %v7687, 16
        %v7851 = vrot.slane %v7849, 5
        %v7852 = vsel %vm305, %v7847, %v7851
        %v7853 = vshrl.u32 %v7687, 16
        %v7855 = vrot.slane %v7853, 4
        %v7856 = vor.u32 %v7855, %v7851
        %v7857 = vrot.slane %v7856, 4
        %v7859 = vshll.u32 %v7688, 16
        %v7861 = vrot.slane %v7859, 5
        %v7862 = vsel %vm305, %v7857, %v7861
        %v7864 = vshrl.u32 %v7689, 16
        %v7866 = vrot.slane %v7864, 4
        %v7867 = vshll.u32 %v7689, 16
        %v7869 = vrot.slane %v7867, 5
        %v7870 = vor.u32 %v7866, %v7869
        %v7871 = vrot.slane %v7870, 4
        %v7873 = vshll.u32 %v7690, 16
        %v7875 = vrot.slane %v7873, 5
        %v7876 = vsel %vm305, %v7871, %v7875
        %v7877 = vshrl.u32 %v7690, 16
        %v7879 = vrot.slane %v7877, 4
        %v7880 = vor.u32 %v7879, %v7875
        %v7881 = vrot.slane %v7880, 4
        %v7883 = vshll.u32 %v7691, 16
        %v7885 = vrot.slane %v7883, 5
        %v7886 = vsel %vm305, %v7881, %v7885
        %v7888 = vshrl.u32 %v7692, 16
        %v7890 = vrot.slane %v7888, 4
        %v7891 = vshll.u32 %v7692, 16
        %v7893 = vrot.slane %v7891, 5
        %v7894 = vor.u32 %v7890, %v7893
        %v7895 = vrot.slane %v7894, 4
        %v7897 = vshll.u32 %v7693, 16
        %v7899 = vrot.slane %v7897, 5
        %v7900 = vsel %vm305, %v7895, %v7899
        %v7901 = vshrl.u32 %v7693, 16
        %v7903 = vrot.slane %v7901, 4
        %v7904 = vor.u32 %v7903, %v7899
        %v7905 = vrot.slane %v7904, 4
        %v7907 = vshll.u32 %v7694, 16
        %v7909 = vrot.slane %v7907, 5
        %v7910 = vsel %vm305, %v7905, %v7909
        %v7912 = vshrl.u32 %v7695, 16
        %v7914 = vrot.slane %v7912, 4
        %v7915 = vshll.u32 %v7695, 16
        %v7917 = vrot.slane %v7915, 5
        %v7918 = vor.u32 %v7914, %v7917
        %v7919 = vrot.slane %v7918, 4
        %v7921 = vshll.u32 %v7696, 16
        %v7923 = vrot.slane %v7921, 5
        %v7924 = vsel %vm305, %v7919, %v7923
        %v7925 = vshrl.u32 %v7696, 16
        %v7927 = vrot.slane %v7925, 4
        %v7928 = vor.u32 %v7927, %v7923
        %v7929 = vrot.slane %v7928, 4
        %v7931 = vshll.u32 %v7697, 16
        %v7933 = vrot.slane %v7931, 5
        %v7934 = vsel %vm305, %v7929, %v7933
        %v7936 = vshrl.u32 %v7698, 16
        %v7938 = vrot.slane %v7936, 4
        %v7939 = vshll.u32 %v7698, 16
        %v7941 = vrot.slane %v7939, 5
        %v7942 = vor.u32 %v7938, %v7941
        %v7943 = vrot.slane %v7942, 4
        %v7945 = vshll.u32 %v7699, 16
        %v7947 = vrot.slane %v7945, 5
        %v7948 = vsel %vm305, %v7943, %v7947
        %v7949 = vshrl.u32 %v7699, 16
        %v7951 = vrot.slane %v7949, 4
        %v7952 = vor.u32 %v7951, %v7947
        %v7953 = vrot.slane %v7952, 4
        %v7955 = vshll.u32 %v7700, 16
        %v7957 = vrot.slane %v7955, 5
        %v7958 = vsel %vm305, %v7953, %v7957
        %v7960 = vshrl.u32 %v7701, 16
        %v7962 = vrot.slane %v7960, 4
        %v7963 = vshll.u32 %v7701, 16
        %v7965 = vrot.slane %v7963, 5
        %v7966 = vor.u32 %v7962, %v7965
        %v7967 = vrot.slane %v7966, 4
        %v7969 = vshll.u32 %v7702, 16
        %v7971 = vrot.slane %v7969, 5
        %v7972 = vsel %vm305, %v7967, %v7971
        %v7973 = vshrl.u32 %v7702, 16
        %v7975 = vrot.slane %v7973, 4
        %v7976 = vor.u32 %v7975, %v7971
        %v7977 = vrot.slane %v7976, 4
        %v7979 = vshll.u32 %v7703, 16
        %v7981 = vrot.slane %v7979, 5
        %v7982 = vsel %vm305, %v7977, %v7981
        %v7984 = vshrl.u32 %v7704, 16
        %v7986 = vrot.slane %v7984, 4
        %v7987 = vshll.u32 %v7704, 16
        %v7989 = vrot.slane %v7987, 5
        %v7990 = vor.u32 %v7986, %v7989
        %v7991 = vrot.slane %v7990, 4
        %v7993 = vshll.u32 %v7705, 16
        %v7995 = vrot.slane %v7993, 5
        %v7996 = vsel %vm305, %v7991, %v7995
        %v7997 = vshrl.u32 %v7705, 16
        %v7999 = vrot.slane %v7997, 4
        %v8000 = vor.u32 %v7999, %v7995
        %v8001 = vrot.slane %v8000, 4
        %v8003 = vshll.u32 %v7706, 16
        %v8005 = vrot.slane %v8003, 5
        %v8006 = vsel %vm305, %v8001, %v8005
        %v8008 = vshrl.u32 %v7707, 16
        %v8010 = vrot.slane %v8008, 4
        %v8011 = vshll.u32 %v7707, 16
        %v8013 = vrot.slane %v8011, 5
        %v8014 = vor.u32 %v8010, %v8013
        %v8015 = vrot.slane %v8014, 4
        %v8017 = vshll.u32 %v7708, 16
        %v8019 = vrot.slane %v8017, 5
        %v8020 = vsel %vm305, %v8015, %v8019
        %v8021 = vshrl.u32 %v7708, 16
        %v8023 = vrot.slane %v8021, 4
        %v8024 = vor.u32 %v8023, %v8019
        %v8025 = vrot.slane %v8024, 4
        %v8027 = vshll.u32 %v7709, 16
        %v8029 = vrot.slane %v8027, 5
        %v8030 = vsel %vm305, %v8025, %v8029
        %v8032 = vshrl.u32 %v7710, 16
        %v8034 = vrot.slane %v8032, 4
        %v8035 = vshll.u32 %v7710, 16
        %v8037 = vrot.slane %v8035, 5
        %v8038 = vor.u32 %v8034, %v8037
        %v8039 = vrot.slane %v8038, 4
        %v8041 = vshll.u32 %v7711, 16
        %v8043 = vrot.slane %v8041, 5
        %v8044 = vsel %vm305, %v8039, %v8043
        %v8045 = vshrl.u32 %v7711, 16
        %v8047 = vrot.slane %v8045, 4
        %v8048 = vor.u32 %v8047, %v8043
        %v8049 = vrot.slane %v8048, 4
        %v8051 = vshll.u32 %v7712, 16
        %v8053 = vrot.slane %v8051, 5
        %v8054 = vsel %vm305, %v8049, %v8053
        %v8056 = vshrl.u32 %v7713, 16
        %v8058 = vrot.slane %v8056, 4
        %v8059 = vshll.u32 %v7713, 16
        %v8061 = vrot.slane %v8059, 5
        %v8062 = vor.u32 %v8058, %v8061
        %v8063 = vrot.slane %v8062, 4
        %v8065 = vshll.u32 %v7714, 16
        %v8067 = vrot.slane %v8065, 5
        %v8068 = vsel %vm305, %v8063, %v8067
        %v8069 = vshrl.u32 %v7714, 16
        %v8071 = vrot.slane %v8069, 4
        %v8072 = vor.u32 %v8071, %v8067
        %v8073 = vrot.slane %v8072, 4
        %v8075 = vshll.u32 %v7715, 16
        %v8077 = vrot.slane %v8075, 5
        %v8078 = vsel %vm305, %v8073, %v8077
        %v8080 = vshrl.u32 %v7716, 16
        %v8082 = vrot.slane %v8080, 4
        %v8083 = vshll.u32 %v7716, 16
        %v8085 = vrot.slane %v8083, 5
        %v8086 = vor.u32 %v8082, %v8085
        %v8087 = vrot.slane %v8086, 4
        %v8089 = vshll.u32 %v7717, 16
        %v8091 = vrot.slane %v8089, 5
        %v8092 = vsel %vm305, %v8087, %v8091
        %v8093 = vshrl.u32 %v7717, 16
        %v8095 = vrot.slane %v8093, 4
        %v8096 = vor.u32 %v8095, %v8091
        %v8097 = vrot.slane %v8096, 4
        %v8099 = vshll.u32 %v7718, 16
        %v8101 = vrot.slane %v8099, 5
        %v8102 = vsel %vm305, %v8097, %v8101
        %s8103 = scalar_lea.vmem [#allocation3], 256
        %v8104 = vld [vmem:[%s8103] sm:$0xf]
        %v8105 = vld [vmem:[%s8103 + $0x4] sm:$0xf]
        %v8106 = vld [vmem:[%s8103 + $0x8] sm:$0xf]
        %v8107 = vld [vmem:[%s8103 + $0xc] sm:$0xf]
        %v8108 = vld [vmem:[%s8103 + $0x10] sm:$0xf]
        %v8109 = vld [vmem:[%s8103 + $0x14] sm:$0xf]
        %v8110 = vld [vmem:[%s8103 + $0x18] sm:$0xf]
        %v8111 = vld [vmem:[%s8103 + $0x1c] sm:$0xf]
        %v8112 = vld [vmem:[%s8103 + $0x20] sm:$0xf]
        %v8113 = vld [vmem:[%s8103 + $0x24] sm:$0xf]
        %v8114 = vld [vmem:[%s8103 + $0x28] sm:$0xf]
        %v8115 = vld [vmem:[%s8103 + $0x2c] sm:$0xf]
        %v8116 = vld [vmem:[%s8103 + $0x30] sm:$0xf]
        %v8117 = vld [vmem:[%s8103 + $0x34] sm:$0xf]
        %v8118 = vld [vmem:[%s8103 + $0x38] sm:$0xf]
        %v8119 = vld [vmem:[%s8103 + $0x3c] sm:$0xf]
        %v8120 = vunpack.c.l.b16 %v7732
        %v8121 = vunpack.c.l.b16 %v7742
        %v8122 = vunpack.c.l.b16 %v7756
        %v8123 = vunpack.c.l.b16 %v7766
        %v8124 = vunpack.c.l.b16 %v7780
        %v8125 = vunpack.c.l.b16 %v7790
        %v8126 = vunpack.c.l.b16 %v7804
        %v8127 = vunpack.c.l.b16 %v7814
        %v8128 = vunpack.c.l.b16 %v7828
        %v8129 = vunpack.c.l.b16 %v7838
        %v8130 = vunpack.c.l.b16 %v7852
        %v8131 = vunpack.c.l.b16 %v7862
        %v8132 = vunpack.c.l.b16 %v7876
        %v8133 = vunpack.c.l.b16 %v7886
        %v8134 = vunpack.c.l.b16 %v7900
        %v8135 = vunpack.c.l.b16 %v7910
        %v8136 = vunpack.c.l.b16 %v7924
        %v8137 = vunpack.c.l.b16 %v7934
        %v8138 = vunpack.c.l.b16 %v7948
        %v8139 = vunpack.c.l.b16 %v7958
        %v8140 = vunpack.c.l.b16 %v7972
        %v8141 = vunpack.c.l.b16 %v7982
        %v8142 = vunpack.c.l.b16 %v7996
        %v8143 = vunpack.c.l.b16 %v8006
        %v8144 = vunpack.c.l.b16 %v8020
        %v8145 = vunpack.c.l.b16 %v8030
        %v8146 = vunpack.c.l.b16 %v8044
        %v8147 = vunpack.c.l.b16 %v8054
        %v8148 = vunpack.c.l.b16 %v8068
        %v8149 = vunpack.c.l.b16 %v8078
        %v8150 = vunpack.c.l.b16 %v8092
        %v8151 = vunpack.c.l.b16 %v8102
        %v8152 = vpack.c.b16 %v8121, %v8120
        %v8153 = vpack.c.b16 %v8123, %v8122
        %v8154 = vpack.c.b16 %v8125, %v8124
        %v8155 = vpack.c.b16 %v8127, %v8126
        %v8156 = vpack.c.b16 %v8129, %v8128
        %v8157 = vpack.c.b16 %v8131, %v8130
        %v8158 = vpack.c.b16 %v8133, %v8132
        %v8159 = vpack.c.b16 %v8135, %v8134
        %v8160 = vpack.c.b16 %v8137, %v8136
        %v8161 = vpack.c.b16 %v8139, %v8138
        %v8162 = vpack.c.b16 %v8141, %v8140
        %v8163 = vpack.c.b16 %v8143, %v8142
        %v8164 = vpack.c.b16 %v8145, %v8144
        %v8165 = vpack.c.b16 %v8147, %v8146
        %v8166 = vpack.c.b16 %v8149, %v8148
        %v8167 = vpack.c.b16 %v8151, %v8150
        %v8200 = vunpack.c.l.b16 %v8104
        %v8201 = vunpack.c.l.b16 %v8105
        %v8202 = vunpack.c.l.b16 %v8106
        %v8203 = vunpack.c.l.b16 %v8107
        %v8204 = vunpack.c.l.b16 %v8108
        %v8205 = vunpack.c.l.b16 %v8109
        %v8206 = vunpack.c.l.b16 %v8110
        %v8207 = vunpack.c.l.b16 %v8111
        %v8208 = vunpack.c.l.b16 %v8112
        %v8209 = vunpack.c.l.b16 %v8113
        %v8210 = vunpack.c.l.b16 %v8114
        %v8211 = vunpack.c.l.b16 %v8115
        %v8212 = vunpack.c.l.b16 %v8116
        %v8213 = vunpack.c.l.b16 %v8117
        %v8214 = vunpack.c.l.b16 %v8118
        %v8215 = vunpack.c.l.b16 %v8119
        %v8216 = vpack.c.b16 %v8201, %v8200
        %v8217 = vpack.c.b16 %v8203, %v8202
        %v8218 = vpack.c.b16 %v8205, %v8204
        %v8219 = vpack.c.b16 %v8207, %v8206
        %v8220 = vpack.c.b16 %v8209, %v8208
        %v8221 = vpack.c.b16 %v8211, %v8210
        %v8222 = vpack.c.b16 %v8213, %v8212
        %v8223 = vpack.c.b16 %v8215, %v8214
        %8232 = vmatprep.subr.bf16.mxu0 0
        %8233 = vmatpush1.bf16.msra.mxu0 %v8223
        %8234 = vmatprep.subr.bf16.mxu0 0
        %8235 = vmatpush1.bf16.msra.mxu0 %v8222
        %8236 = vmatprep.subr.bf16.mxu0 0
        %8237 = vmatpush1.bf16.msra.mxu0 %v8221
        %8238 = vmatprep.subr.bf16.mxu0 0
        %8239 = vmatpush1.bf16.msra.mxu0 %v8220
        %8240 = vmatprep.subr.bf16.mxu0 0
        %8241 = vmatpush1.bf16.msra.mxu0 %v8219
        %8242 = vmatprep.subr.bf16.mxu0 0
        %8243 = vmatpush1.bf16.msra.mxu0 %v8218
        %8244 = vmatprep.subr.bf16.mxu0 0
        %8245 = vmatpush1.bf16.msra.mxu0 %v8217
        %8246 = vmatprep.subr.bf16.mxu0 0
        %8247 = vmatpush1.bf16.msra.mxu0 %v8216
        %8248 = vmatprep.subr.bf16.mxu0 0
        %8249 = vmatpush2.bf16.msra.mxu0 0
        %8250 = vmatprep.subr.bf16.mxu0 0
        %8251 = vmatpush2.bf16.msra.mxu0 0
        %8252 = vmatprep.subr.bf16.mxu0 0
        %8253 = vmatpush2.bf16.msra.mxu0 0
        %8254 = vmatprep.subr.bf16.mxu0 0
        %8255 = vmatpush2.bf16.msra.mxu0 0
        %8256 = vmatprep.subr.bf16.mxu0 0
        %8257 = vmatpush2.bf16.msra.mxu0 0
        %8258 = vmatprep.subr.bf16.mxu0 0
        %8259 = vmatpush2.bf16.msra.mxu0 0
        %8260 = vmatprep.subr.bf16.mxu0 0
        %8261 = vmatpush2.bf16.msra.mxu0 0
        %8262 = vmatprep.subr.bf16.mxu0 0
        %8263 = vmatpush2.bf16.msra.mxu0 0
        %8264 = vmatprep.mubr.bf16.mxu0 0
        %8265 = vmatmul.mubr.bf16.gmra.mxu0 %v8152
        %v8266 = vpop.f32.mrf.mxu0
        %v8267 = vadd.f32 0.0, %v8266
        %v8268 = vpop.f32.mrf.mxu0
        %v8269 = vpop.f32.mrf.mxu0
        %v8270 = vadd.f32 0.0, %v8269
        %v8271 = vpop.f32.mrf.mxu0
        %8272 = vmatprep.mubr.bf16.mxu0 0
        %8273 = vmatmul.mubr.bf16.gmra.mxu0 %v8153
        %v8274 = vpop.f32.mrf.mxu0
        %v8275 = vadd.f32 0.0, %v8274
        %v8276 = vpop.f32.mrf.mxu0
        %v8277 = vpop.f32.mrf.mxu0
        %v8278 = vadd.f32 0.0, %v8277
        %v8279 = vpop.f32.mrf.mxu0
        %8280 = vmatprep.mubr.bf16.mxu0 0
        %8281 = vmatmul.mubr.bf16.gmra.mxu0 %v8154
        %v8282 = vpop.f32.mrf.mxu0
        %v8283 = vadd.f32 0.0, %v8282
        %v8284 = vpop.f32.mrf.mxu0
        %v8285 = vpop.f32.mrf.mxu0
        %v8286 = vadd.f32 0.0, %v8285
        %v8287 = vpop.f32.mrf.mxu0
        %8288 = vmatprep.mubr.bf16.mxu0 0
        %8289 = vmatmul.mubr.bf16.gmra.mxu0 %v8155
        %v8290 = vpop.f32.mrf.mxu0
        %v8291 = vadd.f32 0.0, %v8290
        %v8292 = vpop.f32.mrf.mxu0
        %v8293 = vpop.f32.mrf.mxu0
        %v8294 = vadd.f32 0.0, %v8293
        %v8295 = vpop.f32.mrf.mxu0
        %8296 = vmatprep.mubr.bf16.mxu0 0
        %8297 = vmatmul.mubr.bf16.gmra.mxu0 %v8156
        %v8298 = vpop.f32.mrf.mxu0
        %v8299 = vadd.f32 0.0, %v8298
        %v8300 = vpop.f32.mrf.mxu0
        %v8301 = vpop.f32.mrf.mxu0
        %v8302 = vadd.f32 0.0, %v8301
        %v8303 = vpop.f32.mrf.mxu0
        %8304 = vmatprep.mubr.bf16.mxu0 0
        %8305 = vmatmul.mubr.bf16.gmra.mxu0 %v8157
        %v8306 = vpop.f32.mrf.mxu0
        %v8307 = vadd.f32 0.0, %v8306
        %v8308 = vpop.f32.mrf.mxu0
        %v8309 = vpop.f32.mrf.mxu0
        %v8310 = vadd.f32 0.0, %v8309
        %v8311 = vpop.f32.mrf.mxu0
        %8312 = vmatprep.mubr.bf16.mxu0 0
        %8313 = vmatmul.mubr.bf16.gmra.mxu0 %v8158
        %v8314 = vpop.f32.mrf.mxu0
        %v8315 = vadd.f32 0.0, %v8314
        %v8316 = vpop.f32.mrf.mxu0
        %v8317 = vpop.f32.mrf.mxu0
        %v8318 = vadd.f32 0.0, %v8317
        %v8319 = vpop.f32.mrf.mxu0
        %8320 = vmatprep.mubr.bf16.mxu0 0
        %8321 = vmatmul.mubr.bf16.gmra.mxu0 %v8159
        %v8322 = vpop.f32.mrf.mxu0
        %v8323 = vadd.f32 0.0, %v8322
        %v8324 = vpop.f32.mrf.mxu0
        %v8325 = vpop.f32.mrf.mxu0
        %v8326 = vadd.f32 0.0, %v8325
        %v8327 = vpop.f32.mrf.mxu0
        %8328 = vmatprep.mubr.bf16.mxu0 0
        %8329 = vmatmul.mubr.bf16.gmra.mxu0 %v8160
        %v8330 = vpop.f32.mrf.mxu0
        %v8331 = vadd.f32 0.0, %v8330
        %v8332 = vpop.f32.mrf.mxu0
        %v8333 = vpop.f32.mrf.mxu0
        %v8334 = vadd.f32 0.0, %v8333
        %v8335 = vpop.f32.mrf.mxu0
        %8336 = vmatprep.mubr.bf16.mxu0 0
        %8337 = vmatmul.mubr.bf16.gmra.mxu0 %v8161
        %v8338 = vpop.f32.mrf.mxu0
        %v8339 = vadd.f32 0.0, %v8338
        %v8340 = vpop.f32.mrf.mxu0
        %v8341 = vpop.f32.mrf.mxu0
        %v8342 = vadd.f32 0.0, %v8341
        %v8343 = vpop.f32.mrf.mxu0
        %8344 = vmatprep.mubr.bf16.mxu0 0
        %8345 = vmatmul.mubr.bf16.gmra.mxu0 %v8162
        %v8346 = vpop.f32.mrf.mxu0
        %v8347 = vadd.f32 0.0, %v8346
        %v8348 = vpop.f32.mrf.mxu0
        %v8349 = vpop.f32.mrf.mxu0
        %v8350 = vadd.f32 0.0, %v8349
        %v8351 = vpop.f32.mrf.mxu0
        %8352 = vmatprep.mubr.bf16.mxu0 0
        %8353 = vmatmul.mubr.bf16.gmra.mxu0 %v8163
        %v8354 = vpop.f32.mrf.mxu0
        %v8355 = vadd.f32 0.0, %v8354
        %v8356 = vpop.f32.mrf.mxu0
        %v8357 = vpop.f32.mrf.mxu0
        %v8358 = vadd.f32 0.0, %v8357
        %v8359 = vpop.f32.mrf.mxu0
        %8360 = vmatprep.mubr.bf16.mxu0 0
        %8361 = vmatmul.mubr.bf16.gmra.mxu0 %v8164
        %v8362 = vpop.f32.mrf.mxu0
        %v8363 = vadd.f32 0.0, %v8362
        %v8364 = vpop.f32.mrf.mxu0
        %v8365 = vpop.f32.mrf.mxu0
        %v8366 = vadd.f32 0.0, %v8365
        %v8367 = vpop.f32.mrf.mxu0
        %8368 = vmatprep.mubr.bf16.mxu0 0
        %8369 = vmatmul.mubr.bf16.gmra.mxu0 %v8165
        %v8370 = vpop.f32.mrf.mxu0
        %v8371 = vadd.f32 0.0, %v8370
        %v8372 = vpop.f32.mrf.mxu0
        %v8373 = vpop.f32.mrf.mxu0
        %v8374 = vadd.f32 0.0, %v8373
        %v8375 = vpop.f32.mrf.mxu0
        %8376 = vmatprep.mubr.bf16.mxu0 0
        %8377 = vmatmul.mubr.bf16.gmra.mxu0 %v8166
        %v8378 = vpop.f32.mrf.mxu0
        %v8379 = vadd.f32 0.0, %v8378
        %v8380 = vpop.f32.mrf.mxu0
        %v8381 = vpop.f32.mrf.mxu0
        %v8382 = vadd.f32 0.0, %v8381
        %v8383 = vpop.f32.mrf.mxu0
        %8384 = vmatprep.mubr.bf16.mxu0 0
        %8385 = vmatmul.mubr.bf16.gmra.mxu0 %v8167
        %v8386 = vpop.f32.mrf.mxu0
        %v8387 = vadd.f32 0.0, %v8386
        %v8388 = vpop.f32.mrf.mxu0
        %v8389 = vpop.f32.mrf.mxu0
        %v8390 = vadd.f32 0.0, %v8389
        %v8391 = vpop.f32.mrf.mxu0
        %8392 = vdwg.mxu0
        %v8393 = vadd.f32 %v7639, %v8267
        %v8394 = vadd.f32 %v7640, %v8270
        %v8395 = vadd.f32 %v7641, %v8275
        %v8396 = vadd.f32 %v7642, %v8278
        %v8397 = vadd.f32 %v7643, %v8283
        %v8398 = vadd.f32 %v7644, %v8286
        %v8399 = vadd.f32 %v7645, %v8291
        %v8400 = vadd.f32 %v7646, %v8294
        %v8401 = vadd.f32 %v7647, %v8299
        %v8402 = vadd.f32 %v7648, %v8302
        %v8403 = vadd.f32 %v7649, %v8307
        %v8404 = vadd.f32 %v7650, %v8310
        %v8405 = vadd.f32 %v7651, %v8315
        %v8406 = vadd.f32 %v7652, %v8318
        %v8407 = vadd.f32 %v7653, %v8323
        %v8408 = vadd.f32 %v7654, %v8326
        %v8409 = vadd.f32 %v7655, %v8331
        %v8410 = vadd.f32 %v7656, %v8334
        %v8411 = vadd.f32 %v7657, %v8339
        %v8412 = vadd.f32 %v7658, %v8342
        %v8413 = vadd.f32 %v7659, %v8347
        %v8414 = vadd.f32 %v7660, %v8350
        %v8415 = vadd.f32 %v7661, %v8355
        %v8416 = vadd.f32 %v7662, %v8358
        %v8417 = vadd.f32 %v7663, %v8363
        %v8418 = vadd.f32 %v7664, %v8366
        %v8419 = vadd.f32 %v7665, %v8371
        %v8420 = vadd.f32 %v7666, %v8374
        %v8421 = vadd.f32 %v7667, %v8379
        %v8422 = vadd.f32 %v7668, %v8382
        %v8423 = vadd.f32 %v7669, %v8387
        %v8424 = vadd.f32 %v7670, %v8390
        %v8425 = vld [vmem:[%s5142] sm:$0xe]
        %v8426 = vld [vmem:[%s5142 + $0xc] sm:$0xe]
        %v8427 = vld [vmem:[%s5142 + $0x18] sm:$0xe]
        %v8428 = vld [vmem:[%s5142 + $0x24] sm:$0xe]
        %v8429 = vld [vmem:[%s5142 + $0x30] sm:$0xe]
        %v8430 = vld [vmem:[%s5142 + $0x3c] sm:$0xe]
        %v8431 = vld [vmem:[%s5142 + $0x48] sm:$0xe]
        %v8432 = vld [vmem:[%s5142 + $0x54] sm:$0xe]
        %v8433 = vld [vmem:[%s5142 + $0x60] sm:$0xe]
        %v8434 = vld [vmem:[%s5142 + $0x6c] sm:$0xe]
        %v8435 = vld [vmem:[%s5142 + $0x78] sm:$0xe]
        %v8436 = vld [vmem:[%s5142 + $0x84] sm:$0xe]
        %v8437 = vld [vmem:[%s5142 + $0x90] sm:$0xe]
        %v8438 = vld [vmem:[%s5142 + $0x9c] sm:$0xe]
        %v8439 = vld [vmem:[%s5142 + $0xa8] sm:$0xe]
        %v8440 = vld [vmem:[%s5142 + $0xb4] sm:$0xe]
        %v8489 = vrot.slane %v8425, 5
        %v8490 = vrot.slane %v8489, 4
        %v8491 = vrot.slane %v7672, 5
        %v8492 = vsel %vm1335, %v8490, %v8491
        %v8493 = vrot.slane %v8491, 4
        %v8494 = vrot.slane %v7673, 5
        %v8495 = vsel %vm1335, %v8493, %v8494
        %v8496 = vrot.slane %v8426, 5
        %v8497 = vrot.slane %v8496, 4
        %v8498 = vrot.slane %v7675, 5
        %v8499 = vsel %vm1335, %v8497, %v8498
        %v8500 = vrot.slane %v8498, 4
        %v8501 = vrot.slane %v7676, 5
        %v8502 = vsel %vm1335, %v8500, %v8501
        %v8503 = vrot.slane %v8427, 5
        %v8504 = vrot.slane %v8503, 4
        %v8505 = vrot.slane %v7678, 5
        %v8506 = vsel %vm1335, %v8504, %v8505
        %v8507 = vrot.slane %v8505, 4
        %v8508 = vrot.slane %v7679, 5
        %v8509 = vsel %vm1335, %v8507, %v8508
        %v8510 = vrot.slane %v8428, 5
        %v8511 = vrot.slane %v8510, 4
        %v8512 = vrot.slane %v7681, 5
        %v8513 = vsel %vm1335, %v8511, %v8512
        %v8514 = vrot.slane %v8512, 4
        %v8515 = vrot.slane %v7682, 5
        %v8516 = vsel %vm1335, %v8514, %v8515
        %v8517 = vrot.slane %v8429, 5
        %v8518 = vrot.slane %v8517, 4
        %v8519 = vrot.slane %v7684, 5
        %v8520 = vsel %vm1335, %v8518, %v8519
        %v8521 = vrot.slane %v8519, 4
        %v8522 = vrot.slane %v7685, 5
        %v8523 = vsel %vm1335, %v8521, %v8522
        %v8524 = vrot.slane %v8430, 5
        %v8525 = vrot.slane %v8524, 4
        %v8526 = vrot.slane %v7687, 5
        %v8527 = vsel %vm1335, %v8525, %v8526
        %v8528 = vrot.slane %v8526, 4
        %v8529 = vrot.slane %v7688, 5
        %v8530 = vsel %vm1335, %v8528, %v8529
        %v8531 = vrot.slane %v8431, 5
        %v8532 = vrot.slane %v8531, 4
        %v8533 = vrot.slane %v7690, 5
        %v8534 = vsel %vm1335, %v8532, %v8533
        %v8535 = vrot.slane %v8533, 4
        %v8536 = vrot.slane %v7691, 5
        %v8537 = vsel %vm1335, %v8535, %v8536
        %v8538 = vrot.slane %v8432, 5
        %v8539 = vrot.slane %v8538, 4
        %v8540 = vrot.slane %v7693, 5
        %v8541 = vsel %vm1335, %v8539, %v8540
        %v8542 = vrot.slane %v8540, 4
        %v8543 = vrot.slane %v7694, 5
        %v8544 = vsel %vm1335, %v8542, %v8543
        %v8545 = vrot.slane %v8433, 5
        %v8546 = vrot.slane %v8545, 4
        %v8547 = vrot.slane %v7696, 5
        %v8548 = vsel %vm1335, %v8546, %v8547
        %v8549 = vrot.slane %v8547, 4
        %v8550 = vrot.slane %v7697, 5
        %v8551 = vsel %vm1335, %v8549, %v8550
        %v8552 = vrot.slane %v8434, 5
        %v8553 = vrot.slane %v8552, 4
        %v8554 = vrot.slane %v7699, 5
        %v8555 = vsel %vm1335, %v8553, %v8554
        %v8556 = vrot.slane %v8554, 4
        %v8557 = vrot.slane %v7700, 5
        %v8558 = vsel %vm1335, %v8556, %v8557
        %v8559 = vrot.slane %v8435, 5
        %v8560 = vrot.slane %v8559, 4
        %v8561 = vrot.slane %v7702, 5
        %v8562 = vsel %vm1335, %v8560, %v8561
        %v8563 = vrot.slane %v8561, 4
        %v8564 = vrot.slane %v7703, 5
        %v8565 = vsel %vm1335, %v8563, %v8564
        %v8566 = vrot.slane %v8436, 5
        %v8567 = vrot.slane %v8566, 4
        %v8568 = vrot.slane %v7705, 5
        %v8569 = vsel %vm1335, %v8567, %v8568
        %v8570 = vrot.slane %v8568, 4
        %v8571 = vrot.slane %v7706, 5
        %v8572 = vsel %vm1335, %v8570, %v8571
        %v8573 = vrot.slane %v8437, 5
        %v8574 = vrot.slane %v8573, 4
        %v8575 = vrot.slane %v7708, 5
        %v8576 = vsel %vm1335, %v8574, %v8575
        %v8577 = vrot.slane %v8575, 4
        %v8578 = vrot.slane %v7709, 5
        %v8579 = vsel %vm1335, %v8577, %v8578
        %v8580 = vrot.slane %v8438, 5
        %v8581 = vrot.slane %v8580, 4
        %v8582 = vrot.slane %v7711, 5
        %v8583 = vsel %vm1335, %v8581, %v8582
        %v8584 = vrot.slane %v8582, 4
        %v8585 = vrot.slane %v7712, 5
        %v8586 = vsel %vm1335, %v8584, %v8585
        %v8587 = vrot.slane %v8439, 5
        %v8588 = vrot.slane %v8587, 4
        %v8589 = vrot.slane %v7714, 5
        %v8590 = vsel %vm1335, %v8588, %v8589
        %v8591 = vrot.slane %v8589, 4
        %v8592 = vrot.slane %v7715, 5
        %v8593 = vsel %vm1335, %v8591, %v8592
        %v8594 = vrot.slane %v8440, 5
        %v8595 = vrot.slane %v8594, 4
        %v8596 = vrot.slane %v7717, 5
        %v8597 = vsel %vm1335, %v8595, %v8596
        %v8598 = vrot.slane %v8596, 4
        %v8599 = vrot.slane %v7718, 5
        %v8600 = vsel %vm1335, %v8598, %v8599
        %s8601 = scalar_lea.vmem [#allocation3], 320
        %v8602 = vld [vmem:[%s8601] sm:$0xf]
        %v8603 = vld [vmem:[%s8601 + $0x4] sm:$0xf]
        %v8604 = vld [vmem:[%s8601 + $0x8] sm:$0xf]
        %v8605 = vld [vmem:[%s8601 + $0xc] sm:$0xf]
        %v8606 = vld [vmem:[%s8601 + $0x10] sm:$0xf]
        %v8607 = vld [vmem:[%s8601 + $0x14] sm:$0xf]
        %v8608 = vld [vmem:[%s8601 + $0x18] sm:$0xf]
        %v8609 = vld [vmem:[%s8601 + $0x1c] sm:$0xf]
        %v8610 = vld [vmem:[%s8601 + $0x20] sm:$0xf]
        %v8611 = vld [vmem:[%s8601 + $0x24] sm:$0xf]
        %v8612 = vld [vmem:[%s8601 + $0x28] sm:$0xf]
        %v8613 = vld [vmem:[%s8601 + $0x2c] sm:$0xf]
        %v8614 = vld [vmem:[%s8601 + $0x30] sm:$0xf]
        %v8615 = vld [vmem:[%s8601 + $0x34] sm:$0xf]
        %v8616 = vld [vmem:[%s8601 + $0x38] sm:$0xf]
        %v8617 = vld [vmem:[%s8601 + $0x3c] sm:$0xf]
        %v8618 = vunpack.c.l.b16 %v8492
        %v8619 = vunpack.c.l.b16 %v8495
        %v8620 = vunpack.c.l.b16 %v8499
        %v8621 = vunpack.c.l.b16 %v8502
        %v8622 = vunpack.c.l.b16 %v8506
        %v8623 = vunpack.c.l.b16 %v8509
        %v8624 = vunpack.c.l.b16 %v8513
        %v8625 = vunpack.c.l.b16 %v8516
        %v8626 = vunpack.c.l.b16 %v8520
        %v8627 = vunpack.c.l.b16 %v8523
        %v8628 = vunpack.c.l.b16 %v8527
        %v8629 = vunpack.c.l.b16 %v8530
        %v8630 = vunpack.c.l.b16 %v8534
        %v8631 = vunpack.c.l.b16 %v8537
        %v8632 = vunpack.c.l.b16 %v8541
        %v8633 = vunpack.c.l.b16 %v8544
        %v8634 = vunpack.c.l.b16 %v8548
        %v8635 = vunpack.c.l.b16 %v8551
        %v8636 = vunpack.c.l.b16 %v8555
        %v8637 = vunpack.c.l.b16 %v8558
        %v8638 = vunpack.c.l.b16 %v8562
        %v8639 = vunpack.c.l.b16 %v8565
        %v8640 = vunpack.c.l.b16 %v8569
        %v8641 = vunpack.c.l.b16 %v8572
        %v8642 = vunpack.c.l.b16 %v8576
        %v8643 = vunpack.c.l.b16 %v8579
        %v8644 = vunpack.c.l.b16 %v8583
        %v8645 = vunpack.c.l.b16 %v8586
        %v8646 = vunpack.c.l.b16 %v8590
        %v8647 = vunpack.c.l.b16 %v8593
        %v8648 = vunpack.c.l.b16 %v8597
        %v8649 = vunpack.c.l.b16 %v8600
        %v8650 = vpack.c.b16 %v8619, %v8618
        %v8651 = vpack.c.b16 %v8621, %v8620
        %v8652 = vpack.c.b16 %v8623, %v8622
        %v8653 = vpack.c.b16 %v8625, %v8624
        %v8654 = vpack.c.b16 %v8627, %v8626
        %v8655 = vpack.c.b16 %v8629, %v8628
        %v8656 = vpack.c.b16 %v8631, %v8630
        %v8657 = vpack.c.b16 %v8633, %v8632
        %v8658 = vpack.c.b16 %v8635, %v8634
        %v8659 = vpack.c.b16 %v8637, %v8636
        %v8660 = vpack.c.b16 %v8639, %v8638
        %v8661 = vpack.c.b16 %v8641, %v8640
        %v8662 = vpack.c.b16 %v8643, %v8642
        %v8663 = vpack.c.b16 %v8645, %v8644
        %v8664 = vpack.c.b16 %v8647, %v8646
        %v8665 = vpack.c.b16 %v8649, %v8648
        %v8698 = vunpack.c.l.b16 %v8602
        %v8699 = vunpack.c.l.b16 %v8603
        %v8700 = vunpack.c.l.b16 %v8604
        %v8701 = vunpack.c.l.b16 %v8605
        %v8702 = vunpack.c.l.b16 %v8606
        %v8703 = vunpack.c.l.b16 %v8607
        %v8704 = vunpack.c.l.b16 %v8608
        %v8705 = vunpack.c.l.b16 %v8609
        %v8706 = vunpack.c.l.b16 %v8610
        %v8707 = vunpack.c.l.b16 %v8611
        %v8708 = vunpack.c.l.b16 %v8612
        %v8709 = vunpack.c.l.b16 %v8613
        %v8710 = vunpack.c.l.b16 %v8614
        %v8711 = vunpack.c.l.b16 %v8615
        %v8712 = vunpack.c.l.b16 %v8616
        %v8713 = vunpack.c.l.b16 %v8617
        %v8714 = vpack.c.b16 %v8699, %v8698
        %v8715 = vpack.c.b16 %v8701, %v8700
        %v8716 = vpack.c.b16 %v8703, %v8702
        %v8717 = vpack.c.b16 %v8705, %v8704
        %v8718 = vpack.c.b16 %v8707, %v8706
        %v8719 = vpack.c.b16 %v8709, %v8708
        %v8720 = vpack.c.b16 %v8711, %v8710
        %v8721 = vpack.c.b16 %v8713, %v8712
        %8730 = vmatprep.subr.bf16.mxu0 0
        %8731 = vmatpush1.bf16.msra.mxu0 %v8721
        %8732 = vmatprep.subr.bf16.mxu0 0
        %8733 = vmatpush1.bf16.msra.mxu0 %v8720
        %8734 = vmatprep.subr.bf16.mxu0 0
        %8735 = vmatpush1.bf16.msra.mxu0 %v8719
        %8736 = vmatprep.subr.bf16.mxu0 0
        %8737 = vmatpush1.bf16.msra.mxu0 %v8718
        %8738 = vmatprep.subr.bf16.mxu0 0
        %8739 = vmatpush1.bf16.msra.mxu0 %v8717
        %8740 = vmatprep.subr.bf16.mxu0 0
        %8741 = vmatpush1.bf16.msra.mxu0 %v8716
        %8742 = vmatprep.subr.bf16.mxu0 0
        %8743 = vmatpush1.bf16.msra.mxu0 %v8715
        %8744 = vmatprep.subr.bf16.mxu0 0
        %8745 = vmatpush1.bf16.msra.mxu0 %v8714
        %8746 = vmatprep.subr.bf16.mxu0 0
        %8747 = vmatpush2.bf16.msra.mxu0 0
        %8748 = vmatprep.subr.bf16.mxu0 0
        %8749 = vmatpush2.bf16.msra.mxu0 0
        %8750 = vmatprep.subr.bf16.mxu0 0
        %8751 = vmatpush2.bf16.msra.mxu0 0
        %8752 = vmatprep.subr.bf16.mxu0 0
        %8753 = vmatpush2.bf16.msra.mxu0 0
        %8754 = vmatprep.subr.bf16.mxu0 0
        %8755 = vmatpush2.bf16.msra.mxu0 0
        %8756 = vmatprep.subr.bf16.mxu0 0
        %8757 = vmatpush2.bf16.msra.mxu0 0
        %8758 = vmatprep.subr.bf16.mxu0 0
        %8759 = vmatpush2.bf16.msra.mxu0 0
        %8760 = vmatprep.subr.bf16.mxu0 0
        %8761 = vmatpush2.bf16.msra.mxu0 0
        %8762 = vmatprep.mubr.bf16.mxu0 0
        %8763 = vmatmul.mubr.bf16.gmra.mxu0 %v8650
        %v8764 = vpop.f32.mrf.mxu0
        %v8765 = vadd.f32 0.0, %v8764
        %v8766 = vpop.f32.mrf.mxu0
        %v8767 = vpop.f32.mrf.mxu0
        %v8768 = vadd.f32 0.0, %v8767
        %v8769 = vpop.f32.mrf.mxu0
        %8770 = vmatprep.mubr.bf16.mxu0 0
        %8771 = vmatmul.mubr.bf16.gmra.mxu0 %v8651
        %v8772 = vpop.f32.mrf.mxu0
        %v8773 = vadd.f32 0.0, %v8772
        %v8774 = vpop.f32.mrf.mxu0
        %v8775 = vpop.f32.mrf.mxu0
        %v8776 = vadd.f32 0.0, %v8775
        %v8777 = vpop.f32.mrf.mxu0
        %8778 = vmatprep.mubr.bf16.mxu0 0
        %8779 = vmatmul.mubr.bf16.gmra.mxu0 %v8652
        %v8780 = vpop.f32.mrf.mxu0
        %v8781 = vadd.f32 0.0, %v8780
        %v8782 = vpop.f32.mrf.mxu0
        %v8783 = vpop.f32.mrf.mxu0
        %v8784 = vadd.f32 0.0, %v8783
        %v8785 = vpop.f32.mrf.mxu0
        %8786 = vmatprep.mubr.bf16.mxu0 0
        %8787 = vmatmul.mubr.bf16.gmra.mxu0 %v8653
        %v8788 = vpop.f32.mrf.mxu0
        %v8789 = vadd.f32 0.0, %v8788
        %v8790 = vpop.f32.mrf.mxu0
        %v8791 = vpop.f32.mrf.mxu0
        %v8792 = vadd.f32 0.0, %v8791
        %v8793 = vpop.f32.mrf.mxu0
        %8794 = vmatprep.mubr.bf16.mxu0 0
        %8795 = vmatmul.mubr.bf16.gmra.mxu0 %v8654
        %v8796 = vpop.f32.mrf.mxu0
        %v8797 = vadd.f32 0.0, %v8796
        %v8798 = vpop.f32.mrf.mxu0
        %v8799 = vpop.f32.mrf.mxu0
        %v8800 = vadd.f32 0.0, %v8799
        %v8801 = vpop.f32.mrf.mxu0
        %8802 = vmatprep.mubr.bf16.mxu0 0
        %8803 = vmatmul.mubr.bf16.gmra.mxu0 %v8655
        %v8804 = vpop.f32.mrf.mxu0
        %v8805 = vadd.f32 0.0, %v8804
        %v8806 = vpop.f32.mrf.mxu0
        %v8807 = vpop.f32.mrf.mxu0
        %v8808 = vadd.f32 0.0, %v8807
        %v8809 = vpop.f32.mrf.mxu0
        %8810 = vmatprep.mubr.bf16.mxu0 0
        %8811 = vmatmul.mubr.bf16.gmra.mxu0 %v8656
        %v8812 = vpop.f32.mrf.mxu0
        %v8813 = vadd.f32 0.0, %v8812
        %v8814 = vpop.f32.mrf.mxu0
        %v8815 = vpop.f32.mrf.mxu0
        %v8816 = vadd.f32 0.0, %v8815
        %v8817 = vpop.f32.mrf.mxu0
        %8818 = vmatprep.mubr.bf16.mxu0 0
        %8819 = vmatmul.mubr.bf16.gmra.mxu0 %v8657
        %v8820 = vpop.f32.mrf.mxu0
        %v8821 = vadd.f32 0.0, %v8820
        %v8822 = vpop.f32.mrf.mxu0
        %v8823 = vpop.f32.mrf.mxu0
        %v8824 = vadd.f32 0.0, %v8823
        %v8825 = vpop.f32.mrf.mxu0
        %8826 = vmatprep.mubr.bf16.mxu0 0
        %8827 = vmatmul.mubr.bf16.gmra.mxu0 %v8658
        %v8828 = vpop.f32.mrf.mxu0
        %v8829 = vadd.f32 0.0, %v8828
        %v8830 = vpop.f32.mrf.mxu0
        %v8831 = vpop.f32.mrf.mxu0
        %v8832 = vadd.f32 0.0, %v8831
        %v8833 = vpop.f32.mrf.mxu0
        %8834 = vmatprep.mubr.bf16.mxu0 0
        %8835 = vmatmul.mubr.bf16.gmra.mxu0 %v8659
        %v8836 = vpop.f32.mrf.mxu0
        %v8837 = vadd.f32 0.0, %v8836
        %v8838 = vpop.f32.mrf.mxu0
        %v8839 = vpop.f32.mrf.mxu0
        %v8840 = vadd.f32 0.0, %v8839
        %v8841 = vpop.f32.mrf.mxu0
        %8842 = vmatprep.mubr.bf16.mxu0 0
        %8843 = vmatmul.mubr.bf16.gmra.mxu0 %v8660
        %v8844 = vpop.f32.mrf.mxu0
        %v8845 = vadd.f32 0.0, %v8844
        %v8846 = vpop.f32.mrf.mxu0
        %v8847 = vpop.f32.mrf.mxu0
        %v8848 = vadd.f32 0.0, %v8847
        %v8849 = vpop.f32.mrf.mxu0
        %8850 = vmatprep.mubr.bf16.mxu0 0
        %8851 = vmatmul.mubr.bf16.gmra.mxu0 %v8661
        %v8852 = vpop.f32.mrf.mxu0
        %v8853 = vadd.f32 0.0, %v8852
        %v8854 = vpop.f32.mrf.mxu0
        %v8855 = vpop.f32.mrf.mxu0
        %v8856 = vadd.f32 0.0, %v8855
        %v8857 = vpop.f32.mrf.mxu0
        %8858 = vmatprep.mubr.bf16.mxu0 0
        %8859 = vmatmul.mubr.bf16.gmra.mxu0 %v8662
        %v8860 = vpop.f32.mrf.mxu0
        %v8861 = vadd.f32 0.0, %v8860
        %v8862 = vpop.f32.mrf.mxu0
        %v8863 = vpop.f32.mrf.mxu0
        %v8864 = vadd.f32 0.0, %v8863
        %v8865 = vpop.f32.mrf.mxu0
        %8866 = vmatprep.mubr.bf16.mxu0 0
        %8867 = vmatmul.mubr.bf16.gmra.mxu0 %v8663
        %v8868 = vpop.f32.mrf.mxu0
        %v8869 = vadd.f32 0.0, %v8868
        %v8870 = vpop.f32.mrf.mxu0
        %v8871 = vpop.f32.mrf.mxu0
        %v8872 = vadd.f32 0.0, %v8871
        %v8873 = vpop.f32.mrf.mxu0
        %8874 = vmatprep.mubr.bf16.mxu0 0
        %8875 = vmatmul.mubr.bf16.gmra.mxu0 %v8664
        %v8876 = vpop.f32.mrf.mxu0
        %v8877 = vadd.f32 0.0, %v8876
        %v8878 = vpop.f32.mrf.mxu0
        %v8879 = vpop.f32.mrf.mxu0
        %v8880 = vadd.f32 0.0, %v8879
        %v8881 = vpop.f32.mrf.mxu0
        %8882 = vmatprep.mubr.bf16.mxu0 0
        %8883 = vmatmul.mubr.bf16.gmra.mxu0 %v8665
        %v8884 = vpop.f32.mrf.mxu0
        %v8885 = vadd.f32 0.0, %v8884
        %v8886 = vpop.f32.mrf.mxu0
        %v8887 = vpop.f32.mrf.mxu0
        %v8888 = vadd.f32 0.0, %v8887
        %v8889 = vpop.f32.mrf.mxu0
        %8890 = vdwg.mxu0
        %v8891 = vadd.f32 %v8393, %v8765
        %v8892 = vadd.f32 %v8394, %v8768
        %v8893 = vadd.f32 %v8395, %v8773
        %v8894 = vadd.f32 %v8396, %v8776
        %v8895 = vadd.f32 %v8397, %v8781
        %v8896 = vadd.f32 %v8398, %v8784
        %v8897 = vadd.f32 %v8399, %v8789
        %v8898 = vadd.f32 %v8400, %v8792
        %v8899 = vadd.f32 %v8401, %v8797
        %v8900 = vadd.f32 %v8402, %v8800
        %v8901 = vadd.f32 %v8403, %v8805
        %v8902 = vadd.f32 %v8404, %v8808
        %v8903 = vadd.f32 %v8405, %v8813
        %v8904 = vadd.f32 %v8406, %v8816
        %v8905 = vadd.f32 %v8407, %v8821
        %v8906 = vadd.f32 %v8408, %v8824
        %v8907 = vadd.f32 %v8409, %v8829
        %v8908 = vadd.f32 %v8410, %v8832
        %v8909 = vadd.f32 %v8411, %v8837
        %v8910 = vadd.f32 %v8412, %v8840
        %v8911 = vadd.f32 %v8413, %v8845
        %v8912 = vadd.f32 %v8414, %v8848
        %v8913 = vadd.f32 %v8415, %v8853
        %v8914 = vadd.f32 %v8416, %v8856
        %v8915 = vadd.f32 %v8417, %v8861
        %v8916 = vadd.f32 %v8418, %v8864
        %v8917 = vadd.f32 %v8419, %v8869
        %v8918 = vadd.f32 %v8420, %v8872
        %v8919 = vadd.f32 %v8421, %v8877
        %v8920 = vadd.f32 %v8422, %v8880
        %v8921 = vadd.f32 %v8423, %v8885
        %v8922 = vadd.f32 %v8424, %v8888
        %s8923 = scalar_lea.vmem [#allocation2], 24
        %v8924 = vld [vmem:[%s8923] sm:$0xf]
        %v8925 = vld [vmem:[%s8923 + $0x4] sm:$0xf]
        %v8926 = vld [vmem:[%s8923 + $0xc] sm:$0xf]
        %v8927 = vld [vmem:[%s8923 + $0x10] sm:$0xf]
        %v8928 = vld [vmem:[%s8923 + $0x18] sm:$0xf]
        %v8929 = vld [vmem:[%s8923 + $0x1c] sm:$0xf]
        %v8930 = vld [vmem:[%s8923 + $0x24] sm:$0xf]
        %v8931 = vld [vmem:[%s8923 + $0x28] sm:$0xf]
        %v8932 = vld [vmem:[%s8923 + $0x30] sm:$0xf]
        %v8933 = vld [vmem:[%s8923 + $0x34] sm:$0xf]
        %v8934 = vld [vmem:[%s8923 + $0x3c] sm:$0xf]
        %v8935 = vld [vmem:[%s8923 + $0x40] sm:$0xf]
        %v8936 = vld [vmem:[%s8923 + $0x48] sm:$0xf]
        %v8937 = vld [vmem:[%s8923 + $0x4c] sm:$0xf]
        %v8938 = vld [vmem:[%s8923 + $0x54] sm:$0xf]
        %v8939 = vld [vmem:[%s8923 + $0x58] sm:$0xf]
        %v8940 = vld [vmem:[%s8923 + $0x60] sm:$0xf]
        %v8941 = vld [vmem:[%s8923 + $0x64] sm:$0xf]
        %v8942 = vld [vmem:[%s8923 + $0x6c] sm:$0xf]
        %v8943 = vld [vmem:[%s8923 + $0x70] sm:$0xf]
        %v8944 = vld [vmem:[%s8923 + $0x78] sm:$0xf]
        %v8945 = vld [vmem:[%s8923 + $0x7c] sm:$0xf]
        %v8946 = vld [vmem:[%s8923 + $0x84] sm:$0xf]
        %v8947 = vld [vmem:[%s8923 + $0x88] sm:$0xf]
        %v8948 = vld [vmem:[%s8923 + $0x90] sm:$0xf]
        %v8949 = vld [vmem:[%s8923 + $0x94] sm:$0xf]
        %v8950 = vld [vmem:[%s8923 + $0x9c] sm:$0xf]
        %v8951 = vld [vmem:[%s8923 + $0xa0] sm:$0xf]
        %v8952 = vld [vmem:[%s8923 + $0xa8] sm:$0xf]
        %v8953 = vld [vmem:[%s8923 + $0xac] sm:$0xf]
        %v8954 = vld [vmem:[%s8923 + $0xb4] sm:$0xf]
        %v8955 = vld [vmem:[%s8923 + $0xb8] sm:$0xf]
        %s8956 = scalar_lea.vmem [#allocation3], 384
        %v8957 = vld [vmem:[%s8956] sm:$0xf]
        %v8958 = vld [vmem:[%s8956 + $0x4] sm:$0xf]
        %v8959 = vld [vmem:[%s8956 + $0x8] sm:$0xf]
        %v8960 = vld [vmem:[%s8956 + $0xc] sm:$0xf]
        %v8961 = vld [vmem:[%s8956 + $0x10] sm:$0xf]
        %v8962 = vld [vmem:[%s8956 + $0x14] sm:$0xf]
        %v8963 = vld [vmem:[%s8956 + $0x18] sm:$0xf]
        %v8964 = vld [vmem:[%s8956 + $0x1c] sm:$0xf]
        %v8965 = vld [vmem:[%s8956 + $0x20] sm:$0xf]
        %v8966 = vld [vmem:[%s8956 + $0x24] sm:$0xf]
        %v8967 = vld [vmem:[%s8956 + $0x28] sm:$0xf]
        %v8968 = vld [vmem:[%s8956 + $0x2c] sm:$0xf]
        %v8969 = vld [vmem:[%s8956 + $0x30] sm:$0xf]
        %v8970 = vld [vmem:[%s8956 + $0x34] sm:$0xf]
        %v8971 = vld [vmem:[%s8956 + $0x38] sm:$0xf]
        %v8972 = vld [vmem:[%s8956 + $0x3c] sm:$0xf]
        %v9005 = vunpack.c.l.b16 %v8924
        %v9006 = vunpack.c.l.b16 %v8925
        %v9007 = vunpack.c.l.b16 %v8926
        %v9008 = vunpack.c.l.b16 %v8927
        %v9009 = vunpack.c.l.b16 %v8928
        %v9010 = vunpack.c.l.b16 %v8929
        %v9011 = vunpack.c.l.b16 %v8930
        %v9012 = vunpack.c.l.b16 %v8931
        %v9013 = vunpack.c.l.b16 %v8932
        %v9014 = vunpack.c.l.b16 %v8933
        %v9015 = vunpack.c.l.b16 %v8934
        %v9016 = vunpack.c.l.b16 %v8935
        %v9017 = vunpack.c.l.b16 %v8936
        %v9018 = vunpack.c.l.b16 %v8937
        %v9019 = vunpack.c.l.b16 %v8938
        %v9020 = vunpack.c.l.b16 %v8939
        %v9021 = vunpack.c.l.b16 %v8940
        %v9022 = vunpack.c.l.b16 %v8941
        %v9023 = vunpack.c.l.b16 %v8942
        %v9024 = vunpack.c.l.b16 %v8943
        %v9025 = vunpack.c.l.b16 %v8944
        %v9026 = vunpack.c.l.b16 %v8945
        %v9027 = vunpack.c.l.b16 %v8946
        %v9028 = vunpack.c.l.b16 %v8947
        %v9029 = vunpack.c.l.b16 %v8948
        %v9030 = vunpack.c.l.b16 %v8949
        %v9031 = vunpack.c.l.b16 %v8950
        %v9032 = vunpack.c.l.b16 %v8951
        %v9033 = vunpack.c.l.b16 %v8952
        %v9034 = vunpack.c.l.b16 %v8953
        %v9035 = vunpack.c.l.b16 %v8954
        %v9036 = vunpack.c.l.b16 %v8955
        %v9037 = vpack.c.b16 %v9006, %v9005
        %v9038 = vpack.c.b16 %v9008, %v9007
        %v9039 = vpack.c.b16 %v9010, %v9009
        %v9040 = vpack.c.b16 %v9012, %v9011
        %v9041 = vpack.c.b16 %v9014, %v9013
        %v9042 = vpack.c.b16 %v9016, %v9015
        %v9043 = vpack.c.b16 %v9018, %v9017
        %v9044 = vpack.c.b16 %v9020, %v9019
        %v9045 = vpack.c.b16 %v9022, %v9021
        %v9046 = vpack.c.b16 %v9024, %v9023
        %v9047 = vpack.c.b16 %v9026, %v9025
        %v9048 = vpack.c.b16 %v9028, %v9027
        %v9049 = vpack.c.b16 %v9030, %v9029
        %v9050 = vpack.c.b16 %v9032, %v9031
        %v9051 = vpack.c.b16 %v9034, %v9033
        %v9052 = vpack.c.b16 %v9036, %v9035
        %v9085 = vunpack.c.l.b16 %v8957
        %v9086 = vunpack.c.l.b16 %v8958
        %v9087 = vunpack.c.l.b16 %v8959
        %v9088 = vunpack.c.l.b16 %v8960
        %v9089 = vunpack.c.l.b16 %v8961
        %v9090 = vunpack.c.l.b16 %v8962
        %v9091 = vunpack.c.l.b16 %v8963
        %v9092 = vunpack.c.l.b16 %v8964
        %v9093 = vunpack.c.l.b16 %v8965
        %v9094 = vunpack.c.l.b16 %v8966
        %v9095 = vunpack.c.l.b16 %v8967
        %v9096 = vunpack.c.l.b16 %v8968
        %v9097 = vunpack.c.l.b16 %v8969
        %v9098 = vunpack.c.l.b16 %v8970
        %v9099 = vunpack.c.l.b16 %v8971
        %v9100 = vunpack.c.l.b16 %v8972
        %v9101 = vpack.c.b16 %v9086, %v9085
        %v9102 = vpack.c.b16 %v9088, %v9087
        %v9103 = vpack.c.b16 %v9090, %v9089
        %v9104 = vpack.c.b16 %v9092, %v9091
        %v9105 = vpack.c.b16 %v9094, %v9093
        %v9106 = vpack.c.b16 %v9096, %v9095
        %v9107 = vpack.c.b16 %v9098, %v9097
        %v9108 = vpack.c.b16 %v9100, %v9099
        %9117 = vmatprep.subr.bf16.mxu0 0
        %9118 = vmatpush1.bf16.msra.mxu0 %v9108
        %9119 = vmatprep.subr.bf16.mxu0 0
        %9120 = vmatpush1.bf16.msra.mxu0 %v9107
        %9121 = vmatprep.subr.bf16.mxu0 0
        %9122 = vmatpush1.bf16.msra.mxu0 %v9106
        %9123 = vmatprep.subr.bf16.mxu0 0
        %9124 = vmatpush1.bf16.msra.mxu0 %v9105
        %9125 = vmatprep.subr.bf16.mxu0 0
        %9126 = vmatpush1.bf16.msra.mxu0 %v9104
        %9127 = vmatprep.subr.bf16.mxu0 0
        %9128 = vmatpush1.bf16.msra.mxu0 %v9103
        %9129 = vmatprep.subr.bf16.mxu0 0
        %9130 = vmatpush1.bf16.msra.mxu0 %v9102
        %9131 = vmatprep.subr.bf16.mxu0 0
        %9132 = vmatpush1.bf16.msra.mxu0 %v9101
        %9133 = vmatprep.subr.bf16.mxu0 0
        %9134 = vmatpush2.bf16.msra.mxu0 0
        %9135 = vmatprep.subr.bf16.mxu0 0
        %9136 = vmatpush2.bf16.msra.mxu0 0
        %9137 = vmatprep.subr.bf16.mxu0 0
        %9138 = vmatpush2.bf16.msra.mxu0 0
        %9139 = vmatprep.subr.bf16.mxu0 0
        %9140 = vmatpush2.bf16.msra.mxu0 0
        %9141 = vmatprep.subr.bf16.mxu0 0
        %9142 = vmatpush2.bf16.msra.mxu0 0
        %9143 = vmatprep.subr.bf16.mxu0 0
        %9144 = vmatpush2.bf16.msra.mxu0 0
        %9145 = vmatprep.subr.bf16.mxu0 0
        %9146 = vmatpush2.bf16.msra.mxu0 0
        %9147 = vmatprep.subr.bf16.mxu0 0
        %9148 = vmatpush2.bf16.msra.mxu0 0
        %9149 = vmatprep.mubr.bf16.mxu0 0
        %9150 = vmatmul.mubr.bf16.gmra.mxu0 %v9037
        %v9151 = vpop.f32.mrf.mxu0
        %v9152 = vadd.f32 0.0, %v9151
        %v9153 = vpop.f32.mrf.mxu0
        %v9154 = vpop.f32.mrf.mxu0
        %v9155 = vadd.f32 0.0, %v9154
        %v9156 = vpop.f32.mrf.mxu0
        %9157 = vmatprep.mubr.bf16.mxu0 0
        %9158 = vmatmul.mubr.bf16.gmra.mxu0 %v9038
        %v9159 = vpop.f32.mrf.mxu0
        %v9160 = vadd.f32 0.0, %v9159
        %v9161 = vpop.f32.mrf.mxu0
        %v9162 = vpop.f32.mrf.mxu0
        %v9163 = vadd.f32 0.0, %v9162
        %v9164 = vpop.f32.mrf.mxu0
        %9165 = vmatprep.mubr.bf16.mxu0 0
        %9166 = vmatmul.mubr.bf16.gmra.mxu0 %v9039
        %v9167 = vpop.f32.mrf.mxu0
        %v9168 = vadd.f32 0.0, %v9167
        %v9169 = vpop.f32.mrf.mxu0
        %v9170 = vpop.f32.mrf.mxu0
        %v9171 = vadd.f32 0.0, %v9170
        %v9172 = vpop.f32.mrf.mxu0
        %9173 = vmatprep.mubr.bf16.mxu0 0
        %9174 = vmatmul.mubr.bf16.gmra.mxu0 %v9040
        %v9175 = vpop.f32.mrf.mxu0
        %v9176 = vadd.f32 0.0, %v9175
        %v9177 = vpop.f32.mrf.mxu0
        %v9178 = vpop.f32.mrf.mxu0
        %v9179 = vadd.f32 0.0, %v9178
        %v9180 = vpop.f32.mrf.mxu0
        %9181 = vmatprep.mubr.bf16.mxu0 0
        %9182 = vmatmul.mubr.bf16.gmra.mxu0 %v9041
        %v9183 = vpop.f32.mrf.mxu0
        %v9184 = vadd.f32 0.0, %v9183
        %v9185 = vpop.f32.mrf.mxu0
        %v9186 = vpop.f32.mrf.mxu0
        %v9187 = vadd.f32 0.0, %v9186
        %v9188 = vpop.f32.mrf.mxu0
        %9189 = vmatprep.mubr.bf16.mxu0 0
        %9190 = vmatmul.mubr.bf16.gmra.mxu0 %v9042
        %v9191 = vpop.f32.mrf.mxu0
        %v9192 = vadd.f32 0.0, %v9191
        %v9193 = vpop.f32.mrf.mxu0
        %v9194 = vpop.f32.mrf.mxu0
        %v9195 = vadd.f32 0.0, %v9194
        %v9196 = vpop.f32.mrf.mxu0
        %9197 = vmatprep.mubr.bf16.mxu0 0
        %9198 = vmatmul.mubr.bf16.gmra.mxu0 %v9043
        %v9199 = vpop.f32.mrf.mxu0
        %v9200 = vadd.f32 0.0, %v9199
        %v9201 = vpop.f32.mrf.mxu0
        %v9202 = vpop.f32.mrf.mxu0
        %v9203 = vadd.f32 0.0, %v9202
        %v9204 = vpop.f32.mrf.mxu0
        %9205 = vmatprep.mubr.bf16.mxu0 0
        %9206 = vmatmul.mubr.bf16.gmra.mxu0 %v9044
        %v9207 = vpop.f32.mrf.mxu0
        %v9208 = vadd.f32 0.0, %v9207
        %v9209 = vpop.f32.mrf.mxu0
        %v9210 = vpop.f32.mrf.mxu0
        %v9211 = vadd.f32 0.0, %v9210
        %v9212 = vpop.f32.mrf.mxu0
        %9213 = vmatprep.mubr.bf16.mxu0 0
        %9214 = vmatmul.mubr.bf16.gmra.mxu0 %v9045
        %v9215 = vpop.f32.mrf.mxu0
        %v9216 = vadd.f32 0.0, %v9215
        %v9217 = vpop.f32.mrf.mxu0
        %v9218 = vpop.f32.mrf.mxu0
        %v9219 = vadd.f32 0.0, %v9218
        %v9220 = vpop.f32.mrf.mxu0
        %9221 = vmatprep.mubr.bf16.mxu0 0
        %9222 = vmatmul.mubr.bf16.gmra.mxu0 %v9046
        %v9223 = vpop.f32.mrf.mxu0
        %v9224 = vadd.f32 0.0, %v9223
        %v9225 = vpop.f32.mrf.mxu0
        %v9226 = vpop.f32.mrf.mxu0
        %v9227 = vadd.f32 0.0, %v9226
        %v9228 = vpop.f32.mrf.mxu0
        %9229 = vmatprep.mubr.bf16.mxu0 0
        %9230 = vmatmul.mubr.bf16.gmra.mxu0 %v9047
        %v9231 = vpop.f32.mrf.mxu0
        %v9232 = vadd.f32 0.0, %v9231
        %v9233 = vpop.f32.mrf.mxu0
        %v9234 = vpop.f32.mrf.mxu0
        %v9235 = vadd.f32 0.0, %v9234
        %v9236 = vpop.f32.mrf.mxu0
        %9237 = vmatprep.mubr.bf16.mxu0 0
        %9238 = vmatmul.mubr.bf16.gmra.mxu0 %v9048
        %v9239 = vpop.f32.mrf.mxu0
        %v9240 = vadd.f32 0.0, %v9239
        %v9241 = vpop.f32.mrf.mxu0
        %v9242 = vpop.f32.mrf.mxu0
        %v9243 = vadd.f32 0.0, %v9242
        %v9244 = vpop.f32.mrf.mxu0
        %9245 = vmatprep.mubr.bf16.mxu0 0
        %9246 = vmatmul.mubr.bf16.gmra.mxu0 %v9049
        %v9247 = vpop.f32.mrf.mxu0
        %v9248 = vadd.f32 0.0, %v9247
        %v9249 = vpop.f32.mrf.mxu0
        %v9250 = vpop.f32.mrf.mxu0
        %v9251 = vadd.f32 0.0, %v9250
        %v9252 = vpop.f32.mrf.mxu0
        %9253 = vmatprep.mubr.bf16.mxu0 0
        %9254 = vmatmul.mubr.bf16.gmra.mxu0 %v9050
        %v9255 = vpop.f32.mrf.mxu0
        %v9256 = vadd.f32 0.0, %v9255
        %v9257 = vpop.f32.mrf.mxu0
        %v9258 = vpop.f32.mrf.mxu0
        %v9259 = vadd.f32 0.0, %v9258
        %v9260 = vpop.f32.mrf.mxu0
        %9261 = vmatprep.mubr.bf16.mxu0 0
        %9262 = vmatmul.mubr.bf16.gmra.mxu0 %v9051
        %v9263 = vpop.f32.mrf.mxu0
        %v9264 = vadd.f32 0.0, %v9263
        %v9265 = vpop.f32.mrf.mxu0
        %v9266 = vpop.f32.mrf.mxu0
        %v9267 = vadd.f32 0.0, %v9266
        %v9268 = vpop.f32.mrf.mxu0
        %9269 = vmatprep.mubr.bf16.mxu0 0
        %9270 = vmatmul.mubr.bf16.gmra.mxu0 %v9052
        %v9271 = vpop.f32.mrf.mxu0
        %v9272 = vadd.f32 0.0, %v9271
        %v9273 = vpop.f32.mrf.mxu0
        %v9274 = vpop.f32.mrf.mxu0
        %v9275 = vadd.f32 0.0, %v9274
        %v9276 = vpop.f32.mrf.mxu0
        %9277 = vdwg.mxu0
        %v9278 = vadd.f32 %v8891, %v9152
        %v9279 = vadd.f32 %v8892, %v9155
        %v9280 = vadd.f32 %v8893, %v9160
        %v9281 = vadd.f32 %v8894, %v9163
        %v9282 = vadd.f32 %v8895, %v9168
        %v9283 = vadd.f32 %v8896, %v9171
        %v9284 = vadd.f32 %v8897, %v9176
        %v9285 = vadd.f32 %v8898, %v9179
        %v9286 = vadd.f32 %v8899, %v9184
        %v9287 = vadd.f32 %v8900, %v9187
        %v9288 = vadd.f32 %v8901, %v9192
        %v9289 = vadd.f32 %v8902, %v9195
        %v9290 = vadd.f32 %v8903, %v9200
        %v9291 = vadd.f32 %v8904, %v9203
        %v9292 = vadd.f32 %v8905, %v9208
        %v9293 = vadd.f32 %v8906, %v9211
        %v9294 = vadd.f32 %v8907, %v9216
        %v9295 = vadd.f32 %v8908, %v9219
        %v9296 = vadd.f32 %v8909, %v9224
        %v9297 = vadd.f32 %v8910, %v9227
        %v9298 = vadd.f32 %v8911, %v9232
        %v9299 = vadd.f32 %v8912, %v9235
        %v9300 = vadd.f32 %v8913, %v9240
        %v9301 = vadd.f32 %v8914, %v9243
        %v9302 = vadd.f32 %v8915, %v9248
        %v9303 = vadd.f32 %v8916, %v9251
        %v9304 = vadd.f32 %v8917, %v9256
        %v9305 = vadd.f32 %v8918, %v9259
        %v9306 = vadd.f32 %v8919, %v9264
        %v9307 = vadd.f32 %v8920, %v9267
        %v9308 = vadd.f32 %v8921, %v9272
        %v9309 = vadd.f32 %v8922, %v9275
        %v9310 = vld [vmem:[%s8923] sm:$0xf]
        %v9311 = vld [vmem:[%s8923 + $0x4] sm:$0xf]
        %v9312 = vld [vmem:[%s8923 + $0x8] sm:$0x1]
        %v9313 = vld [vmem:[%s8923 + $0xc] sm:$0xf]
        %v9314 = vld [vmem:[%s8923 + $0x10] sm:$0xf]
        %v9315 = vld [vmem:[%s8923 + $0x14] sm:$0x1]
        %v9316 = vld [vmem:[%s8923 + $0x18] sm:$0xf]
        %v9317 = vld [vmem:[%s8923 + $0x1c] sm:$0xf]
        %v9318 = vld [vmem:[%s8923 + $0x20] sm:$0x1]
        %v9319 = vld [vmem:[%s8923 + $0x24] sm:$0xf]
        %v9320 = vld [vmem:[%s8923 + $0x28] sm:$0xf]
        %v9321 = vld [vmem:[%s8923 + $0x2c] sm:$0x1]
        %v9322 = vld [vmem:[%s8923 + $0x30] sm:$0xf]
        %v9323 = vld [vmem:[%s8923 + $0x34] sm:$0xf]
        %v9324 = vld [vmem:[%s8923 + $0x38] sm:$0x1]
        %v9325 = vld [vmem:[%s8923 + $0x3c] sm:$0xf]
        %v9326 = vld [vmem:[%s8923 + $0x40] sm:$0xf]
        %v9327 = vld [vmem:[%s8923 + $0x44] sm:$0x1]
        %v9328 = vld [vmem:[%s8923 + $0x48] sm:$0xf]
        %v9329 = vld [vmem:[%s8923 + $0x4c] sm:$0xf]
        %v9330 = vld [vmem:[%s8923 + $0x50] sm:$0x1]
        %v9331 = vld [vmem:[%s8923 + $0x54] sm:$0xf]
        %v9332 = vld [vmem:[%s8923 + $0x58] sm:$0xf]
        %v9333 = vld [vmem:[%s8923 + $0x5c] sm:$0x1]
        %v9334 = vld [vmem:[%s8923 + $0x60] sm:$0xf]
        %v9335 = vld [vmem:[%s8923 + $0x64] sm:$0xf]
        %v9336 = vld [vmem:[%s8923 + $0x68] sm:$0x1]
        %v9337 = vld [vmem:[%s8923 + $0x6c] sm:$0xf]
        %v9338 = vld [vmem:[%s8923 + $0x70] sm:$0xf]
        %v9339 = vld [vmem:[%s8923 + $0x74] sm:$0x1]
        %v9340 = vld [vmem:[%s8923 + $0x78] sm:$0xf]
        %v9341 = vld [vmem:[%s8923 + $0x7c] sm:$0xf]
        %v9342 = vld [vmem:[%s8923 + $0x80] sm:$0x1]
        %v9343 = vld [vmem:[%s8923 + $0x84] sm:$0xf]
        %v9344 = vld [vmem:[%s8923 + $0x88] sm:$0xf]
        %v9345 = vld [vmem:[%s8923 + $0x8c] sm:$0x1]
        %v9346 = vld [vmem:[%s8923 + $0x90] sm:$0xf]
        %v9347 = vld [vmem:[%s8923 + $0x94] sm:$0xf]
        %v9348 = vld [vmem:[%s8923 + $0x98] sm:$0x1]
        %v9349 = vld [vmem:[%s8923 + $0x9c] sm:$0xf]
        %v9350 = vld [vmem:[%s8923 + $0xa0] sm:$0xf]
        %v9351 = vld [vmem:[%s8923 + $0xa4] sm:$0x1]
        %v9352 = vld [vmem:[%s8923 + $0xa8] sm:$0xf]
        %v9353 = vld [vmem:[%s8923 + $0xac] sm:$0xf]
        %v9354 = vld [vmem:[%s8923 + $0xb0] sm:$0x1]
        %v9355 = vld [vmem:[%s8923 + $0xb4] sm:$0xf]
        %v9356 = vld [vmem:[%s8923 + $0xb8] sm:$0xf]
        %v9357 = vld [vmem:[%s8923 + $0xbc] sm:$0x1]
        %v9359 = vshrl.u32 %v9310, 16
        %v9361 = vrot.slane %v9359, 4
        %v9362 = vshll.u32 %v9310, 16
        %v9364 = vrot.slane %v9362, 5
        %v9365 = vor.u32 %v9361, %v9364
        %v9366 = vrot.slane %v9365, 4
        %v9368 = vshll.u32 %v9311, 16
        %v9370 = vrot.slane %v9368, 5
        %v9371 = vsel %vm305, %v9366, %v9370
        %v9372 = vshrl.u32 %v9311, 16
        %v9374 = vrot.slane %v9372, 4
        %v9375 = vor.u32 %v9374, %v9370
        %v9376 = vrot.slane %v9375, 4
        %v9378 = vshll.u32 %v9312, 16
        %v9380 = vrot.slane %v9378, 5
        %v9381 = vsel %vm305, %v9376, %v9380
        %v9383 = vshrl.u32 %v9313, 16
        %v9385 = vrot.slane %v9383, 4
        %v9386 = vshll.u32 %v9313, 16
        %v9388 = vrot.slane %v9386, 5
        %v9389 = vor.u32 %v9385, %v9388
        %v9390 = vrot.slane %v9389, 4
        %v9392 = vshll.u32 %v9314, 16
        %v9394 = vrot.slane %v9392, 5
        %v9395 = vsel %vm305, %v9390, %v9394
        %v9396 = vshrl.u32 %v9314, 16
        %v9398 = vrot.slane %v9396, 4
        %v9399 = vor.u32 %v9398, %v9394
        %v9400 = vrot.slane %v9399, 4
        %v9402 = vshll.u32 %v9315, 16
        %v9404 = vrot.slane %v9402, 5
        %v9405 = vsel %vm305, %v9400, %v9404
        %v9407 = vshrl.u32 %v9316, 16
        %v9409 = vrot.slane %v9407, 4
        %v9410 = vshll.u32 %v9316, 16
        %v9412 = vrot.slane %v9410, 5
        %v9413 = vor.u32 %v9409, %v9412
        %v9414 = vrot.slane %v9413, 4
        %v9416 = vshll.u32 %v9317, 16
        %v9418 = vrot.slane %v9416, 5
        %v9419 = vsel %vm305, %v9414, %v9418
        %v9420 = vshrl.u32 %v9317, 16
        %v9422 = vrot.slane %v9420, 4
        %v9423 = vor.u32 %v9422, %v9418
        %v9424 = vrot.slane %v9423, 4
        %v9426 = vshll.u32 %v9318, 16
        %v9428 = vrot.slane %v9426, 5
        %v9429 = vsel %vm305, %v9424, %v9428
        %v9431 = vshrl.u32 %v9319, 16
        %v9433 = vrot.slane %v9431, 4
        %v9434 = vshll.u32 %v9319, 16
        %v9436 = vrot.slane %v9434, 5
        %v9437 = vor.u32 %v9433, %v9436
        %v9438 = vrot.slane %v9437, 4
        %v9440 = vshll.u32 %v9320, 16
        %v9442 = vrot.slane %v9440, 5
        %v9443 = vsel %vm305, %v9438, %v9442
        %v9444 = vshrl.u32 %v9320, 16
        %v9446 = vrot.slane %v9444, 4
        %v9447 = vor.u32 %v9446, %v9442
        %v9448 = vrot.slane %v9447, 4
        %v9450 = vshll.u32 %v9321, 16
        %v9452 = vrot.slane %v9450, 5
        %v9453 = vsel %vm305, %v9448, %v9452
        %v9455 = vshrl.u32 %v9322, 16
        %v9457 = vrot.slane %v9455, 4
        %v9458 = vshll.u32 %v9322, 16
        %v9460 = vrot.slane %v9458, 5
        %v9461 = vor.u32 %v9457, %v9460
        %v9462 = vrot.slane %v9461, 4
        %v9464 = vshll.u32 %v9323, 16
        %v9466 = vrot.slane %v9464, 5
        %v9467 = vsel %vm305, %v9462, %v9466
        %v9468 = vshrl.u32 %v9323, 16
        %v9470 = vrot.slane %v9468, 4
        %v9471 = vor.u32 %v9470, %v9466
        %v9472 = vrot.slane %v9471, 4
        %v9474 = vshll.u32 %v9324, 16
        %v9476 = vrot.slane %v9474, 5
        %v9477 = vsel %vm305, %v9472, %v9476
        %v9479 = vshrl.u32 %v9325, 16
        %v9481 = vrot.slane %v9479, 4
        %v9482 = vshll.u32 %v9325, 16
        %v9484 = vrot.slane %v9482, 5
        %v9485 = vor.u32 %v9481, %v9484
        %v9486 = vrot.slane %v9485, 4
        %v9488 = vshll.u32 %v9326, 16
        %v9490 = vrot.slane %v9488, 5
        %v9491 = vsel %vm305, %v9486, %v9490
        %v9492 = vshrl.u32 %v9326, 16
        %v9494 = vrot.slane %v9492, 4
        %v9495 = vor.u32 %v9494, %v9490
        %v9496 = vrot.slane %v9495, 4
        %v9498 = vshll.u32 %v9327, 16
        %v9500 = vrot.slane %v9498, 5
        %v9501 = vsel %vm305, %v9496, %v9500
        %v9503 = vshrl.u32 %v9328, 16
        %v9505 = vrot.slane %v9503, 4
        %v9506 = vshll.u32 %v9328, 16
        %v9508 = vrot.slane %v9506, 5
        %v9509 = vor.u32 %v9505, %v9508
        %v9510 = vrot.slane %v9509, 4
        %v9512 = vshll.u32 %v9329, 16
        %v9514 = vrot.slane %v9512, 5
        %v9515 = vsel %vm305, %v9510, %v9514
        %v9516 = vshrl.u32 %v9329, 16
        %v9518 = vrot.slane %v9516, 4
        %v9519 = vor.u32 %v9518, %v9514
        %v9520 = vrot.slane %v9519, 4
        %v9522 = vshll.u32 %v9330, 16
        %v9524 = vrot.slane %v9522, 5
        %v9525 = vsel %vm305, %v9520, %v9524
        %v9527 = vshrl.u32 %v9331, 16
        %v9529 = vrot.slane %v9527, 4
        %v9530 = vshll.u32 %v9331, 16
        %v9532 = vrot.slane %v9530, 5
        %v9533 = vor.u32 %v9529, %v9532
        %v9534 = vrot.slane %v9533, 4
        %v9536 = vshll.u32 %v9332, 16
        %v9538 = vrot.slane %v9536, 5
        %v9539 = vsel %vm305, %v9534, %v9538
        %v9540 = vshrl.u32 %v9332, 16
        %v9542 = vrot.slane %v9540, 4
        %v9543 = vor.u32 %v9542, %v9538
        %v9544 = vrot.slane %v9543, 4
        %v9546 = vshll.u32 %v9333, 16
        %v9548 = vrot.slane %v9546, 5
        %v9549 = vsel %vm305, %v9544, %v9548
        %v9551 = vshrl.u32 %v9334, 16
        %v9553 = vrot.slane %v9551, 4
        %v9554 = vshll.u32 %v9334, 16
        %v9556 = vrot.slane %v9554, 5
        %v9557 = vor.u32 %v9553, %v9556
        %v9558 = vrot.slane %v9557, 4
        %v9560 = vshll.u32 %v9335, 16
        %v9562 = vrot.slane %v9560, 5
        %v9563 = vsel %vm305, %v9558, %v9562
        %v9564 = vshrl.u32 %v9335, 16
        %v9566 = vrot.slane %v9564, 4
        %v9567 = vor.u32 %v9566, %v9562
        %v9568 = vrot.slane %v9567, 4
        %v9570 = vshll.u32 %v9336, 16
        %v9572 = vrot.slane %v9570, 5
        %v9573 = vsel %vm305, %v9568, %v9572
        %v9575 = vshrl.u32 %v9337, 16
        %v9577 = vrot.slane %v9575, 4
        %v9578 = vshll.u32 %v9337, 16
        %v9580 = vrot.slane %v9578, 5
        %v9581 = vor.u32 %v9577, %v9580
        %v9582 = vrot.slane %v9581, 4
        %v9584 = vshll.u32 %v9338, 16
        %v9586 = vrot.slane %v9584, 5
        %v9587 = vsel %vm305, %v9582, %v9586
        %v9588 = vshrl.u32 %v9338, 16
        %v9590 = vrot.slane %v9588, 4
        %v9591 = vor.u32 %v9590, %v9586
        %v9592 = vrot.slane %v9591, 4
        %v9594 = vshll.u32 %v9339, 16
        %v9596 = vrot.slane %v9594, 5
        %v9597 = vsel %vm305, %v9592, %v9596
        %v9599 = vshrl.u32 %v9340, 16
        %v9601 = vrot.slane %v9599, 4
        %v9602 = vshll.u32 %v9340, 16
        %v9604 = vrot.slane %v9602, 5
        %v9605 = vor.u32 %v9601, %v9604
        %v9606 = vrot.slane %v9605, 4
        %v9608 = vshll.u32 %v9341, 16
        %v9610 = vrot.slane %v9608, 5
        %v9611 = vsel %vm305, %v9606, %v9610
        %v9612 = vshrl.u32 %v9341, 16
        %v9614 = vrot.slane %v9612, 4
        %v9615 = vor.u32 %v9614, %v9610
        %v9616 = vrot.slane %v9615, 4
        %v9618 = vshll.u32 %v9342, 16
        %v9620 = vrot.slane %v9618, 5
        %v9621 = vsel %vm305, %v9616, %v9620
        %v9623 = vshrl.u32 %v9343, 16
        %v9625 = vrot.slane %v9623, 4
        %v9626 = vshll.u32 %v9343, 16
        %v9628 = vrot.slane %v9626, 5
        %v9629 = vor.u32 %v9625, %v9628
        %v9630 = vrot.slane %v9629, 4
        %v9632 = vshll.u32 %v9344, 16
        %v9634 = vrot.slane %v9632, 5
        %v9635 = vsel %vm305, %v9630, %v9634
        %v9636 = vshrl.u32 %v9344, 16
        %v9638 = vrot.slane %v9636, 4
        %v9639 = vor.u32 %v9638, %v9634
        %v9640 = vrot.slane %v9639, 4
        %v9642 = vshll.u32 %v9345, 16
        %v9644 = vrot.slane %v9642, 5
        %v9645 = vsel %vm305, %v9640, %v9644
        %v9647 = vshrl.u32 %v9346, 16
        %v9649 = vrot.slane %v9647, 4
        %v9650 = vshll.u32 %v9346, 16
        %v9652 = vrot.slane %v9650, 5
        %v9653 = vor.u32 %v9649, %v9652
        %v9654 = vrot.slane %v9653, 4
        %v9656 = vshll.u32 %v9347, 16
        %v9658 = vrot.slane %v9656, 5
        %v9659 = vsel %vm305, %v9654, %v9658
        %v9660 = vshrl.u32 %v9347, 16
        %v9662 = vrot.slane %v9660, 4
        %v9663 = vor.u32 %v9662, %v9658
        %v9664 = vrot.slane %v9663, 4
        %v9666 = vshll.u32 %v9348, 16
        %v9668 = vrot.slane %v9666, 5
        %v9669 = vsel %vm305, %v9664, %v9668
        %v9671 = vshrl.u32 %v9349, 16
        %v9673 = vrot.slane %v9671, 4
        %v9674 = vshll.u32 %v9349, 16
        %v9676 = vrot.slane %v9674, 5
        %v9677 = vor.u32 %v9673, %v9676
        %v9678 = vrot.slane %v9677, 4
        %v9680 = vshll.u32 %v9350, 16
        %v9682 = vrot.slane %v9680, 5
        %v9683 = vsel %vm305, %v9678, %v9682
        %v9684 = vshrl.u32 %v9350, 16
        %v9686 = vrot.slane %v9684, 4
        %v9687 = vor.u32 %v9686, %v9682
        %v9688 = vrot.slane %v9687, 4
        %v9690 = vshll.u32 %v9351, 16
        %v9692 = vrot.slane %v9690, 5
        %v9693 = vsel %vm305, %v9688, %v9692
        %v9695 = vshrl.u32 %v9352, 16
        %v9697 = vrot.slane %v9695, 4
        %v9698 = vshll.u32 %v9352, 16
        %v9700 = vrot.slane %v9698, 5
        %v9701 = vor.u32 %v9697, %v9700
        %v9702 = vrot.slane %v9701, 4
        %v9704 = vshll.u32 %v9353, 16
        %v9706 = vrot.slane %v9704, 5
        %v9707 = vsel %vm305, %v9702, %v9706
        %v9708 = vshrl.u32 %v9353, 16
        %v9710 = vrot.slane %v9708, 4
        %v9711 = vor.u32 %v9710, %v9706
        %v9712 = vrot.slane %v9711, 4
        %v9714 = vshll.u32 %v9354, 16
        %v9716 = vrot.slane %v9714, 5
        %v9717 = vsel %vm305, %v9712, %v9716
        %v9719 = vshrl.u32 %v9355, 16
        %v9721 = vrot.slane %v9719, 4
        %v9722 = vshll.u32 %v9355, 16
        %v9724 = vrot.slane %v9722, 5
        %v9725 = vor.u32 %v9721, %v9724
        %v9726 = vrot.slane %v9725, 4
        %v9728 = vshll.u32 %v9356, 16
        %v9730 = vrot.slane %v9728, 5
        %v9731 = vsel %vm305, %v9726, %v9730
        %v9732 = vshrl.u32 %v9356, 16
        %v9734 = vrot.slane %v9732, 4
        %v9735 = vor.u32 %v9734, %v9730
        %v9736 = vrot.slane %v9735, 4
        %v9738 = vshll.u32 %v9357, 16
        %v9740 = vrot.slane %v9738, 5
        %v9741 = vsel %vm305, %v9736, %v9740
        %s9742 = scalar_lea.vmem [#allocation3], 448
        %v9743 = vld [vmem:[%s9742] sm:$0xf]
        %v9744 = vld [vmem:[%s9742 + $0x4] sm:$0xf]
        %v9745 = vld [vmem:[%s9742 + $0x8] sm:$0xf]
        %v9746 = vld [vmem:[%s9742 + $0xc] sm:$0xf]
        %v9747 = vld [vmem:[%s9742 + $0x10] sm:$0xf]
        %v9748 = vld [vmem:[%s9742 + $0x14] sm:$0xf]
        %v9749 = vld [vmem:[%s9742 + $0x18] sm:$0xf]
        %v9750 = vld [vmem:[%s9742 + $0x1c] sm:$0xf]
        %v9751 = vld [vmem:[%s9742 + $0x20] sm:$0xf]
        %v9752 = vld [vmem:[%s9742 + $0x24] sm:$0xf]
        %v9753 = vld [vmem:[%s9742 + $0x28] sm:$0xf]
        %v9754 = vld [vmem:[%s9742 + $0x2c] sm:$0xf]
        %v9755 = vld [vmem:[%s9742 + $0x30] sm:$0xf]
        %v9756 = vld [vmem:[%s9742 + $0x34] sm:$0xf]
        %v9757 = vld [vmem:[%s9742 + $0x38] sm:$0xf]
        %v9758 = vld [vmem:[%s9742 + $0x3c] sm:$0xf]
        %v9759 = vunpack.c.l.b16 %v9371
        %v9760 = vunpack.c.l.b16 %v9381
        %v9761 = vunpack.c.l.b16 %v9395
        %v9762 = vunpack.c.l.b16 %v9405
        %v9763 = vunpack.c.l.b16 %v9419
        %v9764 = vunpack.c.l.b16 %v9429
        %v9765 = vunpack.c.l.b16 %v9443
        %v9766 = vunpack.c.l.b16 %v9453
        %v9767 = vunpack.c.l.b16 %v9467
        %v9768 = vunpack.c.l.b16 %v9477
        %v9769 = vunpack.c.l.b16 %v9491
        %v9770 = vunpack.c.l.b16 %v9501
        %v9771 = vunpack.c.l.b16 %v9515
        %v9772 = vunpack.c.l.b16 %v9525
        %v9773 = vunpack.c.l.b16 %v9539
        %v9774 = vunpack.c.l.b16 %v9549
        %v9775 = vunpack.c.l.b16 %v9563
        %v9776 = vunpack.c.l.b16 %v9573
        %v9777 = vunpack.c.l.b16 %v9587
        %v9778 = vunpack.c.l.b16 %v9597
        %v9779 = vunpack.c.l.b16 %v9611
        %v9780 = vunpack.c.l.b16 %v9621
        %v9781 = vunpack.c.l.b16 %v9635
        %v9782 = vunpack.c.l.b16 %v9645
        %v9783 = vunpack.c.l.b16 %v9659
        %v9784 = vunpack.c.l.b16 %v9669
        %v9785 = vunpack.c.l.b16 %v9683
        %v9786 = vunpack.c.l.b16 %v9693
        %v9787 = vunpack.c.l.b16 %v9707
        %v9788 = vunpack.c.l.b16 %v9717
        %v9789 = vunpack.c.l.b16 %v9731
        %v9790 = vunpack.c.l.b16 %v9741
        %v9791 = vpack.c.b16 %v9760, %v9759
        %v9792 = vpack.c.b16 %v9762, %v9761
        %v9793 = vpack.c.b16 %v9764, %v9763
        %v9794 = vpack.c.b16 %v9766, %v9765
        %v9795 = vpack.c.b16 %v9768, %v9767
        %v9796 = vpack.c.b16 %v9770, %v9769
        %v9797 = vpack.c.b16 %v9772, %v9771
        %v9798 = vpack.c.b16 %v9774, %v9773
        %v9799 = vpack.c.b16 %v9776, %v9775
        %v9800 = vpack.c.b16 %v9778, %v9777
        %v9801 = vpack.c.b16 %v9780, %v9779
        %v9802 = vpack.c.b16 %v9782, %v9781
        %v9803 = vpack.c.b16 %v9784, %v9783
        %v9804 = vpack.c.b16 %v9786, %v9785
        %v9805 = vpack.c.b16 %v9788, %v9787
        %v9806 = vpack.c.b16 %v9790, %v9789
        %v9839 = vunpack.c.l.b16 %v9743
        %v9840 = vunpack.c.l.b16 %v9744
        %v9841 = vunpack.c.l.b16 %v9745
        %v9842 = vunpack.c.l.b16 %v9746
        %v9843 = vunpack.c.l.b16 %v9747
        %v9844 = vunpack.c.l.b16 %v9748
        %v9845 = vunpack.c.l.b16 %v9749
        %v9846 = vunpack.c.l.b16 %v9750
        %v9847 = vunpack.c.l.b16 %v9751
        %v9848 = vunpack.c.l.b16 %v9752
        %v9849 = vunpack.c.l.b16 %v9753
        %v9850 = vunpack.c.l.b16 %v9754
        %v9851 = vunpack.c.l.b16 %v9755
        %v9852 = vunpack.c.l.b16 %v9756
        %v9853 = vunpack.c.l.b16 %v9757
        %v9854 = vunpack.c.l.b16 %v9758
        %v9855 = vpack.c.b16 %v9840, %v9839
        %v9856 = vpack.c.b16 %v9842, %v9841
        %v9857 = vpack.c.b16 %v9844, %v9843
        %v9858 = vpack.c.b16 %v9846, %v9845
        %v9859 = vpack.c.b16 %v9848, %v9847
        %v9860 = vpack.c.b16 %v9850, %v9849
        %v9861 = vpack.c.b16 %v9852, %v9851
        %v9862 = vpack.c.b16 %v9854, %v9853
        %9871 = vmatprep.subr.bf16.mxu0 0
        %9872 = vmatpush1.bf16.msra.mxu0 %v9862
        %9873 = vmatprep.subr.bf16.mxu0 0
        %9874 = vmatpush1.bf16.msra.mxu0 %v9861
        %9875 = vmatprep.subr.bf16.mxu0 0
        %9876 = vmatpush1.bf16.msra.mxu0 %v9860
        %9877 = vmatprep.subr.bf16.mxu0 0
        %9878 = vmatpush1.bf16.msra.mxu0 %v9859
        %9879 = vmatprep.subr.bf16.mxu0 0
        %9880 = vmatpush1.bf16.msra.mxu0 %v9858
        %9881 = vmatprep.subr.bf16.mxu0 0
        %9882 = vmatpush1.bf16.msra.mxu0 %v9857
        %9883 = vmatprep.subr.bf16.mxu0 0
        %9884 = vmatpush1.bf16.msra.mxu0 %v9856
        %9885 = vmatprep.subr.bf16.mxu0 0
        %9886 = vmatpush1.bf16.msra.mxu0 %v9855
        %9887 = vmatprep.subr.bf16.mxu0 0
        %9888 = vmatpush2.bf16.msra.mxu0 0
        %9889 = vmatprep.subr.bf16.mxu0 0
        %9890 = vmatpush2.bf16.msra.mxu0 0
        %9891 = vmatprep.subr.bf16.mxu0 0
        %9892 = vmatpush2.bf16.msra.mxu0 0
        %9893 = vmatprep.subr.bf16.mxu0 0
        %9894 = vmatpush2.bf16.msra.mxu0 0
        %9895 = vmatprep.subr.bf16.mxu0 0
        %9896 = vmatpush2.bf16.msra.mxu0 0
        %9897 = vmatprep.subr.bf16.mxu0 0
        %9898 = vmatpush2.bf16.msra.mxu0 0
        %9899 = vmatprep.subr.bf16.mxu0 0
        %9900 = vmatpush2.bf16.msra.mxu0 0
        %9901 = vmatprep.subr.bf16.mxu0 0
        %9902 = vmatpush2.bf16.msra.mxu0 0
        %9903 = vmatprep.mubr.bf16.mxu0 0
        %9904 = vmatmul.mubr.bf16.gmra.mxu0 %v9791
        %v9905 = vpop.f32.mrf.mxu0
        %v9906 = vadd.f32 0.0, %v9905
        %v9907 = vpop.f32.mrf.mxu0
        %v9908 = vpop.f32.mrf.mxu0
        %v9909 = vadd.f32 0.0, %v9908
        %v9910 = vpop.f32.mrf.mxu0
        %9911 = vmatprep.mubr.bf16.mxu0 0
        %9912 = vmatmul.mubr.bf16.gmra.mxu0 %v9792
        %v9913 = vpop.f32.mrf.mxu0
        %v9914 = vadd.f32 0.0, %v9913
        %v9915 = vpop.f32.mrf.mxu0
        %v9916 = vpop.f32.mrf.mxu0
        %v9917 = vadd.f32 0.0, %v9916
        %v9918 = vpop.f32.mrf.mxu0
        %9919 = vmatprep.mubr.bf16.mxu0 0
        %9920 = vmatmul.mubr.bf16.gmra.mxu0 %v9793
        %v9921 = vpop.f32.mrf.mxu0
        %v9922 = vadd.f32 0.0, %v9921
        %v9923 = vpop.f32.mrf.mxu0
        %v9924 = vpop.f32.mrf.mxu0
        %v9925 = vadd.f32 0.0, %v9924
        %v9926 = vpop.f32.mrf.mxu0
        %9927 = vmatprep.mubr.bf16.mxu0 0
        %9928 = vmatmul.mubr.bf16.gmra.mxu0 %v9794
        %v9929 = vpop.f32.mrf.mxu0
        %v9930 = vadd.f32 0.0, %v9929
        %v9931 = vpop.f32.mrf.mxu0
        %v9932 = vpop.f32.mrf.mxu0
        %v9933 = vadd.f32 0.0, %v9932
        %v9934 = vpop.f32.mrf.mxu0
        %9935 = vmatprep.mubr.bf16.mxu0 0
        %9936 = vmatmul.mubr.bf16.gmra.mxu0 %v9795
        %v9937 = vpop.f32.mrf.mxu0
        %v9938 = vadd.f32 0.0, %v9937
        %v9939 = vpop.f32.mrf.mxu0
        %v9940 = vpop.f32.mrf.mxu0
        %v9941 = vadd.f32 0.0, %v9940
        %v9942 = vpop.f32.mrf.mxu0
        %9943 = vmatprep.mubr.bf16.mxu0 0
        %9944 = vmatmul.mubr.bf16.gmra.mxu0 %v9796
        %v9945 = vpop.f32.mrf.mxu0
        %v9946 = vadd.f32 0.0, %v9945
        %v9947 = vpop.f32.mrf.mxu0
        %v9948 = vpop.f32.mrf.mxu0
        %v9949 = vadd.f32 0.0, %v9948
        %v9950 = vpop.f32.mrf.mxu0
        %9951 = vmatprep.mubr.bf16.mxu0 0
        %9952 = vmatmul.mubr.bf16.gmra.mxu0 %v9797
        %v9953 = vpop.f32.mrf.mxu0
        %v9954 = vadd.f32 0.0, %v9953
        %v9955 = vpop.f32.mrf.mxu0
        %v9956 = vpop.f32.mrf.mxu0
        %v9957 = vadd.f32 0.0, %v9956
        %v9958 = vpop.f32.mrf.mxu0
        %9959 = vmatprep.mubr.bf16.mxu0 0
        %9960 = vmatmul.mubr.bf16.gmra.mxu0 %v9798
        %v9961 = vpop.f32.mrf.mxu0
        %v9962 = vadd.f32 0.0, %v9961
        %v9963 = vpop.f32.mrf.mxu0
        %v9964 = vpop.f32.mrf.mxu0
        %v9965 = vadd.f32 0.0, %v9964
        %v9966 = vpop.f32.mrf.mxu0
        %9967 = vmatprep.mubr.bf16.mxu0 0
        %9968 = vmatmul.mubr.bf16.gmra.mxu0 %v9799
        %v9969 = vpop.f32.mrf.mxu0
        %v9970 = vadd.f32 0.0, %v9969
        %v9971 = vpop.f32.mrf.mxu0
        %v9972 = vpop.f32.mrf.mxu0
        %v9973 = vadd.f32 0.0, %v9972
        %v9974 = vpop.f32.mrf.mxu0
        %9975 = vmatprep.mubr.bf16.mxu0 0
        %9976 = vmatmul.mubr.bf16.gmra.mxu0 %v9800
        %v9977 = vpop.f32.mrf.mxu0
        %v9978 = vadd.f32 0.0, %v9977
        %v9979 = vpop.f32.mrf.mxu0
        %v9980 = vpop.f32.mrf.mxu0
        %v9981 = vadd.f32 0.0, %v9980
        %v9982 = vpop.f32.mrf.mxu0
        %9983 = vmatprep.mubr.bf16.mxu0 0
        %9984 = vmatmul.mubr.bf16.gmra.mxu0 %v9801
        %v9985 = vpop.f32.mrf.mxu0
        %v9986 = vadd.f32 0.0, %v9985
        %v9987 = vpop.f32.mrf.mxu0
        %v9988 = vpop.f32.mrf.mxu0
        %v9989 = vadd.f32 0.0, %v9988
        %v9990 = vpop.f32.mrf.mxu0
        %9991 = vmatprep.mubr.bf16.mxu0 0
        %9992 = vmatmul.mubr.bf16.gmra.mxu0 %v9802
        %v9993 = vpop.f32.mrf.mxu0
        %v9994 = vadd.f32 0.0, %v9993
        %v9995 = vpop.f32.mrf.mxu0
        %v9996 = vpop.f32.mrf.mxu0
        %v9997 = vadd.f32 0.0, %v9996
        %v9998 = vpop.f32.mrf.mxu0
        %9999 = vmatprep.mubr.bf16.mxu0 0
        %10000 = vmatmul.mubr.bf16.gmra.mxu0 %v9803
        %v10001 = vpop.f32.mrf.mxu0
        %v10002 = vadd.f32 0.0, %v10001
        %v10003 = vpop.f32.mrf.mxu0
        %v10004 = vpop.f32.mrf.mxu0
        %v10005 = vadd.f32 0.0, %v10004
        %v10006 = vpop.f32.mrf.mxu0
        %10007 = vmatprep.mubr.bf16.mxu0 0
        %10008 = vmatmul.mubr.bf16.gmra.mxu0 %v9804
        %v10009 = vpop.f32.mrf.mxu0
        %v10010 = vadd.f32 0.0, %v10009
        %v10011 = vpop.f32.mrf.mxu0
        %v10012 = vpop.f32.mrf.mxu0
        %v10013 = vadd.f32 0.0, %v10012
        %v10014 = vpop.f32.mrf.mxu0
        %10015 = vmatprep.mubr.bf16.mxu0 0
        %10016 = vmatmul.mubr.bf16.gmra.mxu0 %v9805
        %v10017 = vpop.f32.mrf.mxu0
        %v10018 = vadd.f32 0.0, %v10017
        %v10019 = vpop.f32.mrf.mxu0
        %v10020 = vpop.f32.mrf.mxu0
        %v10021 = vadd.f32 0.0, %v10020
        %v10022 = vpop.f32.mrf.mxu0
        %10023 = vmatprep.mubr.bf16.mxu0 0
        %10024 = vmatmul.mubr.bf16.gmra.mxu0 %v9806
        %v10025 = vpop.f32.mrf.mxu0
        %v10026 = vadd.f32 0.0, %v10025
        %v10027 = vpop.f32.mrf.mxu0
        %v10028 = vpop.f32.mrf.mxu0
        %v10029 = vadd.f32 0.0, %v10028
        %v10030 = vpop.f32.mrf.mxu0
        %10031 = vdwg.mxu0
        %v10032 = vadd.f32 %v9278, %v9906
        %v10033 = vadd.f32 %v9279, %v9909
        %v10034 = vadd.f32 %v9280, %v9914
        %v10035 = vadd.f32 %v9281, %v9917
        %v10036 = vadd.f32 %v9282, %v9922
        %v10037 = vadd.f32 %v9283, %v9925
        %v10038 = vadd.f32 %v9284, %v9930
        %v10039 = vadd.f32 %v9285, %v9933
        %v10040 = vadd.f32 %v9286, %v9938
        %v10041 = vadd.f32 %v9287, %v9941
        %v10042 = vadd.f32 %v9288, %v9946
        %v10043 = vadd.f32 %v9289, %v9949
        %v10044 = vadd.f32 %v9290, %v9954
        %v10045 = vadd.f32 %v9291, %v9957
        %v10046 = vadd.f32 %v9292, %v9962
        %v10047 = vadd.f32 %v9293, %v9965
        %v10048 = vadd.f32 %v9294, %v9970
        %v10049 = vadd.f32 %v9295, %v9973
        %v10050 = vadd.f32 %v9296, %v9978
        %v10051 = vadd.f32 %v9297, %v9981
        %v10052 = vadd.f32 %v9298, %v9986
        %v10053 = vadd.f32 %v9299, %v9989
        %v10054 = vadd.f32 %v9300, %v9994
        %v10055 = vadd.f32 %v9301, %v9997
        %v10056 = vadd.f32 %v9302, %v10002
        %v10057 = vadd.f32 %v9303, %v10005
        %v10058 = vadd.f32 %v9304, %v10010
        %v10059 = vadd.f32 %v9305, %v10013
        %v10060 = vadd.f32 %v9306, %v10018
        %v10061 = vadd.f32 %v9307, %v10021
        %v10062 = vadd.f32 %v9308, %v10026
        %v10063 = vadd.f32 %v9309, %v10029
        %v10064 = vld [vmem:[%s8923] sm:$0xe]
        %v10065 = vld [vmem:[%s8923 + $0xc] sm:$0xe]
        %v10066 = vld [vmem:[%s8923 + $0x18] sm:$0xe]
        %v10067 = vld [vmem:[%s8923 + $0x24] sm:$0xe]
        %v10068 = vld [vmem:[%s8923 + $0x30] sm:$0xe]
        %v10069 = vld [vmem:[%s8923 + $0x3c] sm:$0xe]
        %v10070 = vld [vmem:[%s8923 + $0x48] sm:$0xe]
        %v10071 = vld [vmem:[%s8923 + $0x54] sm:$0xe]
        %v10072 = vld [vmem:[%s8923 + $0x60] sm:$0xe]
        %v10073 = vld [vmem:[%s8923 + $0x6c] sm:$0xe]
        %v10074 = vld [vmem:[%s8923 + $0x78] sm:$0xe]
        %v10075 = vld [vmem:[%s8923 + $0x84] sm:$0xe]
        %v10076 = vld [vmem:[%s8923 + $0x90] sm:$0xe]
        %v10077 = vld [vmem:[%s8923 + $0x9c] sm:$0xe]
        %v10078 = vld [vmem:[%s8923 + $0xa8] sm:$0xe]
        %v10079 = vld [vmem:[%s8923 + $0xb4] sm:$0xe]
        %v10128 = vrot.slane %v10064, 5
        %v10129 = vrot.slane %v10128, 4
        %v10130 = vrot.slane %v9311, 5
        %v10131 = vsel %vm1335, %v10129, %v10130
        %v10132 = vrot.slane %v10130, 4
        %v10133 = vrot.slane %v9312, 5
        %v10134 = vsel %vm1335, %v10132, %v10133
        %v10135 = vrot.slane %v10065, 5
        %v10136 = vrot.slane %v10135, 4
        %v10137 = vrot.slane %v9314, 5
        %v10138 = vsel %vm1335, %v10136, %v10137
        %v10139 = vrot.slane %v10137, 4
        %v10140 = vrot.slane %v9315, 5
        %v10141 = vsel %vm1335, %v10139, %v10140
        %v10142 = vrot.slane %v10066, 5
        %v10143 = vrot.slane %v10142, 4
        %v10144 = vrot.slane %v9317, 5
        %v10145 = vsel %vm1335, %v10143, %v10144
        %v10146 = vrot.slane %v10144, 4
        %v10147 = vrot.slane %v9318, 5
        %v10148 = vsel %vm1335, %v10146, %v10147
        %v10149 = vrot.slane %v10067, 5
        %v10150 = vrot.slane %v10149, 4
        %v10151 = vrot.slane %v9320, 5
        %v10152 = vsel %vm1335, %v10150, %v10151
        %v10153 = vrot.slane %v10151, 4
        %v10154 = vrot.slane %v9321, 5
        %v10155 = vsel %vm1335, %v10153, %v10154
        %v10156 = vrot.slane %v10068, 5
        %v10157 = vrot.slane %v10156, 4
        %v10158 = vrot.slane %v9323, 5
        %v10159 = vsel %vm1335, %v10157, %v10158
        %v10160 = vrot.slane %v10158, 4
        %v10161 = vrot.slane %v9324, 5
        %v10162 = vsel %vm1335, %v10160, %v10161
        %v10163 = vrot.slane %v10069, 5
        %v10164 = vrot.slane %v10163, 4
        %v10165 = vrot.slane %v9326, 5
        %v10166 = vsel %vm1335, %v10164, %v10165
        %v10167 = vrot.slane %v10165, 4
        %v10168 = vrot.slane %v9327, 5
        %v10169 = vsel %vm1335, %v10167, %v10168
        %v10170 = vrot.slane %v10070, 5
        %v10171 = vrot.slane %v10170, 4
        %v10172 = vrot.slane %v9329, 5
        %v10173 = vsel %vm1335, %v10171, %v10172
        %v10174 = vrot.slane %v10172, 4
        %v10175 = vrot.slane %v9330, 5
        %v10176 = vsel %vm1335, %v10174, %v10175
        %v10177 = vrot.slane %v10071, 5
        %v10178 = vrot.slane %v10177, 4
        %v10179 = vrot.slane %v9332, 5
        %v10180 = vsel %vm1335, %v10178, %v10179
        %v10181 = vrot.slane %v10179, 4
        %v10182 = vrot.slane %v9333, 5
        %v10183 = vsel %vm1335, %v10181, %v10182
        %v10184 = vrot.slane %v10072, 5
        %v10185 = vrot.slane %v10184, 4
        %v10186 = vrot.slane %v9335, 5
        %v10187 = vsel %vm1335, %v10185, %v10186
        %v10188 = vrot.slane %v10186, 4
        %v10189 = vrot.slane %v9336, 5
        %v10190 = vsel %vm1335, %v10188, %v10189
        %v10191 = vrot.slane %v10073, 5
        %v10192 = vrot.slane %v10191, 4
        %v10193 = vrot.slane %v9338, 5
        %v10194 = vsel %vm1335, %v10192, %v10193
        %v10195 = vrot.slane %v10193, 4
        %v10196 = vrot.slane %v9339, 5
        %v10197 = vsel %vm1335, %v10195, %v10196
        %v10198 = vrot.slane %v10074, 5
        %v10199 = vrot.slane %v10198, 4
        %v10200 = vrot.slane %v9341, 5
        %v10201 = vsel %vm1335, %v10199, %v10200
        %v10202 = vrot.slane %v10200, 4
        %v10203 = vrot.slane %v9342, 5
        %v10204 = vsel %vm1335, %v10202, %v10203
        %v10205 = vrot.slane %v10075, 5
        %v10206 = vrot.slane %v10205, 4
        %v10207 = vrot.slane %v9344, 5
        %v10208 = vsel %vm1335, %v10206, %v10207
        %v10209 = vrot.slane %v10207, 4
        %v10210 = vrot.slane %v9345, 5
        %v10211 = vsel %vm1335, %v10209, %v10210
        %v10212 = vrot.slane %v10076, 5
        %v10213 = vrot.slane %v10212, 4
        %v10214 = vrot.slane %v9347, 5
        %v10215 = vsel %vm1335, %v10213, %v10214
        %v10216 = vrot.slane %v10214, 4
        %v10217 = vrot.slane %v9348, 5
        %v10218 = vsel %vm1335, %v10216, %v10217
        %v10219 = vrot.slane %v10077, 5
        %v10220 = vrot.slane %v10219, 4
        %v10221 = vrot.slane %v9350, 5
        %v10222 = vsel %vm1335, %v10220, %v10221
        %v10223 = vrot.slane %v10221, 4
        %v10224 = vrot.slane %v9351, 5
        %v10225 = vsel %vm1335, %v10223, %v10224
        %v10226 = vrot.slane %v10078, 5
        %v10227 = vrot.slane %v10226, 4
        %v10228 = vrot.slane %v9353, 5
        %v10229 = vsel %vm1335, %v10227, %v10228
        %v10230 = vrot.slane %v10228, 4
        %v10231 = vrot.slane %v9354, 5
        %v10232 = vsel %vm1335, %v10230, %v10231
        %v10233 = vrot.slane %v10079, 5
        %v10234 = vrot.slane %v10233, 4
        %v10235 = vrot.slane %v9356, 5
        %v10236 = vsel %vm1335, %v10234, %v10235
        %v10237 = vrot.slane %v10235, 4
        %v10238 = vrot.slane %v9357, 5
        %v10239 = vsel %vm1335, %v10237, %v10238
        %s10240 = scalar_lea.vmem [#allocation3], 512
        %v10241 = vld [vmem:[%s10240] sm:$0xf]
        %v10242 = vld [vmem:[%s10240 + $0x4] sm:$0xf]
        %v10243 = vld [vmem:[%s10240 + $0x8] sm:$0xf]
        %v10244 = vld [vmem:[%s10240 + $0xc] sm:$0xf]
        %v10245 = vld [vmem:[%s10240 + $0x10] sm:$0xf]
        %v10246 = vld [vmem:[%s10240 + $0x14] sm:$0xf]
        %v10247 = vld [vmem:[%s10240 + $0x18] sm:$0xf]
        %v10248 = vld [vmem:[%s10240 + $0x1c] sm:$0xf]
        %v10249 = vld [vmem:[%s10240 + $0x20] sm:$0xf]
        %v10250 = vld [vmem:[%s10240 + $0x24] sm:$0xf]
        %v10251 = vld [vmem:[%s10240 + $0x28] sm:$0xf]
        %v10252 = vld [vmem:[%s10240 + $0x2c] sm:$0xf]
        %v10253 = vld [vmem:[%s10240 + $0x30] sm:$0xf]
        %v10254 = vld [vmem:[%s10240 + $0x34] sm:$0xf]
        %v10255 = vld [vmem:[%s10240 + $0x38] sm:$0xf]
        %v10256 = vld [vmem:[%s10240 + $0x3c] sm:$0xf]
        %v10257 = vunpack.c.l.b16 %v10131
        %v10258 = vunpack.c.l.b16 %v10134
        %v10259 = vunpack.c.l.b16 %v10138
        %v10260 = vunpack.c.l.b16 %v10141
        %v10261 = vunpack.c.l.b16 %v10145
        %v10262 = vunpack.c.l.b16 %v10148
        %v10263 = vunpack.c.l.b16 %v10152
        %v10264 = vunpack.c.l.b16 %v10155
        %v10265 = vunpack.c.l.b16 %v10159
        %v10266 = vunpack.c.l.b16 %v10162
        %v10267 = vunpack.c.l.b16 %v10166
        %v10268 = vunpack.c.l.b16 %v10169
        %v10269 = vunpack.c.l.b16 %v10173
        %v10270 = vunpack.c.l.b16 %v10176
        %v10271 = vunpack.c.l.b16 %v10180
        %v10272 = vunpack.c.l.b16 %v10183
        %v10273 = vunpack.c.l.b16 %v10187
        %v10274 = vunpack.c.l.b16 %v10190
        %v10275 = vunpack.c.l.b16 %v10194
        %v10276 = vunpack.c.l.b16 %v10197
        %v10277 = vunpack.c.l.b16 %v10201
        %v10278 = vunpack.c.l.b16 %v10204
        %v10279 = vunpack.c.l.b16 %v10208
        %v10280 = vunpack.c.l.b16 %v10211
        %v10281 = vunpack.c.l.b16 %v10215
        %v10282 = vunpack.c.l.b16 %v10218
        %v10283 = vunpack.c.l.b16 %v10222
        %v10284 = vunpack.c.l.b16 %v10225
        %v10285 = vunpack.c.l.b16 %v10229
        %v10286 = vunpack.c.l.b16 %v10232
        %v10287 = vunpack.c.l.b16 %v10236
        %v10288 = vunpack.c.l.b16 %v10239
        %v10289 = vpack.c.b16 %v10258, %v10257
        %v10290 = vpack.c.b16 %v10260, %v10259
        %v10291 = vpack.c.b16 %v10262, %v10261
        %v10292 = vpack.c.b16 %v10264, %v10263
        %v10293 = vpack.c.b16 %v10266, %v10265
        %v10294 = vpack.c.b16 %v10268, %v10267
        %v10295 = vpack.c.b16 %v10270, %v10269
        %v10296 = vpack.c.b16 %v10272, %v10271
        %v10297 = vpack.c.b16 %v10274, %v10273
        %v10298 = vpack.c.b16 %v10276, %v10275
        %v10299 = vpack.c.b16 %v10278, %v10277
        %v10300 = vpack.c.b16 %v10280, %v10279
        %v10301 = vpack.c.b16 %v10282, %v10281
        %v10302 = vpack.c.b16 %v10284, %v10283
        %v10303 = vpack.c.b16 %v10286, %v10285
        %v10304 = vpack.c.b16 %v10288, %v10287
        %v10337 = vunpack.c.l.b16 %v10241
        %v10338 = vunpack.c.l.b16 %v10242
        %v10339 = vunpack.c.l.b16 %v10243
        %v10340 = vunpack.c.l.b16 %v10244
        %v10341 = vunpack.c.l.b16 %v10245
        %v10342 = vunpack.c.l.b16 %v10246
        %v10343 = vunpack.c.l.b16 %v10247
        %v10344 = vunpack.c.l.b16 %v10248
        %v10345 = vunpack.c.l.b16 %v10249
        %v10346 = vunpack.c.l.b16 %v10250
        %v10347 = vunpack.c.l.b16 %v10251
        %v10348 = vunpack.c.l.b16 %v10252
        %v10349 = vunpack.c.l.b16 %v10253
        %v10350 = vunpack.c.l.b16 %v10254
        %v10351 = vunpack.c.l.b16 %v10255
        %v10352 = vunpack.c.l.b16 %v10256
        %v10353 = vpack.c.b16 %v10338, %v10337
        %v10354 = vpack.c.b16 %v10340, %v10339
        %v10355 = vpack.c.b16 %v10342, %v10341
        %v10356 = vpack.c.b16 %v10344, %v10343
        %v10357 = vpack.c.b16 %v10346, %v10345
        %v10358 = vpack.c.b16 %v10348, %v10347
        %v10359 = vpack.c.b16 %v10350, %v10349
        %v10360 = vpack.c.b16 %v10352, %v10351
        %10369 = vmatprep.subr.bf16.mxu0 0
        %10370 = vmatpush1.bf16.msra.mxu0 %v10360
        %10371 = vmatprep.subr.bf16.mxu0 0
        %10372 = vmatpush1.bf16.msra.mxu0 %v10359
        %10373 = vmatprep.subr.bf16.mxu0 0
        %10374 = vmatpush1.bf16.msra.mxu0 %v10358
        %10375 = vmatprep.subr.bf16.mxu0 0
        %10376 = vmatpush1.bf16.msra.mxu0 %v10357
        %10377 = vmatprep.subr.bf16.mxu0 0
        %10378 = vmatpush1.bf16.msra.mxu0 %v10356
        %10379 = vmatprep.subr.bf16.mxu0 0
        %10380 = vmatpush1.bf16.msra.mxu0 %v10355
        %10381 = vmatprep.subr.bf16.mxu0 0
        %10382 = vmatpush1.bf16.msra.mxu0 %v10354
        %10383 = vmatprep.subr.bf16.mxu0 0
        %10384 = vmatpush1.bf16.msra.mxu0 %v10353
        %10385 = vmatprep.subr.bf16.mxu0 0
        %10386 = vmatpush2.bf16.msra.mxu0 0
        %10387 = vmatprep.subr.bf16.mxu0 0
        %10388 = vmatpush2.bf16.msra.mxu0 0
        %10389 = vmatprep.subr.bf16.mxu0 0
        %10390 = vmatpush2.bf16.msra.mxu0 0
        %10391 = vmatprep.subr.bf16.mxu0 0
        %10392 = vmatpush2.bf16.msra.mxu0 0
        %10393 = vmatprep.subr.bf16.mxu0 0
        %10394 = vmatpush2.bf16.msra.mxu0 0
        %10395 = vmatprep.subr.bf16.mxu0 0
        %10396 = vmatpush2.bf16.msra.mxu0 0
        %10397 = vmatprep.subr.bf16.mxu0 0
        %10398 = vmatpush2.bf16.msra.mxu0 0
        %10399 = vmatprep.subr.bf16.mxu0 0
        %10400 = vmatpush2.bf16.msra.mxu0 0
        %10401 = vmatprep.mubr.bf16.mxu0 0
        %10402 = vmatmul.mubr.bf16.gmra.mxu0 %v10289
        %v10403 = vpop.f32.mrf.mxu0
        %v10404 = vadd.f32 0.0, %v10403
        %v10405 = vpop.f32.mrf.mxu0
        %v10406 = vpop.f32.mrf.mxu0
        %v10407 = vadd.f32 0.0, %v10406
        %v10408 = vpop.f32.mrf.mxu0
        %10409 = vmatprep.mubr.bf16.mxu0 0
        %10410 = vmatmul.mubr.bf16.gmra.mxu0 %v10290
        %v10411 = vpop.f32.mrf.mxu0
        %v10412 = vadd.f32 0.0, %v10411
        %v10413 = vpop.f32.mrf.mxu0
        %v10414 = vpop.f32.mrf.mxu0
        %v10415 = vadd.f32 0.0, %v10414
        %v10416 = vpop.f32.mrf.mxu0
        %10417 = vmatprep.mubr.bf16.mxu0 0
        %10418 = vmatmul.mubr.bf16.gmra.mxu0 %v10291
        %v10419 = vpop.f32.mrf.mxu0
        %v10420 = vadd.f32 0.0, %v10419
        %v10421 = vpop.f32.mrf.mxu0
        %v10422 = vpop.f32.mrf.mxu0
        %v10423 = vadd.f32 0.0, %v10422
        %v10424 = vpop.f32.mrf.mxu0
        %10425 = vmatprep.mubr.bf16.mxu0 0
        %10426 = vmatmul.mubr.bf16.gmra.mxu0 %v10292
        %v10427 = vpop.f32.mrf.mxu0
        %v10428 = vadd.f32 0.0, %v10427
        %v10429 = vpop.f32.mrf.mxu0
        %v10430 = vpop.f32.mrf.mxu0
        %v10431 = vadd.f32 0.0, %v10430
        %v10432 = vpop.f32.mrf.mxu0
        %10433 = vmatprep.mubr.bf16.mxu0 0
        %10434 = vmatmul.mubr.bf16.gmra.mxu0 %v10293
        %v10435 = vpop.f32.mrf.mxu0
        %v10436 = vadd.f32 0.0, %v10435
        %v10437 = vpop.f32.mrf.mxu0
        %v10438 = vpop.f32.mrf.mxu0
        %v10439 = vadd.f32 0.0, %v10438
        %v10440 = vpop.f32.mrf.mxu0
        %10441 = vmatprep.mubr.bf16.mxu0 0
        %10442 = vmatmul.mubr.bf16.gmra.mxu0 %v10294
        %v10443 = vpop.f32.mrf.mxu0
        %v10444 = vadd.f32 0.0, %v10443
        %v10445 = vpop.f32.mrf.mxu0
        %v10446 = vpop.f32.mrf.mxu0
        %v10447 = vadd.f32 0.0, %v10446
        %v10448 = vpop.f32.mrf.mxu0
        %10449 = vmatprep.mubr.bf16.mxu0 0
        %10450 = vmatmul.mubr.bf16.gmra.mxu0 %v10295
        %v10451 = vpop.f32.mrf.mxu0
        %v10452 = vadd.f32 0.0, %v10451
        %v10453 = vpop.f32.mrf.mxu0
        %v10454 = vpop.f32.mrf.mxu0
        %v10455 = vadd.f32 0.0, %v10454
        %v10456 = vpop.f32.mrf.mxu0
        %10457 = vmatprep.mubr.bf16.mxu0 0
        %10458 = vmatmul.mubr.bf16.gmra.mxu0 %v10296
        %v10459 = vpop.f32.mrf.mxu0
        %v10460 = vadd.f32 0.0, %v10459
        %v10461 = vpop.f32.mrf.mxu0
        %v10462 = vpop.f32.mrf.mxu0
        %v10463 = vadd.f32 0.0, %v10462
        %v10464 = vpop.f32.mrf.mxu0
        %10465 = vmatprep.mubr.bf16.mxu0 0
        %10466 = vmatmul.mubr.bf16.gmra.mxu0 %v10297
        %v10467 = vpop.f32.mrf.mxu0
        %v10468 = vadd.f32 0.0, %v10467
        %v10469 = vpop.f32.mrf.mxu0
        %v10470 = vpop.f32.mrf.mxu0
        %v10471 = vadd.f32 0.0, %v10470
        %v10472 = vpop.f32.mrf.mxu0
        %10473 = vmatprep.mubr.bf16.mxu0 0
        %10474 = vmatmul.mubr.bf16.gmra.mxu0 %v10298
        %v10475 = vpop.f32.mrf.mxu0
        %v10476 = vadd.f32 0.0, %v10475
        %v10477 = vpop.f32.mrf.mxu0
        %v10478 = vpop.f32.mrf.mxu0
        %v10479 = vadd.f32 0.0, %v10478
        %v10480 = vpop.f32.mrf.mxu0
        %10481 = vmatprep.mubr.bf16.mxu0 0
        %10482 = vmatmul.mubr.bf16.gmra.mxu0 %v10299
        %v10483 = vpop.f32.mrf.mxu0
        %v10484 = vadd.f32 0.0, %v10483
        %v10485 = vpop.f32.mrf.mxu0
        %v10486 = vpop.f32.mrf.mxu0
        %v10487 = vadd.f32 0.0, %v10486
        %v10488 = vpop.f32.mrf.mxu0
        %10489 = vmatprep.mubr.bf16.mxu0 0
        %10490 = vmatmul.mubr.bf16.gmra.mxu0 %v10300
        %v10491 = vpop.f32.mrf.mxu0
        %v10492 = vadd.f32 0.0, %v10491
        %v10493 = vpop.f32.mrf.mxu0
        %v10494 = vpop.f32.mrf.mxu0
        %v10495 = vadd.f32 0.0, %v10494
        %v10496 = vpop.f32.mrf.mxu0
        %10497 = vmatprep.mubr.bf16.mxu0 0
        %10498 = vmatmul.mubr.bf16.gmra.mxu0 %v10301
        %v10499 = vpop.f32.mrf.mxu0
        %v10500 = vadd.f32 0.0, %v10499
        %v10501 = vpop.f32.mrf.mxu0
        %v10502 = vpop.f32.mrf.mxu0
        %v10503 = vadd.f32 0.0, %v10502
        %v10504 = vpop.f32.mrf.mxu0
        %10505 = vmatprep.mubr.bf16.mxu0 0
        %10506 = vmatmul.mubr.bf16.gmra.mxu0 %v10302
        %v10507 = vpop.f32.mrf.mxu0
        %v10508 = vadd.f32 0.0, %v10507
        %v10509 = vpop.f32.mrf.mxu0
        %v10510 = vpop.f32.mrf.mxu0
        %v10511 = vadd.f32 0.0, %v10510
        %v10512 = vpop.f32.mrf.mxu0
        %10513 = vmatprep.mubr.bf16.mxu0 0
        %10514 = vmatmul.mubr.bf16.gmra.mxu0 %v10303
        %v10515 = vpop.f32.mrf.mxu0
        %v10516 = vadd.f32 0.0, %v10515
        %v10517 = vpop.f32.mrf.mxu0
        %v10518 = vpop.f32.mrf.mxu0
        %v10519 = vadd.f32 0.0, %v10518
        %v10520 = vpop.f32.mrf.mxu0
        %10521 = vmatprep.mubr.bf16.mxu0 0
        %10522 = vmatmul.mubr.bf16.gmra.mxu0 %v10304
        %v10523 = vpop.f32.mrf.mxu0
        %v10524 = vadd.f32 0.0, %v10523
        %v10525 = vpop.f32.mrf.mxu0
        %v10526 = vpop.f32.mrf.mxu0
        %v10527 = vadd.f32 0.0, %v10526
        %v10528 = vpop.f32.mrf.mxu0
        %10529 = vdwg.mxu0
        %v10530 = vadd.f32 %v10032, %v10404
        %v10531 = vadd.f32 %v10033, %v10407
        %v10532 = vadd.f32 %v10034, %v10412
        %v10533 = vadd.f32 %v10035, %v10415
        %v10534 = vadd.f32 %v10036, %v10420
        %v10535 = vadd.f32 %v10037, %v10423
        %v10536 = vadd.f32 %v10038, %v10428
        %v10537 = vadd.f32 %v10039, %v10431
        %v10538 = vadd.f32 %v10040, %v10436
        %v10539 = vadd.f32 %v10041, %v10439
        %v10540 = vadd.f32 %v10042, %v10444
        %v10541 = vadd.f32 %v10043, %v10447
        %v10542 = vadd.f32 %v10044, %v10452
        %v10543 = vadd.f32 %v10045, %v10455
        %v10544 = vadd.f32 %v10046, %v10460
        %v10545 = vadd.f32 %v10047, %v10463
        %v10546 = vadd.f32 %v10048, %v10468
        %v10547 = vadd.f32 %v10049, %v10471
        %v10548 = vadd.f32 %v10050, %v10476
        %v10549 = vadd.f32 %v10051, %v10479
        %v10550 = vadd.f32 %v10052, %v10484
        %v10551 = vadd.f32 %v10053, %v10487
        %v10552 = vadd.f32 %v10054, %v10492
        %v10553 = vadd.f32 %v10055, %v10495
        %v10554 = vadd.f32 %v10056, %v10500
        %v10555 = vadd.f32 %v10057, %v10503
        %v10556 = vadd.f32 %v10058, %v10508
        %v10557 = vadd.f32 %v10059, %v10511
        %v10558 = vadd.f32 %v10060, %v10516
        %v10559 = vadd.f32 %v10061, %v10519
        %v10560 = vadd.f32 %v10062, %v10524
        %v10561 = vadd.f32 %v10063, %v10527
        %v10562 = vld [vmem:[%s4] sm:$0x1]
        %v10564 = vlaneseq
        %v10565 = vshrl.u32 %v10564, 7
        %v10566 = vsub.s32 0, %v10565
        %v10567 = vrot.slane %v10562, %v10566
        %v10569 = vadd.f32 %v10530, %v10567
        %v10570 = vadd.f32 %v10531, %v10567
        %v10571 = vadd.f32 %v10532, %v10567
        %v10572 = vadd.f32 %v10533, %v10567
        %v10573 = vadd.f32 %v10534, %v10567
        %v10574 = vadd.f32 %v10535, %v10567
        %v10575 = vadd.f32 %v10536, %v10567
        %v10576 = vadd.f32 %v10537, %v10567
        %v10577 = vadd.f32 %v10538, %v10567
        %v10578 = vadd.f32 %v10539, %v10567
        %v10579 = vadd.f32 %v10540, %v10567
        %v10580 = vadd.f32 %v10541, %v10567
        %v10581 = vadd.f32 %v10542, %v10567
        %v10582 = vadd.f32 %v10543, %v10567
        %v10583 = vadd.f32 %v10544, %v10567
        %v10584 = vadd.f32 %v10545, %v10567
        %v10585 = vadd.f32 %v10546, %v10567
        %v10586 = vadd.f32 %v10547, %v10567
        %v10587 = vadd.f32 %v10548, %v10567
        %v10588 = vadd.f32 %v10549, %v10567
        %v10589 = vadd.f32 %v10550, %v10567
        %v10590 = vadd.f32 %v10551, %v10567
        %v10591 = vadd.f32 %v10552, %v10567
        %v10592 = vadd.f32 %v10553, %v10567
        %v10593 = vadd.f32 %v10554, %v10567
        %v10594 = vadd.f32 %v10555, %v10567
        %v10595 = vadd.f32 %v10556, %v10567
        %v10596 = vadd.f32 %v10557, %v10567
        %v10597 = vadd.f32 %v10558, %v10567
        %v10598 = vadd.f32 %v10559, %v10567
        %v10599 = vadd.f32 %v10560, %v10567
        %v10600 = vadd.f32 %v10561, %v10567
        %v10601 = vld [vmem:[%s1770] sm:$0xf]
        %v10602 = vld [vmem:[%s1770 + $0x4] sm:$0xf]
        %v10603 = vld [vmem:[%s1770 + $0x8] sm:$0x1]
        %v10604 = vld [vmem:[%s1770 + $0xc] sm:$0xf]
        %v10605 = vld [vmem:[%s1770 + $0x10] sm:$0xf]
        %v10606 = vld [vmem:[%s1770 + $0x14] sm:$0x1]
        %v10607 = vld [vmem:[%s1770 + $0x18] sm:$0xf]
        %v10608 = vld [vmem:[%s1770 + $0x1c] sm:$0xf]
        %v10609 = vld [vmem:[%s1770 + $0x20] sm:$0x1]
        %v10610 = vld [vmem:[%s1770 + $0x24] sm:$0xf]
        %v10611 = vld [vmem:[%s1770 + $0x28] sm:$0xf]
        %v10612 = vld [vmem:[%s1770 + $0x2c] sm:$0x1]
        %v10613 = vld [vmem:[%s1770 + $0x30] sm:$0xf]
        %v10614 = vld [vmem:[%s1770 + $0x34] sm:$0xf]
        %v10615 = vld [vmem:[%s1770 + $0x38] sm:$0x1]
        %v10616 = vld [vmem:[%s1770 + $0x3c] sm:$0xf]
        %v10617 = vld [vmem:[%s1770 + $0x40] sm:$0xf]
        %v10618 = vld [vmem:[%s1770 + $0x44] sm:$0x1]
        %v10619 = vld [vmem:[%s1770 + $0x48] sm:$0xf]
        %v10620 = vld [vmem:[%s1770 + $0x4c] sm:$0xf]
        %v10621 = vld [vmem:[%s1770 + $0x50] sm:$0x1]
        %v10622 = vld [vmem:[%s1770 + $0x54] sm:$0xf]
        %v10623 = vld [vmem:[%s1770 + $0x58] sm:$0xf]
        %v10624 = vld [vmem:[%s1770 + $0x5c] sm:$0x1]
        %v10625 = vld [vmem:[%s1770 + $0x60] sm:$0xf]
        %v10626 = vld [vmem:[%s1770 + $0x64] sm:$0xf]
        %v10627 = vld [vmem:[%s1770 + $0x68] sm:$0x1]
        %v10628 = vld [vmem:[%s1770 + $0x6c] sm:$0xf]
        %v10629 = vld [vmem:[%s1770 + $0x70] sm:$0xf]
        %v10630 = vld [vmem:[%s1770 + $0x74] sm:$0x1]
        %v10631 = vld [vmem:[%s1770 + $0x78] sm:$0xf]
        %v10632 = vld [vmem:[%s1770 + $0x7c] sm:$0xf]
        %v10633 = vld [vmem:[%s1770 + $0x80] sm:$0x1]
        %v10634 = vld [vmem:[%s1770 + $0x84] sm:$0xf]
        %v10635 = vld [vmem:[%s1770 + $0x88] sm:$0xf]
        %v10636 = vld [vmem:[%s1770 + $0x8c] sm:$0x1]
        %v10637 = vld [vmem:[%s1770 + $0x90] sm:$0xf]
        %v10638 = vld [vmem:[%s1770 + $0x94] sm:$0xf]
        %v10639 = vld [vmem:[%s1770 + $0x98] sm:$0x1]
        %v10640 = vld [vmem:[%s1770 + $0x9c] sm:$0xf]
        %v10641 = vld [vmem:[%s1770 + $0xa0] sm:$0xf]
        %v10642 = vld [vmem:[%s1770 + $0xa4] sm:$0x1]
        %v10643 = vld [vmem:[%s1770 + $0xa8] sm:$0xf]
        %v10644 = vld [vmem:[%s1770 + $0xac] sm:$0xf]
        %v10645 = vld [vmem:[%s1770 + $0xb0] sm:$0x1]
        %v10646 = vld [vmem:[%s1770 + $0xb4] sm:$0xf]
        %v10647 = vld [vmem:[%s1770 + $0xb8] sm:$0xf]
        %v10648 = vld [vmem:[%s1770 + $0xbc] sm:$0x1]
        %v10649 = vunpack.c.l.bf16 %v10601
        %v10650 = vunpack.c.l.bf16 %v10602
        %v10651 = vunpack.c.l.bf16 %v10603
        %v10652 = vunpack.c.l.bf16 %v10604
        %v10653 = vunpack.c.l.bf16 %v10605
        %v10654 = vunpack.c.l.bf16 %v10606
        %v10655 = vunpack.c.l.bf16 %v10607
        %v10656 = vunpack.c.l.bf16 %v10608
        %v10657 = vunpack.c.l.bf16 %v10609
        %v10658 = vunpack.c.l.bf16 %v10610
        %v10659 = vunpack.c.l.bf16 %v10611
        %v10660 = vunpack.c.l.bf16 %v10612
        %v10661 = vunpack.c.l.bf16 %v10613
        %v10662 = vunpack.c.l.bf16 %v10614
        %v10663 = vunpack.c.l.bf16 %v10615
        %v10664 = vunpack.c.l.bf16 %v10616
        %v10665 = vunpack.c.l.bf16 %v10617
        %v10666 = vunpack.c.l.bf16 %v10618
        %v10667 = vunpack.c.l.bf16 %v10619
        %v10668 = vunpack.c.l.bf16 %v10620
        %v10669 = vunpack.c.l.bf16 %v10621
        %v10670 = vunpack.c.l.bf16 %v10622
        %v10671 = vunpack.c.l.bf16 %v10623
        %v10672 = vunpack.c.l.bf16 %v10624
        %v10673 = vunpack.c.l.bf16 %v10625
        %v10674 = vunpack.c.l.bf16 %v10626
        %v10675 = vunpack.c.l.bf16 %v10627
        %v10676 = vunpack.c.l.bf16 %v10628
        %v10677 = vunpack.c.l.bf16 %v10629
        %v10678 = vunpack.c.l.bf16 %v10630
        %v10679 = vunpack.c.l.bf16 %v10631
        %v10680 = vunpack.c.l.bf16 %v10632
        %v10681 = vunpack.c.l.bf16 %v10633
        %v10682 = vunpack.c.l.bf16 %v10634
        %v10683 = vunpack.c.l.bf16 %v10635
        %v10684 = vunpack.c.l.bf16 %v10636
        %v10685 = vunpack.c.l.bf16 %v10637
        %v10686 = vunpack.c.l.bf16 %v10638
        %v10687 = vunpack.c.l.bf16 %v10639
        %v10688 = vunpack.c.l.bf16 %v10640
        %v10689 = vunpack.c.l.bf16 %v10641
        %v10690 = vunpack.c.l.bf16 %v10642
        %v10691 = vunpack.c.l.bf16 %v10643
        %v10692 = vunpack.c.l.bf16 %v10644
        %v10693 = vunpack.c.l.bf16 %v10645
        %v10694 = vunpack.c.l.bf16 %v10646
        %v10695 = vunpack.c.l.bf16 %v10647
        %v10696 = vunpack.c.l.bf16 %v10648
        %vm10745 = vcmask 1046528
        %v10746 = vrot.slane %v10649, 1
        %v10747 = vrot.slane %v10650, 1
        %v10748 = vsel %vm10745, %v10746, %v10747
        %v10749 = vrot.slane %v10651, 1
        %v10750 = vsel %vm10745, %v10747, %v10749
        %v10751 = vrot.slane %v10652, 1
        %v10752 = vrot.slane %v10653, 1
        %v10753 = vsel %vm10745, %v10751, %v10752
        %v10754 = vrot.slane %v10654, 1
        %v10755 = vsel %vm10745, %v10752, %v10754
        %v10756 = vrot.slane %v10655, 1
        %v10757 = vrot.slane %v10656, 1
        %v10758 = vsel %vm10745, %v10756, %v10757
        %v10759 = vrot.slane %v10657, 1
        %v10760 = vsel %vm10745, %v10757, %v10759
        %v10761 = vrot.slane %v10658, 1
        %v10762 = vrot.slane %v10659, 1
        %v10763 = vsel %vm10745, %v10761, %v10762
        %v10764 = vrot.slane %v10660, 1
        %v10765 = vsel %vm10745, %v10762, %v10764
        %v10766 = vrot.slane %v10661, 1
        %v10767 = vrot.slane %v10662, 1
        %v10768 = vsel %vm10745, %v10766, %v10767
        %v10769 = vrot.slane %v10663, 1
        %v10770 = vsel %vm10745, %v10767, %v10769
        %v10771 = vrot.slane %v10664, 1
        %v10772 = vrot.slane %v10665, 1
        %v10773 = vsel %vm10745, %v10771, %v10772
        %v10774 = vrot.slane %v10666, 1
        %v10775 = vsel %vm10745, %v10772, %v10774
        %v10776 = vrot.slane %v10667, 1
        %v10777 = vrot.slane %v10668, 1
        %v10778 = vsel %vm10745, %v10776, %v10777
        %v10779 = vrot.slane %v10669, 1
        %v10780 = vsel %vm10745, %v10777, %v10779
        %v10781 = vrot.slane %v10670, 1
        %v10782 = vrot.slane %v10671, 1
        %v10783 = vsel %vm10745, %v10781, %v10782
        %v10784 = vrot.slane %v10672, 1
        %v10785 = vsel %vm10745, %v10782, %v10784
        %v10786 = vrot.slane %v10673, 1
        %v10787 = vrot.slane %v10674, 1
        %v10788 = vsel %vm10745, %v10786, %v10787
        %v10789 = vrot.slane %v10675, 1
        %v10790 = vsel %vm10745, %v10787, %v10789
        %v10791 = vrot.slane %v10676, 1
        %v10792 = vrot.slane %v10677, 1
        %v10793 = vsel %vm10745, %v10791, %v10792
        %v10794 = vrot.slane %v10678, 1
        %v10795 = vsel %vm10745, %v10792, %v10794
        %v10796 = vrot.slane %v10679, 1
        %v10797 = vrot.slane %v10680, 1
        %v10798 = vsel %vm10745, %v10796, %v10797
        %v10799 = vrot.slane %v10681, 1
        %v10800 = vsel %vm10745, %v10797, %v10799
        %v10801 = vrot.slane %v10682, 1
        %v10802 = vrot.slane %v10683, 1
        %v10803 = vsel %vm10745, %v10801, %v10802
        %v10804 = vrot.slane %v10684, 1
        %v10805 = vsel %vm10745, %v10802, %v10804
        %v10806 = vrot.slane %v10685, 1
        %v10807 = vrot.slane %v10686, 1
        %v10808 = vsel %vm10745, %v10806, %v10807
        %v10809 = vrot.slane %v10687, 1
        %v10810 = vsel %vm10745, %v10807, %v10809
        %v10811 = vrot.slane %v10688, 1
        %v10812 = vrot.slane %v10689, 1
        %v10813 = vsel %vm10745, %v10811, %v10812
        %v10814 = vrot.slane %v10690, 1
        %v10815 = vsel %vm10745, %v10812, %v10814
        %v10816 = vrot.slane %v10691, 1
        %v10817 = vrot.slane %v10692, 1
        %v10818 = vsel %vm10745, %v10816, %v10817
        %v10819 = vrot.slane %v10693, 1
        %v10820 = vsel %vm10745, %v10817, %v10819
        %v10821 = vrot.slane %v10694, 1
        %v10822 = vrot.slane %v10695, 1
        %v10823 = vsel %vm10745, %v10821, %v10822
        %v10824 = vrot.slane %v10696, 1
        %v10825 = vsel %vm10745, %v10822, %v10824
        %v10858 = vadd.f32 %v10569, %v10748
        %v10859 = vadd.f32 %v10570, %v10750
        %v10860 = vadd.f32 %v10571, %v10753
        %v10861 = vadd.f32 %v10572, %v10755
        %v10862 = vadd.f32 %v10573, %v10758
        %v10863 = vadd.f32 %v10574, %v10760
        %v10864 = vadd.f32 %v10575, %v10763
        %v10865 = vadd.f32 %v10576, %v10765
        %v10866 = vadd.f32 %v10577, %v10768
        %v10867 = vadd.f32 %v10578, %v10770
        %v10868 = vadd.f32 %v10579, %v10773
        %v10869 = vadd.f32 %v10580, %v10775
        %v10870 = vadd.f32 %v10581, %v10778
        %v10871 = vadd.f32 %v10582, %v10780
        %v10872 = vadd.f32 %v10583, %v10783
        %v10873 = vadd.f32 %v10584, %v10785
        %v10874 = vadd.f32 %v10585, %v10788
        %v10875 = vadd.f32 %v10586, %v10790
        %v10876 = vadd.f32 %v10587, %v10793
        %v10877 = vadd.f32 %v10588, %v10795
        %v10878 = vadd.f32 %v10589, %v10798
        %v10879 = vadd.f32 %v10590, %v10800
        %v10880 = vadd.f32 %v10591, %v10803
        %v10881 = vadd.f32 %v10592, %v10805
        %v10882 = vadd.f32 %v10593, %v10808
        %v10883 = vadd.f32 %v10594, %v10810
        %v10884 = vadd.f32 %v10595, %v10813
        %v10885 = vadd.f32 %v10596, %v10815
        %v10886 = vadd.f32 %v10597, %v10818
        %v10887 = vadd.f32 %v10598, %v10820
        %v10888 = vadd.f32 %v10599, %v10823
        %v10889 = vadd.f32 %v10600, %v10825
        %10890 = vst [vmem:[%s232] sm:$0xff] %v10858
        %10891 = vst [vmem:[%s232 + $0x8] sm:$0xff] %v10859
        %10892 = vst [vmem:[%s232 + $0x10] sm:$0xff] %v10860
        %10893 = vst [vmem:[%s232 + $0x18] sm:$0xff] %v10861
        %10894 = vst [vmem:[%s232 + $0x20] sm:$0xff] %v10862
        %10895 = vst [vmem:[%s232 + $0x28] sm:$0xff] %v10863
        %10896 = vst [vmem:[%s232 + $0x30] sm:$0xff] %v10864
        %10897 = vst [vmem:[%s232 + $0x38] sm:$0xff] %v10865
        %10898 = vst [vmem:[%s232 + $0x40] sm:$0xff] %v10866
        %10899 = vst [vmem:[%s232 + $0x48] sm:$0xff] %v10867
        %10900 = vst [vmem:[%s232 + $0x50] sm:$0xff] %v10868
        %10901 = vst [vmem:[%s232 + $0x58] sm:$0xff] %v10869
        %10902 = vst [vmem:[%s232 + $0x60] sm:$0xff] %v10870
        %10903 = vst [vmem:[%s232 + $0x68] sm:$0xff] %v10871
        %10904 = vst [vmem:[%s232 + $0x70] sm:$0xff] %v10872
        %10905 = vst [vmem:[%s232 + $0x78] sm:$0xff] %v10873
        %10906 = vst [vmem:[%s232 + $0x80] sm:$0xff] %v10874
        %10907 = vst [vmem:[%s232 + $0x88] sm:$0xff] %v10875
        %10908 = vst [vmem:[%s232 + $0x90] sm:$0xff] %v10876
        %10909 = vst [vmem:[%s232 + $0x98] sm:$0xff] %v10877
        %10910 = vst [vmem:[%s232 + $0xa0] sm:$0xff] %v10878
        %10911 = vst [vmem:[%s232 + $0xa8] sm:$0xff] %v10879
        %10912 = vst [vmem:[%s232 + $0xb0] sm:$0xff] %v10880
        %10913 = vst [vmem:[%s232 + $0xb8] sm:$0xff] %v10881
        %10914 = vst [vmem:[%s232 + $0xc0] sm:$0xff] %v10882
        %10915 = vst [vmem:[%s232 + $0xc8] sm:$0xff] %v10883
        %10916 = vst [vmem:[%s232 + $0xd0] sm:$0xff] %v10884
        %10917 = vst [vmem:[%s232 + $0xd8] sm:$0xff] %v10885
        %10918 = vst [vmem:[%s232 + $0xe0] sm:$0xff] %v10886
        %10919 = vst [vmem:[%s232 + $0xe8] sm:$0xff] %v10887
        %10920 = vst [vmem:[%s232 + $0xf0] sm:$0xff] %v10888
        %10921 = vst [vmem:[%s232 + $0xf8] sm:$0xff] %v10889
        %s10922 = sand.u32 %s138, 1
        %s10923 = scalar_lea.sflag [#allocation5], %s10922
        %s10924 = sand.u32 %s138, 1
        %s10925 = smul.addr %s10924, 256
        %s10926 = scalar_lea.vmem [#allocation6], %s10925
        // Predicated region
        $region45: #{tpu_custom_call.1} parent=39 // pred_check
          %p10927 = pneg %p148
        $region46: #{tpu_custom_call.1} parent=39 // pred_check_branch
          %10929 = sbr.rel (%p10927) target = $region48
        $region47: #{tpu_custom_call.1} parent=39 // pred_region
          %s10931 = ssub.s32 4096, 4096
          %10932 = vsyncadd %s10923, %s10931
          %s10933 = smul.addr %s20, 32
          %s10934 = smul.addr %s10933, 128
          %s10935 = scalar_lea.hbm %s5, %s10934
          %s10936 = sshll.u32 %s10926, 4
          %s10937 = int_to_ptr.vmem [resolvable:$true] %s10936
          %10942 = dma.vmem_to_hbm [thread:$0]  %s10937, 4096, %s10935, %s10923, 128, 128, 8
        $region48: #{tpu_custom_call.1} parent=39 // pred_fallthru
          _
      $region40: #{tpu_custom_call.1} parent=5 // pred_fallthru
        _
      %p10943 = scmp.le.s32.totalorder 2, %s15
      // Predicated region
      $region49: #{tpu_custom_call.1} parent=5 // pred_check
        %p10944 = pneg %p10943
      $region50: #{tpu_custom_call.1} parent=5 // pred_check_branch
        %10946 = sbr.rel (%p10944) target = $region52
      $region51: #{tpu_custom_call.1} parent=5 // pred_region
        %s10947 = ssub.s32 %s15, 2
        // Predicated region
        $region53: #{tpu_custom_call.1} parent=51 // pred_check
          %p10948 = pneg %p154
        $region54: #{tpu_custom_call.1} parent=51 // pred_check_branch
          %10950 = sbr.rel (%p10948) target = $region56
        $region55: #{tpu_custom_call.1} parent=51 // pred_region
          %s10951 = sand.u32 %s139, 1
          %s10952 = scalar_lea.sflag [#allocation5], %s10951
          %s10953 = sand.u32 %s139, 1
          %s10954 = smul.addr %s10953, 256
          %s10955 = scalar_lea.vmem [#allocation6], %s10954
          %10956 = dma.done %s10952, 4096
        $region56: #{tpu_custom_call.1} parent=51 // pred_fallthru
          _
      $region52: #{tpu_custom_call.1} parent=5 // pred_fallthru
        _
    $region6: #{tpu_custom_call.1} parent=1 // loop_footer
      %s19 = sadd.s32 1, %s15
    $region7: #{tpu_custom_call.1} parent=1 // loop_footer_branch
      %14 = sbr.rel target = $region3
    $region8: #{tpu_custom_call.1} parent=1 // loop_exit
      _
    %10957 = vsyncpa [#allocation4], 1
    %s10958 = scalar_lea.sflag [#allocation4], 1
    %10959 = vsyncpa %s10958, 1
    %10960 = vsyncpa [#allocation5], 1
    %s10961 = scalar_lea.sflag [#allocation5], 1
    %10962 = vsyncpa %s10961, 1

</llo_original>
